<compile_context>
chip_gen: v7x
topology: tpu7x:2x2x1
jax: 0.10.0
libtpu: 0.0.40
codegen_flags: <defaults>
</compile_context>

<pallas_src>
import jax
import jax.numpy as jnp
from jax.experimental import pallas as pl
from jax.experimental.pallas import tpu as pltpu


LANE = 128  # TPU lane width; pad all *output* feature dims to multiples of this.


def _round_up(n, m):
    return ((n + m - 1) // m) * m


def _pad2(a, rows, cols):
    return jnp.pad(a, ((0, rows - a.shape[0]), (0, cols - a.shape[1])))


def _mlp_kernel(x_ref,
                w1_ref, b1_ref,
                w2_ref, b2_ref,
                w3_ref, b3_ref,
                w4_ref, b4_ref,
                o_ref):
    # x arrives f32 (unpadded feature dim); cast to bf16 in-kernel for the MXU.
    # Accumulation, bias-add and ReLU are f32.
    x = x_ref[...].astype(jnp.bfloat16)
    # Layer 1: Linear -> (dropout=id) -> ReLU
    h = jnp.dot(x, w1_ref[...], preferred_element_type=jnp.float32)
    h = jnp.maximum(h + b1_ref[...], 0.0)
    # Layer 2
    h = jnp.dot(h.astype(jnp.bfloat16), w2_ref[...],
                preferred_element_type=jnp.float32)
    h = jnp.maximum(h + b2_ref[...], 0.0)
    # Layer 3
    h = jnp.dot(h.astype(jnp.bfloat16), w3_ref[...],
                preferred_element_type=jnp.float32)
    h = jnp.maximum(h + b3_ref[...], 0.0)
    # Layer 4 (logits, no activation)
    out = jnp.dot(h.astype(jnp.bfloat16), w4_ref[...],
                  preferred_element_type=jnp.float32)
    o_ref[...] = (out + b4_ref[...]).astype(o_ref.dtype)


def prepare_params(params, input_size):
    """Zero-pad weight/bias OUTPUT dims to lane-dense (multiple-of-128) widths
    and cast weights to bf16 (biases stay f32 for the f32 VPU path).

    Layer 1's K axis is left at `input_size` so x can be fed unpadded.

    params: dict with w1..w4 stored as (in_features, out_features) and
            b1..b4 stored as (1, out_features), all f32.
    """
    prepared = {}
    in_pad = input_size              # no K padding for layer 1 (x stays unpadded)
    for i in range(1, 5):
        w = params[f"w{i}"]
        b = params[f"b{i}"]
        out_pad = _round_up(w.shape[1], LANE)
        prepared[f"w{i}"] = _pad2(w, in_pad, out_pad).astype(jnp.bfloat16)
        prepared[f"b{i}"] = _pad2(b, 1, out_pad).astype(jnp.float32)
        in_pad = out_pad
    prepared["input_size"] = input_size
    prepared["num_classes"] = params["w4"].shape[1]
    return prepared


def _pick_batch_tile(B):
    """Batch tile: tiny B -> one sublane-aligned tile; otherwise >=2 grid steps
    (so the 'parallel' axis shards across both v7x TensorCores) capped at 256
    rows (fills the 256-wide v6e/v7x MXU M dim while amortizing step overhead)."""
    if B <= 64:
        return _round_up(max(B, 1), 8)
    if B < 512:
        return min(_round_up((B + 1) // 2, 8), 256)
    return 256


def mlp_forward(x, prepared):
    """Fused 4-layer MLP forward in a single Pallas kernel.

    x: (B, input_size) f32
    prepared: output of prepare_params (padded bf16 weights, f32 biases).
    Returns (B, num_classes) f32 logits.
    """
    B, D = x.shape
    num_classes = prepared["num_classes"]

    w1, b1 = prepared["w1"], prepared["b1"]
    w2, b2 = prepared["w2"], prepared["b2"]
    w3, b3 = prepared["w3"], prepared["b3"]
    w4, b4 = prepared["w4"], prepared["b4"]

    d_in = w1.shape[0]          # == input_size (unpadded)
    h1 = w1.shape[1]
    h2 = w2.shape[1]
    h3 = w3.shape[1]
    nc_pad = w4.shape[1]
    assert d_in == D, "input feature size mismatch"

    tb = _pick_batch_tile(B)
    b_pad = _round_up(B, tb)
    nb = b_pad // tb

    # Only the batch axis is (possibly) padded; x stays f32 and feature-dim
    # unpadded -> no extra HBM pad/cast pass over the activations.
    x_p = x if b_pad == B else jnp.pad(x, ((0, b_pad - B), (0, 0)))

    # --- VMEM plan: weights (x2 for the default double-buffer fallback) +
    #     pipelined x/out tiles + per-step f32 intermediates + headroom. ------
    weight_bytes = sum(int(a.size) * a.dtype.itemsize
                       for a in (w1, b1, w2, b2, w3, b3, w4, b4))
    act_bytes = tb * 4 * (d_in + h1 + h2 + h3 + nc_pad)
    io_bytes = 2 * tb * 4 * (d_in + nc_pad)
    vmem_need = 2 * weight_bytes + io_bytes + act_bytes
    vmem_limit = int(min(48 * 2**20, max(16 * 2**20, 2 * vmem_need)))

    # --- Cost hint so XLA can schedule surrounding ops around the kernel. ----
    flops = 2 * b_pad * (d_in * h1 + h1 * h2 + h2 * h3 + h3 * nc_pad)
    bytes_accessed = (int(x_p.size) * x_p.dtype.itemsize
                      + weight_bytes
                      + b_pad * nc_pad * 4)
    cost = pl.CostEstimate(flops=int(flops), transcendentals=0,
                           bytes_accessed=int(bytes_accessed))

    def make_call(weight_pipeline_mode):
        def resident(shape):
            # Weights/biases always map to block (0,0): fetched once, resident.
            if weight_pipeline_mode is None:
                return pl.BlockSpec(shape, lambda i: (0, 0))
            return pl.BlockSpec(shape, lambda i: (0, 0),
                                pipeline_mode=weight_pipeline_mode)

        return pl.pallas_call(
            _mlp_kernel,
            out_shape=jax.ShapeDtypeStruct((b_pad, nc_pad), jnp.float32),
            grid=(nb,),
            in_specs=[
                pl.BlockSpec((tb, d_in), lambda i: (i, 0)),   # x: tiled over batch
                resident((d_in, h1)), resident((1, h1)),
                resident((h1, h2)),   resident((1, h2)),
                resident((h2, h3)),   resident((1, h3)),
                resident((h3, nc_pad)), resident((1, nc_pad)),
            ],
            out_specs=pl.BlockSpec((tb, nc_pad), lambda i: (i, 0)),
            compiler_params=pltpu.CompilerParams(
                dimension_semantics=("parallel",),
                vmem_limit_bytes=vmem_limit),
            cost_estimate=cost,
        )

    args = (x_p, w1, b1, w2, b2, w3, b3, w4, b4)
    try:
        # Resident weights single-buffered (they never change block index, so
        # double-buffering them only wastes VMEM — matters on v7x's 64 MiB).
        out = jax.block_until_ready(make_call(pl.Buffered(1))(*args))
    except Exception:
        # Fallback: some Pallas versions reject buffer_count=1; use defaults.
        out = make_call(None)(*args)

    return out[:B, :num_classes]


def init_params(key, input_size, hidden_size, num_classes):
    """Deterministic init matching the shapes of the PyTorch module.

    Uses uniform(-1/sqrt(fan_in), 1/sqrt(fan_in)) like torch.nn.Linear default.
    Weights are stored transposed: (in_features, out_features).
    """
    dims = [
        (input_size, hidden_size + 500),
        (hidden_size + 500, hidden_size),
        (hidden_size, hidden_size - 500),
        (hidden_size - 500, num_classes),
    ]
    params = {}
    for i, (fan_in, fan_out) in enumerate(dims, start=1):
        key, kw, kb = jax.random.split(key, 3)
        bound = 1.0 / jnp.sqrt(jnp.float32(fan_in))
        params[f"w{i}"] = jax.random.uniform(
            kw, (fan_in, fan_out), jnp.float32, minval=-bound, maxval=bound)
        params[f"b{i}"] = jax.random.uniform(
            kb, (1, fan_out), jnp.float32, minval=-bound, maxval=bound)
    return params


def reference_forward(x, params):
    """Plain-JAX reference mimicking the kernel's dtype behavior
    (bf16 matmul inputs, f32 accumulation, eval-mode dropout = identity)."""
    def dot_bf16(a, w):
        return jnp.dot(a.astype(jnp.bfloat16), w.astype(jnp.bfloat16),
                       preferred_element_type=jnp.float32)
    h = jnp.maximum(dot_bf16(x, params["w1"]) + params["b1"], 0.0)
    h = jnp.maximum(dot_bf16(h, params["w2"]) + params["b2"], 0.0)
    h = jnp.maximum(dot_bf16(h, params["w3"]) + params["b3"], 0.0)
    return dot_bf16(h, params["w4"]) + params["b4"]


if __name__ == "__main__":
    # hidden_size must exceed 500 (module uses hidden_size - 500).
    input_size = 32
    hidden_size = 628     # -> layer widths: 1128, 628, 128 (padded 1152, 640, 128)
    num_classes = 8
    batch = 8

    key = jax.random.PRNGKey(0)
    key, kx = jax.random.split(key)
    x = jax.random.normal(kx, (batch, input_size), jnp.float32)

    params = init_params(key, input_size, hidden_size, num_classes)
    prepared = prepare_params(params, input_size)

    out = mlp_forward(x, prepared)
    out = jax.block_until_ready(out)

    ref = reference_forward(x, params)
    assert out.shape == (batch, num_classes)
    assert jnp.allclose(out, ref, atol=2e-2, rtol=2e-2), "mismatch vs reference"

    print("KERNEL_OK")
</pallas_src>

<mosaic_0001>
module attributes {stable_mosaic.version = 11 : i64} {
  func.func @_mlp_kernel(%arg0: i32, %arg1: memref<8x32xf32, #tpu.memory_space<vmem>>, %arg2: memref<32x1152xbf16, #tpu.memory_space<vmem>>, %arg3: memref<1x1152xf32, #tpu.memory_space<vmem>>, %arg4: memref<1152x640xbf16, #tpu.memory_space<vmem>>, %arg5: memref<1x640xf32, #tpu.memory_space<vmem>>, %arg6: memref<640x128xbf16, #tpu.memory_space<vmem>>, %arg7: memref<1x128xf32, #tpu.memory_space<vmem>>, %arg8: memref<128x128xbf16, #tpu.memory_space<vmem>>, %arg9: memref<1x128xf32, #tpu.memory_space<vmem>>, %arg10: memref<8x128xf32, #tpu.memory_space<vmem>>) attributes {dimension_semantics = [#tpu.dimension_semantics<parallel>], iteration_bounds = array<i64: 1>, scalar_prefetch = 0 : i64, scratch_operands = 0 : i64, tpu.core_type = #tpu.core_type<tc>, window_params = [{transform_indices = @transform_0, window_bounds = array<i64: 8, 32>}, {pipeline_mode = #tpu.pipeline_mode<synchronous>, transform_indices = @transform_1, window_bounds = array<i64: 32, 1152>}, {pipeline_mode = #tpu.pipeline_mode<synchronous>, transform_indices = @transform_2, window_bounds = array<i64: 1, 1152>}, {pipeline_mode = #tpu.pipeline_mode<synchronous>, transform_indices = @transform_3, window_bounds = array<i64: 1152, 640>}, {pipeline_mode = #tpu.pipeline_mode<synchronous>, transform_indices = @transform_4, window_bounds = array<i64: 1, 640>}, {pipeline_mode = #tpu.pipeline_mode<synchronous>, transform_indices = @transform_5, window_bounds = array<i64: 640, 128>}, {pipeline_mode = #tpu.pipeline_mode<synchronous>, transform_indices = @transform_6, window_bounds = array<i64: 1, 128>}, {pipeline_mode = #tpu.pipeline_mode<synchronous>, transform_indices = @transform_7, window_bounds = array<i64: 128, 128>}, {pipeline_mode = #tpu.pipeline_mode<synchronous>, transform_indices = @transform_8, window_bounds = array<i64: 1, 128>}, {transform_indices = @transform_9, window_bounds = array<i64: 8, 128>}]} {
    %c0 = arith.constant 0 : index
    %c0_0 = arith.constant 0 : index
    %0 = vector.load %arg1[%c0, %c0_0] : memref<8x32xf32, #tpu.memory_space<vmem>>, vector<8x32xf32>
    %1 = arith.truncf %0 : vector<8x32xf32> to vector<8x32xbf16>
    %c0_1 = arith.constant 0 : index
    %c0_2 = arith.constant 0 : index
    %2 = vector.load %arg2[%c0_1, %c0_2] : memref<32x1152xbf16, #tpu.memory_space<vmem>>, vector<32x1152xbf16>
    %cst = arith.constant dense<0.000000e+00> : vector<8x1152xf32>
    %3 = tpu.matmul %1, %2, %cst {dimension_numbers = #tpu.dot_dimension_numbers<[1], [0], [0], [1], [0, 0, 1, 1], [], []>} : vector<8x32xbf16>, vector<32x1152xbf16>, vector<8x1152xf32> -> vector<8x1152xf32>
    %c0_3 = arith.constant 0 : index
    %c0_4 = arith.constant 0 : index
    %4 = vector.load %arg3[%c0_3, %c0_4] : memref<1x1152xf32, #tpu.memory_space<vmem>>, vector<1x1152xf32>
    %5 = vector.broadcast %4 : vector<1x1152xf32> to vector<8x1152xf32>
    %6 = arith.addf %3, %5 : vector<8x1152xf32>
    %cst_5 = arith.constant 0.000000e+00 : f32
    %7 = vector.broadcast %cst_5 : f32 to vector<8x1152xf32>
    %8 = arith.maximumf %6, %7 : vector<8x1152xf32>
    %9 = arith.truncf %8 : vector<8x1152xf32> to vector<8x1152xbf16>
    %c0_6 = arith.constant 0 : index
    %c0_7 = arith.constant 0 : index
    %10 = vector.load %arg4[%c0_6, %c0_7] : memref<1152x640xbf16, #tpu.memory_space<vmem>>, vector<1152x640xbf16>
    %cst_8 = arith.constant dense<0.000000e+00> : vector<8x640xf32>
    %11 = tpu.matmul %9, %10, %cst_8 {dimension_numbers = #tpu.dot_dimension_numbers<[1], [0], [0], [1], [0, 0, 1, 1], [], []>} : vector<8x1152xbf16>, vector<1152x640xbf16>, vector<8x640xf32> -> vector<8x640xf32>
    %c0_9 = arith.constant 0 : index
    %c0_10 = arith.constant 0 : index
    %12 = vector.load %arg5[%c0_9, %c0_10] : memref<1x640xf32, #tpu.memory_space<vmem>>, vector<1x640xf32>
    %13 = vector.broadcast %12 : vector<1x640xf32> to vector<8x640xf32>
    %14 = arith.addf %11, %13 : vector<8x640xf32>
    %cst_11 = arith.constant 0.000000e+00 : f32
    %15 = vector.broadcast %cst_11 : f32 to vector<8x640xf32>
    %16 = arith.maximumf %14, %15 : vector<8x640xf32>
    %17 = arith.truncf %16 : vector<8x640xf32> to vector<8x640xbf16>
    %c0_12 = arith.constant 0 : index
    %c0_13 = arith.constant 0 : index
    %18 = vector.load %arg6[%c0_12, %c0_13] : memref<640x128xbf16, #tpu.memory_space<vmem>>, vector<640x128xbf16>
    %cst_14 = arith.constant dense<0.000000e+00> : vector<8x128xf32>
    %19 = tpu.matmul %17, %18, %cst_14 {dimension_numbers = #tpu.dot_dimension_numbers<[1], [0], [0], [1], [0, 0, 1, 1], [], []>} : vector<8x640xbf16>, vector<640x128xbf16>, vector<8x128xf32> -> vector<8x128xf32>
    %c0_15 = arith.constant 0 : index
    %c0_16 = arith.constant 0 : index
    %20 = vector.load %arg7[%c0_15, %c0_16] : memref<1x128xf32, #tpu.memory_space<vmem>>, vector<1x128xf32>
    %21 = vector.broadcast %20 : vector<1x128xf32> to vector<8x128xf32>
    %22 = arith.addf %19, %21 : vector<8x128xf32>
    %cst_17 = arith.constant 0.000000e+00 : f32
    %23 = vector.broadcast %cst_17 : f32 to vector<8x128xf32>
    %24 = arith.maximumf %22, %23 : vector<8x128xf32>
    %25 = arith.truncf %24 : vector<8x128xf32> to vector<8x128xbf16>
    %c0_18 = arith.constant 0 : index
    %c0_19 = arith.constant 0 : index
    %26 = vector.load %arg8[%c0_18, %c0_19] : memref<128x128xbf16, #tpu.memory_space<vmem>>, vector<128x128xbf16>
    %cst_20 = arith.constant dense<0.000000e+00> : vector<8x128xf32>
    %27 = tpu.matmul %25, %26, %cst_20 {dimension_numbers = #tpu.dot_dimension_numbers<[1], [0], [0], [1], [0, 0, 1, 1], [], []>} : vector<8x128xbf16>, vector<128x128xbf16>, vector<8x128xf32> -> vector<8x128xf32>
    %c0_21 = arith.constant 0 : index
    %c0_22 = arith.constant 0 : index
    %28 = vector.load %arg9[%c0_21, %c0_22] : memref<1x128xf32, #tpu.memory_space<vmem>>, vector<1x128xf32>
    %29 = vector.broadcast %28 : vector<1x128xf32> to vector<8x128xf32>
    %30 = arith.addf %27, %29 : vector<8x128xf32>
    %c0_23 = arith.constant 0 : index
    %c0_24 = arith.constant 0 : index
    %31 = vector.load %arg10[%c0_23, %c0_24] : memref<8x128xf32, #tpu.memory_space<vmem>>, vector<8x128xf32>
    tpu.vector_store %arg10[%c0_23, %c0_24], %30 {strides = array<i32>} : memref<8x128xf32, #tpu.memory_space<vmem>>, vector<8x128xf32>,
    return
  }
  func.func @transform_0(%arg0: i32) -> (i32, i32) {
    %c0_i32 = arith.constant 0 : i32
    %c0_i32_0 = arith.constant 0 : i32
    return %arg0, %c0_i32 : i32, i32
  }
  func.func @transform_1(%arg0: i32) -> (i32, i32) {
    %c0_i32 = arith.constant 0 : i32
    %c0_i32_0 = arith.constant 0 : i32
    %c0_i32_1 = arith.constant 0 : i32
    return %c0_i32, %c0_i32_0 : i32, i32
  }
  func.func @transform_2(%arg0: i32) -> (i32, i32) {
    %c0_i32 = arith.constant 0 : i32
    %c0_i32_0 = arith.constant 0 : i32
    %c0_i32_1 = arith.constant 0 : i32
    return %c0_i32, %c0_i32_0 : i32, i32
  }
  func.func @transform_3(%arg0: i32) -> (i32, i32) {
    %c0_i32 = arith.constant 0 : i32
    %c0_i32_0 = arith.constant 0 : i32
    %c0_i32_1 = arith.constant 0 : i32
    return %c0_i32, %c0_i32_0 : i32, i32
  }
  func.func @transform_4(%arg0: i32) -> (i32, i32) {
    %c0_i32 = arith.constant 0 : i32
    %c0_i32_0 = arith.constant 0 : i32
    %c0_i32_1 = arith.constant 0 : i32
    return %c0_i32, %c0_i32_0 : i32, i32
  }
  func.func @transform_5(%arg0: i32) -> (i32, i32) {
    %c0_i32 = arith.constant 0 : i32
    %c0_i32_0 = arith.constant 0 : i32
    %c0_i32_1 = arith.constant 0 : i32
    return %c0_i32, %c0_i32_0 : i32, i32
  }
  func.func @transform_6(%arg0: i32) -> (i32, i32) {
    %c0_i32 = arith.constant 0 : i32
    %c0_i32_0 = arith.constant 0 : i32
    %c0_i32_1 = arith.constant 0 : i32
    return %c0_i32, %c0_i32_0 : i32, i32
  }
  func.func @transform_7(%arg0: i32) -> (i32, i32) {
    %c0_i32 = arith.constant 0 : i32
    %c0_i32_0 = arith.constant 0 : i32
    %c0_i32_1 = arith.constant 0 : i32
    return %c0_i32, %c0_i32_0 : i32, i32
  }
  func.func @transform_8(%arg0: i32) -> (i32, i32) {
    %c0_i32 = arith.constant 0 : i32
    %c0_i32_0 = arith.constant 0 : i32
    %c0_i32_1 = arith.constant 0 : i32
    return %c0_i32, %c0_i32_0 : i32, i32
  }
  func.func @transform_9(%arg0: i32) -> (i32, i32) {
    %c0_i32 = arith.constant 0 : i32
    %c0_i32_0 = arith.constant 0 : i32
    return %arg0, %c0_i32 : i32, i32
  }
}

module attributes {stable_mosaic.version = 11 : i64} {
  func.func @_mlp_kernel(%arg0: i32, %arg1: memref<8x32xf32, #tpu.memory_space<vmem>>, %arg2: memref<32x1152xbf16, #tpu.memory_space<vmem>>, %arg3: memref<1x1152xf32, #tpu.memory_space<vmem>>, %arg4: memref<1152x640xbf16, #tpu.memory_space<vmem>>, %arg5: memref<1x640xf32, #tpu.memory_space<vmem>>, %arg6: memref<640x128xbf16, #tpu.memory_space<vmem>>, %arg7: memref<1x128xf32, #tpu.memory_space<vmem>>, %arg8: memref<128x128xbf16, #tpu.memory_space<vmem>>, %arg9: memref<1x128xf32, #tpu.memory_space<vmem>>, %arg10: memref<8x128xf32, #tpu.memory_space<vmem>>) attributes {dimension_semantics = [#tpu.dimension_semantics<parallel>], iteration_bounds = array<i64: 1>, scalar_prefetch = 0 : i64, scratch_operands = 0 : i64, tpu.core_type = #tpu.core_type<tc>, window_params = [{transform_indices = @transform_0, window_bounds = array<i64: 8, 32>}, {pipeline_mode = #tpu.pipeline_mode<synchronous>, transform_indices = @transform_1, window_bounds = array<i64: 32, 1152>}, {pipeline_mode = #tpu.pipeline_mode<synchronous>, transform_indices = @transform_2, window_bounds = array<i64: 1, 1152>}, {pipeline_mode = #tpu.pipeline_mode<synchronous>, transform_indices = @transform_3, window_bounds = array<i64: 1152, 640>}, {pipeline_mode = #tpu.pipeline_mode<synchronous>, transform_indices = @transform_4, window_bounds = array<i64: 1, 640>}, {pipeline_mode = #tpu.pipeline_mode<synchronous>, transform_indices = @transform_5, window_bounds = array<i64: 640, 128>}, {pipeline_mode = #tpu.pipeline_mode<synchronous>, transform_indices = @transform_6, window_bounds = array<i64: 1, 128>}, {pipeline_mode = #tpu.pipeline_mode<synchronous>, transform_indices = @transform_7, window_bounds = array<i64: 128, 128>}, {pipeline_mode = #tpu.pipeline_mode<synchronous>, transform_indices = @transform_8, window_bounds = array<i64: 1, 128>}, {transform_indices = @transform_9, window_bounds = array<i64: 8, 128>}]} {
    %c0 = arith.constant 0 : index
    %c0_0 = arith.constant 0 : index
    %0 = vector.load %arg1[%c0, %c0_0] : memref<8x32xf32, #tpu.memory_space<vmem>>, vector<8x32xf32>
    %1 = arith.truncf %0 : vector<8x32xf32> to vector<8x32xbf16>
    %c0_1 = arith.constant 0 : index
    %c0_2 = arith.constant 0 : index
    %2 = vector.load %arg2[%c0_1, %c0_2] : memref<32x1152xbf16, #tpu.memory_space<vmem>>, vector<32x1152xbf16>
    %cst = arith.constant dense<0.000000e+00> : vector<8x1152xf32>
    %3 = tpu.matmul %1, %2, %cst {dimension_numbers = #tpu.dot_dimension_numbers<[1], [0], [0], [1], [0, 0, 1, 1], [], []>} : vector<8x32xbf16>, vector<32x1152xbf16>, vector<8x1152xf32> -> vector<8x1152xf32>
    %c0_3 = arith.constant 0 : index
    %c0_4 = arith.constant 0 : index
    %4 = vector.load %arg3[%c0_3, %c0_4] : memref<1x1152xf32, #tpu.memory_space<vmem>>, vector<1x1152xf32>
    %5 = vector.broadcast %4 : vector<1x1152xf32> to vector<8x1152xf32>
    %6 = arith.addf %3, %5 : vector<8x1152xf32>
    %cst_5 = arith.constant 0.000000e+00 : f32
    %7 = vector.broadcast %cst_5 : f32 to vector<8x1152xf32>
    %8 = arith.maximumf %6, %7 : vector<8x1152xf32>
    %9 = arith.truncf %8 : vector<8x1152xf32> to vector<8x1152xbf16>
    %c0_6 = arith.constant 0 : index
    %c0_7 = arith.constant 0 : index
    %10 = vector.load %arg4[%c0_6, %c0_7] : memref<1152x640xbf16, #tpu.memory_space<vmem>>, vector<1152x640xbf16>
    %cst_8 = arith.constant dense<0.000000e+00> : vector<8x640xf32>
    %11 = tpu.matmul %9, %10, %cst_8 {dimension_numbers = #tpu.dot_dimension_numbers<[1], [0], [0], [1], [0, 0, 1, 1], [], []>} : vector<8x1152xbf16>, vector<1152x640xbf16>, vector<8x640xf32> -> vector<8x640xf32>
    %c0_9 = arith.constant 0 : index
    %c0_10 = arith.constant 0 : index
    %12 = vector.load %arg5[%c0_9, %c0_10] : memref<1x640xf32, #tpu.memory_space<vmem>>, vector<1x640xf32>
    %13 = vector.broadcast %12 : vector<1x640xf32> to vector<8x640xf32>
    %14 = arith.addf %11, %13 : vector<8x640xf32>
    %cst_11 = arith.constant 0.000000e+00 : f32
    %15 = vector.broadcast %cst_11 : f32 to vector<8x640xf32>
    %16 = arith.maximumf %14, %15 : vector<8x640xf32>
    %17 = arith.truncf %16 : vector<8x640xf32> to vector<8x640xbf16>
    %c0_12 = arith.constant 0 : index
    %c0_13 = arith.constant 0 : index
    %18 = vector.load %arg6[%c0_12, %c0_13] : memref<640x128xbf16, #tpu.memory_space<vmem>>, vector<640x128xbf16>
    %cst_14 = arith.constant dense<0.000000e+00> : vector<8x128xf32>
    %19 = tpu.matmul %17, %18, %cst_14 {dimension_numbers = #tpu.dot_dimension_numbers<[1], [0], [0], [1], [0, 0, 1, 1], [], []>} : vector<8x640xbf16>, vector<640x128xbf16>, vector<8x128xf32> -> vector<8x128xf32>
    %c0_15 = arith.constant 0 : index
    %c0_16 = arith.constant 0 : index
    %20 = vector.load %arg7[%c0_15, %c0_16] : memref<1x128xf32, #tpu.memory_space<vmem>>, vector<1x128xf32>
    %21 = vector.broadcast %20 : vector<1x128xf32> to vector<8x128xf32>
    %22 = arith.addf %19, %21 : vector<8x128xf32>
    %cst_17 = arith.constant 0.000000e+00 : f32
    %23 = vector.broadcast %cst_17 : f32 to vector<8x128xf32>
    %24 = arith.maximumf %22, %23 : vector<8x128xf32>
    %25 = arith.truncf %24 : vector<8x128xf32> to vector<8x128xbf16>
    %c0_18 = arith.constant 0 : index
    %c0_19 = arith.constant 0 : index
    %26 = vector.load %arg8[%c0_18, %c0_19] : memref<128x128xbf16, #tpu.memory_space<vmem>>, vector<128x128xbf16>
    %cst_20 = arith.constant dense<0.000000e+00> : vector<8x128xf32>
    %27 = tpu.matmul %25, %26, %cst_20 {dimension_numbers = #tpu.dot_dimension_numbers<[1], [0], [0], [1], [0, 0, 1, 1], [], []>} : vector<8x128xbf16>, vector<128x128xbf16>, vector<8x128xf32> -> vector<8x128xf32>
    %c0_21 = arith.constant 0 : index
    %c0_22 = arith.constant 0 : index
    %28 = vector.load %arg9[%c0_21, %c0_22] : memref<1x128xf32, #tpu.memory_space<vmem>>, vector<1x128xf32>
    %29 = vector.broadcast %28 : vector<1x128xf32> to vector<8x128xf32>
    %30 = arith.addf %27, %29 : vector<8x128xf32>
    %c0_23 = arith.constant 0 : index
    %c0_24 = arith.constant 0 : index
    %31 = vector.load %arg10[%c0_23, %c0_24] : memref<8x128xf32, #tpu.memory_space<vmem>>, vector<8x128xf32>
    tpu.vector_store %arg10[%c0_23, %c0_24], %30 {strides = array<i32>} : memref<8x128xf32, #tpu.memory_space<vmem>>, vector<8x128xf32>,
    return
  }
  func.func @transform_0(%arg0: i32) -> (i32, i32) {
    %c0_i32 = arith.constant 0 : i32
    %c0_i32_0 = arith.constant 0 : i32
    return %arg0, %c0_i32 : i32, i32
  }
  func.func @transform_1(%arg0: i32) -> (i32, i32) {
    %c0_i32 = arith.constant 0 : i32
    %c0_i32_0 = arith.constant 0 : i32
    %c0_i32_1 = arith.constant 0 : i32
    return %c0_i32, %c0_i32_0 : i32, i32
  }
  func.func @transform_2(%arg0: i32) -> (i32, i32) {
    %c0_i32 = arith.constant 0 : i32
    %c0_i32_0 = arith.constant 0 : i32
    %c0_i32_1 = arith.constant 0 : i32
    return %c0_i32, %c0_i32_0 : i32, i32
  }
  func.func @transform_3(%arg0: i32) -> (i32, i32) {
    %c0_i32 = arith.constant 0 : i32
    %c0_i32_0 = arith.constant 0 : i32
    %c0_i32_1 = arith.constant 0 : i32
    return %c0_i32, %c0_i32_0 : i32, i32
  }
  func.func @transform_4(%arg0: i32) -> (i32, i32) {
    %c0_i32 = arith.constant 0 : i32
    %c0_i32_0 = arith.constant 0 : i32
    %c0_i32_1 = arith.constant 0 : i32
    return %c0_i32, %c0_i32_0 : i32, i32
  }
  func.func @transform_5(%arg0: i32) -> (i32, i32) {
    %c0_i32 = arith.constant 0 : i32
    %c0_i32_0 = arith.constant 0 : i32
    %c0_i32_1 = arith.constant 0 : i32
    return %c0_i32, %c0_i32_0 : i32, i32
  }
  func.func @transform_6(%arg0: i32) -> (i32, i32) {
    %c0_i32 = arith.constant 0 : i32
    %c0_i32_0 = arith.constant 0 : i32
    %c0_i32_1 = arith.constant 0 : i32
    return %c0_i32, %c0_i32_0 : i32, i32
  }
  func.func @transform_7(%arg0: i32) -> (i32, i32) {
    %c0_i32 = arith.constant 0 : i32
    %c0_i32_0 = arith.constant 0 : i32
    %c0_i32_1 = arith.constant 0 : i32
    return %c0_i32, %c0_i32_0 : i32, i32
  }
  func.func @transform_8(%arg0: i32) -> (i32, i32) {
    %c0_i32 = arith.constant 0 : i32
    %c0_i32_0 = arith.constant 0 : i32
    %c0_i32_1 = arith.constant 0 : i32
    return %c0_i32, %c0_i32_0 : i32, i32
  }
  func.func @transform_9(%arg0: i32) -> (i32, i32) {
    %c0_i32 = arith.constant 0 : i32
    %c0_i32_0 = arith.constant 0 : i32
    return %arg0, %c0_i32 : i32, i32
  }
}

</mosaic_0001>

<llo_original>
// kernel: tpu_custom_call.1
$region0: #{tpu_custom_call.1}
  #allocation0 [shape = 'u32[]', space=smem, size = 0x4, offset = 0x4, fixed_abs, tag = 'smem constant byte address 0x4 - core index']
  #allocation1 [shape = 'u32[144,128]{1,0:T(1,128)}', space=vmem, size = 0x12000, scoped, tag = 'internal scratch']
  %s0 = inlined_call_operand.hbm [shape: f32[8,32], index: 0, kind: input, shape index: {}]
  %s1 = inlined_call_operand.hbm [shape: bf16[32,1152], index: 1, kind: input, shape index: {}]
  %s2 = inlined_call_operand.hbm [shape: f32[1,1152], index: 2, kind: input, shape index: {}]
  %s3 = inlined_call_operand.hbm [shape: bf16[1152,640], index: 3, kind: input, shape index: {}]
  %s4 = inlined_call_operand.hbm [shape: f32[1,640], index: 4, kind: input, shape index: {}]
  %s5 = inlined_call_operand.hbm [shape: bf16[640,128], index: 5, kind: input, shape index: {}]
  %s6 = inlined_call_operand.hbm [shape: f32[1,128], index: 6, kind: input, shape index: {}]
  %s7 = inlined_call_operand.hbm [shape: bf16[128,128], index: 7, kind: input, shape index: {}]
  %s8 = inlined_call_operand.hbm [shape: f32[1,128], index: 8, kind: input, shape index: {}]
  %s9 = inlined_call_operand.hbm [shape: f32[8,128], index: 9, kind: output, shape index: {}]
  %s10 = sld [smem:[#allocation0]]
  $region82: #{tpu_custom_call.1} parent=0
    _
  %s12 = ssub.s32 1, %s10
  %s13 = scalar_select 0, %s12, %s10
  $region1: #{tpu_custom_call.1} parent=0
    #allocation2 [shape = 'u8[4096]{0}', space=vmem, size = 0x1000, scoped, tag = 'input window, operand 0, single buffered']
    #allocation3 [shape = 's32[1]{0}', space=sflag, size = 0x4, scoped, tag = 'scoped memory for tpu_custom_call.1']
    #allocation4 [shape = 's32[1]{0}', space=sflag, size = 0x4, scoped, tag = 'scoped memory for tpu_custom_call.1']
    #allocation5 [shape = 'u8[73728]{0}', space=vmem, size = 0x12000, scoped, tag = 'input window, operand 1, single buffered']
    #allocation6 [shape = 's32[1]{0}', space=sflag, size = 0x4, scoped, tag = 'scoped memory for tpu_custom_call.1']
    #allocation7 [shape = 'u8[4608]{0}', space=vmem, size = 0x1400, scoped, tag = 'input window, operand 2, single buffered']
    #allocation8 [shape = 'u8[1474560]{0}', space=vmem, size = 0x168000, scoped, tag = 'input window, operand 3, single buffered']
    #allocation9 [shape = 's32[1]{0}', space=sflag, size = 0x4, scoped, tag = 'scoped memory for tpu_custom_call.1']
    #allocation10 [shape = 'u8[2560]{0}', space=vmem, size = 0xc00, scoped, tag = 'input window, operand 4, single buffered']
    #allocation11 [shape = 'u8[163840]{0}', space=vmem, size = 0x28000, scoped, tag = 'input window, operand 5, single buffered']
    #allocation12 [shape = 's32[1]{0}', space=sflag, size = 0x4, scoped, tag = 'scoped memory for tpu_custom_call.1']
    #allocation13 [shape = 'u8[512]{0}', space=vmem, size = 0x400, scoped, tag = 'input window, operand 6, single buffered']
    #allocation14 [shape = 'u8[32768]{0}', space=vmem, size = 0x8000, scoped, tag = 'input window, operand 7, single buffered']
    #allocation15 [shape = 's32[1]{0}', space=sflag, size = 0x4, scoped, tag = 'scoped memory for tpu_custom_call.1']
    #allocation16 [shape = 'u8[512]{0}', space=vmem, size = 0x400, scoped, tag = 'input window, operand 8, single buffered']
    #allocation17 [shape = 'u8[4096]{0}', space=vmem, size = 0x1000, scoped, tag = 'output window, operand 0, single buffered']
    %14 = vsyncpa [#allocation3], 0
    %15 = vsyncpa [#allocation6], 0
    %16 = vsyncpa [#allocation9], 0
    %17 = vsyncpa [#allocation12], 0
    %18 = vsyncpa [#allocation15], 0
    %19 = vsyncpa [#allocation4], 0
    // Predicated region
    $region2: #{tpu_custom_call.1} parent=1 // pred_check
      _
    $region3: #{tpu_custom_call.1} parent=1 // pred_check_branch
      %21 = sbr.rel (0) target = $region5
    $region4: #{tpu_custom_call.1} parent=1 // pred_region
      %s23 = ssub.s32 128, 128
      %24 = vsyncadd [#allocation3], %s23
      %s26 = sshll.u32 [#allocation2], 4
      %s27 = int_to_ptr.vmem [resolvable:$true] %s26
      %29 = dma.hbm_to_vmem [thread:$0]  %s0, 128, %s27, [#allocation3]
    $region5: #{tpu_custom_call.1} parent=1 // pred_fallthru
      _
    // Predicated region
    $region6: #{tpu_custom_call.1} parent=1 // pred_check
      _
    $region7: #{tpu_custom_call.1} parent=1 // pred_check_branch
      %31 = sbr.rel (0) target = $region9
    $region8: #{tpu_custom_call.1} parent=1 // pred_region
      %s33 = ssub.s32 2304, 2304
      %34 = vsyncadd [#allocation6], %s33
      %s35 = sshll.u32 [#allocation5], 4
      %s36 = int_to_ptr.vmem [resolvable:$true] %s35
      %41 = dma.hbm_to_vmem [thread:$0]  %s1, 2304, %s36, [#allocation6], 576, 576, 36
    $region9: #{tpu_custom_call.1} parent=1 // pred_fallthru
      _
    // Predicated region
    $region10: #{tpu_custom_call.1} parent=1 // pred_check
      _
    $region11: #{tpu_custom_call.1} parent=1 // pred_check_branch
      %43 = sbr.rel (0) target = $region13
    $region12: #{tpu_custom_call.1} parent=1 // pred_region
      %s45 = ssub.s32 144, 144
      %46 = vsyncadd [#allocation6], %s45
      %s48 = sshll.u32 [#allocation7], 4
      %s49 = int_to_ptr.vmem [resolvable:$true] %s48
      %51 = dma.hbm_to_vmem [thread:$0]  %s2, 144, %s49, [#allocation6]
    $region13: #{tpu_custom_call.1} parent=1 // pred_fallthru
      _
    // Predicated region
    $region14: #{tpu_custom_call.1} parent=1 // pred_check
      _
    $region15: #{tpu_custom_call.1} parent=1 // pred_check_branch
      %53 = sbr.rel (0) target = $region17
    $region16: #{tpu_custom_call.1} parent=1 // pred_region
      %s55 = ssub.s32 46080, 46080
      %56 = vsyncadd [#allocation9], %s55
      %s57 = sshll.u32 [#allocation8], 4
      %s58 = int_to_ptr.vmem [resolvable:$true] %s57
      %63 = dma.hbm_to_vmem [thread:$0]  %s3, 46080, %s58, [#allocation9], 320, 320, 20
    $region17: #{tpu_custom_call.1} parent=1 // pred_fallthru
      _
    // Predicated region
    $region18: #{tpu_custom_call.1} parent=1 // pred_check
      _
    $region19: #{tpu_custom_call.1} parent=1 // pred_check_branch
      %65 = sbr.rel (0) target = $region21
    $region20: #{tpu_custom_call.1} parent=1 // pred_region
      %s67 = ssub.s32 80, 80
      %68 = vsyncadd [#allocation9], %s67
      %s70 = sshll.u32 [#allocation10], 4
      %s71 = int_to_ptr.vmem [resolvable:$true] %s70
      %73 = dma.hbm_to_vmem [thread:$0]  %s4, 80, %s71, [#allocation9]
    $region21: #{tpu_custom_call.1} parent=1 // pred_fallthru
      _
    // Predicated region
    $region22: #{tpu_custom_call.1} parent=1 // pred_check
      _
    $region23: #{tpu_custom_call.1} parent=1 // pred_check_branch
      %75 = sbr.rel (0) target = $region25
    $region24: #{tpu_custom_call.1} parent=1 // pred_region
      %s77 = ssub.s32 5120, 5120
      %78 = vsyncadd [#allocation12], %s77
      %s79 = sshll.u32 [#allocation11], 4
      %s80 = int_to_ptr.vmem [resolvable:$true] %s79
      %85 = dma.hbm_to_vmem [thread:$0]  %s5, 5120, %s80, [#allocation12], 64, 64, 4
    $region25: #{tpu_custom_call.1} parent=1 // pred_fallthru
      _
    // Predicated region
    $region26: #{tpu_custom_call.1} parent=1 // pred_check
      _
    $region27: #{tpu_custom_call.1} parent=1 // pred_check_branch
      %87 = sbr.rel (0) target = $region29
    $region28: #{tpu_custom_call.1} parent=1 // pred_region
      %s89 = ssub.s32 16, 16
      %90 = vsyncadd [#allocation12], %s89
      %s92 = sshll.u32 [#allocation13], 4
      %s93 = int_to_ptr.vmem [resolvable:$true] %s92
      %95 = dma.hbm_to_vmem [thread:$0]  %s6, 16, %s93, [#allocation12]
    $region29: #{tpu_custom_call.1} parent=1 // pred_fallthru
      _
    // Predicated region
    $region30: #{tpu_custom_call.1} parent=1 // pred_check
      _
    $region31: #{tpu_custom_call.1} parent=1 // pred_check_branch
      %97 = sbr.rel (0) target = $region33
    $region32: #{tpu_custom_call.1} parent=1 // pred_region
      %s99 = ssub.s32 1024, 1024
      %100 = vsyncadd [#allocation15], %s99
      %s101 = sshll.u32 [#allocation14], 4
      %s102 = int_to_ptr.vmem [resolvable:$true] %s101
      %107 = dma.hbm_to_vmem [thread:$0]  %s7, 1024, %s102, [#allocation15], 64, 64, 4
    $region33: #{tpu_custom_call.1} parent=1 // pred_fallthru
      _
    // Predicated region
    $region34: #{tpu_custom_call.1} parent=1 // pred_check
      _
    $region35: #{tpu_custom_call.1} parent=1 // pred_check_branch
      %109 = sbr.rel (0) target = $region37
    $region36: #{tpu_custom_call.1} parent=1 // pred_region
      %s111 = ssub.s32 16, 16
      %112 = vsyncadd [#allocation15], %s111
      %s114 = sshll.u32 [#allocation16], 4
      %s115 = int_to_ptr.vmem [resolvable:$true] %s114
      %117 = dma.hbm_to_vmem [thread:$0]  %s8, 16, %s115, [#allocation15]
    $region37: #{tpu_custom_call.1} parent=1 // pred_fallthru
      _
    // Predicated region
    $region38: #{tpu_custom_call.1} parent=1 // pred_check
      _
    $region39: #{tpu_custom_call.1} parent=1 // pred_check_branch
      %119 = sbr.rel (0) target = $region41
    $region40: #{tpu_custom_call.1} parent=1 // pred_region
      %120 = dma.done [#allocation3], 128
    $region41: #{tpu_custom_call.1} parent=1 // pred_fallthru
      _
    // Predicated region
    $region42: #{tpu_custom_call.1} parent=1 // pred_check
      _
    $region43: #{tpu_custom_call.1} parent=1 // pred_check_branch
      %122 = sbr.rel (0) target = $region45
    $region44: #{tpu_custom_call.1} parent=1 // pred_region
      %123 = dma.done [#allocation6], 2304
    $region45: #{tpu_custom_call.1} parent=1 // pred_fallthru
      _
    // Predicated region
    $region46: #{tpu_custom_call.1} parent=1 // pred_check
      _
    $region47: #{tpu_custom_call.1} parent=1 // pred_check_branch
      %125 = sbr.rel (0) target = $region49
    $region48: #{tpu_custom_call.1} parent=1 // pred_region
      %126 = dma.done [#allocation6], 144
    $region49: #{tpu_custom_call.1} parent=1 // pred_fallthru
      _
    // Predicated region
    $region50: #{tpu_custom_call.1} parent=1 // pred_check
      _
    $region51: #{tpu_custom_call.1} parent=1 // pred_check_branch
      %128 = sbr.rel (0) target = $region53
    $region52: #{tpu_custom_call.1} parent=1 // pred_region
      %129 = dma.done [#allocation9], 46080
    $region53: #{tpu_custom_call.1} parent=1 // pred_fallthru
      _
    // Predicated region
    $region54: #{tpu_custom_call.1} parent=1 // pred_check
      _
    $region55: #{tpu_custom_call.1} parent=1 // pred_check_branch
      %131 = sbr.rel (0) target = $region57
    $region56: #{tpu_custom_call.1} parent=1 // pred_region
      %132 = dma.done [#allocation9], 80
    $region57: #{tpu_custom_call.1} parent=1 // pred_fallthru
      _
    // Predicated region
    $region58: #{tpu_custom_call.1} parent=1 // pred_check
      _
    $region59: #{tpu_custom_call.1} parent=1 // pred_check_branch
      %134 = sbr.rel (0) target = $region61
    $region60: #{tpu_custom_call.1} parent=1 // pred_region
      %135 = dma.done [#allocation12], 5120
    $region61: #{tpu_custom_call.1} parent=1 // pred_fallthru
      _
    // Predicated region
    $region62: #{tpu_custom_call.1} parent=1 // pred_check
      _
    $region63: #{tpu_custom_call.1} parent=1 // pred_check_branch
      %137 = sbr.rel (0) target = $region65
    $region64: #{tpu_custom_call.1} parent=1 // pred_region
      %138 = dma.done [#allocation12], 16
    $region65: #{tpu_custom_call.1} parent=1 // pred_fallthru
      _
    // Predicated region
    $region66: #{tpu_custom_call.1} parent=1 // pred_check
      _
    $region67: #{tpu_custom_call.1} parent=1 // pred_check_branch
      %140 = sbr.rel (0) target = $region69
    $region68: #{tpu_custom_call.1} parent=1 // pred_region
      %141 = dma.done [#allocation15], 1024
    $region69: #{tpu_custom_call.1} parent=1 // pred_fallthru
      _
    // Predicated region
    $region70: #{tpu_custom_call.1} parent=1 // pred_check
      _
    $region71: #{tpu_custom_call.1} parent=1 // pred_check_branch
      %143 = sbr.rel (0) target = $region73
    $region72: #{tpu_custom_call.1} parent=1 // pred_region
      %144 = dma.done [#allocation15], 16
    $region73: #{tpu_custom_call.1} parent=1 // pred_fallthru
      _
    %v146 = vld [vmem:[#allocation2] sm:$0xff]
    %v147 = vpack.c.bf16 %v146, %v146
    %v148 = vld [vmem:[#allocation5] sm:$0xff]
    %v149 = vld [vmem:[#allocation5 + $0x8] sm:$0xff]
    %v150 = vld [vmem:[#allocation5 + $0x10] sm:$0xff]
    %v151 = vld [vmem:[#allocation5 + $0x18] sm:$0xff]
    %v152 = vld [vmem:[#allocation5 + $0x20] sm:$0xf]
    %v153 = vld [vmem:[#allocation5 + $0x24] sm:$0xff]
    %v154 = vld [vmem:[#allocation5 + $0x2c] sm:$0xff]
    %v155 = vld [vmem:[#allocation5 + $0x34] sm:$0xff]
    %v156 = vld [vmem:[#allocation5 + $0x3c] sm:$0xff]
    %v157 = vld [vmem:[#allocation5 + $0x44] sm:$0xf]
    %v158 = vld [vmem:[#allocation5 + $0x48] sm:$0xff]
    %v159 = vld [vmem:[#allocation5 + $0x50] sm:$0xff]
    %v160 = vld [vmem:[#allocation5 + $0x58] sm:$0xff]
    %v161 = vld [vmem:[#allocation5 + $0x60] sm:$0xff]
    %v162 = vld [vmem:[#allocation5 + $0x68] sm:$0xf]
    %v163 = vld [vmem:[#allocation5 + $0x6c] sm:$0xff]
    %v164 = vld [vmem:[#allocation5 + $0x74] sm:$0xff]
    %v165 = vld [vmem:[#allocation5 + $0x7c] sm:$0xff]
    %v166 = vld [vmem:[#allocation5 + $0x84] sm:$0xff]
    %v167 = vld [vmem:[#allocation5 + $0x8c] sm:$0xf]
    %v168 = vld [vmem:[#allocation7] sm:$0xff]
    %v169 = vld [vmem:[#allocation7 + $0x8] sm:$0x1]
    %v172 = vlaneseq
    %v173 = vshrl.u32 %v172, 7
    %v174 = vsub.s32 0, %v173
    %v175 = vrot.slane %v168, %v174
    %v176 = vlaneseq
    %v177 = vshrl.u32 %v176, 7
    %v178 = vsub.s32 1, %v177
    %v179 = vrot.slane %v168, %v178
    %v180 = vlaneseq
    %v181 = vshrl.u32 %v180, 7
    %v182 = vsub.s32 2, %v181
    %v183 = vrot.slane %v168, %v182
    %v184 = vlaneseq
    %v185 = vshrl.u32 %v184, 7
    %v186 = vsub.s32 3, %v185
    %v187 = vrot.slane %v168, %v186
    %v188 = vlaneseq
    %v189 = vshrl.u32 %v188, 7
    %v190 = vsub.s32 4, %v189
    %v191 = vrot.slane %v168, %v190
    %v192 = vlaneseq
    %v193 = vshrl.u32 %v192, 7
    %v194 = vsub.s32 5, %v193
    %v195 = vrot.slane %v168, %v194
    %v196 = vlaneseq
    %v197 = vshrl.u32 %v196, 7
    %v198 = vsub.s32 6, %v197
    %v199 = vrot.slane %v168, %v198
    %v200 = vlaneseq
    %v201 = vshrl.u32 %v200, 7
    %v202 = vsub.s32 7, %v201
    %v203 = vrot.slane %v168, %v202
    %v204 = vlaneseq
    %v205 = vshrl.u32 %v204, 7
    %v206 = vsub.s32 0, %v205
    %v207 = vrot.slane %v169, %v206
    %v237 = vunpack.c.l.b16 %v148
    %v238 = vunpack.c.h.b16 %v148
    %v239 = vunpack.c.l.b16 %v149
    %v240 = vunpack.c.h.b16 %v149
    %v241 = vunpack.c.l.b16 %v150
    %v242 = vunpack.c.h.b16 %v150
    %v243 = vunpack.c.l.b16 %v151
    %v244 = vunpack.c.h.b16 %v151
    %v245 = vunpack.c.l.b16 %v152
    %v246 = vunpack.c.l.b16 %v153
    %v247 = vunpack.c.h.b16 %v153
    %v248 = vunpack.c.l.b16 %v154
    %v249 = vunpack.c.h.b16 %v154
    %v250 = vunpack.c.l.b16 %v155
    %v251 = vunpack.c.h.b16 %v155
    %v252 = vunpack.c.l.b16 %v156
    %v253 = vunpack.c.h.b16 %v156
    %v254 = vunpack.c.l.b16 %v157
    %v255 = vunpack.c.l.b16 %v158
    %v256 = vunpack.c.h.b16 %v158
    %v257 = vunpack.c.l.b16 %v159
    %v258 = vunpack.c.h.b16 %v159
    %v259 = vunpack.c.l.b16 %v160
    %v260 = vunpack.c.h.b16 %v160
    %v261 = vunpack.c.l.b16 %v161
    %v262 = vunpack.c.h.b16 %v161
    %v263 = vunpack.c.l.b16 %v162
    %v264 = vunpack.c.l.b16 %v163
    %v265 = vunpack.c.h.b16 %v163
    %v266 = vunpack.c.l.b16 %v164
    %v267 = vunpack.c.h.b16 %v164
    %v268 = vunpack.c.l.b16 %v165
    %v269 = vunpack.c.h.b16 %v165
    %v270 = vunpack.c.l.b16 %v166
    %v271 = vunpack.c.h.b16 %v166
    %v272 = vunpack.c.l.b16 %v167
    %v273 = vpack.c.b16 %v246, %v237
    %v274 = vpack.c.b16 %v247, %v238
    %v275 = vpack.c.b16 %v248, %v239
    %v276 = vpack.c.b16 %v249, %v240
    %v277 = vpack.c.b16 %v250, %v241
    %v278 = vpack.c.b16 %v251, %v242
    %v279 = vpack.c.b16 %v252, %v243
    %v280 = vpack.c.b16 %v253, %v244
    %v281 = vpack.c.b16 %v254, %v245
    %v282 = vpack.c.b16 %v264, %v255
    %v283 = vpack.c.b16 %v265, %v256
    %v284 = vpack.c.b16 %v266, %v257
    %v285 = vpack.c.b16 %v267, %v258
    %v286 = vpack.c.b16 %v268, %v259
    %v287 = vpack.c.b16 %v269, %v260
    %v288 = vpack.c.b16 %v270, %v261
    %v289 = vpack.c.b16 %v271, %v262
    %v290 = vpack.c.b16 %v272, %v263
    %vm309 = vcmask 261120
    %v311 = vsel %vm309, %v147, 0
    %313 = vmatprep.subr.bf16.mxu0 %v274
    %314 = vmatpush1.bf16.msra.mxu0 %v273
    %315 = vmatprep.subr.bf16.mxu0 %v283
    %316 = vmatpush1.bf16.msra.mxu0 %v282
    %317 = vmatprep.subr.bf16.mxu0 0
    %318 = vmatpush1.bf16.msra.mxu0 0
    %319 = vmatprep.subr.bf16.mxu0 0
    %320 = vmatpush1.bf16.msra.mxu0 0
    %321 = vmatprep.subr.bf16.mxu0 0
    %322 = vmatpush1.bf16.msra.mxu0 0
    %323 = vmatprep.subr.bf16.mxu0 0
    %324 = vmatpush1.bf16.msra.mxu0 0
    %325 = vmatprep.subr.bf16.mxu0 0
    %326 = vmatpush1.bf16.msra.mxu0 0
    %327 = vmatprep.subr.bf16.mxu0 0
    %328 = vmatpush1.bf16.msra.mxu0 0
    %329 = vmatprep.subr.bf16.mxu0 0
    %330 = vmatpush1.bf16.msra.mxu0 0
    %331 = vmatprep.subr.bf16.mxu0 0
    %332 = vmatpush1.bf16.msra.mxu0 0
    %333 = vmatprep.subr.bf16.mxu0 0
    %334 = vmatpush1.bf16.msra.mxu0 0
    %335 = vmatprep.subr.bf16.mxu0 0
    %336 = vmatpush1.bf16.msra.mxu0 0
    %337 = vmatprep.subr.bf16.mxu0 0
    %338 = vmatpush1.bf16.msra.mxu0 0
    %339 = vmatprep.subr.bf16.mxu0 0
    %340 = vmatpush1.bf16.msra.mxu0 0
    %341 = vmatprep.subr.bf16.mxu0 0
    %342 = vmatpush1.bf16.msra.mxu0 0
    %343 = vmatprep.subr.bf16.mxu0 0
    %344 = vmatpush1.bf16.msra.mxu0 0
    %345 = vmatprep.mubr.bf16.mxu0 0
    %346 = vmatmul.mubr.bf16.gmra.mrb[0].mxu0 %v311
    %v347 = vpop.f32.mrb[0].mxu0
    %v348 = vadd.f32 %v175, %v347
    %v349 = vpop.f32.mrb[0].mxu0
    %v350 = vadd.f32 %v179, %v349
    %v351 = vpop.f32.mrb[0].mxu0
    %v352 = vpop.f32.mrb[0].mxu0
    %353 = vdwg.mxu0
    %354 = vmatprep.subr.bf16.mxu0 %v276
    %355 = vmatpush1.bf16.msra.mxu0 %v275
    %356 = vmatprep.subr.bf16.mxu0 %v285
    %357 = vmatpush1.bf16.msra.mxu0 %v284
    %358 = vmatprep.subr.bf16.mxu0 0
    %359 = vmatpush1.bf16.msra.mxu0 0
    %360 = vmatprep.subr.bf16.mxu0 0
    %361 = vmatpush1.bf16.msra.mxu0 0
    %362 = vmatprep.subr.bf16.mxu0 0
    %363 = vmatpush1.bf16.msra.mxu0 0
    %364 = vmatprep.subr.bf16.mxu0 0
    %365 = vmatpush1.bf16.msra.mxu0 0
    %366 = vmatprep.subr.bf16.mxu0 0
    %367 = vmatpush1.bf16.msra.mxu0 0
    %368 = vmatprep.subr.bf16.mxu0 0
    %369 = vmatpush1.bf16.msra.mxu0 0
    %370 = vmatprep.subr.bf16.mxu0 0
    %371 = vmatpush1.bf16.msra.mxu0 0
    %372 = vmatprep.subr.bf16.mxu0 0
    %373 = vmatpush1.bf16.msra.mxu0 0
    %374 = vmatprep.subr.bf16.mxu0 0
    %375 = vmatpush1.bf16.msra.mxu0 0
    %376 = vmatprep.subr.bf16.mxu0 0
    %377 = vmatpush1.bf16.msra.mxu0 0
    %378 = vmatprep.subr.bf16.mxu0 0
    %379 = vmatpush1.bf16.msra.mxu0 0
    %380 = vmatprep.subr.bf16.mxu0 0
    %381 = vmatpush1.bf16.msra.mxu0 0
    %382 = vmatprep.subr.bf16.mxu0 0
    %383 = vmatpush1.bf16.msra.mxu0 0
    %384 = vmatprep.subr.bf16.mxu0 0
    %385 = vmatpush1.bf16.msra.mxu0 0
    %386 = vmatprep.mubr.bf16.mxu0 0
    %387 = vmatmul.mubr.bf16.gmra.mrb[0].mxu0 %v311
    %v388 = vpop.f32.mrb[0].mxu0
    %v389 = vadd.f32 %v183, %v388
    %v390 = vpop.f32.mrb[0].mxu0
    %v391 = vadd.f32 %v187, %v390
    %v392 = vpop.f32.mrb[0].mxu0
    %v393 = vpop.f32.mrb[0].mxu0
    %394 = vdwg.mxu0
    %395 = vmatprep.subr.bf16.mxu0 %v278
    %396 = vmatpush1.bf16.msra.mxu0 %v277
    %397 = vmatprep.subr.bf16.mxu0 %v287
    %398 = vmatpush1.bf16.msra.mxu0 %v286
    %399 = vmatprep.subr.bf16.mxu0 0
    %400 = vmatpush1.bf16.msra.mxu0 0
    %401 = vmatprep.subr.bf16.mxu0 0
    %402 = vmatpush1.bf16.msra.mxu0 0
    %403 = vmatprep.subr.bf16.mxu0 0
    %404 = vmatpush1.bf16.msra.mxu0 0
    %405 = vmatprep.subr.bf16.mxu0 0
    %406 = vmatpush1.bf16.msra.mxu0 0
    %407 = vmatprep.subr.bf16.mxu0 0
    %408 = vmatpush1.bf16.msra.mxu0 0
    %409 = vmatprep.subr.bf16.mxu0 0
    %410 = vmatpush1.bf16.msra.mxu0 0
    %411 = vmatprep.subr.bf16.mxu0 0
    %412 = vmatpush1.bf16.msra.mxu0 0
    %413 = vmatprep.subr.bf16.mxu0 0
    %414 = vmatpush1.bf16.msra.mxu0 0
    %415 = vmatprep.subr.bf16.mxu0 0
    %416 = vmatpush1.bf16.msra.mxu0 0
    %417 = vmatprep.subr.bf16.mxu0 0
    %418 = vmatpush1.bf16.msra.mxu0 0
    %419 = vmatprep.subr.bf16.mxu0 0
    %420 = vmatpush1.bf16.msra.mxu0 0
    %421 = vmatprep.subr.bf16.mxu0 0
    %422 = vmatpush1.bf16.msra.mxu0 0
    %423 = vmatprep.subr.bf16.mxu0 0
    %424 = vmatpush1.bf16.msra.mxu0 0
    %425 = vmatprep.subr.bf16.mxu0 0
    %426 = vmatpush1.bf16.msra.mxu0 0
    %427 = vmatprep.mubr.bf16.mxu0 0
    %428 = vmatmul.mubr.bf16.gmra.mrb[0].mxu0 %v311
    %v429 = vpop.f32.mrb[0].mxu0
    %v430 = vadd.f32 %v191, %v429
    %v431 = vpop.f32.mrb[0].mxu0
    %v432 = vadd.f32 %v195, %v431
    %v433 = vpop.f32.mrb[0].mxu0
    %v434 = vpop.f32.mrb[0].mxu0
    %435 = vdwg.mxu0
    %436 = vmatprep.subr.bf16.mxu0 %v280
    %437 = vmatpush1.bf16.msra.mxu0 %v279
    %438 = vmatprep.subr.bf16.mxu0 %v289
    %439 = vmatpush1.bf16.msra.mxu0 %v288
    %440 = vmatprep.subr.bf16.mxu0 0
    %441 = vmatpush1.bf16.msra.mxu0 0
    %442 = vmatprep.subr.bf16.mxu0 0
    %443 = vmatpush1.bf16.msra.mxu0 0
    %444 = vmatprep.subr.bf16.mxu0 0
    %445 = vmatpush1.bf16.msra.mxu0 0
    %446 = vmatprep.subr.bf16.mxu0 0
    %447 = vmatpush1.bf16.msra.mxu0 0
    %448 = vmatprep.subr.bf16.mxu0 0
    %449 = vmatpush1.bf16.msra.mxu0 0
    %450 = vmatprep.subr.bf16.mxu0 0
    %451 = vmatpush1.bf16.msra.mxu0 0
    %452 = vmatprep.subr.bf16.mxu0 0
    %453 = vmatpush1.bf16.msra.mxu0 0
    %454 = vmatprep.subr.bf16.mxu0 0
    %455 = vmatpush1.bf16.msra.mxu0 0
    %456 = vmatprep.subr.bf16.mxu0 0
    %457 = vmatpush1.bf16.msra.mxu0 0
    %458 = vmatprep.subr.bf16.mxu0 0
    %459 = vmatpush1.bf16.msra.mxu0 0
    %460 = vmatprep.subr.bf16.mxu0 0
    %461 = vmatpush1.bf16.msra.mxu0 0
    %462 = vmatprep.subr.bf16.mxu0 0
    %463 = vmatpush1.bf16.msra.mxu0 0
    %464 = vmatprep.subr.bf16.mxu0 0
    %465 = vmatpush1.bf16.msra.mxu0 0
    %466 = vmatprep.subr.bf16.mxu0 0
    %467 = vmatpush1.bf16.msra.mxu0 0
    %468 = vmatprep.mubr.bf16.mxu0 0
    %469 = vmatmul.mubr.bf16.gmra.mrb[0].mxu0 %v311
    %v470 = vpop.f32.mrb[0].mxu0
    %v471 = vadd.f32 %v199, %v470
    %v472 = vpop.f32.mrb[0].mxu0
    %v473 = vadd.f32 %v203, %v472
    %v474 = vpop.f32.mrb[0].mxu0
    %v475 = vpop.f32.mrb[0].mxu0
    %476 = vdwg.mxu0
    %477 = vmatprep.subr.bf16.mxu0 0
    %478 = vmatpush1.bf16.msra.mxu0 %v281
    %479 = vmatprep.subr.bf16.mxu0 0
    %480 = vmatpush1.bf16.msra.mxu0 %v290
    %481 = vmatprep.subr.bf16.mxu0 0
    %482 = vmatpush1.bf16.msra.mxu0 0
    %483 = vmatprep.subr.bf16.mxu0 0
    %484 = vmatpush1.bf16.msra.mxu0 0
    %485 = vmatprep.subr.bf16.mxu0 0
    %486 = vmatpush1.bf16.msra.mxu0 0
    %487 = vmatprep.subr.bf16.mxu0 0
    %488 = vmatpush1.bf16.msra.mxu0 0
    %489 = vmatprep.subr.bf16.mxu0 0
    %490 = vmatpush1.bf16.msra.mxu0 0
    %491 = vmatprep.subr.bf16.mxu0 0
    %492 = vmatpush1.bf16.msra.mxu0 0
    %493 = vmatprep.subr.bf16.mxu0 0
    %494 = vmatpush1.bf16.msra.mxu0 0
    %495 = vmatprep.subr.bf16.mxu0 0
    %496 = vmatpush1.bf16.msra.mxu0 0
    %497 = vmatprep.subr.bf16.mxu0 0
    %498 = vmatpush1.bf16.msra.mxu0 0
    %499 = vmatprep.subr.bf16.mxu0 0
    %500 = vmatpush1.bf16.msra.mxu0 0
    %501 = vmatprep.subr.bf16.mxu0 0
    %502 = vmatpush1.bf16.msra.mxu0 0
    %503 = vmatprep.subr.bf16.mxu0 0
    %504 = vmatpush1.bf16.msra.mxu0 0
    %505 = vmatprep.subr.bf16.mxu0 0
    %506 = vmatpush1.bf16.msra.mxu0 0
    %507 = vmatprep.subr.bf16.mxu0 0
    %508 = vmatpush1.bf16.msra.mxu0 0
    %509 = vmatprep.mubr.bf16.mxu0 0
    %510 = vmatmul.mubr.bf16.gmra.mrb[0].mxu0 %v311
    %v511 = vpop.f32.mrb[0].mxu0
    %v512 = vadd.f32 %v207, %v511
    %v513 = vpop.f32.mrb[0].mxu0
    %v514 = vpop.f32.mrb[0].mxu0
    %v515 = vpop.f32.mrb[0].mxu0
    %516 = vdwg.mxu0
    %v517 = vmax.f32 %v348, 0.0
    %v518 = vmax.f32 %v350, 0.0
    %v519 = vmax.f32 %v389, 0.0
    %v520 = vmax.f32 %v391, 0.0
    %v521 = vmax.f32 %v430, 0.0
    %v522 = vmax.f32 %v432, 0.0
    %v523 = vmax.f32 %v471, 0.0
    %v524 = vmax.f32 %v473, 0.0
    %v525 = vmax.f32 %v512, 0.0
    %v526 = vpack.c.bf16 %v517, %v517
    %v527 = vpack.c.bf16 %v518, %v518
    %v528 = vpack.c.bf16 %v519, %v519
    %v529 = vpack.c.bf16 %v520, %v520
    %v530 = vpack.c.bf16 %v521, %v521
    %v531 = vpack.c.bf16 %v522, %v522
    %v532 = vpack.c.bf16 %v523, %v523
    %v533 = vpack.c.bf16 %v524, %v524
    %v534 = vpack.c.bf16 %v525, %v525
    %v535 = vld [vmem:[#allocation8] sm:$0xff]
    %v536 = vld [vmem:[#allocation8 + $0x8] sm:$0xff]
    %v537 = vld [vmem:[#allocation8 + $0x10] sm:$0xf]
    %v538 = vld [vmem:[#allocation8 + $0x14] sm:$0xff]
    %v539 = vld [vmem:[#allocation8 + $0x1c] sm:$0xff]
    %v540 = vld [vmem:[#allocation8 + $0x24] sm:$0xf]
    %v541 = vld [vmem:[#allocation8 + $0x28] sm:$0xff]
    %v542 = vld [vmem:[#allocation8 + $0x30] sm:$0xff]
    %v543 = vld [vmem:[#allocation8 + $0x38] sm:$0xf]
    %v544 = vld [vmem:[#allocation8 + $0x3c] sm:$0xff]
    %v545 = vld [vmem:[#allocation8 + $0x44] sm:$0xff]
    %v546 = vld [vmem:[#allocation8 + $0x4c] sm:$0xf]
    %v547 = vld [vmem:[#allocation8 + $0x50] sm:$0xff]
    %v548 = vld [vmem:[#allocation8 + $0x58] sm:$0xff]
    %v549 = vld [vmem:[#allocation8 + $0x60] sm:$0xf]
    %v550 = vld [vmem:[#allocation8 + $0x64] sm:$0xff]
    %v551 = vld [vmem:[#allocation8 + $0x6c] sm:$0xff]
    %v552 = vld [vmem:[#allocation8 + $0x74] sm:$0xf]
    %v553 = vld [vmem:[#allocation8 + $0x78] sm:$0xff]
    %v554 = vld [vmem:[#allocation8 + $0x80] sm:$0xff]
    %v555 = vld [vmem:[#allocation8 + $0x88] sm:$0xf]
    %v556 = vld [vmem:[#allocation8 + $0x8c] sm:$0xff]
    %v557 = vld [vmem:[#allocation8 + $0x94] sm:$0xff]
    %v558 = vld [vmem:[#allocation8 + $0x9c] sm:$0xf]
    %v559 = vld [vmem:[#allocation8 + $0xa0] sm:$0xff]
    %v560 = vld [vmem:[#allocation8 + $0xa8] sm:$0xff]
    %v561 = vld [vmem:[#allocation8 + $0xb0] sm:$0xf]
    %v562 = vld [vmem:[#allocation8 + $0xb4] sm:$0xff]
    %v563 = vld [vmem:[#allocation8 + $0xbc] sm:$0xff]
    %v564 = vld [vmem:[#allocation8 + $0xc4] sm:$0xf]
    %v565 = vld [vmem:[#allocation8 + $0xc8] sm:$0xff]
    %v566 = vld [vmem:[#allocation8 + $0xd0] sm:$0xff]
    %v567 = vld [vmem:[#allocation8 + $0xd8] sm:$0xf]
    %v568 = vld [vmem:[#allocation8 + $0xdc] sm:$0xff]
    %v569 = vld [vmem:[#allocation8 + $0xe4] sm:$0xff]
    %v570 = vld [vmem:[#allocation8 + $0xec] sm:$0xf]
    %v571 = vld [vmem:[#allocation8 + $0xf0] sm:$0xff]
    %v572 = vld [vmem:[#allocation8 + $0xf8] sm:$0xff]
    %v573 = vld [vmem:[#allocation8 + $0x100] sm:$0xf]
    %v574 = vld [vmem:[#allocation8 + $0x104] sm:$0xff]
    %v575 = vld [vmem:[#allocation8 + $0x10c] sm:$0xff]
    %v576 = vld [vmem:[#allocation8 + $0x114] sm:$0xf]
    %v577 = vld [vmem:[#allocation8 + $0x118] sm:$0xff]
    %v578 = vld [vmem:[#allocation8 + $0x120] sm:$0xff]
    %v579 = vld [vmem:[#allocation8 + $0x128] sm:$0xf]
    %v580 = vld [vmem:[#allocation8 + $0x12c] sm:$0xff]
    %v581 = vld [vmem:[#allocation8 + $0x134] sm:$0xff]
    %v582 = vld [vmem:[#allocation8 + $0x13c] sm:$0xf]
    %v583 = vld [vmem:[#allocation8 + $0x140] sm:$0xff]
    %v584 = vld [vmem:[#allocation8 + $0x148] sm:$0xff]
    %v585 = vld [vmem:[#allocation8 + $0x150] sm:$0xf]
    %v586 = vld [vmem:[#allocation8 + $0x154] sm:$0xff]
    %v587 = vld [vmem:[#allocation8 + $0x15c] sm:$0xff]
    %v588 = vld [vmem:[#allocation8 + $0x164] sm:$0xf]
    %v589 = vld [vmem:[#allocation8 + $0x168] sm:$0xff]
    %v590 = vld [vmem:[#allocation8 + $0x170] sm:$0xff]
    %v591 = vld [vmem:[#allocation8 + $0x178] sm:$0xf]
    %v592 = vld [vmem:[#allocation8 + $0x17c] sm:$0xff]
    %v593 = vld [vmem:[#allocation8 + $0x184] sm:$0xff]
    %v594 = vld [vmem:[#allocation8 + $0x18c] sm:$0xf]
    %v595 = vld [vmem:[#allocation8 + $0x190] sm:$0xff]
    %v596 = vld [vmem:[#allocation8 + $0x198] sm:$0xff]
    %v597 = vld [vmem:[#allocation8 + $0x1a0] sm:$0xf]
    %v598 = vld [vmem:[#allocation8 + $0x1a4] sm:$0xff]
    %v599 = vld [vmem:[#allocation8 + $0x1ac] sm:$0xff]
    %v600 = vld [vmem:[#allocation8 + $0x1b4] sm:$0xf]
    %v601 = vld [vmem:[#allocation8 + $0x1b8] sm:$0xff]
    %v602 = vld [vmem:[#allocation8 + $0x1c0] sm:$0xff]
    %v603 = vld [vmem:[#allocation8 + $0x1c8] sm:$0xf]
    %v604 = vld [vmem:[#allocation8 + $0x1cc] sm:$0xff]
    %v605 = vld [vmem:[#allocation8 + $0x1d4] sm:$0xff]
    %v606 = vld [vmem:[#allocation8 + $0x1dc] sm:$0xf]
    %v607 = vld [vmem:[#allocation8 + $0x1e0] sm:$0xff]
    %v608 = vld [vmem:[#allocation8 + $0x1e8] sm:$0xff]
    %v609 = vld [vmem:[#allocation8 + $0x1f0] sm:$0xf]
    %v610 = vld [vmem:[#allocation8 + $0x1f4] sm:$0xff]
    %v611 = vld [vmem:[#allocation8 + $0x1fc] sm:$0xff]
    %v612 = vld [vmem:[#allocation8 + $0x204] sm:$0xf]
    %v613 = vld [vmem:[#allocation8 + $0x208] sm:$0xff]
    %v614 = vld [vmem:[#allocation8 + $0x210] sm:$0xff]
    %v615 = vld [vmem:[#allocation8 + $0x218] sm:$0xf]
    %v616 = vld [vmem:[#allocation8 + $0x21c] sm:$0xff]
    %v617 = vld [vmem:[#allocation8 + $0x224] sm:$0xff]
    %v618 = vld [vmem:[#allocation8 + $0x22c] sm:$0xf]
    %v619 = vld [vmem:[#allocation8 + $0x230] sm:$0xff]
    %v620 = vld [vmem:[#allocation8 + $0x238] sm:$0xff]
    %v621 = vld [vmem:[#allocation8 + $0x240] sm:$0xf]
    %v622 = vld [vmem:[#allocation8 + $0x244] sm:$0xff]
    %v623 = vld [vmem:[#allocation8 + $0x24c] sm:$0xff]
    %v624 = vld [vmem:[#allocation8 + $0x254] sm:$0xf]
    %v625 = vld [vmem:[#allocation8 + $0x258] sm:$0xff]
    %v626 = vld [vmem:[#allocation8 + $0x260] sm:$0xff]
    %v627 = vld [vmem:[#allocation8 + $0x268] sm:$0xf]
    %v628 = vld [vmem:[#allocation8 + $0x26c] sm:$0xff]
    %v629 = vld [vmem:[#allocation8 + $0x274] sm:$0xff]
    %v630 = vld [vmem:[#allocation8 + $0x27c] sm:$0xf]
    %v631 = vld [vmem:[#allocation8 + $0x280] sm:$0xff]
    %v632 = vld [vmem:[#allocation8 + $0x288] sm:$0xff]
    %v633 = vld [vmem:[#allocation8 + $0x290] sm:$0xf]
    %v634 = vld [vmem:[#allocation8 + $0x294] sm:$0xff]
    %v635 = vld [vmem:[#allocation8 + $0x29c] sm:$0xff]
    %v636 = vld [vmem:[#allocation8 + $0x2a4] sm:$0xf]
    %v637 = vld [vmem:[#allocation8 + $0x2a8] sm:$0xff]
    %v638 = vld [vmem:[#allocation8 + $0x2b0] sm:$0xff]
    %v639 = vld [vmem:[#allocation8 + $0x2b8] sm:$0xf]
    %v640 = vld [vmem:[#allocation8 + $0x2bc] sm:$0xff]
    %v641 = vld [vmem:[#allocation8 + $0x2c4] sm:$0xff]
    %v642 = vld [vmem:[#allocation8 + $0x2cc] sm:$0xf]
    %v643 = vld [vmem:[#allocation8 + $0x2d0] sm:$0xff]
    %v644 = vld [vmem:[#allocation8 + $0x2d8] sm:$0xff]
    %v645 = vld [vmem:[#allocation8 + $0x2e0] sm:$0xf]
    %v646 = vld [vmem:[#allocation8 + $0x2e4] sm:$0xff]
    %v647 = vld [vmem:[#allocation8 + $0x2ec] sm:$0xff]
    %v648 = vld [vmem:[#allocation8 + $0x2f4] sm:$0xf]
    %v649 = vld [vmem:[#allocation8 + $0x2f8] sm:$0xff]
    %v650 = vld [vmem:[#allocation8 + $0x300] sm:$0xff]
    %v651 = vld [vmem:[#allocation8 + $0x308] sm:$0xf]
    %v652 = vld [vmem:[#allocation8 + $0x30c] sm:$0xff]
    %v653 = vld [vmem:[#allocation8 + $0x314] sm:$0xff]
    %v654 = vld [vmem:[#allocation8 + $0x31c] sm:$0xf]
    %v655 = vld [vmem:[#allocation8 + $0x320] sm:$0xff]
    %v656 = vld [vmem:[#allocation8 + $0x328] sm:$0xff]
    %v657 = vld [vmem:[#allocation8 + $0x330] sm:$0xf]
    %v658 = vld [vmem:[#allocation8 + $0x334] sm:$0xff]
    %v659 = vld [vmem:[#allocation8 + $0x33c] sm:$0xff]
    %v660 = vld [vmem:[#allocation8 + $0x344] sm:$0xf]
    %v661 = vld [vmem:[#allocation8 + $0x348] sm:$0xff]
    %v662 = vld [vmem:[#allocation8 + $0x350] sm:$0xff]
    %v663 = vld [vmem:[#allocation8 + $0x358] sm:$0xf]
    %v664 = vld [vmem:[#allocation8 + $0x35c] sm:$0xff]
    %v665 = vld [vmem:[#allocation8 + $0x364] sm:$0xff]
    %v666 = vld [vmem:[#allocation8 + $0x36c] sm:$0xf]
    %v667 = vld [vmem:[#allocation8 + $0x370] sm:$0xff]
    %v668 = vld [vmem:[#allocation8 + $0x378] sm:$0xff]
    %v669 = vld [vmem:[#allocation8 + $0x380] sm:$0xf]
    %v670 = vld [vmem:[#allocation8 + $0x384] sm:$0xff]
    %v671 = vld [vmem:[#allocation8 + $0x38c] sm:$0xff]
    %v672 = vld [vmem:[#allocation8 + $0x394] sm:$0xf]
    %v673 = vld [vmem:[#allocation8 + $0x398] sm:$0xff]
    %v674 = vld [vmem:[#allocation8 + $0x3a0] sm:$0xff]
    %v675 = vld [vmem:[#allocation8 + $0x3a8] sm:$0xf]
    %v676 = vld [vmem:[#allocation8 + $0x3ac] sm:$0xff]
    %v677 = vld [vmem:[#allocation8 + $0x3b4] sm:$0xff]
    %v678 = vld [vmem:[#allocation8 + $0x3bc] sm:$0xf]
    %v679 = vld [vmem:[#allocation8 + $0x3c0] sm:$0xff]
    %v680 = vld [vmem:[#allocation8 + $0x3c8] sm:$0xff]
    %v681 = vld [vmem:[#allocation8 + $0x3d0] sm:$0xf]
    %v682 = vld [vmem:[#allocation8 + $0x3d4] sm:$0xff]
    %v683 = vld [vmem:[#allocation8 + $0x3dc] sm:$0xff]
    %v684 = vld [vmem:[#allocation8 + $0x3e4] sm:$0xf]
    %v685 = vld [vmem:[#allocation8 + $0x3e8] sm:$0xff]
    %v686 = vld [vmem:[#allocation8 + $0x3f0] sm:$0xff]
    %v687 = vld [vmem:[#allocation8 + $0x3f8] sm:$0xf]
    %v688 = vld [vmem:[#allocation8 + $0x3fc] sm:$0xff]
    %v689 = vld [vmem:[#allocation8 + $0x404] sm:$0xff]
    %v690 = vld [vmem:[#allocation8 + $0x40c] sm:$0xf]
    %v691 = vld [vmem:[#allocation8 + $0x410] sm:$0xff]
    %v692 = vld [vmem:[#allocation8 + $0x418] sm:$0xff]
    %v693 = vld [vmem:[#allocation8 + $0x420] sm:$0xf]
    %v694 = vld [vmem:[#allocation8 + $0x424] sm:$0xff]
    %v695 = vld [vmem:[#allocation8 + $0x42c] sm:$0xff]
    %v696 = vld [vmem:[#allocation8 + $0x434] sm:$0xf]
    %v697 = vld [vmem:[#allocation8 + $0x438] sm:$0xff]
    %v698 = vld [vmem:[#allocation8 + $0x440] sm:$0xff]
    %v699 = vld [vmem:[#allocation8 + $0x448] sm:$0xf]
    %v700 = vld [vmem:[#allocation8 + $0x44c] sm:$0xff]
    %v701 = vld [vmem:[#allocation8 + $0x454] sm:$0xff]
    %v702 = vld [vmem:[#allocation8 + $0x45c] sm:$0xf]
    %v703 = vld [vmem:[#allocation8 + $0x460] sm:$0xff]
    %v704 = vld [vmem:[#allocation8 + $0x468] sm:$0xff]
    %v705 = vld [vmem:[#allocation8 + $0x470] sm:$0xf]
    %v706 = vld [vmem:[#allocation8 + $0x474] sm:$0xff]
    %v707 = vld [vmem:[#allocation8 + $0x47c] sm:$0xff]
    %v708 = vld [vmem:[#allocation8 + $0x484] sm:$0xf]
    %v709 = vld [vmem:[#allocation8 + $0x488] sm:$0xff]
    %v710 = vld [vmem:[#allocation8 + $0x490] sm:$0xff]
    %v711 = vld [vmem:[#allocation8 + $0x498] sm:$0xf]
    %v712 = vld [vmem:[#allocation8 + $0x49c] sm:$0xff]
    %v713 = vld [vmem:[#allocation8 + $0x4a4] sm:$0xff]
    %v714 = vld [vmem:[#allocation8 + $0x4ac] sm:$0xf]
    %v715 = vld [vmem:[#allocation8 + $0x4b0] sm:$0xff]
    %v716 = vld [vmem:[#allocation8 + $0x4b8] sm:$0xff]
    %v717 = vld [vmem:[#allocation8 + $0x4c0] sm:$0xf]
    %v718 = vld [vmem:[#allocation8 + $0x4c4] sm:$0xff]
    %v719 = vld [vmem:[#allocation8 + $0x4cc] sm:$0xff]
    %v720 = vld [vmem:[#allocation8 + $0x4d4] sm:$0xf]
    %v721 = vld [vmem:[#allocation8 + $0x4d8] sm:$0xff]
    %v722 = vld [vmem:[#allocation8 + $0x4e0] sm:$0xff]
    %v723 = vld [vmem:[#allocation8 + $0x4e8] sm:$0xf]
    %v724 = vld [vmem:[#allocation8 + $0x4ec] sm:$0xff]
    %v725 = vld [vmem:[#allocation8 + $0x4f4] sm:$0xff]
    %v726 = vld [vmem:[#allocation8 + $0x4fc] sm:$0xf]
    %v727 = vld [vmem:[#allocation8 + $0x500] sm:$0xff]
    %v728 = vld [vmem:[#allocation8 + $0x508] sm:$0xff]
    %v729 = vld [vmem:[#allocation8 + $0x510] sm:$0xf]
    %v730 = vld [vmem:[#allocation8 + $0x514] sm:$0xff]
    %v731 = vld [vmem:[#allocation8 + $0x51c] sm:$0xff]
    %v732 = vld [vmem:[#allocation8 + $0x524] sm:$0xf]
    %v733 = vld [vmem:[#allocation8 + $0x528] sm:$0xff]
    %v734 = vld [vmem:[#allocation8 + $0x530] sm:$0xff]
    %v735 = vld [vmem:[#allocation8 + $0x538] sm:$0xf]
    %v736 = vld [vmem:[#allocation8 + $0x53c] sm:$0xff]
    %v737 = vld [vmem:[#allocation8 + $0x544] sm:$0xff]
    %v738 = vld [vmem:[#allocation8 + $0x54c] sm:$0xf]
    %v739 = vld [vmem:[#allocation8 + $0x550] sm:$0xff]
    %v740 = vld [vmem:[#allocation8 + $0x558] sm:$0xff]
    %v741 = vld [vmem:[#allocation8 + $0x560] sm:$0xf]
    %v742 = vld [vmem:[#allocation8 + $0x564] sm:$0xff]
    %v743 = vld [vmem:[#allocation8 + $0x56c] sm:$0xff]
    %v744 = vld [vmem:[#allocation8 + $0x574] sm:$0xf]
    %v745 = vld [vmem:[#allocation8 + $0x578] sm:$0xff]
    %v746 = vld [vmem:[#allocation8 + $0x580] sm:$0xff]
    %v747 = vld [vmem:[#allocation8 + $0x588] sm:$0xf]
    %v748 = vld [vmem:[#allocation8 + $0x58c] sm:$0xff]
    %v749 = vld [vmem:[#allocation8 + $0x594] sm:$0xff]
    %v750 = vld [vmem:[#allocation8 + $0x59c] sm:$0xf]
    %v751 = vld [vmem:[#allocation8 + $0x5a0] sm:$0xff]
    %v752 = vld [vmem:[#allocation8 + $0x5a8] sm:$0xff]
    %v753 = vld [vmem:[#allocation8 + $0x5b0] sm:$0xf]
    %v754 = vld [vmem:[#allocation8 + $0x5b4] sm:$0xff]
    %v755 = vld [vmem:[#allocation8 + $0x5bc] sm:$0xff]
    %v756 = vld [vmem:[#allocation8 + $0x5c4] sm:$0xf]
    %v757 = vld [vmem:[#allocation8 + $0x5c8] sm:$0xff]
    %v758 = vld [vmem:[#allocation8 + $0x5d0] sm:$0xff]
    %v759 = vld [vmem:[#allocation8 + $0x5d8] sm:$0xf]
    %v760 = vld [vmem:[#allocation8 + $0x5dc] sm:$0xff]
    %v761 = vld [vmem:[#allocation8 + $0x5e4] sm:$0xff]
    %v762 = vld [vmem:[#allocation8 + $0x5ec] sm:$0xf]
    %v763 = vld [vmem:[#allocation8 + $0x5f0] sm:$0xff]
    %v764 = vld [vmem:[#allocation8 + $0x5f8] sm:$0xff]
    %v765 = vld [vmem:[#allocation8 + $0x600] sm:$0xf]
    %v766 = vld [vmem:[#allocation8 + $0x604] sm:$0xff]
    %v767 = vld [vmem:[#allocation8 + $0x60c] sm:$0xff]
    %v768 = vld [vmem:[#allocation8 + $0x614] sm:$0xf]
    %v769 = vld [vmem:[#allocation8 + $0x618] sm:$0xff]
    %v770 = vld [vmem:[#allocation8 + $0x620] sm:$0xff]
    %v771 = vld [vmem:[#allocation8 + $0x628] sm:$0xf]
    %v772 = vld [vmem:[#allocation8 + $0x62c] sm:$0xff]
    %v773 = vld [vmem:[#allocation8 + $0x634] sm:$0xff]
    %v774 = vld [vmem:[#allocation8 + $0x63c] sm:$0xf]
    %v775 = vld [vmem:[#allocation8 + $0x640] sm:$0xff]
    %v776 = vld [vmem:[#allocation8 + $0x648] sm:$0xff]
    %v777 = vld [vmem:[#allocation8 + $0x650] sm:$0xf]
    %v778 = vld [vmem:[#allocation8 + $0x654] sm:$0xff]
    %v779 = vld [vmem:[#allocation8 + $0x65c] sm:$0xff]
    %v780 = vld [vmem:[#allocation8 + $0x664] sm:$0xf]
    %v781 = vld [vmem:[#allocation8 + $0x668] sm:$0xff]
    %v782 = vld [vmem:[#allocation8 + $0x670] sm:$0xff]
    %v783 = vld [vmem:[#allocation8 + $0x678] sm:$0xf]
    %v784 = vld [vmem:[#allocation8 + $0x67c] sm:$0xff]
    %v785 = vld [vmem:[#allocation8 + $0x684] sm:$0xff]
    %v786 = vld [vmem:[#allocation8 + $0x68c] sm:$0xf]
    %v787 = vld [vmem:[#allocation8 + $0x690] sm:$0xff]
    %v788 = vld [vmem:[#allocation8 + $0x698] sm:$0xff]
    %v789 = vld [vmem:[#allocation8 + $0x6a0] sm:$0xf]
    %v790 = vld [vmem:[#allocation8 + $0x6a4] sm:$0xff]
    %v791 = vld [vmem:[#allocation8 + $0x6ac] sm:$0xff]
    %v792 = vld [vmem:[#allocation8 + $0x6b4] sm:$0xf]
    %v793 = vld [vmem:[#allocation8 + $0x6b8] sm:$0xff]
    %v794 = vld [vmem:[#allocation8 + $0x6c0] sm:$0xff]
    %v795 = vld [vmem:[#allocation8 + $0x6c8] sm:$0xf]
    %v796 = vld [vmem:[#allocation8 + $0x6cc] sm:$0xff]
    %v797 = vld [vmem:[#allocation8 + $0x6d4] sm:$0xff]
    %v798 = vld [vmem:[#allocation8 + $0x6dc] sm:$0xf]
    %v799 = vld [vmem:[#allocation8 + $0x6e0] sm:$0xff]
    %v800 = vld [vmem:[#allocation8 + $0x6e8] sm:$0xff]
    %v801 = vld [vmem:[#allocation8 + $0x6f0] sm:$0xf]
    %v802 = vld [vmem:[#allocation8 + $0x6f4] sm:$0xff]
    %v803 = vld [vmem:[#allocation8 + $0x6fc] sm:$0xff]
    %v804 = vld [vmem:[#allocation8 + $0x704] sm:$0xf]
    %v805 = vld [vmem:[#allocation8 + $0x708] sm:$0xff]
    %v806 = vld [vmem:[#allocation8 + $0x710] sm:$0xff]
    %v807 = vld [vmem:[#allocation8 + $0x718] sm:$0xf]
    %v808 = vld [vmem:[#allocation8 + $0x71c] sm:$0xff]
    %v809 = vld [vmem:[#allocation8 + $0x724] sm:$0xff]
    %v810 = vld [vmem:[#allocation8 + $0x72c] sm:$0xf]
    %v811 = vld [vmem:[#allocation8 + $0x730] sm:$0xff]
    %v812 = vld [vmem:[#allocation8 + $0x738] sm:$0xff]
    %v813 = vld [vmem:[#allocation8 + $0x740] sm:$0xf]
    %v814 = vld [vmem:[#allocation8 + $0x744] sm:$0xff]
    %v815 = vld [vmem:[#allocation8 + $0x74c] sm:$0xff]
    %v816 = vld [vmem:[#allocation8 + $0x754] sm:$0xf]
    %v817 = vld [vmem:[#allocation8 + $0x758] sm:$0xff]
    %v818 = vld [vmem:[#allocation8 + $0x760] sm:$0xff]
    %v819 = vld [vmem:[#allocation8 + $0x768] sm:$0xf]
    %v820 = vld [vmem:[#allocation8 + $0x76c] sm:$0xff]
    %v821 = vld [vmem:[#allocation8 + $0x774] sm:$0xff]
    %v822 = vld [vmem:[#allocation8 + $0x77c] sm:$0xf]
    %v823 = vld [vmem:[#allocation8 + $0x780] sm:$0xff]
    %v824 = vld [vmem:[#allocation8 + $0x788] sm:$0xff]
    %v825 = vld [vmem:[#allocation8 + $0x790] sm:$0xf]
    %v826 = vld [vmem:[#allocation8 + $0x794] sm:$0xff]
    %v827 = vld [vmem:[#allocation8 + $0x79c] sm:$0xff]
    %v828 = vld [vmem:[#allocation8 + $0x7a4] sm:$0xf]
    %v829 = vld [vmem:[#allocation8 + $0x7a8] sm:$0xff]
    %v830 = vld [vmem:[#allocation8 + $0x7b0] sm:$0xff]
    %v831 = vld [vmem:[#allocation8 + $0x7b8] sm:$0xf]
    %v832 = vld [vmem:[#allocation8 + $0x7bc] sm:$0xff]
    %v833 = vld [vmem:[#allocation8 + $0x7c4] sm:$0xff]
    %v834 = vld [vmem:[#allocation8 + $0x7cc] sm:$0xf]
    %v835 = vld [vmem:[#allocation8 + $0x7d0] sm:$0xff]
    %v836 = vld [vmem:[#allocation8 + $0x7d8] sm:$0xff]
    %v837 = vld [vmem:[#allocation8 + $0x7e0] sm:$0xf]
    %v838 = vld [vmem:[#allocation8 + $0x7e4] sm:$0xff]
    %v839 = vld [vmem:[#allocation8 + $0x7ec] sm:$0xff]
    %v840 = vld [vmem:[#allocation8 + $0x7f4] sm:$0xf]
    %v841 = vld [vmem:[#allocation8 + $0x7f8] sm:$0xff]
    %v842 = vld [vmem:[#allocation8 + $0x800] sm:$0xff]
    %v843 = vld [vmem:[#allocation8 + $0x808] sm:$0xf]
    %v844 = vld [vmem:[#allocation8 + $0x80c] sm:$0xff]
    %v845 = vld [vmem:[#allocation8 + $0x814] sm:$0xff]
    %v846 = vld [vmem:[#allocation8 + $0x81c] sm:$0xf]
    %v847 = vld [vmem:[#allocation8 + $0x820] sm:$0xff]
    %v848 = vld [vmem:[#allocation8 + $0x828] sm:$0xff]
    %v849 = vld [vmem:[#allocation8 + $0x830] sm:$0xf]
    %v850 = vld [vmem:[#allocation8 + $0x834] sm:$0xff]
    %v851 = vld [vmem:[#allocation8 + $0x83c] sm:$0xff]
    %v852 = vld [vmem:[#allocation8 + $0x844] sm:$0xf]
    %v853 = vld [vmem:[#allocation8 + $0x848] sm:$0xff]
    %v854 = vld [vmem:[#allocation8 + $0x850] sm:$0xff]
    %v855 = vld [vmem:[#allocation8 + $0x858] sm:$0xf]
    %v856 = vld [vmem:[#allocation8 + $0x85c] sm:$0xff]
    %v857 = vld [vmem:[#allocation8 + $0x864] sm:$0xff]
    %v858 = vld [vmem:[#allocation8 + $0x86c] sm:$0xf]
    %v859 = vld [vmem:[#allocation8 + $0x870] sm:$0xff]
    %v860 = vld [vmem:[#allocation8 + $0x878] sm:$0xff]
    %v861 = vld [vmem:[#allocation8 + $0x880] sm:$0xf]
    %v862 = vld [vmem:[#allocation8 + $0x884] sm:$0xff]
    %v863 = vld [vmem:[#allocation8 + $0x88c] sm:$0xff]
    %v864 = vld [vmem:[#allocation8 + $0x894] sm:$0xf]
    %v865 = vld [vmem:[#allocation8 + $0x898] sm:$0xff]
    %v866 = vld [vmem:[#allocation8 + $0x8a0] sm:$0xff]
    %v867 = vld [vmem:[#allocation8 + $0x8a8] sm:$0xf]
    %v868 = vld [vmem:[#allocation8 + $0x8ac] sm:$0xff]
    %v869 = vld [vmem:[#allocation8 + $0x8b4] sm:$0xff]
    %v870 = vld [vmem:[#allocation8 + $0x8bc] sm:$0xf]
    %v871 = vld [vmem:[#allocation8 + $0x8c0] sm:$0xff]
    %v872 = vld [vmem:[#allocation8 + $0x8c8] sm:$0xff]
    %v873 = vld [vmem:[#allocation8 + $0x8d0] sm:$0xf]
    %v874 = vld [vmem:[#allocation8 + $0x8d4] sm:$0xff]
    %v875 = vld [vmem:[#allocation8 + $0x8dc] sm:$0xff]
    %v876 = vld [vmem:[#allocation8 + $0x8e4] sm:$0xf]
    %v877 = vld [vmem:[#allocation8 + $0x8e8] sm:$0xff]
    %v878 = vld [vmem:[#allocation8 + $0x8f0] sm:$0xff]
    %v879 = vld [vmem:[#allocation8 + $0x8f8] sm:$0xf]
    %v880 = vld [vmem:[#allocation8 + $0x8fc] sm:$0xff]
    %v881 = vld [vmem:[#allocation8 + $0x904] sm:$0xff]
    %v882 = vld [vmem:[#allocation8 + $0x90c] sm:$0xf]
    %v883 = vld [vmem:[#allocation8 + $0x910] sm:$0xff]
    %v884 = vld [vmem:[#allocation8 + $0x918] sm:$0xff]
    %v885 = vld [vmem:[#allocation8 + $0x920] sm:$0xf]
    %v886 = vld [vmem:[#allocation8 + $0x924] sm:$0xff]
    %v887 = vld [vmem:[#allocation8 + $0x92c] sm:$0xff]
    %v888 = vld [vmem:[#allocation8 + $0x934] sm:$0xf]
    %v889 = vld [vmem:[#allocation8 + $0x938] sm:$0xff]
    %v890 = vld [vmem:[#allocation8 + $0x940] sm:$0xff]
    %v891 = vld [vmem:[#allocation8 + $0x948] sm:$0xf]
    %v892 = vld [vmem:[#allocation8 + $0x94c] sm:$0xff]
    %v893 = vld [vmem:[#allocation8 + $0x954] sm:$0xff]
    %v894 = vld [vmem:[#allocation8 + $0x95c] sm:$0xf]
    %v895 = vld [vmem:[#allocation8 + $0x960] sm:$0xff]
    %v896 = vld [vmem:[#allocation8 + $0x968] sm:$0xff]
    %v897 = vld [vmem:[#allocation8 + $0x970] sm:$0xf]
    %v898 = vld [vmem:[#allocation8 + $0x974] sm:$0xff]
    %v899 = vld [vmem:[#allocation8 + $0x97c] sm:$0xff]
    %v900 = vld [vmem:[#allocation8 + $0x984] sm:$0xf]
    %v901 = vld [vmem:[#allocation8 + $0x988] sm:$0xff]
    %v902 = vld [vmem:[#allocation8 + $0x990] sm:$0xff]
    %v903 = vld [vmem:[#allocation8 + $0x998] sm:$0xf]
    %v904 = vld [vmem:[#allocation8 + $0x99c] sm:$0xff]
    %v905 = vld [vmem:[#allocation8 + $0x9a4] sm:$0xff]
    %v906 = vld [vmem:[#allocation8 + $0x9ac] sm:$0xf]
    %v907 = vld [vmem:[#allocation8 + $0x9b0] sm:$0xff]
    %v908 = vld [vmem:[#allocation8 + $0x9b8] sm:$0xff]
    %v909 = vld [vmem:[#allocation8 + $0x9c0] sm:$0xf]
    %v910 = vld [vmem:[#allocation8 + $0x9c4] sm:$0xff]
    %v911 = vld [vmem:[#allocation8 + $0x9cc] sm:$0xff]
    %v912 = vld [vmem:[#allocation8 + $0x9d4] sm:$0xf]
    %v913 = vld [vmem:[#allocation8 + $0x9d8] sm:$0xff]
    %v914 = vld [vmem:[#allocation8 + $0x9e0] sm:$0xff]
    %v915 = vld [vmem:[#allocation8 + $0x9e8] sm:$0xf]
    %v916 = vld [vmem:[#allocation8 + $0x9ec] sm:$0xff]
    %v917 = vld [vmem:[#allocation8 + $0x9f4] sm:$0xff]
    %v918 = vld [vmem:[#allocation8 + $0x9fc] sm:$0xf]
    %v919 = vld [vmem:[#allocation8 + $0xa00] sm:$0xff]
    %v920 = vld [vmem:[#allocation8 + $0xa08] sm:$0xff]
    %v921 = vld [vmem:[#allocation8 + $0xa10] sm:$0xf]
    %v922 = vld [vmem:[#allocation8 + $0xa14] sm:$0xff]
    %v923 = vld [vmem:[#allocation8 + $0xa1c] sm:$0xff]
    %v924 = vld [vmem:[#allocation8 + $0xa24] sm:$0xf]
    %v925 = vld [vmem:[#allocation8 + $0xa28] sm:$0xff]
    %v926 = vld [vmem:[#allocation8 + $0xa30] sm:$0xff]
    %v927 = vld [vmem:[#allocation8 + $0xa38] sm:$0xf]
    %v928 = vld [vmem:[#allocation8 + $0xa3c] sm:$0xff]
    %v929 = vld [vmem:[#allocation8 + $0xa44] sm:$0xff]
    %v930 = vld [vmem:[#allocation8 + $0xa4c] sm:$0xf]
    %v931 = vld [vmem:[#allocation8 + $0xa50] sm:$0xff]
    %v932 = vld [vmem:[#allocation8 + $0xa58] sm:$0xff]
    %v933 = vld [vmem:[#allocation8 + $0xa60] sm:$0xf]
    %v934 = vld [vmem:[#allocation8 + $0xa64] sm:$0xff]
    %v935 = vld [vmem:[#allocation8 + $0xa6c] sm:$0xff]
    %v936 = vld [vmem:[#allocation8 + $0xa74] sm:$0xf]
    %v937 = vld [vmem:[#allocation8 + $0xa78] sm:$0xff]
    %v938 = vld [vmem:[#allocation8 + $0xa80] sm:$0xff]
    %v939 = vld [vmem:[#allocation8 + $0xa88] sm:$0xf]
    %v940 = vld [vmem:[#allocation8 + $0xa8c] sm:$0xff]
    %v941 = vld [vmem:[#allocation8 + $0xa94] sm:$0xff]
    %v942 = vld [vmem:[#allocation8 + $0xa9c] sm:$0xf]
    %v943 = vld [vmem:[#allocation8 + $0xaa0] sm:$0xff]
    %v944 = vld [vmem:[#allocation8 + $0xaa8] sm:$0xff]
    %v945 = vld [vmem:[#allocation8 + $0xab0] sm:$0xf]
    %v946 = vld [vmem:[#allocation8 + $0xab4] sm:$0xff]
    %v947 = vld [vmem:[#allocation8 + $0xabc] sm:$0xff]
    %v948 = vld [vmem:[#allocation8 + $0xac4] sm:$0xf]
    %v949 = vld [vmem:[#allocation8 + $0xac8] sm:$0xff]
    %v950 = vld [vmem:[#allocation8 + $0xad0] sm:$0xff]
    %v951 = vld [vmem:[#allocation8 + $0xad8] sm:$0xf]
    %v952 = vld [vmem:[#allocation8 + $0xadc] sm:$0xff]
    %v953 = vld [vmem:[#allocation8 + $0xae4] sm:$0xff]
    %v954 = vld [vmem:[#allocation8 + $0xaec] sm:$0xf]
    %v955 = vld [vmem:[#allocation8 + $0xaf0] sm:$0xff]
    %v956 = vld [vmem:[#allocation8 + $0xaf8] sm:$0xff]
    %v957 = vld [vmem:[#allocation8 + $0xb00] sm:$0xf]
    %v958 = vld [vmem:[#allocation8 + $0xb04] sm:$0xff]
    %v959 = vld [vmem:[#allocation8 + $0xb0c] sm:$0xff]
    %v960 = vld [vmem:[#allocation8 + $0xb14] sm:$0xf]
    %v961 = vld [vmem:[#allocation8 + $0xb18] sm:$0xff]
    %v962 = vld [vmem:[#allocation8 + $0xb20] sm:$0xff]
    %v963 = vld [vmem:[#allocation8 + $0xb28] sm:$0xf]
    %v964 = vld [vmem:[#allocation8 + $0xb2c] sm:$0xff]
    %v965 = vld [vmem:[#allocation8 + $0xb34] sm:$0xff]
    %v966 = vld [vmem:[#allocation8 + $0xb3c] sm:$0xf]
    %v967 = vld [vmem:[#allocation10] sm:$0x1f]
    %v969 = vlaneseq
    %v970 = vshrl.u32 %v969, 7
    %v971 = vsub.s32 0, %v970
    %v972 = vrot.slane %v967, %v971
    %v973 = vlaneseq
    %v974 = vshrl.u32 %v973, 7
    %v975 = vsub.s32 1, %v974
    %v976 = vrot.slane %v967, %v975
    %v977 = vlaneseq
    %v978 = vshrl.u32 %v977, 7
    %v979 = vsub.s32 2, %v978
    %v980 = vrot.slane %v967, %v979
    %v981 = vlaneseq
    %v982 = vshrl.u32 %v981, 7
    %v983 = vsub.s32 3, %v982
    %v984 = vrot.slane %v967, %v983
    %v985 = vlaneseq
    %v986 = vshrl.u32 %v985, 7
    %v987 = vsub.s32 4, %v986
    %v988 = vrot.slane %v967, %v987
    %v1426 = vunpack.c.l.b16 %v535
    %v1427 = vunpack.c.h.b16 %v535
    %v1428 = vunpack.c.l.b16 %v536
    %v1429 = vunpack.c.h.b16 %v536
    %v1430 = vunpack.c.l.b16 %v537
    %v1431 = vunpack.c.l.b16 %v538
    %v1432 = vunpack.c.h.b16 %v538
    %v1433 = vunpack.c.l.b16 %v539
    %v1434 = vunpack.c.h.b16 %v539
    %v1435 = vunpack.c.l.b16 %v540
    %v1436 = vunpack.c.l.b16 %v541
    %v1437 = vunpack.c.h.b16 %v541
    %v1438 = vunpack.c.l.b16 %v542
    %v1439 = vunpack.c.h.b16 %v542
    %v1440 = vunpack.c.l.b16 %v543
    %v1441 = vunpack.c.l.b16 %v544
    %v1442 = vunpack.c.h.b16 %v544
    %v1443 = vunpack.c.l.b16 %v545
    %v1444 = vunpack.c.h.b16 %v545
    %v1445 = vunpack.c.l.b16 %v546
    %v1446 = vunpack.c.l.b16 %v547
    %v1447 = vunpack.c.h.b16 %v547
    %v1448 = vunpack.c.l.b16 %v548
    %v1449 = vunpack.c.h.b16 %v548
    %v1450 = vunpack.c.l.b16 %v549
    %v1451 = vunpack.c.l.b16 %v550
    %v1452 = vunpack.c.h.b16 %v550
    %v1453 = vunpack.c.l.b16 %v551
    %v1454 = vunpack.c.h.b16 %v551
    %v1455 = vunpack.c.l.b16 %v552
    %v1456 = vunpack.c.l.b16 %v553
    %v1457 = vunpack.c.h.b16 %v553
    %v1458 = vunpack.c.l.b16 %v554
    %v1459 = vunpack.c.h.b16 %v554
    %v1460 = vunpack.c.l.b16 %v555
    %v1461 = vunpack.c.l.b16 %v556
    %v1462 = vunpack.c.h.b16 %v556
    %v1463 = vunpack.c.l.b16 %v557
    %v1464 = vunpack.c.h.b16 %v557
    %v1465 = vunpack.c.l.b16 %v558
    %v1466 = vunpack.c.l.b16 %v559
    %v1467 = vunpack.c.h.b16 %v559
    %v1468 = vunpack.c.l.b16 %v560
    %v1469 = vunpack.c.h.b16 %v560
    %v1470 = vunpack.c.l.b16 %v561
    %v1471 = vunpack.c.l.b16 %v562
    %v1472 = vunpack.c.h.b16 %v562
    %v1473 = vunpack.c.l.b16 %v563
    %v1474 = vunpack.c.h.b16 %v563
    %v1475 = vunpack.c.l.b16 %v564
    %v1476 = vunpack.c.l.b16 %v565
    %v1477 = vunpack.c.h.b16 %v565
    %v1478 = vunpack.c.l.b16 %v566
    %v1479 = vunpack.c.h.b16 %v566
    %v1480 = vunpack.c.l.b16 %v567
    %v1481 = vunpack.c.l.b16 %v568
    %v1482 = vunpack.c.h.b16 %v568
    %v1483 = vunpack.c.l.b16 %v569
    %v1484 = vunpack.c.h.b16 %v569
    %v1485 = vunpack.c.l.b16 %v570
    %v1486 = vunpack.c.l.b16 %v571
    %v1487 = vunpack.c.h.b16 %v571
    %v1488 = vunpack.c.l.b16 %v572
    %v1489 = vunpack.c.h.b16 %v572
    %v1490 = vunpack.c.l.b16 %v573
    %v1491 = vunpack.c.l.b16 %v574
    %v1492 = vunpack.c.h.b16 %v574
    %v1493 = vunpack.c.l.b16 %v575
    %v1494 = vunpack.c.h.b16 %v575
    %v1495 = vunpack.c.l.b16 %v576
    %v1496 = vunpack.c.l.b16 %v577
    %v1497 = vunpack.c.h.b16 %v577
    %v1498 = vunpack.c.l.b16 %v578
    %v1499 = vunpack.c.h.b16 %v578
    %v1500 = vunpack.c.l.b16 %v579
    %v1501 = vunpack.c.l.b16 %v580
    %v1502 = vunpack.c.h.b16 %v580
    %v1503 = vunpack.c.l.b16 %v581
    %v1504 = vunpack.c.h.b16 %v581
    %v1505 = vunpack.c.l.b16 %v582
    %v1506 = vunpack.c.l.b16 %v583
    %v1507 = vunpack.c.h.b16 %v583
    %v1508 = vunpack.c.l.b16 %v584
    %v1509 = vunpack.c.h.b16 %v584
    %v1510 = vunpack.c.l.b16 %v585
    %v1511 = vunpack.c.l.b16 %v586
    %v1512 = vunpack.c.h.b16 %v586
    %v1513 = vunpack.c.l.b16 %v587
    %v1514 = vunpack.c.h.b16 %v587
    %v1515 = vunpack.c.l.b16 %v588
    %v1516 = vunpack.c.l.b16 %v589
    %v1517 = vunpack.c.h.b16 %v589
    %v1518 = vunpack.c.l.b16 %v590
    %v1519 = vunpack.c.h.b16 %v590
    %v1520 = vunpack.c.l.b16 %v591
    %v1521 = vunpack.c.l.b16 %v592
    %v1522 = vunpack.c.h.b16 %v592
    %v1523 = vunpack.c.l.b16 %v593
    %v1524 = vunpack.c.h.b16 %v593
    %v1525 = vunpack.c.l.b16 %v594
    %v1526 = vunpack.c.l.b16 %v595
    %v1527 = vunpack.c.h.b16 %v595
    %v1528 = vunpack.c.l.b16 %v596
    %v1529 = vunpack.c.h.b16 %v596
    %v1530 = vunpack.c.l.b16 %v597
    %v1531 = vunpack.c.l.b16 %v598
    %v1532 = vunpack.c.h.b16 %v598
    %v1533 = vunpack.c.l.b16 %v599
    %v1534 = vunpack.c.h.b16 %v599
    %v1535 = vunpack.c.l.b16 %v600
    %v1536 = vunpack.c.l.b16 %v601
    %v1537 = vunpack.c.h.b16 %v601
    %v1538 = vunpack.c.l.b16 %v602
    %v1539 = vunpack.c.h.b16 %v602
    %v1540 = vunpack.c.l.b16 %v603
    %v1541 = vunpack.c.l.b16 %v604
    %v1542 = vunpack.c.h.b16 %v604
    %v1543 = vunpack.c.l.b16 %v605
    %v1544 = vunpack.c.h.b16 %v605
    %v1545 = vunpack.c.l.b16 %v606
    %v1546 = vunpack.c.l.b16 %v607
    %v1547 = vunpack.c.h.b16 %v607
    %v1548 = vunpack.c.l.b16 %v608
    %v1549 = vunpack.c.h.b16 %v608
    %v1550 = vunpack.c.l.b16 %v609
    %v1551 = vunpack.c.l.b16 %v610
    %v1552 = vunpack.c.h.b16 %v610
    %v1553 = vunpack.c.l.b16 %v611
    %v1554 = vunpack.c.h.b16 %v611
    %v1555 = vunpack.c.l.b16 %v612
    %v1556 = vunpack.c.l.b16 %v613
    %v1557 = vunpack.c.h.b16 %v613
    %v1558 = vunpack.c.l.b16 %v614
    %v1559 = vunpack.c.h.b16 %v614
    %v1560 = vunpack.c.l.b16 %v615
    %v1561 = vunpack.c.l.b16 %v616
    %v1562 = vunpack.c.h.b16 %v616
    %v1563 = vunpack.c.l.b16 %v617
    %v1564 = vunpack.c.h.b16 %v617
    %v1565 = vunpack.c.l.b16 %v618
    %v1566 = vunpack.c.l.b16 %v619
    %v1567 = vunpack.c.h.b16 %v619
    %v1568 = vunpack.c.l.b16 %v620
    %v1569 = vunpack.c.h.b16 %v620
    %v1570 = vunpack.c.l.b16 %v621
    %v1571 = vunpack.c.l.b16 %v622
    %v1572 = vunpack.c.h.b16 %v622
    %v1573 = vunpack.c.l.b16 %v623
    %v1574 = vunpack.c.h.b16 %v623
    %v1575 = vunpack.c.l.b16 %v624
    %v1576 = vunpack.c.l.b16 %v625
    %v1577 = vunpack.c.h.b16 %v625
    %v1578 = vunpack.c.l.b16 %v626
    %v1579 = vunpack.c.h.b16 %v626
    %v1580 = vunpack.c.l.b16 %v627
    %v1581 = vunpack.c.l.b16 %v628
    %v1582 = vunpack.c.h.b16 %v628
    %v1583 = vunpack.c.l.b16 %v629
    %v1584 = vunpack.c.h.b16 %v629
    %v1585 = vunpack.c.l.b16 %v630
    %v1586 = vunpack.c.l.b16 %v631
    %v1587 = vunpack.c.h.b16 %v631
    %v1588 = vunpack.c.l.b16 %v632
    %v1589 = vunpack.c.h.b16 %v632
    %v1590 = vunpack.c.l.b16 %v633
    %v1591 = vunpack.c.l.b16 %v634
    %v1592 = vunpack.c.h.b16 %v634
    %v1593 = vunpack.c.l.b16 %v635
    %v1594 = vunpack.c.h.b16 %v635
    %v1595 = vunpack.c.l.b16 %v636
    %v1596 = vunpack.c.l.b16 %v637
    %v1597 = vunpack.c.h.b16 %v637
    %v1598 = vunpack.c.l.b16 %v638
    %v1599 = vunpack.c.h.b16 %v638
    %v1600 = vunpack.c.l.b16 %v639
    %v1601 = vunpack.c.l.b16 %v640
    %v1602 = vunpack.c.h.b16 %v640
    %v1603 = vunpack.c.l.b16 %v641
    %v1604 = vunpack.c.h.b16 %v641
    %v1605 = vunpack.c.l.b16 %v642
    %v1606 = vunpack.c.l.b16 %v643
    %v1607 = vunpack.c.h.b16 %v643
    %v1608 = vunpack.c.l.b16 %v644
    %v1609 = vunpack.c.h.b16 %v644
    %v1610 = vunpack.c.l.b16 %v645
    %v1611 = vunpack.c.l.b16 %v646
    %v1612 = vunpack.c.h.b16 %v646
    %v1613 = vunpack.c.l.b16 %v647
    %v1614 = vunpack.c.h.b16 %v647
    %v1615 = vunpack.c.l.b16 %v648
    %v1616 = vunpack.c.l.b16 %v649
    %v1617 = vunpack.c.h.b16 %v649
    %v1618 = vunpack.c.l.b16 %v650
    %v1619 = vunpack.c.h.b16 %v650
    %v1620 = vunpack.c.l.b16 %v651
    %v1621 = vunpack.c.l.b16 %v652
    %v1622 = vunpack.c.h.b16 %v652
    %v1623 = vunpack.c.l.b16 %v653
    %v1624 = vunpack.c.h.b16 %v653
    %v1625 = vunpack.c.l.b16 %v654
    %v1626 = vunpack.c.l.b16 %v655
    %v1627 = vunpack.c.h.b16 %v655
    %v1628 = vunpack.c.l.b16 %v656
    %v1629 = vunpack.c.h.b16 %v656
    %v1630 = vunpack.c.l.b16 %v657
    %v1631 = vunpack.c.l.b16 %v658
    %v1632 = vunpack.c.h.b16 %v658
    %v1633 = vunpack.c.l.b16 %v659
    %v1634 = vunpack.c.h.b16 %v659
    %v1635 = vunpack.c.l.b16 %v660
    %v1636 = vunpack.c.l.b16 %v661
    %v1637 = vunpack.c.h.b16 %v661
    %v1638 = vunpack.c.l.b16 %v662
    %v1639 = vunpack.c.h.b16 %v662
    %v1640 = vunpack.c.l.b16 %v663
    %v1641 = vunpack.c.l.b16 %v664
    %v1642 = vunpack.c.h.b16 %v664
    %v1643 = vunpack.c.l.b16 %v665
    %v1644 = vunpack.c.h.b16 %v665
    %v1645 = vunpack.c.l.b16 %v666
    %v1646 = vunpack.c.l.b16 %v667
    %v1647 = vunpack.c.h.b16 %v667
    %v1648 = vunpack.c.l.b16 %v668
    %v1649 = vunpack.c.h.b16 %v668
    %v1650 = vunpack.c.l.b16 %v669
    %v1651 = vunpack.c.l.b16 %v670
    %v1652 = vunpack.c.h.b16 %v670
    %v1653 = vunpack.c.l.b16 %v671
    %v1654 = vunpack.c.h.b16 %v671
    %v1655 = vunpack.c.l.b16 %v672
    %v1656 = vunpack.c.l.b16 %v673
    %v1657 = vunpack.c.h.b16 %v673
    %v1658 = vunpack.c.l.b16 %v674
    %v1659 = vunpack.c.h.b16 %v674
    %v1660 = vunpack.c.l.b16 %v675
    %v1661 = vunpack.c.l.b16 %v676
    %v1662 = vunpack.c.h.b16 %v676
    %v1663 = vunpack.c.l.b16 %v677
    %v1664 = vunpack.c.h.b16 %v677
    %v1665 = vunpack.c.l.b16 %v678
    %v1666 = vunpack.c.l.b16 %v679
    %v1667 = vunpack.c.h.b16 %v679
    %v1668 = vunpack.c.l.b16 %v680
    %v1669 = vunpack.c.h.b16 %v680
    %v1670 = vunpack.c.l.b16 %v681
    %v1671 = vunpack.c.l.b16 %v682
    %v1672 = vunpack.c.h.b16 %v682
    %v1673 = vunpack.c.l.b16 %v683
    %v1674 = vunpack.c.h.b16 %v683
    %v1675 = vunpack.c.l.b16 %v684
    %v1676 = vunpack.c.l.b16 %v685
    %v1677 = vunpack.c.h.b16 %v685
    %v1678 = vunpack.c.l.b16 %v686
    %v1679 = vunpack.c.h.b16 %v686
    %v1680 = vunpack.c.l.b16 %v687
    %v1681 = vunpack.c.l.b16 %v688
    %v1682 = vunpack.c.h.b16 %v688
    %v1683 = vunpack.c.l.b16 %v689
    %v1684 = vunpack.c.h.b16 %v689
    %v1685 = vunpack.c.l.b16 %v690
    %v1686 = vunpack.c.l.b16 %v691
    %v1687 = vunpack.c.h.b16 %v691
    %v1688 = vunpack.c.l.b16 %v692
    %v1689 = vunpack.c.h.b16 %v692
    %v1690 = vunpack.c.l.b16 %v693
    %v1691 = vunpack.c.l.b16 %v694
    %v1692 = vunpack.c.h.b16 %v694
    %v1693 = vunpack.c.l.b16 %v695
    %v1694 = vunpack.c.h.b16 %v695
    %v1695 = vunpack.c.l.b16 %v696
    %v1696 = vunpack.c.l.b16 %v697
    %v1697 = vunpack.c.h.b16 %v697
    %v1698 = vunpack.c.l.b16 %v698
    %v1699 = vunpack.c.h.b16 %v698
    %v1700 = vunpack.c.l.b16 %v699
    %v1701 = vunpack.c.l.b16 %v700
    %v1702 = vunpack.c.h.b16 %v700
    %v1703 = vunpack.c.l.b16 %v701
    %v1704 = vunpack.c.h.b16 %v701
    %v1705 = vunpack.c.l.b16 %v702
    %v1706 = vunpack.c.l.b16 %v703
    %v1707 = vunpack.c.h.b16 %v703
    %v1708 = vunpack.c.l.b16 %v704
    %v1709 = vunpack.c.h.b16 %v704
    %v1710 = vunpack.c.l.b16 %v705
    %v1711 = vunpack.c.l.b16 %v706
    %v1712 = vunpack.c.h.b16 %v706
    %v1713 = vunpack.c.l.b16 %v707
    %v1714 = vunpack.c.h.b16 %v707
    %v1715 = vunpack.c.l.b16 %v708
    %v1716 = vunpack.c.l.b16 %v709
    %v1717 = vunpack.c.h.b16 %v709
    %v1718 = vunpack.c.l.b16 %v710
    %v1719 = vunpack.c.h.b16 %v710
    %v1720 = vunpack.c.l.b16 %v711
    %v1721 = vunpack.c.l.b16 %v712
    %v1722 = vunpack.c.h.b16 %v712
    %v1723 = vunpack.c.l.b16 %v713
    %v1724 = vunpack.c.h.b16 %v713
    %v1725 = vunpack.c.l.b16 %v714
    %v1726 = vunpack.c.l.b16 %v715
    %v1727 = vunpack.c.h.b16 %v715
    %v1728 = vunpack.c.l.b16 %v716
    %v1729 = vunpack.c.h.b16 %v716
    %v1730 = vunpack.c.l.b16 %v717
    %v1731 = vunpack.c.l.b16 %v718
    %v1732 = vunpack.c.h.b16 %v718
    %v1733 = vunpack.c.l.b16 %v719
    %v1734 = vunpack.c.h.b16 %v719
    %v1735 = vunpack.c.l.b16 %v720
    %v1736 = vunpack.c.l.b16 %v721
    %v1737 = vunpack.c.h.b16 %v721
    %v1738 = vunpack.c.l.b16 %v722
    %v1739 = vunpack.c.h.b16 %v722
    %v1740 = vunpack.c.l.b16 %v723
    %v1741 = vunpack.c.l.b16 %v724
    %v1742 = vunpack.c.h.b16 %v724
    %v1743 = vunpack.c.l.b16 %v725
    %v1744 = vunpack.c.h.b16 %v725
    %v1745 = vunpack.c.l.b16 %v726
    %v1746 = vunpack.c.l.b16 %v727
    %v1747 = vunpack.c.h.b16 %v727
    %v1748 = vunpack.c.l.b16 %v728
    %v1749 = vunpack.c.h.b16 %v728
    %v1750 = vunpack.c.l.b16 %v729
    %v1751 = vunpack.c.l.b16 %v730
    %v1752 = vunpack.c.h.b16 %v730
    %v1753 = vunpack.c.l.b16 %v731
    %v1754 = vunpack.c.h.b16 %v731
    %v1755 = vunpack.c.l.b16 %v732
    %v1756 = vunpack.c.l.b16 %v733
    %v1757 = vunpack.c.h.b16 %v733
    %v1758 = vunpack.c.l.b16 %v734
    %v1759 = vunpack.c.h.b16 %v734
    %v1760 = vunpack.c.l.b16 %v735
    %v1761 = vunpack.c.l.b16 %v736
    %v1762 = vunpack.c.h.b16 %v736
    %v1763 = vunpack.c.l.b16 %v737
    %v1764 = vunpack.c.h.b16 %v737
    %v1765 = vunpack.c.l.b16 %v738
    %v1766 = vunpack.c.l.b16 %v739
    %v1767 = vunpack.c.h.b16 %v739
    %v1768 = vunpack.c.l.b16 %v740
    %v1769 = vunpack.c.h.b16 %v740
    %v1770 = vunpack.c.l.b16 %v741
    %v1771 = vunpack.c.l.b16 %v742
    %v1772 = vunpack.c.h.b16 %v742
    %v1773 = vunpack.c.l.b16 %v743
    %v1774 = vunpack.c.h.b16 %v743
    %v1775 = vunpack.c.l.b16 %v744
    %v1776 = vunpack.c.l.b16 %v745
    %v1777 = vunpack.c.h.b16 %v745
    %v1778 = vunpack.c.l.b16 %v746
    %v1779 = vunpack.c.h.b16 %v746
    %v1780 = vunpack.c.l.b16 %v747
    %v1781 = vunpack.c.l.b16 %v748
    %v1782 = vunpack.c.h.b16 %v748
    %v1783 = vunpack.c.l.b16 %v749
    %v1784 = vunpack.c.h.b16 %v749
    %v1785 = vunpack.c.l.b16 %v750
    %v1786 = vunpack.c.l.b16 %v751
    %v1787 = vunpack.c.h.b16 %v751
    %v1788 = vunpack.c.l.b16 %v752
    %v1789 = vunpack.c.h.b16 %v752
    %v1790 = vunpack.c.l.b16 %v753
    %v1791 = vunpack.c.l.b16 %v754
    %v1792 = vunpack.c.h.b16 %v754
    %v1793 = vunpack.c.l.b16 %v755
    %v1794 = vunpack.c.h.b16 %v755
    %v1795 = vunpack.c.l.b16 %v756
    %v1796 = vunpack.c.l.b16 %v757
    %v1797 = vunpack.c.h.b16 %v757
    %v1798 = vunpack.c.l.b16 %v758
    %v1799 = vunpack.c.h.b16 %v758
    %v1800 = vunpack.c.l.b16 %v759
    %v1801 = vunpack.c.l.b16 %v760
    %v1802 = vunpack.c.h.b16 %v760
    %v1803 = vunpack.c.l.b16 %v761
    %v1804 = vunpack.c.h.b16 %v761
    %v1805 = vunpack.c.l.b16 %v762
    %v1806 = vunpack.c.l.b16 %v763
    %v1807 = vunpack.c.h.b16 %v763
    %v1808 = vunpack.c.l.b16 %v764
    %v1809 = vunpack.c.h.b16 %v764
    %v1810 = vunpack.c.l.b16 %v765
    %v1811 = vunpack.c.l.b16 %v766
    %v1812 = vunpack.c.h.b16 %v766
    %v1813 = vunpack.c.l.b16 %v767
    %v1814 = vunpack.c.h.b16 %v767
    %v1815 = vunpack.c.l.b16 %v768
    %v1816 = vunpack.c.l.b16 %v769
    %v1817 = vunpack.c.h.b16 %v769
    %v1818 = vunpack.c.l.b16 %v770
    %v1819 = vunpack.c.h.b16 %v770
    %v1820 = vunpack.c.l.b16 %v771
    %v1821 = vunpack.c.l.b16 %v772
    %v1822 = vunpack.c.h.b16 %v772
    %v1823 = vunpack.c.l.b16 %v773
    %v1824 = vunpack.c.h.b16 %v773
    %v1825 = vunpack.c.l.b16 %v774
    %v1826 = vunpack.c.l.b16 %v775
    %v1827 = vunpack.c.h.b16 %v775
    %v1828 = vunpack.c.l.b16 %v776
    %v1829 = vunpack.c.h.b16 %v776
    %v1830 = vunpack.c.l.b16 %v777
    %v1831 = vunpack.c.l.b16 %v778
    %v1832 = vunpack.c.h.b16 %v778
    %v1833 = vunpack.c.l.b16 %v779
    %v1834 = vunpack.c.h.b16 %v779
    %v1835 = vunpack.c.l.b16 %v780
    %v1836 = vunpack.c.l.b16 %v781
    %v1837 = vunpack.c.h.b16 %v781
    %v1838 = vunpack.c.l.b16 %v782
    %v1839 = vunpack.c.h.b16 %v782
    %v1840 = vunpack.c.l.b16 %v783
    %v1841 = vunpack.c.l.b16 %v784
    %v1842 = vunpack.c.h.b16 %v784
    %v1843 = vunpack.c.l.b16 %v785
    %v1844 = vunpack.c.h.b16 %v785
    %v1845 = vunpack.c.l.b16 %v786
    %v1846 = vunpack.c.l.b16 %v787
    %v1847 = vunpack.c.h.b16 %v787
    %v1848 = vunpack.c.l.b16 %v788
    %v1849 = vunpack.c.h.b16 %v788
    %v1850 = vunpack.c.l.b16 %v789
    %v1851 = vunpack.c.l.b16 %v790
    %v1852 = vunpack.c.h.b16 %v790
    %v1853 = vunpack.c.l.b16 %v791
    %v1854 = vunpack.c.h.b16 %v791
    %v1855 = vunpack.c.l.b16 %v792
    %v1856 = vunpack.c.l.b16 %v793
    %v1857 = vunpack.c.h.b16 %v793
    %v1858 = vunpack.c.l.b16 %v794
    %v1859 = vunpack.c.h.b16 %v794
    %v1860 = vunpack.c.l.b16 %v795
    %v1861 = vunpack.c.l.b16 %v796
    %v1862 = vunpack.c.h.b16 %v796
    %v1863 = vunpack.c.l.b16 %v797
    %v1864 = vunpack.c.h.b16 %v797
    %v1865 = vunpack.c.l.b16 %v798
    %v1866 = vunpack.c.l.b16 %v799
    %v1867 = vunpack.c.h.b16 %v799
    %v1868 = vunpack.c.l.b16 %v800
    %v1869 = vunpack.c.h.b16 %v800
    %v1870 = vunpack.c.l.b16 %v801
    %v1871 = vunpack.c.l.b16 %v802
    %v1872 = vunpack.c.h.b16 %v802
    %v1873 = vunpack.c.l.b16 %v803
    %v1874 = vunpack.c.h.b16 %v803
    %v1875 = vunpack.c.l.b16 %v804
    %v1876 = vunpack.c.l.b16 %v805
    %v1877 = vunpack.c.h.b16 %v805
    %v1878 = vunpack.c.l.b16 %v806
    %v1879 = vunpack.c.h.b16 %v806
    %v1880 = vunpack.c.l.b16 %v807
    %v1881 = vunpack.c.l.b16 %v808
    %v1882 = vunpack.c.h.b16 %v808
    %v1883 = vunpack.c.l.b16 %v809
    %v1884 = vunpack.c.h.b16 %v809
    %v1885 = vunpack.c.l.b16 %v810
    %v1886 = vunpack.c.l.b16 %v811
    %v1887 = vunpack.c.h.b16 %v811
    %v1888 = vunpack.c.l.b16 %v812
    %v1889 = vunpack.c.h.b16 %v812
    %v1890 = vunpack.c.l.b16 %v813
    %v1891 = vunpack.c.l.b16 %v814
    %v1892 = vunpack.c.h.b16 %v814
    %v1893 = vunpack.c.l.b16 %v815
    %v1894 = vunpack.c.h.b16 %v815
    %v1895 = vunpack.c.l.b16 %v816
    %v1896 = vunpack.c.l.b16 %v817
    %v1897 = vunpack.c.h.b16 %v817
    %v1898 = vunpack.c.l.b16 %v818
    %v1899 = vunpack.c.h.b16 %v818
    %v1900 = vunpack.c.l.b16 %v819
    %v1901 = vunpack.c.l.b16 %v820
    %v1902 = vunpack.c.h.b16 %v820
    %v1903 = vunpack.c.l.b16 %v821
    %v1904 = vunpack.c.h.b16 %v821
    %v1905 = vunpack.c.l.b16 %v822
    %v1906 = vunpack.c.l.b16 %v823
    %v1907 = vunpack.c.h.b16 %v823
    %v1908 = vunpack.c.l.b16 %v824
    %v1909 = vunpack.c.h.b16 %v824
    %v1910 = vunpack.c.l.b16 %v825
    %v1911 = vunpack.c.l.b16 %v826
    %v1912 = vunpack.c.h.b16 %v826
    %v1913 = vunpack.c.l.b16 %v827
    %v1914 = vunpack.c.h.b16 %v827
    %v1915 = vunpack.c.l.b16 %v828
    %v1916 = vunpack.c.l.b16 %v829
    %v1917 = vunpack.c.h.b16 %v829
    %v1918 = vunpack.c.l.b16 %v830
    %v1919 = vunpack.c.h.b16 %v830
    %v1920 = vunpack.c.l.b16 %v831
    %v1921 = vunpack.c.l.b16 %v832
    %v1922 = vunpack.c.h.b16 %v832
    %v1923 = vunpack.c.l.b16 %v833
    %v1924 = vunpack.c.h.b16 %v833
    %v1925 = vunpack.c.l.b16 %v834
    %v1926 = vunpack.c.l.b16 %v835
    %v1927 = vunpack.c.h.b16 %v835
    %v1928 = vunpack.c.l.b16 %v836
    %v1929 = vunpack.c.h.b16 %v836
    %v1930 = vunpack.c.l.b16 %v837
    %v1931 = vunpack.c.l.b16 %v838
    %v1932 = vunpack.c.h.b16 %v838
    %v1933 = vunpack.c.l.b16 %v839
    %v1934 = vunpack.c.h.b16 %v839
    %v1935 = vunpack.c.l.b16 %v840
    %v1936 = vunpack.c.l.b16 %v841
    %v1937 = vunpack.c.h.b16 %v841
    %v1938 = vunpack.c.l.b16 %v842
    %v1939 = vunpack.c.h.b16 %v842
    %v1940 = vunpack.c.l.b16 %v843
    %v1941 = vunpack.c.l.b16 %v844
    %v1942 = vunpack.c.h.b16 %v844
    %v1943 = vunpack.c.l.b16 %v845
    %v1944 = vunpack.c.h.b16 %v845
    %v1945 = vunpack.c.l.b16 %v846
    %v1946 = vunpack.c.l.b16 %v847
    %v1947 = vunpack.c.h.b16 %v847
    %v1948 = vunpack.c.l.b16 %v848
    %v1949 = vunpack.c.h.b16 %v848
    %v1950 = vunpack.c.l.b16 %v849
    %v1951 = vunpack.c.l.b16 %v850
    %v1952 = vunpack.c.h.b16 %v850
    %v1953 = vunpack.c.l.b16 %v851
    %v1954 = vunpack.c.h.b16 %v851
    %v1955 = vunpack.c.l.b16 %v852
    %v1956 = vunpack.c.l.b16 %v853
    %v1957 = vunpack.c.h.b16 %v853
    %v1958 = vunpack.c.l.b16 %v854
    %v1959 = vunpack.c.h.b16 %v854
    %v1960 = vunpack.c.l.b16 %v855
    %v1961 = vunpack.c.l.b16 %v856
    %v1962 = vunpack.c.h.b16 %v856
    %v1963 = vunpack.c.l.b16 %v857
    %v1964 = vunpack.c.h.b16 %v857
    %v1965 = vunpack.c.l.b16 %v858
    %v1966 = vunpack.c.l.b16 %v859
    %v1967 = vunpack.c.h.b16 %v859
    %v1968 = vunpack.c.l.b16 %v860
    %v1969 = vunpack.c.h.b16 %v860
    %v1970 = vunpack.c.l.b16 %v861
    %v1971 = vunpack.c.l.b16 %v862
    %v1972 = vunpack.c.h.b16 %v862
    %v1973 = vunpack.c.l.b16 %v863
    %v1974 = vunpack.c.h.b16 %v863
    %v1975 = vunpack.c.l.b16 %v864
    %v1976 = vunpack.c.l.b16 %v865
    %v1977 = vunpack.c.h.b16 %v865
    %v1978 = vunpack.c.l.b16 %v866
    %v1979 = vunpack.c.h.b16 %v866
    %v1980 = vunpack.c.l.b16 %v867
    %v1981 = vunpack.c.l.b16 %v868
    %v1982 = vunpack.c.h.b16 %v868
    %v1983 = vunpack.c.l.b16 %v869
    %v1984 = vunpack.c.h.b16 %v869
    %v1985 = vunpack.c.l.b16 %v870
    %v1986 = vunpack.c.l.b16 %v871
    %v1987 = vunpack.c.h.b16 %v871
    %v1988 = vunpack.c.l.b16 %v872
    %v1989 = vunpack.c.h.b16 %v872
    %v1990 = vunpack.c.l.b16 %v873
    %v1991 = vunpack.c.l.b16 %v874
    %v1992 = vunpack.c.h.b16 %v874
    %v1993 = vunpack.c.l.b16 %v875
    %v1994 = vunpack.c.h.b16 %v875
    %v1995 = vunpack.c.l.b16 %v876
    %v1996 = vunpack.c.l.b16 %v877
    %v1997 = vunpack.c.h.b16 %v877
    %v1998 = vunpack.c.l.b16 %v878
    %v1999 = vunpack.c.h.b16 %v878
    %v2000 = vunpack.c.l.b16 %v879
    %v2001 = vunpack.c.l.b16 %v880
    %v2002 = vunpack.c.h.b16 %v880
    %v2003 = vunpack.c.l.b16 %v881
    %v2004 = vunpack.c.h.b16 %v881
    %v2005 = vunpack.c.l.b16 %v882
    %v2006 = vunpack.c.l.b16 %v883
    %v2007 = vunpack.c.h.b16 %v883
    %v2008 = vunpack.c.l.b16 %v884
    %v2009 = vunpack.c.h.b16 %v884
    %v2010 = vunpack.c.l.b16 %v885
    %v2011 = vunpack.c.l.b16 %v886
    %v2012 = vunpack.c.h.b16 %v886
    %v2013 = vunpack.c.l.b16 %v887
    %v2014 = vunpack.c.h.b16 %v887
    %v2015 = vunpack.c.l.b16 %v888
    %v2016 = vunpack.c.l.b16 %v889
    %v2017 = vunpack.c.h.b16 %v889
    %v2018 = vunpack.c.l.b16 %v890
    %v2019 = vunpack.c.h.b16 %v890
    %v2020 = vunpack.c.l.b16 %v891
    %v2021 = vunpack.c.l.b16 %v892
    %v2022 = vunpack.c.h.b16 %v892
    %v2023 = vunpack.c.l.b16 %v893
    %v2024 = vunpack.c.h.b16 %v893
    %v2025 = vunpack.c.l.b16 %v894
    %v2026 = vunpack.c.l.b16 %v895
    %v2027 = vunpack.c.h.b16 %v895
    %v2028 = vunpack.c.l.b16 %v896
    %v2029 = vunpack.c.h.b16 %v896
    %v2030 = vunpack.c.l.b16 %v897
    %v2031 = vunpack.c.l.b16 %v898
    %v2032 = vunpack.c.h.b16 %v898
    %v2033 = vunpack.c.l.b16 %v899
    %v2034 = vunpack.c.h.b16 %v899
    %v2035 = vunpack.c.l.b16 %v900
    %v2036 = vunpack.c.l.b16 %v901
    %v2037 = vunpack.c.h.b16 %v901
    %v2038 = vunpack.c.l.b16 %v902
    %v2039 = vunpack.c.h.b16 %v902
    %v2040 = vunpack.c.l.b16 %v903
    %v2041 = vunpack.c.l.b16 %v904
    %v2042 = vunpack.c.h.b16 %v904
    %v2043 = vunpack.c.l.b16 %v905
    %v2044 = vunpack.c.h.b16 %v905
    %v2045 = vunpack.c.l.b16 %v906
    %v2046 = vunpack.c.l.b16 %v907
    %v2047 = vunpack.c.h.b16 %v907
    %v2048 = vunpack.c.l.b16 %v908
    %v2049 = vunpack.c.h.b16 %v908
    %v2050 = vunpack.c.l.b16 %v909
    %v2051 = vunpack.c.l.b16 %v910
    %v2052 = vunpack.c.h.b16 %v910
    %v2053 = vunpack.c.l.b16 %v911
    %v2054 = vunpack.c.h.b16 %v911
    %v2055 = vunpack.c.l.b16 %v912
    %v2056 = vunpack.c.l.b16 %v913
    %v2057 = vunpack.c.h.b16 %v913
    %v2058 = vunpack.c.l.b16 %v914
    %v2059 = vunpack.c.h.b16 %v914
    %v2060 = vunpack.c.l.b16 %v915
    %v2061 = vunpack.c.l.b16 %v916
    %v2062 = vunpack.c.h.b16 %v916
    %v2063 = vunpack.c.l.b16 %v917
    %v2064 = vunpack.c.h.b16 %v917
    %v2065 = vunpack.c.l.b16 %v918
    %v2066 = vunpack.c.l.b16 %v919
    %v2067 = vunpack.c.h.b16 %v919
    %v2068 = vunpack.c.l.b16 %v920
    %v2069 = vunpack.c.h.b16 %v920
    %v2070 = vunpack.c.l.b16 %v921
    %v2071 = vunpack.c.l.b16 %v922
    %v2072 = vunpack.c.h.b16 %v922
    %v2073 = vunpack.c.l.b16 %v923
    %v2074 = vunpack.c.h.b16 %v923
    %v2075 = vunpack.c.l.b16 %v924
    %v2076 = vunpack.c.l.b16 %v925
    %v2077 = vunpack.c.h.b16 %v925
    %v2078 = vunpack.c.l.b16 %v926
    %v2079 = vunpack.c.h.b16 %v926
    %v2080 = vunpack.c.l.b16 %v927
    %v2081 = vunpack.c.l.b16 %v928
    %v2082 = vunpack.c.h.b16 %v928
    %v2083 = vunpack.c.l.b16 %v929
    %v2084 = vunpack.c.h.b16 %v929
    %v2085 = vunpack.c.l.b16 %v930
    %v2086 = vunpack.c.l.b16 %v931
    %v2087 = vunpack.c.h.b16 %v931
    %v2088 = vunpack.c.l.b16 %v932
    %v2089 = vunpack.c.h.b16 %v932
    %v2090 = vunpack.c.l.b16 %v933
    %v2091 = vunpack.c.l.b16 %v934
    %v2092 = vunpack.c.h.b16 %v934
    %v2093 = vunpack.c.l.b16 %v935
    %v2094 = vunpack.c.h.b16 %v935
    %v2095 = vunpack.c.l.b16 %v936
    %v2096 = vunpack.c.l.b16 %v937
    %v2097 = vunpack.c.h.b16 %v937
    %v2098 = vunpack.c.l.b16 %v938
    %v2099 = vunpack.c.h.b16 %v938
    %v2100 = vunpack.c.l.b16 %v939
    %v2101 = vunpack.c.l.b16 %v940
    %v2102 = vunpack.c.h.b16 %v940
    %v2103 = vunpack.c.l.b16 %v941
    %v2104 = vunpack.c.h.b16 %v941
    %v2105 = vunpack.c.l.b16 %v942
    %v2106 = vunpack.c.l.b16 %v943
    %v2107 = vunpack.c.h.b16 %v943
    %v2108 = vunpack.c.l.b16 %v944
    %v2109 = vunpack.c.h.b16 %v944
    %v2110 = vunpack.c.l.b16 %v945
    %v2111 = vunpack.c.l.b16 %v946
    %v2112 = vunpack.c.h.b16 %v946
    %v2113 = vunpack.c.l.b16 %v947
    %v2114 = vunpack.c.h.b16 %v947
    %v2115 = vunpack.c.l.b16 %v948
    %v2116 = vunpack.c.l.b16 %v949
    %v2117 = vunpack.c.h.b16 %v949
    %v2118 = vunpack.c.l.b16 %v950
    %v2119 = vunpack.c.h.b16 %v950
    %v2120 = vunpack.c.l.b16 %v951
    %v2121 = vunpack.c.l.b16 %v952
    %v2122 = vunpack.c.h.b16 %v952
    %v2123 = vunpack.c.l.b16 %v953
    %v2124 = vunpack.c.h.b16 %v953
    %v2125 = vunpack.c.l.b16 %v954
    %v2126 = vunpack.c.l.b16 %v955
    %v2127 = vunpack.c.h.b16 %v955
    %v2128 = vunpack.c.l.b16 %v956
    %v2129 = vunpack.c.h.b16 %v956
    %v2130 = vunpack.c.l.b16 %v957
    %v2131 = vunpack.c.l.b16 %v958
    %v2132 = vunpack.c.h.b16 %v958
    %v2133 = vunpack.c.l.b16 %v959
    %v2134 = vunpack.c.h.b16 %v959
    %v2135 = vunpack.c.l.b16 %v960
    %v2136 = vunpack.c.l.b16 %v961
    %v2137 = vunpack.c.h.b16 %v961
    %v2138 = vunpack.c.l.b16 %v962
    %v2139 = vunpack.c.h.b16 %v962
    %v2140 = vunpack.c.l.b16 %v963
    %v2141 = vunpack.c.l.b16 %v964
    %v2142 = vunpack.c.h.b16 %v964
    %v2143 = vunpack.c.l.b16 %v965
    %v2144 = vunpack.c.h.b16 %v965
    %v2145 = vunpack.c.l.b16 %v966
    %v2146 = vpack.c.b16 %v1431, %v1426
    %v2147 = vpack.c.b16 %v1432, %v1427
    %v2148 = vpack.c.b16 %v1433, %v1428
    %v2149 = vpack.c.b16 %v1434, %v1429
    %v2150 = vpack.c.b16 %v1435, %v1430
    %v2151 = vpack.c.b16 %v1441, %v1436
    %v2152 = vpack.c.b16 %v1442, %v1437
    %v2153 = vpack.c.b16 %v1443, %v1438
    %v2154 = vpack.c.b16 %v1444, %v1439
    %v2155 = vpack.c.b16 %v1445, %v1440
    %v2156 = vpack.c.b16 %v1451, %v1446
    %v2157 = vpack.c.b16 %v1452, %v1447
    %v2158 = vpack.c.b16 %v1453, %v1448
    %v2159 = vpack.c.b16 %v1454, %v1449
    %v2160 = vpack.c.b16 %v1455, %v1450
    %v2161 = vpack.c.b16 %v1461, %v1456
    %v2162 = vpack.c.b16 %v1462, %v1457
    %v2163 = vpack.c.b16 %v1463, %v1458
    %v2164 = vpack.c.b16 %v1464, %v1459
    %v2165 = vpack.c.b16 %v1465, %v1460
    %v2166 = vpack.c.b16 %v1471, %v1466
    %v2167 = vpack.c.b16 %v1472, %v1467
    %v2168 = vpack.c.b16 %v1473, %v1468
    %v2169 = vpack.c.b16 %v1474, %v1469
    %v2170 = vpack.c.b16 %v1475, %v1470
    %v2171 = vpack.c.b16 %v1481, %v1476
    %v2172 = vpack.c.b16 %v1482, %v1477
    %v2173 = vpack.c.b16 %v1483, %v1478
    %v2174 = vpack.c.b16 %v1484, %v1479
    %v2175 = vpack.c.b16 %v1485, %v1480
    %v2176 = vpack.c.b16 %v1491, %v1486
    %v2177 = vpack.c.b16 %v1492, %v1487
    %v2178 = vpack.c.b16 %v1493, %v1488
    %v2179 = vpack.c.b16 %v1494, %v1489
    %v2180 = vpack.c.b16 %v1495, %v1490
    %v2181 = vpack.c.b16 %v1501, %v1496
    %v2182 = vpack.c.b16 %v1502, %v1497
    %v2183 = vpack.c.b16 %v1503, %v1498
    %v2184 = vpack.c.b16 %v1504, %v1499
    %v2185 = vpack.c.b16 %v1505, %v1500
    %v2186 = vpack.c.b16 %v1511, %v1506
    %v2187 = vpack.c.b16 %v1512, %v1507
    %v2188 = vpack.c.b16 %v1513, %v1508
    %v2189 = vpack.c.b16 %v1514, %v1509
    %v2190 = vpack.c.b16 %v1515, %v1510
    %v2191 = vpack.c.b16 %v1521, %v1516
    %v2192 = vpack.c.b16 %v1522, %v1517
    %v2193 = vpack.c.b16 %v1523, %v1518
    %v2194 = vpack.c.b16 %v1524, %v1519
    %v2195 = vpack.c.b16 %v1525, %v1520
    %v2196 = vpack.c.b16 %v1531, %v1526
    %v2197 = vpack.c.b16 %v1532, %v1527
    %v2198 = vpack.c.b16 %v1533, %v1528
    %v2199 = vpack.c.b16 %v1534, %v1529
    %v2200 = vpack.c.b16 %v1535, %v1530
    %v2201 = vpack.c.b16 %v1541, %v1536
    %v2202 = vpack.c.b16 %v1542, %v1537
    %v2203 = vpack.c.b16 %v1543, %v1538
    %v2204 = vpack.c.b16 %v1544, %v1539
    %v2205 = vpack.c.b16 %v1545, %v1540
    %v2206 = vpack.c.b16 %v1551, %v1546
    %v2207 = vpack.c.b16 %v1552, %v1547
    %v2208 = vpack.c.b16 %v1553, %v1548
    %v2209 = vpack.c.b16 %v1554, %v1549
    %v2210 = vpack.c.b16 %v1555, %v1550
    %v2211 = vpack.c.b16 %v1561, %v1556
    %v2212 = vpack.c.b16 %v1562, %v1557
    %v2213 = vpack.c.b16 %v1563, %v1558
    %v2214 = vpack.c.b16 %v1564, %v1559
    %v2215 = vpack.c.b16 %v1565, %v1560
    %v2216 = vpack.c.b16 %v1571, %v1566
    %v2217 = vpack.c.b16 %v1572, %v1567
    %v2218 = vpack.c.b16 %v1573, %v1568
    %v2219 = vpack.c.b16 %v1574, %v1569
    %v2220 = vpack.c.b16 %v1575, %v1570
    %v2221 = vpack.c.b16 %v1581, %v1576
    %v2222 = vpack.c.b16 %v1582, %v1577
    %v2223 = vpack.c.b16 %v1583, %v1578
    %v2224 = vpack.c.b16 %v1584, %v1579
    %v2225 = vpack.c.b16 %v1585, %v1580
    %v2226 = vpack.c.b16 %v1591, %v1586
    %v2227 = vpack.c.b16 %v1592, %v1587
    %v2228 = vpack.c.b16 %v1593, %v1588
    %v2229 = vpack.c.b16 %v1594, %v1589
    %v2230 = vpack.c.b16 %v1595, %v1590
    %v2231 = vpack.c.b16 %v1601, %v1596
    %v2232 = vpack.c.b16 %v1602, %v1597
    %v2233 = vpack.c.b16 %v1603, %v1598
    %v2234 = vpack.c.b16 %v1604, %v1599
    %v2235 = vpack.c.b16 %v1605, %v1600
    %v2236 = vpack.c.b16 %v1611, %v1606
    %v2237 = vpack.c.b16 %v1612, %v1607
    %v2238 = vpack.c.b16 %v1613, %v1608
    %v2239 = vpack.c.b16 %v1614, %v1609
    %v2240 = vpack.c.b16 %v1615, %v1610
    %v2241 = vpack.c.b16 %v1621, %v1616
    %v2242 = vpack.c.b16 %v1622, %v1617
    %v2243 = vpack.c.b16 %v1623, %v1618
    %v2244 = vpack.c.b16 %v1624, %v1619
    %v2245 = vpack.c.b16 %v1625, %v1620
    %v2246 = vpack.c.b16 %v1631, %v1626
    %v2247 = vpack.c.b16 %v1632, %v1627
    %v2248 = vpack.c.b16 %v1633, %v1628
    %v2249 = vpack.c.b16 %v1634, %v1629
    %v2250 = vpack.c.b16 %v1635, %v1630
    %v2251 = vpack.c.b16 %v1641, %v1636
    %v2252 = vpack.c.b16 %v1642, %v1637
    %v2253 = vpack.c.b16 %v1643, %v1638
    %v2254 = vpack.c.b16 %v1644, %v1639
    %v2255 = vpack.c.b16 %v1645, %v1640
    %v2256 = vpack.c.b16 %v1651, %v1646
    %v2257 = vpack.c.b16 %v1652, %v1647
    %v2258 = vpack.c.b16 %v1653, %v1648
    %v2259 = vpack.c.b16 %v1654, %v1649
    %v2260 = vpack.c.b16 %v1655, %v1650
    %v2261 = vpack.c.b16 %v1661, %v1656
    %v2262 = vpack.c.b16 %v1662, %v1657
    %v2263 = vpack.c.b16 %v1663, %v1658
    %v2264 = vpack.c.b16 %v1664, %v1659
    %v2265 = vpack.c.b16 %v1665, %v1660
    %v2266 = vpack.c.b16 %v1671, %v1666
    %v2267 = vpack.c.b16 %v1672, %v1667
    %v2268 = vpack.c.b16 %v1673, %v1668
    %v2269 = vpack.c.b16 %v1674, %v1669
    %v2270 = vpack.c.b16 %v1675, %v1670
    %v2271 = vpack.c.b16 %v1681, %v1676
    %v2272 = vpack.c.b16 %v1682, %v1677
    %v2273 = vpack.c.b16 %v1683, %v1678
    %v2274 = vpack.c.b16 %v1684, %v1679
    %v2275 = vpack.c.b16 %v1685, %v1680
    %v2276 = vpack.c.b16 %v1691, %v1686
    %v2277 = vpack.c.b16 %v1692, %v1687
    %v2278 = vpack.c.b16 %v1693, %v1688
    %v2279 = vpack.c.b16 %v1694, %v1689
    %v2280 = vpack.c.b16 %v1695, %v1690
    %v2281 = vpack.c.b16 %v1701, %v1696
    %v2282 = vpack.c.b16 %v1702, %v1697
    %v2283 = vpack.c.b16 %v1703, %v1698
    %v2284 = vpack.c.b16 %v1704, %v1699
    %v2285 = vpack.c.b16 %v1705, %v1700
    %v2286 = vpack.c.b16 %v1711, %v1706
    %v2287 = vpack.c.b16 %v1712, %v1707
    %v2288 = vpack.c.b16 %v1713, %v1708
    %v2289 = vpack.c.b16 %v1714, %v1709
    %v2290 = vpack.c.b16 %v1715, %v1710
    %v2291 = vpack.c.b16 %v1721, %v1716
    %v2292 = vpack.c.b16 %v1722, %v1717
    %v2293 = vpack.c.b16 %v1723, %v1718
    %v2294 = vpack.c.b16 %v1724, %v1719
    %v2295 = vpack.c.b16 %v1725, %v1720
    %v2296 = vpack.c.b16 %v1731, %v1726
    %v2297 = vpack.c.b16 %v1732, %v1727
    %v2298 = vpack.c.b16 %v1733, %v1728
    %v2299 = vpack.c.b16 %v1734, %v1729
    %v2300 = vpack.c.b16 %v1735, %v1730
    %v2301 = vpack.c.b16 %v1741, %v1736
    %v2302 = vpack.c.b16 %v1742, %v1737
    %v2303 = vpack.c.b16 %v1743, %v1738
    %v2304 = vpack.c.b16 %v1744, %v1739
    %v2305 = vpack.c.b16 %v1745, %v1740
    %v2306 = vpack.c.b16 %v1751, %v1746
    %v2307 = vpack.c.b16 %v1752, %v1747
    %v2308 = vpack.c.b16 %v1753, %v1748
    %v2309 = vpack.c.b16 %v1754, %v1749
    %v2310 = vpack.c.b16 %v1755, %v1750
    %v2311 = vpack.c.b16 %v1761, %v1756
    %v2312 = vpack.c.b16 %v1762, %v1757
    %v2313 = vpack.c.b16 %v1763, %v1758
    %v2314 = vpack.c.b16 %v1764, %v1759
    %v2315 = vpack.c.b16 %v1765, %v1760
    %v2316 = vpack.c.b16 %v1771, %v1766
    %v2317 = vpack.c.b16 %v1772, %v1767
    %v2318 = vpack.c.b16 %v1773, %v1768
    %v2319 = vpack.c.b16 %v1774, %v1769
    %v2320 = vpack.c.b16 %v1775, %v1770
    %v2321 = vpack.c.b16 %v1781, %v1776
    %v2322 = vpack.c.b16 %v1782, %v1777
    %v2323 = vpack.c.b16 %v1783, %v1778
    %v2324 = vpack.c.b16 %v1784, %v1779
    %v2325 = vpack.c.b16 %v1785, %v1780
    %v2326 = vpack.c.b16 %v1791, %v1786
    %v2327 = vpack.c.b16 %v1792, %v1787
    %v2328 = vpack.c.b16 %v1793, %v1788
    %v2329 = vpack.c.b16 %v1794, %v1789
    %v2330 = vpack.c.b16 %v1795, %v1790
    %v2331 = vpack.c.b16 %v1801, %v1796
    %v2332 = vpack.c.b16 %v1802, %v1797
    %v2333 = vpack.c.b16 %v1803, %v1798
    %v2334 = vpack.c.b16 %v1804, %v1799
    %v2335 = vpack.c.b16 %v1805, %v1800
    %v2336 = vpack.c.b16 %v1811, %v1806
    %v2337 = vpack.c.b16 %v1812, %v1807
    %v2338 = vpack.c.b16 %v1813, %v1808
    %v2339 = vpack.c.b16 %v1814, %v1809
    %v2340 = vpack.c.b16 %v1815, %v1810
    %v2341 = vpack.c.b16 %v1821, %v1816
    %v2342 = vpack.c.b16 %v1822, %v1817
    %v2343 = vpack.c.b16 %v1823, %v1818
    %v2344 = vpack.c.b16 %v1824, %v1819
    %v2345 = vpack.c.b16 %v1825, %v1820
    %v2346 = vpack.c.b16 %v1831, %v1826
    %v2347 = vpack.c.b16 %v1832, %v1827
    %v2348 = vpack.c.b16 %v1833, %v1828
    %v2349 = vpack.c.b16 %v1834, %v1829
    %v2350 = vpack.c.b16 %v1835, %v1830
    %v2351 = vpack.c.b16 %v1841, %v1836
    %v2352 = vpack.c.b16 %v1842, %v1837
    %v2353 = vpack.c.b16 %v1843, %v1838
    %v2354 = vpack.c.b16 %v1844, %v1839
    %v2355 = vpack.c.b16 %v1845, %v1840
    %v2356 = vpack.c.b16 %v1851, %v1846
    %v2357 = vpack.c.b16 %v1852, %v1847
    %v2358 = vpack.c.b16 %v1853, %v1848
    %v2359 = vpack.c.b16 %v1854, %v1849
    %v2360 = vpack.c.b16 %v1855, %v1850
    %v2361 = vpack.c.b16 %v1861, %v1856
    %v2362 = vpack.c.b16 %v1862, %v1857
    %v2363 = vpack.c.b16 %v1863, %v1858
    %v2364 = vpack.c.b16 %v1864, %v1859
    %v2365 = vpack.c.b16 %v1865, %v1860
    %v2366 = vpack.c.b16 %v1871, %v1866
    %v2367 = vpack.c.b16 %v1872, %v1867
    %v2368 = vpack.c.b16 %v1873, %v1868
    %v2369 = vpack.c.b16 %v1874, %v1869
    %v2370 = vpack.c.b16 %v1875, %v1870
    %v2371 = vpack.c.b16 %v1881, %v1876
    %v2372 = vpack.c.b16 %v1882, %v1877
    %v2373 = vpack.c.b16 %v1883, %v1878
    %v2374 = vpack.c.b16 %v1884, %v1879
    %v2375 = vpack.c.b16 %v1885, %v1880
    %v2376 = vpack.c.b16 %v1891, %v1886
    %v2377 = vpack.c.b16 %v1892, %v1887
    %v2378 = vpack.c.b16 %v1893, %v1888
    %v2379 = vpack.c.b16 %v1894, %v1889
    %v2380 = vpack.c.b16 %v1895, %v1890
    %v2381 = vpack.c.b16 %v1901, %v1896
    %v2382 = vpack.c.b16 %v1902, %v1897
    %v2383 = vpack.c.b16 %v1903, %v1898
    %v2384 = vpack.c.b16 %v1904, %v1899
    %v2385 = vpack.c.b16 %v1905, %v1900
    %v2386 = vpack.c.b16 %v1911, %v1906
    %v2387 = vpack.c.b16 %v1912, %v1907
    %v2388 = vpack.c.b16 %v1913, %v1908
    %v2389 = vpack.c.b16 %v1914, %v1909
    %v2390 = vpack.c.b16 %v1915, %v1910
    %v2391 = vpack.c.b16 %v1921, %v1916
    %v2392 = vpack.c.b16 %v1922, %v1917
    %v2393 = vpack.c.b16 %v1923, %v1918
    %v2394 = vpack.c.b16 %v1924, %v1919
    %v2395 = vpack.c.b16 %v1925, %v1920
    %v2396 = vpack.c.b16 %v1931, %v1926
    %v2397 = vpack.c.b16 %v1932, %v1927
    %v2398 = vpack.c.b16 %v1933, %v1928
    %v2399 = vpack.c.b16 %v1934, %v1929
    %v2400 = vpack.c.b16 %v1935, %v1930
    %v2401 = vpack.c.b16 %v1941, %v1936
    %v2402 = vpack.c.b16 %v1942, %v1937
    %v2403 = vpack.c.b16 %v1943, %v1938
    %v2404 = vpack.c.b16 %v1944, %v1939
    %v2405 = vpack.c.b16 %v1945, %v1940
    %v2406 = vpack.c.b16 %v1951, %v1946
    %v2407 = vpack.c.b16 %v1952, %v1947
    %v2408 = vpack.c.b16 %v1953, %v1948
    %v2409 = vpack.c.b16 %v1954, %v1949
    %v2410 = vpack.c.b16 %v1955, %v1950
    %v2411 = vpack.c.b16 %v1961, %v1956
    %v2412 = vpack.c.b16 %v1962, %v1957
    %v2413 = vpack.c.b16 %v1963, %v1958
    %v2414 = vpack.c.b16 %v1964, %v1959
    %v2415 = vpack.c.b16 %v1965, %v1960
    %v2416 = vpack.c.b16 %v1971, %v1966
    %v2417 = vpack.c.b16 %v1972, %v1967
    %v2418 = vpack.c.b16 %v1973, %v1968
    %v2419 = vpack.c.b16 %v1974, %v1969
    %v2420 = vpack.c.b16 %v1975, %v1970
    %v2421 = vpack.c.b16 %v1981, %v1976
    %v2422 = vpack.c.b16 %v1982, %v1977
    %v2423 = vpack.c.b16 %v1983, %v1978
    %v2424 = vpack.c.b16 %v1984, %v1979
    %v2425 = vpack.c.b16 %v1985, %v1980
    %v2426 = vpack.c.b16 %v1991, %v1986
    %v2427 = vpack.c.b16 %v1992, %v1987
    %v2428 = vpack.c.b16 %v1993, %v1988
    %v2429 = vpack.c.b16 %v1994, %v1989
    %v2430 = vpack.c.b16 %v1995, %v1990
    %v2431 = vpack.c.b16 %v2001, %v1996
    %v2432 = vpack.c.b16 %v2002, %v1997
    %v2433 = vpack.c.b16 %v2003, %v1998
    %v2434 = vpack.c.b16 %v2004, %v1999
    %v2435 = vpack.c.b16 %v2005, %v2000
    %v2436 = vpack.c.b16 %v2011, %v2006
    %v2437 = vpack.c.b16 %v2012, %v2007
    %v2438 = vpack.c.b16 %v2013, %v2008
    %v2439 = vpack.c.b16 %v2014, %v2009
    %v2440 = vpack.c.b16 %v2015, %v2010
    %v2441 = vpack.c.b16 %v2021, %v2016
    %v2442 = vpack.c.b16 %v2022, %v2017
    %v2443 = vpack.c.b16 %v2023, %v2018
    %v2444 = vpack.c.b16 %v2024, %v2019
    %v2445 = vpack.c.b16 %v2025, %v2020
    %v2446 = vpack.c.b16 %v2031, %v2026
    %v2447 = vpack.c.b16 %v2032, %v2027
    %v2448 = vpack.c.b16 %v2033, %v2028
    %v2449 = vpack.c.b16 %v2034, %v2029
    %v2450 = vpack.c.b16 %v2035, %v2030
    %v2451 = vpack.c.b16 %v2041, %v2036
    %v2452 = vpack.c.b16 %v2042, %v2037
    %v2453 = vpack.c.b16 %v2043, %v2038
    %v2454 = vpack.c.b16 %v2044, %v2039
    %v2455 = vpack.c.b16 %v2045, %v2040
    %v2456 = vpack.c.b16 %v2051, %v2046
    %v2457 = vpack.c.b16 %v2052, %v2047
    %v2458 = vpack.c.b16 %v2053, %v2048
    %v2459 = vpack.c.b16 %v2054, %v2049
    %v2460 = vpack.c.b16 %v2055, %v2050
    %v2461 = vpack.c.b16 %v2061, %v2056
    %v2462 = vpack.c.b16 %v2062, %v2057
    %v2463 = vpack.c.b16 %v2063, %v2058
    %v2464 = vpack.c.b16 %v2064, %v2059
    %v2465 = vpack.c.b16 %v2065, %v2060
    %v2466 = vpack.c.b16 %v2071, %v2066
    %v2467 = vpack.c.b16 %v2072, %v2067
    %v2468 = vpack.c.b16 %v2073, %v2068
    %v2469 = vpack.c.b16 %v2074, %v2069
    %v2470 = vpack.c.b16 %v2075, %v2070
    %v2471 = vpack.c.b16 %v2081, %v2076
    %v2472 = vpack.c.b16 %v2082, %v2077
    %v2473 = vpack.c.b16 %v2083, %v2078
    %v2474 = vpack.c.b16 %v2084, %v2079
    %v2475 = vpack.c.b16 %v2085, %v2080
    %v2476 = vpack.c.b16 %v2091, %v2086
    %v2477 = vpack.c.b16 %v2092, %v2087
    %v2478 = vpack.c.b16 %v2093, %v2088
    %v2479 = vpack.c.b16 %v2094, %v2089
    %v2480 = vpack.c.b16 %v2095, %v2090
    %v2481 = vpack.c.b16 %v2101, %v2096
    %v2482 = vpack.c.b16 %v2102, %v2097
    %v2483 = vpack.c.b16 %v2103, %v2098
    %v2484 = vpack.c.b16 %v2104, %v2099
    %v2485 = vpack.c.b16 %v2105, %v2100
    %v2486 = vpack.c.b16 %v2111, %v2106
    %v2487 = vpack.c.b16 %v2112, %v2107
    %v2488 = vpack.c.b16 %v2113, %v2108
    %v2489 = vpack.c.b16 %v2114, %v2109
    %v2490 = vpack.c.b16 %v2115, %v2110
    %v2491 = vpack.c.b16 %v2121, %v2116
    %v2492 = vpack.c.b16 %v2122, %v2117
    %v2493 = vpack.c.b16 %v2123, %v2118
    %v2494 = vpack.c.b16 %v2124, %v2119
    %v2495 = vpack.c.b16 %v2125, %v2120
    %v2496 = vpack.c.b16 %v2131, %v2126
    %v2497 = vpack.c.b16 %v2132, %v2127
    %v2498 = vpack.c.b16 %v2133, %v2128
    %v2499 = vpack.c.b16 %v2134, %v2129
    %v2500 = vpack.c.b16 %v2135, %v2130
    %v2501 = vpack.c.b16 %v2141, %v2136
    %v2502 = vpack.c.b16 %v2142, %v2137
    %v2503 = vpack.c.b16 %v2143, %v2138
    %v2504 = vpack.c.b16 %v2144, %v2139
    %v2505 = vpack.c.b16 %v2145, %v2140
    %2866 = vmatprep.subr.bf16.mxu0 %v2147
    %2867 = vmatpush1.bf16.msra.mxu0 %v2146
    %2868 = vmatprep.subr.bf16.mxu0 %v2152
    %2869 = vmatpush1.bf16.msra.mxu0 %v2151
    %2870 = vmatprep.subr.bf16.mxu0 %v2157
    %2871 = vmatpush1.bf16.msra.mxu0 %v2156
    %2872 = vmatprep.subr.bf16.mxu0 %v2162
    %2873 = vmatpush1.bf16.msra.mxu0 %v2161
    %2874 = vmatprep.subr.bf16.mxu0 %v2167
    %2875 = vmatpush1.bf16.msra.mxu0 %v2166
    %2876 = vmatprep.subr.bf16.mxu0 %v2172
    %2877 = vmatpush1.bf16.msra.mxu0 %v2171
    %2878 = vmatprep.subr.bf16.mxu0 %v2177
    %2879 = vmatpush1.bf16.msra.mxu0 %v2176
    %2880 = vmatprep.subr.bf16.mxu0 %v2182
    %2881 = vmatpush1.bf16.msra.mxu0 %v2181
    %2882 = vmatprep.subr.bf16.mxu0 %v2187
    %2883 = vmatpush1.bf16.msra.mxu0 %v2186
    %2884 = vmatprep.subr.bf16.mxu0 %v2192
    %2885 = vmatpush1.bf16.msra.mxu0 %v2191
    %2886 = vmatprep.subr.bf16.mxu0 %v2197
    %2887 = vmatpush1.bf16.msra.mxu0 %v2196
    %2888 = vmatprep.subr.bf16.mxu0 %v2202
    %2889 = vmatpush1.bf16.msra.mxu0 %v2201
    %2890 = vmatprep.subr.bf16.mxu0 %v2207
    %2891 = vmatpush1.bf16.msra.mxu0 %v2206
    %2892 = vmatprep.subr.bf16.mxu0 %v2212
    %2893 = vmatpush1.bf16.msra.mxu0 %v2211
    %2894 = vmatprep.subr.bf16.mxu0 %v2217
    %2895 = vmatpush1.bf16.msra.mxu0 %v2216
    %2896 = vmatprep.subr.bf16.mxu0 %v2222
    %2897 = vmatpush1.bf16.msra.mxu0 %v2221
    %2898 = vmatprep.mubr.bf16.mxu0 %v527
    %2899 = vmatmul.mubr.bf16.gmra.mrb[0].mxu0 %v526
    %v2900 = vpop.f32.mrb[0].mxu0
    %v2901 = vadd.f32 %v972, %v2900
    %v2902 = vpop.f32.mrb[0].mxu0
    %v2903 = vadd.f32 %v976, %v2902
    %v2904 = vpop.f32.mrb[0].mxu0
    %v2905 = vpop.f32.mrb[0].mxu0
    %2906 = vdwg.mxu0
    %2907 = vmatprep.subr.bf16.mxu0 %v2227
    %2908 = vmatpush1.bf16.msra.mxu0 %v2226
    %2909 = vmatprep.subr.bf16.mxu0 %v2232
    %2910 = vmatpush1.bf16.msra.mxu0 %v2231
    %2911 = vmatprep.subr.bf16.mxu0 %v2237
    %2912 = vmatpush1.bf16.msra.mxu0 %v2236
    %2913 = vmatprep.subr.bf16.mxu0 %v2242
    %2914 = vmatpush1.bf16.msra.mxu0 %v2241
    %2915 = vmatprep.subr.bf16.mxu0 %v2247
    %2916 = vmatpush1.bf16.msra.mxu0 %v2246
    %2917 = vmatprep.subr.bf16.mxu0 %v2252
    %2918 = vmatpush1.bf16.msra.mxu0 %v2251
    %2919 = vmatprep.subr.bf16.mxu0 %v2257
    %2920 = vmatpush1.bf16.msra.mxu0 %v2256
    %2921 = vmatprep.subr.bf16.mxu0 %v2262
    %2922 = vmatpush1.bf16.msra.mxu0 %v2261
    %2923 = vmatprep.subr.bf16.mxu0 %v2267
    %2924 = vmatpush1.bf16.msra.mxu0 %v2266
    %2925 = vmatprep.subr.bf16.mxu0 %v2272
    %2926 = vmatpush1.bf16.msra.mxu0 %v2271
    %2927 = vmatprep.subr.bf16.mxu0 %v2277
    %2928 = vmatpush1.bf16.msra.mxu0 %v2276
    %2929 = vmatprep.subr.bf16.mxu0 %v2282
    %2930 = vmatpush1.bf16.msra.mxu0 %v2281
    %2931 = vmatprep.subr.bf16.mxu0 %v2287
    %2932 = vmatpush1.bf16.msra.mxu0 %v2286
    %2933 = vmatprep.subr.bf16.mxu0 %v2292
    %2934 = vmatpush1.bf16.msra.mxu0 %v2291
    %2935 = vmatprep.subr.bf16.mxu0 %v2297
    %2936 = vmatpush1.bf16.msra.mxu0 %v2296
    %2937 = vmatprep.subr.bf16.mxu0 %v2302
    %2938 = vmatpush1.bf16.msra.mxu0 %v2301
    %2939 = vmatprep.mubr.bf16.mxu0 %v529
    %2940 = vmatmul.mubr.bf16.gmra.mrb[0].mxu0 %v528
    %v2941 = vpop.f32.mrb[0].mxu0
    %v2942 = vadd.f32 %v2901, %v2941
    %v2943 = vpop.f32.mrb[0].mxu0
    %v2944 = vadd.f32 %v2903, %v2943
    %v2945 = vpop.f32.mrb[0].mxu0
    %v2946 = vpop.f32.mrb[0].mxu0
    %2947 = vdwg.mxu0
    %2948 = vmatprep.subr.bf16.mxu0 %v2307
    %2949 = vmatpush1.bf16.msra.mxu0 %v2306
    %2950 = vmatprep.subr.bf16.mxu0 %v2312
    %2951 = vmatpush1.bf16.msra.mxu0 %v2311
    %2952 = vmatprep.subr.bf16.mxu0 %v2317
    %2953 = vmatpush1.bf16.msra.mxu0 %v2316
    %2954 = vmatprep.subr.bf16.mxu0 %v2322
    %2955 = vmatpush1.bf16.msra.mxu0 %v2321
    %2956 = vmatprep.subr.bf16.mxu0 %v2327
    %2957 = vmatpush1.bf16.msra.mxu0 %v2326
    %2958 = vmatprep.subr.bf16.mxu0 %v2332
    %2959 = vmatpush1.bf16.msra.mxu0 %v2331
    %2960 = vmatprep.subr.bf16.mxu0 %v2337
    %2961 = vmatpush1.bf16.msra.mxu0 %v2336
    %2962 = vmatprep.subr.bf16.mxu0 %v2342
    %2963 = vmatpush1.bf16.msra.mxu0 %v2341
    %2964 = vmatprep.subr.bf16.mxu0 %v2347
    %2965 = vmatpush1.bf16.msra.mxu0 %v2346
    %2966 = vmatprep.subr.bf16.mxu0 %v2352
    %2967 = vmatpush1.bf16.msra.mxu0 %v2351
    %2968 = vmatprep.subr.bf16.mxu0 %v2357
    %2969 = vmatpush1.bf16.msra.mxu0 %v2356
    %2970 = vmatprep.subr.bf16.mxu0 %v2362
    %2971 = vmatpush1.bf16.msra.mxu0 %v2361
    %2972 = vmatprep.subr.bf16.mxu0 %v2367
    %2973 = vmatpush1.bf16.msra.mxu0 %v2366
    %2974 = vmatprep.subr.bf16.mxu0 %v2372
    %2975 = vmatpush1.bf16.msra.mxu0 %v2371
    %2976 = vmatprep.subr.bf16.mxu0 %v2377
    %2977 = vmatpush1.bf16.msra.mxu0 %v2376
    %2978 = vmatprep.subr.bf16.mxu0 %v2382
    %2979 = vmatpush1.bf16.msra.mxu0 %v2381
    %2980 = vmatprep.mubr.bf16.mxu0 %v531
    %2981 = vmatmul.mubr.bf16.gmra.mrb[0].mxu0 %v530
    %v2982 = vpop.f32.mrb[0].mxu0
    %v2983 = vadd.f32 %v2942, %v2982
    %v2984 = vpop.f32.mrb[0].mxu0
    %v2985 = vadd.f32 %v2944, %v2984
    %v2986 = vpop.f32.mrb[0].mxu0
    %v2987 = vpop.f32.mrb[0].mxu0
    %2988 = vdwg.mxu0
    %2989 = vmatprep.subr.bf16.mxu0 %v2387
    %2990 = vmatpush1.bf16.msra.mxu0 %v2386
    %2991 = vmatprep.subr.bf16.mxu0 %v2392
    %2992 = vmatpush1.bf16.msra.mxu0 %v2391
    %2993 = vmatprep.subr.bf16.mxu0 %v2397
    %2994 = vmatpush1.bf16.msra.mxu0 %v2396
    %2995 = vmatprep.subr.bf16.mxu0 %v2402
    %2996 = vmatpush1.bf16.msra.mxu0 %v2401
    %2997 = vmatprep.subr.bf16.mxu0 %v2407
    %2998 = vmatpush1.bf16.msra.mxu0 %v2406
    %2999 = vmatprep.subr.bf16.mxu0 %v2412
    %3000 = vmatpush1.bf16.msra.mxu0 %v2411
    %3001 = vmatprep.subr.bf16.mxu0 %v2417
    %3002 = vmatpush1.bf16.msra.mxu0 %v2416
    %3003 = vmatprep.subr.bf16.mxu0 %v2422
    %3004 = vmatpush1.bf16.msra.mxu0 %v2421
    %3005 = vmatprep.subr.bf16.mxu0 %v2427
    %3006 = vmatpush1.bf16.msra.mxu0 %v2426
    %3007 = vmatprep.subr.bf16.mxu0 %v2432
    %3008 = vmatpush1.bf16.msra.mxu0 %v2431
    %3009 = vmatprep.subr.bf16.mxu0 %v2437
    %3010 = vmatpush1.bf16.msra.mxu0 %v2436
    %3011 = vmatprep.subr.bf16.mxu0 %v2442
    %3012 = vmatpush1.bf16.msra.mxu0 %v2441
    %3013 = vmatprep.subr.bf16.mxu0 %v2447
    %3014 = vmatpush1.bf16.msra.mxu0 %v2446
    %3015 = vmatprep.subr.bf16.mxu0 %v2452
    %3016 = vmatpush1.bf16.msra.mxu0 %v2451
    %3017 = vmatprep.subr.bf16.mxu0 %v2457
    %3018 = vmatpush1.bf16.msra.mxu0 %v2456
    %3019 = vmatprep.subr.bf16.mxu0 %v2462
    %3020 = vmatpush1.bf16.msra.mxu0 %v2461
    %3021 = vmatprep.mubr.bf16.mxu0 %v533
    %3022 = vmatmul.mubr.bf16.gmra.mrb[0].mxu0 %v532
    %v3023 = vpop.f32.mrb[0].mxu0
    %v3024 = vadd.f32 %v2983, %v3023
    %v3025 = vpop.f32.mrb[0].mxu0
    %v3026 = vadd.f32 %v2985, %v3025
    %v3027 = vpop.f32.mrb[0].mxu0
    %v3028 = vpop.f32.mrb[0].mxu0
    %3029 = vdwg.mxu0
    %3030 = vmatprep.subr.bf16.mxu0 %v2467
    %3031 = vmatpush1.bf16.msra.mxu0 %v2466
    %3032 = vmatprep.subr.bf16.mxu0 %v2472
    %3033 = vmatpush1.bf16.msra.mxu0 %v2471
    %3034 = vmatprep.subr.bf16.mxu0 %v2477
    %3035 = vmatpush1.bf16.msra.mxu0 %v2476
    %3036 = vmatprep.subr.bf16.mxu0 %v2482
    %3037 = vmatpush1.bf16.msra.mxu0 %v2481
    %3038 = vmatprep.subr.bf16.mxu0 %v2487
    %3039 = vmatpush1.bf16.msra.mxu0 %v2486
    %3040 = vmatprep.subr.bf16.mxu0 %v2492
    %3041 = vmatpush1.bf16.msra.mxu0 %v2491
    %3042 = vmatprep.subr.bf16.mxu0 %v2497
    %3043 = vmatpush1.bf16.msra.mxu0 %v2496
    %3044 = vmatprep.subr.bf16.mxu0 %v2502
    %3045 = vmatpush1.bf16.msra.mxu0 %v2501
    %3046 = vmatprep.subr.bf16.mxu0 0
    %3047 = vmatpush1.bf16.msra.mxu0 0
    %3048 = vmatprep.subr.bf16.mxu0 0
    %3049 = vmatpush1.bf16.msra.mxu0 0
    %3050 = vmatprep.subr.bf16.mxu0 0
    %3051 = vmatpush1.bf16.msra.mxu0 0
    %3052 = vmatprep.subr.bf16.mxu0 0
    %3053 = vmatpush1.bf16.msra.mxu0 0
    %3054 = vmatprep.subr.bf16.mxu0 0
    %3055 = vmatpush1.bf16.msra.mxu0 0
    %3056 = vmatprep.subr.bf16.mxu0 0
    %3057 = vmatpush1.bf16.msra.mxu0 0
    %3058 = vmatprep.subr.bf16.mxu0 0
    %3059 = vmatpush1.bf16.msra.mxu0 0
    %3060 = vmatprep.subr.bf16.mxu0 0
    %3061 = vmatpush1.bf16.msra.mxu0 0
    %3062 = vmatprep.mubr.bf16.mxu0 0
    %3063 = vmatmul.mubr.bf16.gmra.mrb[0].mxu0 %v534
    %v3064 = vpop.f32.mrb[0].mxu0
    %v3065 = vadd.f32 %v3024, %v3064
    %v3066 = vpop.f32.mrb[0].mxu0
    %v3067 = vadd.f32 %v3026, %v3066
    %v3068 = vpop.f32.mrb[0].mxu0
    %v3069 = vpop.f32.mrb[0].mxu0
    %3070 = vdwg.mxu0
    %3071 = vmatprep.subr.bf16.mxu0 %v2149
    %3072 = vmatpush1.bf16.msra.mxu0 %v2148
    %3073 = vmatprep.subr.bf16.mxu0 %v2154
    %3074 = vmatpush1.bf16.msra.mxu0 %v2153
    %3075 = vmatprep.subr.bf16.mxu0 %v2159
    %3076 = vmatpush1.bf16.msra.mxu0 %v2158
    %3077 = vmatprep.subr.bf16.mxu0 %v2164
    %3078 = vmatpush1.bf16.msra.mxu0 %v2163
    %3079 = vmatprep.subr.bf16.mxu0 %v2169
    %3080 = vmatpush1.bf16.msra.mxu0 %v2168
    %3081 = vmatprep.subr.bf16.mxu0 %v2174
    %3082 = vmatpush1.bf16.msra.mxu0 %v2173
    %3083 = vmatprep.subr.bf16.mxu0 %v2179
    %3084 = vmatpush1.bf16.msra.mxu0 %v2178
    %3085 = vmatprep.subr.bf16.mxu0 %v2184
    %3086 = vmatpush1.bf16.msra.mxu0 %v2183
    %3087 = vmatprep.subr.bf16.mxu0 %v2189
    %3088 = vmatpush1.bf16.msra.mxu0 %v2188
    %3089 = vmatprep.subr.bf16.mxu0 %v2194
    %3090 = vmatpush1.bf16.msra.mxu0 %v2193
    %3091 = vmatprep.subr.bf16.mxu0 %v2199
    %3092 = vmatpush1.bf16.msra.mxu0 %v2198
    %3093 = vmatprep.subr.bf16.mxu0 %v2204
    %3094 = vmatpush1.bf16.msra.mxu0 %v2203
    %3095 = vmatprep.subr.bf16.mxu0 %v2209
    %3096 = vmatpush1.bf16.msra.mxu0 %v2208
    %3097 = vmatprep.subr.bf16.mxu0 %v2214
    %3098 = vmatpush1.bf16.msra.mxu0 %v2213
    %3099 = vmatprep.subr.bf16.mxu0 %v2219
    %3100 = vmatpush1.bf16.msra.mxu0 %v2218
    %3101 = vmatprep.subr.bf16.mxu0 %v2224
    %3102 = vmatpush1.bf16.msra.mxu0 %v2223
    %3103 = vmatprep.mubr.bf16.mxu0 %v527
    %3104 = vmatmul.mubr.bf16.gmra.mrb[0].mxu0 %v526
    %v3105 = vpop.f32.mrb[0].mxu0
    %v3106 = vadd.f32 %v980, %v3105
    %v3107 = vpop.f32.mrb[0].mxu0
    %v3108 = vadd.f32 %v984, %v3107
    %v3109 = vpop.f32.mrb[0].mxu0
    %v3110 = vpop.f32.mrb[0].mxu0
    %3111 = vdwg.mxu0
    %3112 = vmatprep.subr.bf16.mxu0 %v2229
    %3113 = vmatpush1.bf16.msra.mxu0 %v2228
    %3114 = vmatprep.subr.bf16.mxu0 %v2234
    %3115 = vmatpush1.bf16.msra.mxu0 %v2233
    %3116 = vmatprep.subr.bf16.mxu0 %v2239
    %3117 = vmatpush1.bf16.msra.mxu0 %v2238
    %3118 = vmatprep.subr.bf16.mxu0 %v2244
    %3119 = vmatpush1.bf16.msra.mxu0 %v2243
    %3120 = vmatprep.subr.bf16.mxu0 %v2249
    %3121 = vmatpush1.bf16.msra.mxu0 %v2248
    %3122 = vmatprep.subr.bf16.mxu0 %v2254
    %3123 = vmatpush1.bf16.msra.mxu0 %v2253
    %3124 = vmatprep.subr.bf16.mxu0 %v2259
    %3125 = vmatpush1.bf16.msra.mxu0 %v2258
    %3126 = vmatprep.subr.bf16.mxu0 %v2264
    %3127 = vmatpush1.bf16.msra.mxu0 %v2263
    %3128 = vmatprep.subr.bf16.mxu0 %v2269
    %3129 = vmatpush1.bf16.msra.mxu0 %v2268
    %3130 = vmatprep.subr.bf16.mxu0 %v2274
    %3131 = vmatpush1.bf16.msra.mxu0 %v2273
    %3132 = vmatprep.subr.bf16.mxu0 %v2279
    %3133 = vmatpush1.bf16.msra.mxu0 %v2278
    %3134 = vmatprep.subr.bf16.mxu0 %v2284
    %3135 = vmatpush1.bf16.msra.mxu0 %v2283
    %3136 = vmatprep.subr.bf16.mxu0 %v2289
    %3137 = vmatpush1.bf16.msra.mxu0 %v2288
    %3138 = vmatprep.subr.bf16.mxu0 %v2294
    %3139 = vmatpush1.bf16.msra.mxu0 %v2293
    %3140 = vmatprep.subr.bf16.mxu0 %v2299
    %3141 = vmatpush1.bf16.msra.mxu0 %v2298
    %3142 = vmatprep.subr.bf16.mxu0 %v2304
    %3143 = vmatpush1.bf16.msra.mxu0 %v2303
    %3144 = vmatprep.mubr.bf16.mxu0 %v529
    %3145 = vmatmul.mubr.bf16.gmra.mrb[0].mxu0 %v528
    %v3146 = vpop.f32.mrb[0].mxu0
    %v3147 = vadd.f32 %v3106, %v3146
    %v3148 = vpop.f32.mrb[0].mxu0
    %v3149 = vadd.f32 %v3108, %v3148
    %v3150 = vpop.f32.mrb[0].mxu0
    %v3151 = vpop.f32.mrb[0].mxu0
    %3152 = vdwg.mxu0
    %3153 = vmatprep.subr.bf16.mxu0 %v2309
    %3154 = vmatpush1.bf16.msra.mxu0 %v2308
    %3155 = vmatprep.subr.bf16.mxu0 %v2314
    %3156 = vmatpush1.bf16.msra.mxu0 %v2313
    %3157 = vmatprep.subr.bf16.mxu0 %v2319
    %3158 = vmatpush1.bf16.msra.mxu0 %v2318
    %3159 = vmatprep.subr.bf16.mxu0 %v2324
    %3160 = vmatpush1.bf16.msra.mxu0 %v2323
    %3161 = vmatprep.subr.bf16.mxu0 %v2329
    %3162 = vmatpush1.bf16.msra.mxu0 %v2328
    %3163 = vmatprep.subr.bf16.mxu0 %v2334
    %3164 = vmatpush1.bf16.msra.mxu0 %v2333
    %3165 = vmatprep.subr.bf16.mxu0 %v2339
    %3166 = vmatpush1.bf16.msra.mxu0 %v2338
    %3167 = vmatprep.subr.bf16.mxu0 %v2344
    %3168 = vmatpush1.bf16.msra.mxu0 %v2343
    %3169 = vmatprep.subr.bf16.mxu0 %v2349
    %3170 = vmatpush1.bf16.msra.mxu0 %v2348
    %3171 = vmatprep.subr.bf16.mxu0 %v2354
    %3172 = vmatpush1.bf16.msra.mxu0 %v2353
    %3173 = vmatprep.subr.bf16.mxu0 %v2359
    %3174 = vmatpush1.bf16.msra.mxu0 %v2358
    %3175 = vmatprep.subr.bf16.mxu0 %v2364
    %3176 = vmatpush1.bf16.msra.mxu0 %v2363
    %3177 = vmatprep.subr.bf16.mxu0 %v2369
    %3178 = vmatpush1.bf16.msra.mxu0 %v2368
    %3179 = vmatprep.subr.bf16.mxu0 %v2374
    %3180 = vmatpush1.bf16.msra.mxu0 %v2373
    %3181 = vmatprep.subr.bf16.mxu0 %v2379
    %3182 = vmatpush1.bf16.msra.mxu0 %v2378
    %3183 = vmatprep.subr.bf16.mxu0 %v2384
    %3184 = vmatpush1.bf16.msra.mxu0 %v2383
    %3185 = vmatprep.mubr.bf16.mxu0 %v531
    %3186 = vmatmul.mubr.bf16.gmra.mrb[0].mxu0 %v530
    %v3187 = vpop.f32.mrb[0].mxu0
    %v3188 = vadd.f32 %v3147, %v3187
    %v3189 = vpop.f32.mrb[0].mxu0
    %v3190 = vadd.f32 %v3149, %v3189
    %v3191 = vpop.f32.mrb[0].mxu0
    %v3192 = vpop.f32.mrb[0].mxu0
    %3193 = vdwg.mxu0
    %3194 = vmatprep.subr.bf16.mxu0 %v2389
    %3195 = vmatpush1.bf16.msra.mxu0 %v2388
    %3196 = vmatprep.subr.bf16.mxu0 %v2394
    %3197 = vmatpush1.bf16.msra.mxu0 %v2393
    %3198 = vmatprep.subr.bf16.mxu0 %v2399
    %3199 = vmatpush1.bf16.msra.mxu0 %v2398
    %3200 = vmatprep.subr.bf16.mxu0 %v2404
    %3201 = vmatpush1.bf16.msra.mxu0 %v2403
    %3202 = vmatprep.subr.bf16.mxu0 %v2409
    %3203 = vmatpush1.bf16.msra.mxu0 %v2408
    %3204 = vmatprep.subr.bf16.mxu0 %v2414
    %3205 = vmatpush1.bf16.msra.mxu0 %v2413
    %3206 = vmatprep.subr.bf16.mxu0 %v2419
    %3207 = vmatpush1.bf16.msra.mxu0 %v2418
    %3208 = vmatprep.subr.bf16.mxu0 %v2424
    %3209 = vmatpush1.bf16.msra.mxu0 %v2423
    %3210 = vmatprep.subr.bf16.mxu0 %v2429
    %3211 = vmatpush1.bf16.msra.mxu0 %v2428
    %3212 = vmatprep.subr.bf16.mxu0 %v2434
    %3213 = vmatpush1.bf16.msra.mxu0 %v2433
    %3214 = vmatprep.subr.bf16.mxu0 %v2439
    %3215 = vmatpush1.bf16.msra.mxu0 %v2438
    %3216 = vmatprep.subr.bf16.mxu0 %v2444
    %3217 = vmatpush1.bf16.msra.mxu0 %v2443
    %3218 = vmatprep.subr.bf16.mxu0 %v2449
    %3219 = vmatpush1.bf16.msra.mxu0 %v2448
    %3220 = vmatprep.subr.bf16.mxu0 %v2454
    %3221 = vmatpush1.bf16.msra.mxu0 %v2453
    %3222 = vmatprep.subr.bf16.mxu0 %v2459
    %3223 = vmatpush1.bf16.msra.mxu0 %v2458
    %3224 = vmatprep.subr.bf16.mxu0 %v2464
    %3225 = vmatpush1.bf16.msra.mxu0 %v2463
    %3226 = vmatprep.mubr.bf16.mxu0 %v533
    %3227 = vmatmul.mubr.bf16.gmra.mrb[0].mxu0 %v532
    %v3228 = vpop.f32.mrb[0].mxu0
    %v3229 = vadd.f32 %v3188, %v3228
    %v3230 = vpop.f32.mrb[0].mxu0
    %v3231 = vadd.f32 %v3190, %v3230
    %v3232 = vpop.f32.mrb[0].mxu0
    %v3233 = vpop.f32.mrb[0].mxu0
    %3234 = vdwg.mxu0
    %3235 = vmatprep.subr.bf16.mxu0 %v2469
    %3236 = vmatpush1.bf16.msra.mxu0 %v2468
    %3237 = vmatprep.subr.bf16.mxu0 %v2474
    %3238 = vmatpush1.bf16.msra.mxu0 %v2473
    %3239 = vmatprep.subr.bf16.mxu0 %v2479
    %3240 = vmatpush1.bf16.msra.mxu0 %v2478
    %3241 = vmatprep.subr.bf16.mxu0 %v2484
    %3242 = vmatpush1.bf16.msra.mxu0 %v2483
    %3243 = vmatprep.subr.bf16.mxu0 %v2489
    %3244 = vmatpush1.bf16.msra.mxu0 %v2488
    %3245 = vmatprep.subr.bf16.mxu0 %v2494
    %3246 = vmatpush1.bf16.msra.mxu0 %v2493
    %3247 = vmatprep.subr.bf16.mxu0 %v2499
    %3248 = vmatpush1.bf16.msra.mxu0 %v2498
    %3249 = vmatprep.subr.bf16.mxu0 %v2504
    %3250 = vmatpush1.bf16.msra.mxu0 %v2503
    %3251 = vmatprep.subr.bf16.mxu0 0
    %3252 = vmatpush1.bf16.msra.mxu0 0
    %3253 = vmatprep.subr.bf16.mxu0 0
    %3254 = vmatpush1.bf16.msra.mxu0 0
    %3255 = vmatprep.subr.bf16.mxu0 0
    %3256 = vmatpush1.bf16.msra.mxu0 0
    %3257 = vmatprep.subr.bf16.mxu0 0
    %3258 = vmatpush1.bf16.msra.mxu0 0
    %3259 = vmatprep.subr.bf16.mxu0 0
    %3260 = vmatpush1.bf16.msra.mxu0 0
    %3261 = vmatprep.subr.bf16.mxu0 0
    %3262 = vmatpush1.bf16.msra.mxu0 0
    %3263 = vmatprep.subr.bf16.mxu0 0
    %3264 = vmatpush1.bf16.msra.mxu0 0
    %3265 = vmatprep.subr.bf16.mxu0 0
    %3266 = vmatpush1.bf16.msra.mxu0 0
    %3267 = vmatprep.mubr.bf16.mxu0 0
    %3268 = vmatmul.mubr.bf16.gmra.mrb[0].mxu0 %v534
    %v3269 = vpop.f32.mrb[0].mxu0
    %v3270 = vadd.f32 %v3229, %v3269
    %v3271 = vpop.f32.mrb[0].mxu0
    %v3272 = vadd.f32 %v3231, %v3271
    %v3273 = vpop.f32.mrb[0].mxu0
    %v3274 = vpop.f32.mrb[0].mxu0
    %3275 = vdwg.mxu0
    %3276 = vmatprep.subr.bf16.mxu0 0
    %3277 = vmatpush1.bf16.msra.mxu0 %v2150
    %3278 = vmatprep.subr.bf16.mxu0 0
    %3279 = vmatpush1.bf16.msra.mxu0 %v2155
    %3280 = vmatprep.subr.bf16.mxu0 0
    %3281 = vmatpush1.bf16.msra.mxu0 %v2160
    %3282 = vmatprep.subr.bf16.mxu0 0
    %3283 = vmatpush1.bf16.msra.mxu0 %v2165
    %3284 = vmatprep.subr.bf16.mxu0 0
    %3285 = vmatpush1.bf16.msra.mxu0 %v2170
    %3286 = vmatprep.subr.bf16.mxu0 0
    %3287 = vmatpush1.bf16.msra.mxu0 %v2175
    %3288 = vmatprep.subr.bf16.mxu0 0
    %3289 = vmatpush1.bf16.msra.mxu0 %v2180
    %3290 = vmatprep.subr.bf16.mxu0 0
    %3291 = vmatpush1.bf16.msra.mxu0 %v2185
    %3292 = vmatprep.subr.bf16.mxu0 0
    %3293 = vmatpush1.bf16.msra.mxu0 %v2190
    %3294 = vmatprep.subr.bf16.mxu0 0
    %3295 = vmatpush1.bf16.msra.mxu0 %v2195
    %3296 = vmatprep.subr.bf16.mxu0 0
    %3297 = vmatpush1.bf16.msra.mxu0 %v2200
    %3298 = vmatprep.subr.bf16.mxu0 0
    %3299 = vmatpush1.bf16.msra.mxu0 %v2205
    %3300 = vmatprep.subr.bf16.mxu0 0
    %3301 = vmatpush1.bf16.msra.mxu0 %v2210
    %3302 = vmatprep.subr.bf16.mxu0 0
    %3303 = vmatpush1.bf16.msra.mxu0 %v2215
    %3304 = vmatprep.subr.bf16.mxu0 0
    %3305 = vmatpush1.bf16.msra.mxu0 %v2220
    %3306 = vmatprep.subr.bf16.mxu0 0
    %3307 = vmatpush1.bf16.msra.mxu0 %v2225
    %3308 = vmatprep.mubr.bf16.mxu0 %v527
    %3309 = vmatmul.mubr.bf16.gmra.mrb[0].mxu0 %v526
    %v3310 = vpop.f32.mrb[0].mxu0
    %v3311 = vadd.f32 %v988, %v3310
    %v3312 = vpop.f32.mrb[0].mxu0
    %v3313 = vpop.f32.mrb[0].mxu0
    %v3314 = vpop.f32.mrb[0].mxu0
    %3315 = vdwg.mxu0
    %3316 = vmatprep.subr.bf16.mxu0 0
    %3317 = vmatpush1.bf16.msra.mxu0 %v2230
    %3318 = vmatprep.subr.bf16.mxu0 0
    %3319 = vmatpush1.bf16.msra.mxu0 %v2235
    %3320 = vmatprep.subr.bf16.mxu0 0
    %3321 = vmatpush1.bf16.msra.mxu0 %v2240
    %3322 = vmatprep.subr.bf16.mxu0 0
    %3323 = vmatpush1.bf16.msra.mxu0 %v2245
    %3324 = vmatprep.subr.bf16.mxu0 0
    %3325 = vmatpush1.bf16.msra.mxu0 %v2250
    %3326 = vmatprep.subr.bf16.mxu0 0
    %3327 = vmatpush1.bf16.msra.mxu0 %v2255
    %3328 = vmatprep.subr.bf16.mxu0 0
    %3329 = vmatpush1.bf16.msra.mxu0 %v2260
    %3330 = vmatprep.subr.bf16.mxu0 0
    %3331 = vmatpush1.bf16.msra.mxu0 %v2265
    %3332 = vmatprep.subr.bf16.mxu0 0
    %3333 = vmatpush1.bf16.msra.mxu0 %v2270
    %3334 = vmatprep.subr.bf16.mxu0 0
    %3335 = vmatpush1.bf16.msra.mxu0 %v2275
    %3336 = vmatprep.subr.bf16.mxu0 0
    %3337 = vmatpush1.bf16.msra.mxu0 %v2280
    %3338 = vmatprep.subr.bf16.mxu0 0
    %3339 = vmatpush1.bf16.msra.mxu0 %v2285
    %3340 = vmatprep.subr.bf16.mxu0 0
    %3341 = vmatpush1.bf16.msra.mxu0 %v2290
    %3342 = vmatprep.subr.bf16.mxu0 0
    %3343 = vmatpush1.bf16.msra.mxu0 %v2295
    %3344 = vmatprep.subr.bf16.mxu0 0
    %3345 = vmatpush1.bf16.msra.mxu0 %v2300
    %3346 = vmatprep.subr.bf16.mxu0 0
    %3347 = vmatpush1.bf16.msra.mxu0 %v2305
    %3348 = vmatprep.mubr.bf16.mxu0 %v529
    %3349 = vmatmul.mubr.bf16.gmra.mrb[0].mxu0 %v528
    %v3350 = vpop.f32.mrb[0].mxu0
    %v3351 = vadd.f32 %v3311, %v3350
    %v3352 = vpop.f32.mrb[0].mxu0
    %v3353 = vpop.f32.mrb[0].mxu0
    %v3354 = vpop.f32.mrb[0].mxu0
    %3355 = vdwg.mxu0
    %3356 = vmatprep.subr.bf16.mxu0 0
    %3357 = vmatpush1.bf16.msra.mxu0 %v2310
    %3358 = vmatprep.subr.bf16.mxu0 0
    %3359 = vmatpush1.bf16.msra.mxu0 %v2315
    %3360 = vmatprep.subr.bf16.mxu0 0
    %3361 = vmatpush1.bf16.msra.mxu0 %v2320
    %3362 = vmatprep.subr.bf16.mxu0 0
    %3363 = vmatpush1.bf16.msra.mxu0 %v2325
    %3364 = vmatprep.subr.bf16.mxu0 0
    %3365 = vmatpush1.bf16.msra.mxu0 %v2330
    %3366 = vmatprep.subr.bf16.mxu0 0
    %3367 = vmatpush1.bf16.msra.mxu0 %v2335
    %3368 = vmatprep.subr.bf16.mxu0 0
    %3369 = vmatpush1.bf16.msra.mxu0 %v2340
    %3370 = vmatprep.subr.bf16.mxu0 0
    %3371 = vmatpush1.bf16.msra.mxu0 %v2345
    %3372 = vmatprep.subr.bf16.mxu0 0
    %3373 = vmatpush1.bf16.msra.mxu0 %v2350
    %3374 = vmatprep.subr.bf16.mxu0 0
    %3375 = vmatpush1.bf16.msra.mxu0 %v2355
    %3376 = vmatprep.subr.bf16.mxu0 0
    %3377 = vmatpush1.bf16.msra.mxu0 %v2360
    %3378 = vmatprep.subr.bf16.mxu0 0
    %3379 = vmatpush1.bf16.msra.mxu0 %v2365
    %3380 = vmatprep.subr.bf16.mxu0 0
    %3381 = vmatpush1.bf16.msra.mxu0 %v2370
    %3382 = vmatprep.subr.bf16.mxu0 0
    %3383 = vmatpush1.bf16.msra.mxu0 %v2375
    %3384 = vmatprep.subr.bf16.mxu0 0
    %3385 = vmatpush1.bf16.msra.mxu0 %v2380
    %3386 = vmatprep.subr.bf16.mxu0 0
    %3387 = vmatpush1.bf16.msra.mxu0 %v2385
    %3388 = vmatprep.mubr.bf16.mxu0 %v531
    %3389 = vmatmul.mubr.bf16.gmra.mrb[0].mxu0 %v530
    %v3390 = vpop.f32.mrb[0].mxu0
    %v3391 = vadd.f32 %v3351, %v3390
    %v3392 = vpop.f32.mrb[0].mxu0
    %v3393 = vpop.f32.mrb[0].mxu0
    %v3394 = vpop.f32.mrb[0].mxu0
    %3395 = vdwg.mxu0
    %3396 = vmatprep.subr.bf16.mxu0 0
    %3397 = vmatpush1.bf16.msra.mxu0 %v2390
    %3398 = vmatprep.subr.bf16.mxu0 0
    %3399 = vmatpush1.bf16.msra.mxu0 %v2395
    %3400 = vmatprep.subr.bf16.mxu0 0
    %3401 = vmatpush1.bf16.msra.mxu0 %v2400
    %3402 = vmatprep.subr.bf16.mxu0 0
    %3403 = vmatpush1.bf16.msra.mxu0 %v2405
    %3404 = vmatprep.subr.bf16.mxu0 0
    %3405 = vmatpush1.bf16.msra.mxu0 %v2410
    %3406 = vmatprep.subr.bf16.mxu0 0
    %3407 = vmatpush1.bf16.msra.mxu0 %v2415
    %3408 = vmatprep.subr.bf16.mxu0 0
    %3409 = vmatpush1.bf16.msra.mxu0 %v2420
    %3410 = vmatprep.subr.bf16.mxu0 0
    %3411 = vmatpush1.bf16.msra.mxu0 %v2425
    %3412 = vmatprep.subr.bf16.mxu0 0
    %3413 = vmatpush1.bf16.msra.mxu0 %v2430
    %3414 = vmatprep.subr.bf16.mxu0 0
    %3415 = vmatpush1.bf16.msra.mxu0 %v2435
    %3416 = vmatprep.subr.bf16.mxu0 0
    %3417 = vmatpush1.bf16.msra.mxu0 %v2440
    %3418 = vmatprep.subr.bf16.mxu0 0
    %3419 = vmatpush1.bf16.msra.mxu0 %v2445
    %3420 = vmatprep.subr.bf16.mxu0 0
    %3421 = vmatpush1.bf16.msra.mxu0 %v2450
    %3422 = vmatprep.subr.bf16.mxu0 0
    %3423 = vmatpush1.bf16.msra.mxu0 %v2455
    %3424 = vmatprep.subr.bf16.mxu0 0
    %3425 = vmatpush1.bf16.msra.mxu0 %v2460
    %3426 = vmatprep.subr.bf16.mxu0 0
    %3427 = vmatpush1.bf16.msra.mxu0 %v2465
    %3428 = vmatprep.mubr.bf16.mxu0 %v533
    %3429 = vmatmul.mubr.bf16.gmra.mrb[0].mxu0 %v532
    %v3430 = vpop.f32.mrb[0].mxu0
    %v3431 = vadd.f32 %v3391, %v3430
    %v3432 = vpop.f32.mrb[0].mxu0
    %v3433 = vpop.f32.mrb[0].mxu0
    %v3434 = vpop.f32.mrb[0].mxu0
    %3435 = vdwg.mxu0
    %3436 = vmatprep.subr.bf16.mxu0 0
    %3437 = vmatpush1.bf16.msra.mxu0 %v2470
    %3438 = vmatprep.subr.bf16.mxu0 0
    %3439 = vmatpush1.bf16.msra.mxu0 %v2475
    %3440 = vmatprep.subr.bf16.mxu0 0
    %3441 = vmatpush1.bf16.msra.mxu0 %v2480
    %3442 = vmatprep.subr.bf16.mxu0 0
    %3443 = vmatpush1.bf16.msra.mxu0 %v2485
    %3444 = vmatprep.subr.bf16.mxu0 0
    %3445 = vmatpush1.bf16.msra.mxu0 %v2490
    %3446 = vmatprep.subr.bf16.mxu0 0
    %3447 = vmatpush1.bf16.msra.mxu0 %v2495
    %3448 = vmatprep.subr.bf16.mxu0 0
    %3449 = vmatpush1.bf16.msra.mxu0 %v2500
    %3450 = vmatprep.subr.bf16.mxu0 0
    %3451 = vmatpush1.bf16.msra.mxu0 %v2505
    %3452 = vmatprep.subr.bf16.mxu0 0
    %3453 = vmatpush1.bf16.msra.mxu0 0
    %3454 = vmatprep.subr.bf16.mxu0 0
    %3455 = vmatpush1.bf16.msra.mxu0 0
    %3456 = vmatprep.subr.bf16.mxu0 0
    %3457 = vmatpush1.bf16.msra.mxu0 0
    %3458 = vmatprep.subr.bf16.mxu0 0
    %3459 = vmatpush1.bf16.msra.mxu0 0
    %3460 = vmatprep.subr.bf16.mxu0 0
    %3461 = vmatpush1.bf16.msra.mxu0 0
    %3462 = vmatprep.subr.bf16.mxu0 0
    %3463 = vmatpush1.bf16.msra.mxu0 0
    %3464 = vmatprep.subr.bf16.mxu0 0
    %3465 = vmatpush1.bf16.msra.mxu0 0
    %3466 = vmatprep.subr.bf16.mxu0 0
    %3467 = vmatpush1.bf16.msra.mxu0 0
    %3468 = vmatprep.mubr.bf16.mxu0 0
    %3469 = vmatmul.mubr.bf16.gmra.mrb[0].mxu0 %v534
    %v3470 = vpop.f32.mrb[0].mxu0
    %v3471 = vadd.f32 %v3431, %v3470
    %v3472 = vpop.f32.mrb[0].mxu0
    %v3473 = vpop.f32.mrb[0].mxu0
    %v3474 = vpop.f32.mrb[0].mxu0
    %3475 = vdwg.mxu0
    %v3476 = vmax.f32 %v3065, 0.0
    %v3477 = vmax.f32 %v3067, 0.0
    %v3478 = vmax.f32 %v3270, 0.0
    %v3479 = vmax.f32 %v3272, 0.0
    %v3480 = vmax.f32 %v3471, 0.0
    %v3481 = vpack.c.bf16 %v3476, %v3476
    %v3482 = vpack.c.bf16 %v3477, %v3477
    %v3483 = vpack.c.bf16 %v3478, %v3478
    %v3484 = vpack.c.bf16 %v3479, %v3479
    %v3485 = vpack.c.bf16 %v3480, %v3480
    %v3486 = vld [vmem:[#allocation11] sm:$0xf]
    %v3487 = vld [vmem:[#allocation11 + $0x4] sm:$0xf]
    %v3488 = vld [vmem:[#allocation11 + $0x8] sm:$0xf]
    %v3489 = vld [vmem:[#allocation11 + $0xc] sm:$0xf]
    %v3490 = vld [vmem:[#allocation11 + $0x10] sm:$0xf]
    %v3491 = vld [vmem:[#allocation11 + $0x14] sm:$0xf]
    %v3492 = vld [vmem:[#allocation11 + $0x18] sm:$0xf]
    %v3493 = vld [vmem:[#allocation11 + $0x1c] sm:$0xf]
    %v3494 = vld [vmem:[#allocation11 + $0x20] sm:$0xf]
    %v3495 = vld [vmem:[#allocation11 + $0x24] sm:$0xf]
    %v3496 = vld [vmem:[#allocation11 + $0x28] sm:$0xf]
    %v3497 = vld [vmem:[#allocation11 + $0x2c] sm:$0xf]
    %v3498 = vld [vmem:[#allocation11 + $0x30] sm:$0xf]
    %v3499 = vld [vmem:[#allocation11 + $0x34] sm:$0xf]
    %v3500 = vld [vmem:[#allocation11 + $0x38] sm:$0xf]
    %v3501 = vld [vmem:[#allocation11 + $0x3c] sm:$0xf]
    %v3502 = vld [vmem:[#allocation11 + $0x40] sm:$0xf]
    %v3503 = vld [vmem:[#allocation11 + $0x44] sm:$0xf]
    %v3504 = vld [vmem:[#allocation11 + $0x48] sm:$0xf]
    %v3505 = vld [vmem:[#allocation11 + $0x4c] sm:$0xf]
    %v3506 = vld [vmem:[#allocation11 + $0x50] sm:$0xf]
    %v3507 = vld [vmem:[#allocation11 + $0x54] sm:$0xf]
    %v3508 = vld [vmem:[#allocation11 + $0x58] sm:$0xf]
    %v3509 = vld [vmem:[#allocation11 + $0x5c] sm:$0xf]
    %v3510 = vld [vmem:[#allocation11 + $0x60] sm:$0xf]
    %v3511 = vld [vmem:[#allocation11 + $0x64] sm:$0xf]
    %v3512 = vld [vmem:[#allocation11 + $0x68] sm:$0xf]
    %v3513 = vld [vmem:[#allocation11 + $0x6c] sm:$0xf]
    %v3514 = vld [vmem:[#allocation11 + $0x70] sm:$0xf]
    %v3515 = vld [vmem:[#allocation11 + $0x74] sm:$0xf]
    %v3516 = vld [vmem:[#allocation11 + $0x78] sm:$0xf]
    %v3517 = vld [vmem:[#allocation11 + $0x7c] sm:$0xf]
    %v3518 = vld [vmem:[#allocation11 + $0x80] sm:$0xf]
    %v3519 = vld [vmem:[#allocation11 + $0x84] sm:$0xf]
    %v3520 = vld [vmem:[#allocation11 + $0x88] sm:$0xf]
    %v3521 = vld [vmem:[#allocation11 + $0x8c] sm:$0xf]
    %v3522 = vld [vmem:[#allocation11 + $0x90] sm:$0xf]
    %v3523 = vld [vmem:[#allocation11 + $0x94] sm:$0xf]
    %v3524 = vld [vmem:[#allocation11 + $0x98] sm:$0xf]
    %v3525 = vld [vmem:[#allocation11 + $0x9c] sm:$0xf]
    %v3526 = vld [vmem:[#allocation11 + $0xa0] sm:$0xf]
    %v3527 = vld [vmem:[#allocation11 + $0xa4] sm:$0xf]
    %v3528 = vld [vmem:[#allocation11 + $0xa8] sm:$0xf]
    %v3529 = vld [vmem:[#allocation11 + $0xac] sm:$0xf]
    %v3530 = vld [vmem:[#allocation11 + $0xb0] sm:$0xf]
    %v3531 = vld [vmem:[#allocation11 + $0xb4] sm:$0xf]
    %v3532 = vld [vmem:[#allocation11 + $0xb8] sm:$0xf]
    %v3533 = vld [vmem:[#allocation11 + $0xbc] sm:$0xf]
    %v3534 = vld [vmem:[#allocation11 + $0xc0] sm:$0xf]
    %v3535 = vld [vmem:[#allocation11 + $0xc4] sm:$0xf]
    %v3536 = vld [vmem:[#allocation11 + $0xc8] sm:$0xf]
    %v3537 = vld [vmem:[#allocation11 + $0xcc] sm:$0xf]
    %v3538 = vld [vmem:[#allocation11 + $0xd0] sm:$0xf]
    %v3539 = vld [vmem:[#allocation11 + $0xd4] sm:$0xf]
    %v3540 = vld [vmem:[#allocation11 + $0xd8] sm:$0xf]
    %v3541 = vld [vmem:[#allocation11 + $0xdc] sm:$0xf]
    %v3542 = vld [vmem:[#allocation11 + $0xe0] sm:$0xf]
    %v3543 = vld [vmem:[#allocation11 + $0xe4] sm:$0xf]
    %v3544 = vld [vmem:[#allocation11 + $0xe8] sm:$0xf]
    %v3545 = vld [vmem:[#allocation11 + $0xec] sm:$0xf]
    %v3546 = vld [vmem:[#allocation11 + $0xf0] sm:$0xf]
    %v3547 = vld [vmem:[#allocation11 + $0xf4] sm:$0xf]
    %v3548 = vld [vmem:[#allocation11 + $0xf8] sm:$0xf]
    %v3549 = vld [vmem:[#allocation11 + $0xfc] sm:$0xf]
    %v3550 = vld [vmem:[#allocation11 + $0x100] sm:$0xf]
    %v3551 = vld [vmem:[#allocation11 + $0x104] sm:$0xf]
    %v3552 = vld [vmem:[#allocation11 + $0x108] sm:$0xf]
    %v3553 = vld [vmem:[#allocation11 + $0x10c] sm:$0xf]
    %v3554 = vld [vmem:[#allocation11 + $0x110] sm:$0xf]
    %v3555 = vld [vmem:[#allocation11 + $0x114] sm:$0xf]
    %v3556 = vld [vmem:[#allocation11 + $0x118] sm:$0xf]
    %v3557 = vld [vmem:[#allocation11 + $0x11c] sm:$0xf]
    %v3558 = vld [vmem:[#allocation11 + $0x120] sm:$0xf]
    %v3559 = vld [vmem:[#allocation11 + $0x124] sm:$0xf]
    %v3560 = vld [vmem:[#allocation11 + $0x128] sm:$0xf]
    %v3561 = vld [vmem:[#allocation11 + $0x12c] sm:$0xf]
    %v3562 = vld [vmem:[#allocation11 + $0x130] sm:$0xf]
    %v3563 = vld [vmem:[#allocation11 + $0x134] sm:$0xf]
    %v3564 = vld [vmem:[#allocation11 + $0x138] sm:$0xf]
    %v3565 = vld [vmem:[#allocation11 + $0x13c] sm:$0xf]
    %v3566 = vld [vmem:[#allocation13] sm:$0x1]
    %v3568 = vlaneseq
    %v3569 = vshrl.u32 %v3568, 7
    %v3570 = vsub.s32 0, %v3569
    %v3571 = vrot.slane %v3566, %v3570
    %v3653 = vunpack.c.l.b16 %v3486
    %v3654 = vunpack.c.l.b16 %v3487
    %v3655 = vunpack.c.l.b16 %v3488
    %v3656 = vunpack.c.l.b16 %v3489
    %v3657 = vunpack.c.l.b16 %v3490
    %v3658 = vunpack.c.l.b16 %v3491
    %v3659 = vunpack.c.l.b16 %v3492
    %v3660 = vunpack.c.l.b16 %v3493
    %v3661 = vunpack.c.l.b16 %v3494
    %v3662 = vunpack.c.l.b16 %v3495
    %v3663 = vunpack.c.l.b16 %v3496
    %v3664 = vunpack.c.l.b16 %v3497
    %v3665 = vunpack.c.l.b16 %v3498
    %v3666 = vunpack.c.l.b16 %v3499
    %v3667 = vunpack.c.l.b16 %v3500
    %v3668 = vunpack.c.l.b16 %v3501
    %v3669 = vunpack.c.l.b16 %v3502
    %v3670 = vunpack.c.l.b16 %v3503
    %v3671 = vunpack.c.l.b16 %v3504
    %v3672 = vunpack.c.l.b16 %v3505
    %v3673 = vunpack.c.l.b16 %v3506
    %v3674 = vunpack.c.l.b16 %v3507
    %v3675 = vunpack.c.l.b16 %v3508
    %v3676 = vunpack.c.l.b16 %v3509
    %v3677 = vunpack.c.l.b16 %v3510
    %v3678 = vunpack.c.l.b16 %v3511
    %v3679 = vunpack.c.l.b16 %v3512
    %v3680 = vunpack.c.l.b16 %v3513
    %v3681 = vunpack.c.l.b16 %v3514
    %v3682 = vunpack.c.l.b16 %v3515
    %v3683 = vunpack.c.l.b16 %v3516
    %v3684 = vunpack.c.l.b16 %v3517
    %v3685 = vunpack.c.l.b16 %v3518
    %v3686 = vunpack.c.l.b16 %v3519
    %v3687 = vunpack.c.l.b16 %v3520
    %v3688 = vunpack.c.l.b16 %v3521
    %v3689 = vunpack.c.l.b16 %v3522
    %v3690 = vunpack.c.l.b16 %v3523
    %v3691 = vunpack.c.l.b16 %v3524
    %v3692 = vunpack.c.l.b16 %v3525
    %v3693 = vunpack.c.l.b16 %v3526
    %v3694 = vunpack.c.l.b16 %v3527
    %v3695 = vunpack.c.l.b16 %v3528
    %v3696 = vunpack.c.l.b16 %v3529
    %v3697 = vunpack.c.l.b16 %v3530
    %v3698 = vunpack.c.l.b16 %v3531
    %v3699 = vunpack.c.l.b16 %v3532
    %v3700 = vunpack.c.l.b16 %v3533
    %v3701 = vunpack.c.l.b16 %v3534
    %v3702 = vunpack.c.l.b16 %v3535
    %v3703 = vunpack.c.l.b16 %v3536
    %v3704 = vunpack.c.l.b16 %v3537
    %v3705 = vunpack.c.l.b16 %v3538
    %v3706 = vunpack.c.l.b16 %v3539
    %v3707 = vunpack.c.l.b16 %v3540
    %v3708 = vunpack.c.l.b16 %v3541
    %v3709 = vunpack.c.l.b16 %v3542
    %v3710 = vunpack.c.l.b16 %v3543
    %v3711 = vunpack.c.l.b16 %v3544
    %v3712 = vunpack.c.l.b16 %v3545
    %v3713 = vunpack.c.l.b16 %v3546
    %v3714 = vunpack.c.l.b16 %v3547
    %v3715 = vunpack.c.l.b16 %v3548
    %v3716 = vunpack.c.l.b16 %v3549
    %v3717 = vunpack.c.l.b16 %v3550
    %v3718 = vunpack.c.l.b16 %v3551
    %v3719 = vunpack.c.l.b16 %v3552
    %v3720 = vunpack.c.l.b16 %v3553
    %v3721 = vunpack.c.l.b16 %v3554
    %v3722 = vunpack.c.l.b16 %v3555
    %v3723 = vunpack.c.l.b16 %v3556
    %v3724 = vunpack.c.l.b16 %v3557
    %v3725 = vunpack.c.l.b16 %v3558
    %v3726 = vunpack.c.l.b16 %v3559
    %v3727 = vunpack.c.l.b16 %v3560
    %v3728 = vunpack.c.l.b16 %v3561
    %v3729 = vunpack.c.l.b16 %v3562
    %v3730 = vunpack.c.l.b16 %v3563
    %v3731 = vunpack.c.l.b16 %v3564
    %v3732 = vunpack.c.l.b16 %v3565
    %v3733 = vpack.c.b16 %v3654, %v3653
    %v3734 = vpack.c.b16 %v3656, %v3655
    %v3735 = vpack.c.b16 %v3658, %v3657
    %v3736 = vpack.c.b16 %v3660, %v3659
    %v3737 = vpack.c.b16 %v3662, %v3661
    %v3738 = vpack.c.b16 %v3664, %v3663
    %v3739 = vpack.c.b16 %v3666, %v3665
    %v3740 = vpack.c.b16 %v3668, %v3667
    %v3741 = vpack.c.b16 %v3670, %v3669
    %v3742 = vpack.c.b16 %v3672, %v3671
    %v3743 = vpack.c.b16 %v3674, %v3673
    %v3744 = vpack.c.b16 %v3676, %v3675
    %v3745 = vpack.c.b16 %v3678, %v3677
    %v3746 = vpack.c.b16 %v3680, %v3679
    %v3747 = vpack.c.b16 %v3682, %v3681
    %v3748 = vpack.c.b16 %v3684, %v3683
    %v3749 = vpack.c.b16 %v3686, %v3685
    %v3750 = vpack.c.b16 %v3688, %v3687
    %v3751 = vpack.c.b16 %v3690, %v3689
    %v3752 = vpack.c.b16 %v3692, %v3691
    %v3753 = vpack.c.b16 %v3694, %v3693
    %v3754 = vpack.c.b16 %v3696, %v3695
    %v3755 = vpack.c.b16 %v3698, %v3697
    %v3756 = vpack.c.b16 %v3700, %v3699
    %v3757 = vpack.c.b16 %v3702, %v3701
    %v3758 = vpack.c.b16 %v3704, %v3703
    %v3759 = vpack.c.b16 %v3706, %v3705
    %v3760 = vpack.c.b16 %v3708, %v3707
    %v3761 = vpack.c.b16 %v3710, %v3709
    %v3762 = vpack.c.b16 %v3712, %v3711
    %v3763 = vpack.c.b16 %v3714, %v3713
    %v3764 = vpack.c.b16 %v3716, %v3715
    %v3765 = vpack.c.b16 %v3718, %v3717
    %v3766 = vpack.c.b16 %v3720, %v3719
    %v3767 = vpack.c.b16 %v3722, %v3721
    %v3768 = vpack.c.b16 %v3724, %v3723
    %v3769 = vpack.c.b16 %v3726, %v3725
    %v3770 = vpack.c.b16 %v3728, %v3727
    %v3771 = vpack.c.b16 %v3730, %v3729
    %v3772 = vpack.c.b16 %v3732, %v3731
    %3813 = vmatprep.subr.bf16.mxu0 0
    %3814 = vmatpush1.bf16.msra.mxu0 %v3733
    %3815 = vmatprep.subr.bf16.mxu0 0
    %3816 = vmatpush1.bf16.msra.mxu0 %v3734
    %3817 = vmatprep.subr.bf16.mxu0 0
    %3818 = vmatpush1.bf16.msra.mxu0 %v3735
    %3819 = vmatprep.subr.bf16.mxu0 0
    %3820 = vmatpush1.bf16.msra.mxu0 %v3736
    %3821 = vmatprep.subr.bf16.mxu0 0
    %3822 = vmatpush1.bf16.msra.mxu0 %v3737
    %3823 = vmatprep.subr.bf16.mxu0 0
    %3824 = vmatpush1.bf16.msra.mxu0 %v3738
    %3825 = vmatprep.subr.bf16.mxu0 0
    %3826 = vmatpush1.bf16.msra.mxu0 %v3739
    %3827 = vmatprep.subr.bf16.mxu0 0
    %3828 = vmatpush1.bf16.msra.mxu0 %v3740
    %3829 = vmatprep.subr.bf16.mxu0 0
    %3830 = vmatpush1.bf16.msra.mxu0 %v3741
    %3831 = vmatprep.subr.bf16.mxu0 0
    %3832 = vmatpush1.bf16.msra.mxu0 %v3742
    %3833 = vmatprep.subr.bf16.mxu0 0
    %3834 = vmatpush1.bf16.msra.mxu0 %v3743
    %3835 = vmatprep.subr.bf16.mxu0 0
    %3836 = vmatpush1.bf16.msra.mxu0 %v3744
    %3837 = vmatprep.subr.bf16.mxu0 0
    %3838 = vmatpush1.bf16.msra.mxu0 %v3745
    %3839 = vmatprep.subr.bf16.mxu0 0
    %3840 = vmatpush1.bf16.msra.mxu0 %v3746
    %3841 = vmatprep.subr.bf16.mxu0 0
    %3842 = vmatpush1.bf16.msra.mxu0 %v3747
    %3843 = vmatprep.subr.bf16.mxu0 0
    %3844 = vmatpush1.bf16.msra.mxu0 %v3748
    %3845 = vmatprep.mubr.bf16.mxu0 %v3482
    %3846 = vmatmul.mubr.bf16.gmra.mrb[0].mxu0 %v3481
    %v3847 = vpop.f32.mrb[0].mxu0
    %v3848 = vadd.f32 %v3571, %v3847
    %v3849 = vpop.f32.mrb[0].mxu0
    %v3850 = vpop.f32.mrb[0].mxu0
    %v3851 = vpop.f32.mrb[0].mxu0
    %3852 = vdwg.mxu0
    %3853 = vmatprep.subr.bf16.mxu0 0
    %3854 = vmatpush1.bf16.msra.mxu0 %v3749
    %3855 = vmatprep.subr.bf16.mxu0 0
    %3856 = vmatpush1.bf16.msra.mxu0 %v3750
    %3857 = vmatprep.subr.bf16.mxu0 0
    %3858 = vmatpush1.bf16.msra.mxu0 %v3751
    %3859 = vmatprep.subr.bf16.mxu0 0
    %3860 = vmatpush1.bf16.msra.mxu0 %v3752
    %3861 = vmatprep.subr.bf16.mxu0 0
    %3862 = vmatpush1.bf16.msra.mxu0 %v3753
    %3863 = vmatprep.subr.bf16.mxu0 0
    %3864 = vmatpush1.bf16.msra.mxu0 %v3754
    %3865 = vmatprep.subr.bf16.mxu0 0
    %3866 = vmatpush1.bf16.msra.mxu0 %v3755
    %3867 = vmatprep.subr.bf16.mxu0 0
    %3868 = vmatpush1.bf16.msra.mxu0 %v3756
    %3869 = vmatprep.subr.bf16.mxu0 0
    %3870 = vmatpush1.bf16.msra.mxu0 %v3757
    %3871 = vmatprep.subr.bf16.mxu0 0
    %3872 = vmatpush1.bf16.msra.mxu0 %v3758
    %3873 = vmatprep.subr.bf16.mxu0 0
    %3874 = vmatpush1.bf16.msra.mxu0 %v3759
    %3875 = vmatprep.subr.bf16.mxu0 0
    %3876 = vmatpush1.bf16.msra.mxu0 %v3760
    %3877 = vmatprep.subr.bf16.mxu0 0
    %3878 = vmatpush1.bf16.msra.mxu0 %v3761
    %3879 = vmatprep.subr.bf16.mxu0 0
    %3880 = vmatpush1.bf16.msra.mxu0 %v3762
    %3881 = vmatprep.subr.bf16.mxu0 0
    %3882 = vmatpush1.bf16.msra.mxu0 %v3763
    %3883 = vmatprep.subr.bf16.mxu0 0
    %3884 = vmatpush1.bf16.msra.mxu0 %v3764
    %3885 = vmatprep.mubr.bf16.mxu0 %v3484
    %3886 = vmatmul.mubr.bf16.gmra.mrb[0].mxu0 %v3483
    %v3887 = vpop.f32.mrb[0].mxu0
    %v3888 = vadd.f32 %v3848, %v3887
    %v3889 = vpop.f32.mrb[0].mxu0
    %v3890 = vpop.f32.mrb[0].mxu0
    %v3891 = vpop.f32.mrb[0].mxu0
    %3892 = vdwg.mxu0
    %3893 = vmatprep.subr.bf16.mxu0 0
    %3894 = vmatpush1.bf16.msra.mxu0 %v3765
    %3895 = vmatprep.subr.bf16.mxu0 0
    %3896 = vmatpush1.bf16.msra.mxu0 %v3766
    %3897 = vmatprep.subr.bf16.mxu0 0
    %3898 = vmatpush1.bf16.msra.mxu0 %v3767
    %3899 = vmatprep.subr.bf16.mxu0 0
    %3900 = vmatpush1.bf16.msra.mxu0 %v3768
    %3901 = vmatprep.subr.bf16.mxu0 0
    %3902 = vmatpush1.bf16.msra.mxu0 %v3769
    %3903 = vmatprep.subr.bf16.mxu0 0
    %3904 = vmatpush1.bf16.msra.mxu0 %v3770
    %3905 = vmatprep.subr.bf16.mxu0 0
    %3906 = vmatpush1.bf16.msra.mxu0 %v3771
    %3907 = vmatprep.subr.bf16.mxu0 0
    %3908 = vmatpush1.bf16.msra.mxu0 %v3772
    %3909 = vmatprep.subr.bf16.mxu0 0
    %3910 = vmatpush1.bf16.msra.mxu0 0
    %3911 = vmatprep.subr.bf16.mxu0 0
    %3912 = vmatpush1.bf16.msra.mxu0 0
    %3913 = vmatprep.subr.bf16.mxu0 0
    %3914 = vmatpush1.bf16.msra.mxu0 0
    %3915 = vmatprep.subr.bf16.mxu0 0
    %3916 = vmatpush1.bf16.msra.mxu0 0
    %3917 = vmatprep.subr.bf16.mxu0 0
    %3918 = vmatpush1.bf16.msra.mxu0 0
    %3919 = vmatprep.subr.bf16.mxu0 0
    %3920 = vmatpush1.bf16.msra.mxu0 0
    %3921 = vmatprep.subr.bf16.mxu0 0
    %3922 = vmatpush1.bf16.msra.mxu0 0
    %3923 = vmatprep.subr.bf16.mxu0 0
    %3924 = vmatpush1.bf16.msra.mxu0 0
    %3925 = vmatprep.mubr.bf16.mxu0 0
    %3926 = vmatmul.mubr.bf16.gmra.mrb[0].mxu0 %v3485
    %v3927 = vpop.f32.mrb[0].mxu0
    %v3928 = vadd.f32 %v3888, %v3927
    %v3929 = vpop.f32.mrb[0].mxu0
    %v3930 = vpop.f32.mrb[0].mxu0
    %v3931 = vpop.f32.mrb[0].mxu0
    %3932 = vdwg.mxu0
    %v3933 = vmax.f32 %v3928, 0.0
    %v3934 = vpack.c.bf16 %v3933, %v3933
    %v3935 = vld [vmem:[#allocation14] sm:$0xf]
    %v3936 = vld [vmem:[#allocation14 + $0x4] sm:$0xf]
    %v3937 = vld [vmem:[#allocation14 + $0x8] sm:$0xf]
    %v3938 = vld [vmem:[#allocation14 + $0xc] sm:$0xf]
    %v3939 = vld [vmem:[#allocation14 + $0x10] sm:$0xf]
    %v3940 = vld [vmem:[#allocation14 + $0x14] sm:$0xf]
    %v3941 = vld [vmem:[#allocation14 + $0x18] sm:$0xf]
    %v3942 = vld [vmem:[#allocation14 + $0x1c] sm:$0xf]
    %v3943 = vld [vmem:[#allocation14 + $0x20] sm:$0xf]
    %v3944 = vld [vmem:[#allocation14 + $0x24] sm:$0xf]
    %v3945 = vld [vmem:[#allocation14 + $0x28] sm:$0xf]
    %v3946 = vld [vmem:[#allocation14 + $0x2c] sm:$0xf]
    %v3947 = vld [vmem:[#allocation14 + $0x30] sm:$0xf]
    %v3948 = vld [vmem:[#allocation14 + $0x34] sm:$0xf]
    %v3949 = vld [vmem:[#allocation14 + $0x38] sm:$0xf]
    %v3950 = vld [vmem:[#allocation14 + $0x3c] sm:$0xf]
    %v3951 = vld [vmem:[#allocation16] sm:$0x1]
    %v3953 = vlaneseq
    %v3954 = vshrl.u32 %v3953, 7
    %v3955 = vsub.s32 0, %v3954
    %v3956 = vrot.slane %v3951, %v3955
    %v3974 = vunpack.c.l.b16 %v3935
    %v3975 = vunpack.c.l.b16 %v3936
    %v3976 = vunpack.c.l.b16 %v3937
    %v3977 = vunpack.c.l.b16 %v3938
    %v3978 = vunpack.c.l.b16 %v3939
    %v3979 = vunpack.c.l.b16 %v3940
    %v3980 = vunpack.c.l.b16 %v3941
    %v3981 = vunpack.c.l.b16 %v3942
    %v3982 = vunpack.c.l.b16 %v3943
    %v3983 = vunpack.c.l.b16 %v3944
    %v3984 = vunpack.c.l.b16 %v3945
    %v3985 = vunpack.c.l.b16 %v3946
    %v3986 = vunpack.c.l.b16 %v3947
    %v3987 = vunpack.c.l.b16 %v3948
    %v3988 = vunpack.c.l.b16 %v3949
    %v3989 = vunpack.c.l.b16 %v3950
    %v3990 = vpack.c.b16 %v3975, %v3974
    %v3991 = vpack.c.b16 %v3977, %v3976
    %v3992 = vpack.c.b16 %v3979, %v3978
    %v3993 = vpack.c.b16 %v3981, %v3980
    %v3994 = vpack.c.b16 %v3983, %v3982
    %v3995 = vpack.c.b16 %v3985, %v3984
    %v3996 = vpack.c.b16 %v3987, %v3986
    %v3997 = vpack.c.b16 %v3989, %v3988
    %4006 = vmatprep.subr.bf16.mxu0 0
    %4007 = vmatpush1.bf16.msra.mxu0 %v3990
    %4008 = vmatprep.subr.bf16.mxu0 0
    %4009 = vmatpush1.bf16.msra.mxu0 %v3991
    %4010 = vmatprep.subr.bf16.mxu0 0
    %4011 = vmatpush1.bf16.msra.mxu0 %v3992
    %4012 = vmatprep.subr.bf16.mxu0 0
    %4013 = vmatpush1.bf16.msra.mxu0 %v3993
    %4014 = vmatprep.subr.bf16.mxu0 0
    %4015 = vmatpush1.bf16.msra.mxu0 %v3994
    %4016 = vmatprep.subr.bf16.mxu0 0
    %4017 = vmatpush1.bf16.msra.mxu0 %v3995
    %4018 = vmatprep.subr.bf16.mxu0 0
    %4019 = vmatpush1.bf16.msra.mxu0 %v3996
    %4020 = vmatprep.subr.bf16.mxu0 0
    %4021 = vmatpush1.bf16.msra.mxu0 %v3997
    %4022 = vmatprep.subr.bf16.mxu0 0
    %4023 = vmatpush1.bf16.msra.mxu0 0
    %4024 = vmatprep.subr.bf16.mxu0 0
    %4025 = vmatpush1.bf16.msra.mxu0 0
    %4026 = vmatprep.subr.bf16.mxu0 0
    %4027 = vmatpush1.bf16.msra.mxu0 0
    %4028 = vmatprep.subr.bf16.mxu0 0
    %4029 = vmatpush1.bf16.msra.mxu0 0
    %4030 = vmatprep.subr.bf16.mxu0 0
    %4031 = vmatpush1.bf16.msra.mxu0 0
    %4032 = vmatprep.subr.bf16.mxu0 0
    %4033 = vmatpush1.bf16.msra.mxu0 0
    %4034 = vmatprep.subr.bf16.mxu0 0
    %4035 = vmatpush1.bf16.msra.mxu0 0
    %4036 = vmatprep.subr.bf16.mxu0 0
    %4037 = vmatpush1.bf16.msra.mxu0 0
    %4038 = vmatprep.mubr.bf16.mxu0 0
    %4039 = vmatmul.mubr.bf16.gmra.mrb[0].mxu0 %v3934
    %v4040 = vpop.f32.mrb[0].mxu0
    %v4041 = vadd.f32 %v3956, %v4040
    %v4042 = vpop.f32.mrb[0].mxu0
    %v4043 = vpop.f32.mrb[0].mxu0
    %v4044 = vpop.f32.mrb[0].mxu0
    %4045 = vdwg.mxu0
    %4046 = vst [vmem:[#allocation17] sm:$0xff] %v4041
    // Predicated region
    $region74: #{tpu_custom_call.1} parent=1 // pred_check
      _
    $region75: #{tpu_custom_call.1} parent=1 // pred_check_branch
      %4048 = sbr.rel (0) target = $region77
    $region76: #{tpu_custom_call.1} parent=1 // pred_region
      %s4050 = ssub.s32 128, 128
      %4051 = vsyncadd [#allocation4], %s4050
      %s4053 = sshll.u32 [#allocation17], 4
      %s4054 = int_to_ptr.vmem [resolvable:$true] %s4053
      %4056 = dma.vmem_to_hbm [thread:$0]  %s4054, 128, %s9, [#allocation4]
    $region77: #{tpu_custom_call.1} parent=1 // pred_fallthru
      _
    // Predicated region
    $region78: #{tpu_custom_call.1} parent=1 // pred_check
      _
    $region79: #{tpu_custom_call.1} parent=1 // pred_check_branch
      %4058 = sbr.rel (0) target = $region81
    $region80: #{tpu_custom_call.1} parent=1 // pred_region
      %4059 = dma.done [#allocation4], 128
    $region81: #{tpu_custom_call.1} parent=1 // pred_fallthru
      _
    %4060 = vsyncpa [#allocation3], 1
    %4061 = vsyncpa [#allocation6], 1
    %4062 = vsyncpa [#allocation9], 1
    %4063 = vsyncpa [#allocation12], 1
    %4064 = vsyncpa [#allocation15], 1
    %4065 = vsyncpa [#allocation4], 1

// kernel: tpu_custom_call.1
$region0: #{tpu_custom_call.1}
  #allocation0 [shape = 'u32[]', space=smem, size = 0x4, offset = 0x4, fixed_abs, tag = 'smem constant byte address 0x4 - core index']
  #allocation1 [shape = 'u32[144,128]{1,0:T(1,128)}', space=vmem, size = 0x12000, scoped, tag = 'internal scratch']
  %s0 = inlined_call_operand.hbm [shape: f32[8,32], index: 0, kind: input, shape index: {}]
  %s1 = inlined_call_operand.hbm [shape: bf16[32,1152], index: 1, kind: input, shape index: {}]
  %s2 = inlined_call_operand.hbm [shape: f32[1,1152], index: 2, kind: input, shape index: {}]
  %s3 = inlined_call_operand.hbm [shape: bf16[1152,640], index: 3, kind: input, shape index: {}]
  %s4 = inlined_call_operand.hbm [shape: f32[1,640], index: 4, kind: input, shape index: {}]
  %s5 = inlined_call_operand.hbm [shape: bf16[640,128], index: 5, kind: input, shape index: {}]
  %s6 = inlined_call_operand.hbm [shape: f32[1,128], index: 6, kind: input, shape index: {}]
  %s7 = inlined_call_operand.hbm [shape: bf16[128,128], index: 7, kind: input, shape index: {}]
  %s8 = inlined_call_operand.hbm [shape: f32[1,128], index: 8, kind: input, shape index: {}]
  %s9 = inlined_call_operand.hbm [shape: f32[8,128], index: 9, kind: output, shape index: {}]
  %s10 = sld [smem:[#allocation0]]
  $region82: #{tpu_custom_call.1} parent=0
    _
  %s12 = ssub.s32 1, %s10
  %s13 = scalar_select 0, %s12, %s10
  $region1: #{tpu_custom_call.1} parent=0
    #allocation2 [shape = 'u8[4096]{0}', space=vmem, size = 0x1000, scoped, tag = 'input window, operand 0, single buffered']
    #allocation3 [shape = 's32[1]{0}', space=sflag, size = 0x4, scoped, tag = 'scoped memory for tpu_custom_call.1']
    #allocation4 [shape = 's32[1]{0}', space=sflag, size = 0x4, scoped, tag = 'scoped memory for tpu_custom_call.1']
    #allocation5 [shape = 'u8[73728]{0}', space=vmem, size = 0x12000, scoped, tag = 'input window, operand 1, single buffered']
    #allocation6 [shape = 's32[1]{0}', space=sflag, size = 0x4, scoped, tag = 'scoped memory for tpu_custom_call.1']
    #allocation7 [shape = 'u8[4608]{0}', space=vmem, size = 0x1400, scoped, tag = 'input window, operand 2, single buffered']
    #allocation8 [shape = 'u8[1474560]{0}', space=vmem, size = 0x168000, scoped, tag = 'input window, operand 3, single buffered']
    #allocation9 [shape = 's32[1]{0}', space=sflag, size = 0x4, scoped, tag = 'scoped memory for tpu_custom_call.1']
    #allocation10 [shape = 'u8[2560]{0}', space=vmem, size = 0xc00, scoped, tag = 'input window, operand 4, single buffered']
    #allocation11 [shape = 'u8[163840]{0}', space=vmem, size = 0x28000, scoped, tag = 'input window, operand 5, single buffered']
    #allocation12 [shape = 's32[1]{0}', space=sflag, size = 0x4, scoped, tag = 'scoped memory for tpu_custom_call.1']
    #allocation13 [shape = 'u8[512]{0}', space=vmem, size = 0x400, scoped, tag = 'input window, operand 6, single buffered']
    #allocation14 [shape = 'u8[32768]{0}', space=vmem, size = 0x8000, scoped, tag = 'input window, operand 7, single buffered']
    #allocation15 [shape = 's32[1]{0}', space=sflag, size = 0x4, scoped, tag = 'scoped memory for tpu_custom_call.1']
    #allocation16 [shape = 'u8[512]{0}', space=vmem, size = 0x400, scoped, tag = 'input window, operand 8, single buffered']
    #allocation17 [shape = 'u8[4096]{0}', space=vmem, size = 0x1000, scoped, tag = 'output window, operand 0, single buffered']
    %14 = vsyncpa [#allocation3], 0
    %15 = vsyncpa [#allocation6], 0
    %16 = vsyncpa [#allocation9], 0
    %17 = vsyncpa [#allocation12], 0
    %18 = vsyncpa [#allocation15], 0
    %19 = vsyncpa [#allocation4], 0
    // Predicated region
    $region2: #{tpu_custom_call.1} parent=1 // pred_check
      _
    $region3: #{tpu_custom_call.1} parent=1 // pred_check_branch
      %21 = sbr.rel (0) target = $region5
    $region4: #{tpu_custom_call.1} parent=1 // pred_region
      %s23 = ssub.s32 128, 128
      %24 = vsyncadd [#allocation3], %s23
      %s26 = sshll.u32 [#allocation2], 4
      %s27 = int_to_ptr.vmem [resolvable:$true] %s26
      %29 = dma.hbm_to_vmem [thread:$0]  %s0, 128, %s27, [#allocation3]
    $region5: #{tpu_custom_call.1} parent=1 // pred_fallthru
      _
    // Predicated region
    $region6: #{tpu_custom_call.1} parent=1 // pred_check
      _
    $region7: #{tpu_custom_call.1} parent=1 // pred_check_branch
      %31 = sbr.rel (0) target = $region9
    $region8: #{tpu_custom_call.1} parent=1 // pred_region
      %s33 = ssub.s32 2304, 2304
      %34 = vsyncadd [#allocation6], %s33
      %s35 = sshll.u32 [#allocation5], 4
      %s36 = int_to_ptr.vmem [resolvable:$true] %s35
      %41 = dma.hbm_to_vmem [thread:$0]  %s1, 2304, %s36, [#allocation6], 576, 576, 36
    $region9: #{tpu_custom_call.1} parent=1 // pred_fallthru
      _
    // Predicated region
    $region10: #{tpu_custom_call.1} parent=1 // pred_check
      _
    $region11: #{tpu_custom_call.1} parent=1 // pred_check_branch
      %43 = sbr.rel (0) target = $region13
    $region12: #{tpu_custom_call.1} parent=1 // pred_region
      %s45 = ssub.s32 144, 144
      %46 = vsyncadd [#allocation6], %s45
      %s48 = sshll.u32 [#allocation7], 4
      %s49 = int_to_ptr.vmem [resolvable:$true] %s48
      %51 = dma.hbm_to_vmem [thread:$0]  %s2, 144, %s49, [#allocation6]
    $region13: #{tpu_custom_call.1} parent=1 // pred_fallthru
      _
    // Predicated region
    $region14: #{tpu_custom_call.1} parent=1 // pred_check
      _
    $region15: #{tpu_custom_call.1} parent=1 // pred_check_branch
      %53 = sbr.rel (0) target = $region17
    $region16: #{tpu_custom_call.1} parent=1 // pred_region
      %s55 = ssub.s32 46080, 46080
      %56 = vsyncadd [#allocation9], %s55
      %s57 = sshll.u32 [#allocation8], 4
      %s58 = int_to_ptr.vmem [resolvable:$true] %s57
      %63 = dma.hbm_to_vmem [thread:$0]  %s3, 46080, %s58, [#allocation9], 320, 320, 20
    $region17: #{tpu_custom_call.1} parent=1 // pred_fallthru
      _
    // Predicated region
    $region18: #{tpu_custom_call.1} parent=1 // pred_check
      _
    $region19: #{tpu_custom_call.1} parent=1 // pred_check_branch
      %65 = sbr.rel (0) target = $region21
    $region20: #{tpu_custom_call.1} parent=1 // pred_region
      %s67 = ssub.s32 80, 80
      %68 = vsyncadd [#allocation9], %s67
      %s70 = sshll.u32 [#allocation10], 4
      %s71 = int_to_ptr.vmem [resolvable:$true] %s70
      %73 = dma.hbm_to_vmem [thread:$0]  %s4, 80, %s71, [#allocation9]
    $region21: #{tpu_custom_call.1} parent=1 // pred_fallthru
      _
    // Predicated region
    $region22: #{tpu_custom_call.1} parent=1 // pred_check
      _
    $region23: #{tpu_custom_call.1} parent=1 // pred_check_branch
      %75 = sbr.rel (0) target = $region25
    $region24: #{tpu_custom_call.1} parent=1 // pred_region
      %s77 = ssub.s32 5120, 5120
      %78 = vsyncadd [#allocation12], %s77
      %s79 = sshll.u32 [#allocation11], 4
      %s80 = int_to_ptr.vmem [resolvable:$true] %s79
      %85 = dma.hbm_to_vmem [thread:$0]  %s5, 5120, %s80, [#allocation12], 64, 64, 4
    $region25: #{tpu_custom_call.1} parent=1 // pred_fallthru
      _
    // Predicated region
    $region26: #{tpu_custom_call.1} parent=1 // pred_check
      _
    $region27: #{tpu_custom_call.1} parent=1 // pred_check_branch
      %87 = sbr.rel (0) target = $region29
    $region28: #{tpu_custom_call.1} parent=1 // pred_region
      %s89 = ssub.s32 16, 16
      %90 = vsyncadd [#allocation12], %s89
      %s92 = sshll.u32 [#allocation13], 4
      %s93 = int_to_ptr.vmem [resolvable:$true] %s92
      %95 = dma.hbm_to_vmem [thread:$0]  %s6, 16, %s93, [#allocation12]
    $region29: #{tpu_custom_call.1} parent=1 // pred_fallthru
      _
    // Predicated region
    $region30: #{tpu_custom_call.1} parent=1 // pred_check
      _
    $region31: #{tpu_custom_call.1} parent=1 // pred_check_branch
      %97 = sbr.rel (0) target = $region33
    $region32: #{tpu_custom_call.1} parent=1 // pred_region
      %s99 = ssub.s32 1024, 1024
      %100 = vsyncadd [#allocation15], %s99
      %s101 = sshll.u32 [#allocation14], 4
      %s102 = int_to_ptr.vmem [resolvable:$true] %s101
      %107 = dma.hbm_to_vmem [thread:$0]  %s7, 1024, %s102, [#allocation15], 64, 64, 4
    $region33: #{tpu_custom_call.1} parent=1 // pred_fallthru
      _
    // Predicated region
    $region34: #{tpu_custom_call.1} parent=1 // pred_check
      _
    $region35: #{tpu_custom_call.1} parent=1 // pred_check_branch
      %109 = sbr.rel (0) target = $region37
    $region36: #{tpu_custom_call.1} parent=1 // pred_region
      %s111 = ssub.s32 16, 16
      %112 = vsyncadd [#allocation15], %s111
      %s114 = sshll.u32 [#allocation16], 4
      %s115 = int_to_ptr.vmem [resolvable:$true] %s114
      %117 = dma.hbm_to_vmem [thread:$0]  %s8, 16, %s115, [#allocation15]
    $region37: #{tpu_custom_call.1} parent=1 // pred_fallthru
      _
    // Predicated region
    $region38: #{tpu_custom_call.1} parent=1 // pred_check
      _
    $region39: #{tpu_custom_call.1} parent=1 // pred_check_branch
      %119 = sbr.rel (0) target = $region41
    $region40: #{tpu_custom_call.1} parent=1 // pred_region
      %120 = dma.done [#allocation3], 128
    $region41: #{tpu_custom_call.1} parent=1 // pred_fallthru
      _
    // Predicated region
    $region42: #{tpu_custom_call.1} parent=1 // pred_check
      _
    $region43: #{tpu_custom_call.1} parent=1 // pred_check_branch
      %122 = sbr.rel (0) target = $region45
    $region44: #{tpu_custom_call.1} parent=1 // pred_region
      %123 = dma.done [#allocation6], 2304
    $region45: #{tpu_custom_call.1} parent=1 // pred_fallthru
      _
    // Predicated region
    $region46: #{tpu_custom_call.1} parent=1 // pred_check
      _
    $region47: #{tpu_custom_call.1} parent=1 // pred_check_branch
      %125 = sbr.rel (0) target = $region49
    $region48: #{tpu_custom_call.1} parent=1 // pred_region
      %126 = dma.done [#allocation6], 144
    $region49: #{tpu_custom_call.1} parent=1 // pred_fallthru
      _
    // Predicated region
    $region50: #{tpu_custom_call.1} parent=1 // pred_check
      _
    $region51: #{tpu_custom_call.1} parent=1 // pred_check_branch
      %128 = sbr.rel (0) target = $region53
    $region52: #{tpu_custom_call.1} parent=1 // pred_region
      %129 = dma.done [#allocation9], 46080
    $region53: #{tpu_custom_call.1} parent=1 // pred_fallthru
      _
    // Predicated region
    $region54: #{tpu_custom_call.1} parent=1 // pred_check
      _
    $region55: #{tpu_custom_call.1} parent=1 // pred_check_branch
      %131 = sbr.rel (0) target = $region57
    $region56: #{tpu_custom_call.1} parent=1 // pred_region
      %132 = dma.done [#allocation9], 80
    $region57: #{tpu_custom_call.1} parent=1 // pred_fallthru
      _
    // Predicated region
    $region58: #{tpu_custom_call.1} parent=1 // pred_check
      _
    $region59: #{tpu_custom_call.1} parent=1 // pred_check_branch
      %134 = sbr.rel (0) target = $region61
    $region60: #{tpu_custom_call.1} parent=1 // pred_region
      %135 = dma.done [#allocation12], 5120
    $region61: #{tpu_custom_call.1} parent=1 // pred_fallthru
      _
    // Predicated region
    $region62: #{tpu_custom_call.1} parent=1 // pred_check
      _
    $region63: #{tpu_custom_call.1} parent=1 // pred_check_branch
      %137 = sbr.rel (0) target = $region65
    $region64: #{tpu_custom_call.1} parent=1 // pred_region
      %138 = dma.done [#allocation12], 16
    $region65: #{tpu_custom_call.1} parent=1 // pred_fallthru
      _
    // Predicated region
    $region66: #{tpu_custom_call.1} parent=1 // pred_check
      _
    $region67: #{tpu_custom_call.1} parent=1 // pred_check_branch
      %140 = sbr.rel (0) target = $region69
    $region68: #{tpu_custom_call.1} parent=1 // pred_region
      %141 = dma.done [#allocation15], 1024
    $region69: #{tpu_custom_call.1} parent=1 // pred_fallthru
      _
    // Predicated region
    $region70: #{tpu_custom_call.1} parent=1 // pred_check
      _
    $region71: #{tpu_custom_call.1} parent=1 // pred_check_branch
      %143 = sbr.rel (0) target = $region73
    $region72: #{tpu_custom_call.1} parent=1 // pred_region
      %144 = dma.done [#allocation15], 16
    $region73: #{tpu_custom_call.1} parent=1 // pred_fallthru
      _
    %v146 = vld [vmem:[#allocation2] sm:$0xff]
    %v147 = vpack.c.bf16 %v146, %v146
    %v148 = vld [vmem:[#allocation5] sm:$0xff]
    %v149 = vld [vmem:[#allocation5 + $0x8] sm:$0xff]
    %v150 = vld [vmem:[#allocation5 + $0x10] sm:$0xff]
    %v151 = vld [vmem:[#allocation5 + $0x18] sm:$0xff]
    %v152 = vld [vmem:[#allocation5 + $0x20] sm:$0xf]
    %v153 = vld [vmem:[#allocation5 + $0x24] sm:$0xff]
    %v154 = vld [vmem:[#allocation5 + $0x2c] sm:$0xff]
    %v155 = vld [vmem:[#allocation5 + $0x34] sm:$0xff]
    %v156 = vld [vmem:[#allocation5 + $0x3c] sm:$0xff]
    %v157 = vld [vmem:[#allocation5 + $0x44] sm:$0xf]
    %v158 = vld [vmem:[#allocation5 + $0x48] sm:$0xff]
    %v159 = vld [vmem:[#allocation5 + $0x50] sm:$0xff]
    %v160 = vld [vmem:[#allocation5 + $0x58] sm:$0xff]
    %v161 = vld [vmem:[#allocation5 + $0x60] sm:$0xff]
    %v162 = vld [vmem:[#allocation5 + $0x68] sm:$0xf]
    %v163 = vld [vmem:[#allocation5 + $0x6c] sm:$0xff]
    %v164 = vld [vmem:[#allocation5 + $0x74] sm:$0xff]
    %v165 = vld [vmem:[#allocation5 + $0x7c] sm:$0xff]
    %v166 = vld [vmem:[#allocation5 + $0x84] sm:$0xff]
    %v167 = vld [vmem:[#allocation5 + $0x8c] sm:$0xf]
    %v168 = vld [vmem:[#allocation7] sm:$0xff]
    %v169 = vld [vmem:[#allocation7 + $0x8] sm:$0x1]
    %v172 = vlaneseq
    %v173 = vshrl.u32 %v172, 7
    %v174 = vsub.s32 0, %v173
    %v175 = vrot.slane %v168, %v174
    %v176 = vlaneseq
    %v177 = vshrl.u32 %v176, 7
    %v178 = vsub.s32 1, %v177
    %v179 = vrot.slane %v168, %v178
    %v180 = vlaneseq
    %v181 = vshrl.u32 %v180, 7
    %v182 = vsub.s32 2, %v181
    %v183 = vrot.slane %v168, %v182
    %v184 = vlaneseq
    %v185 = vshrl.u32 %v184, 7
    %v186 = vsub.s32 3, %v185
    %v187 = vrot.slane %v168, %v186
    %v188 = vlaneseq
    %v189 = vshrl.u32 %v188, 7
    %v190 = vsub.s32 4, %v189
    %v191 = vrot.slane %v168, %v190
    %v192 = vlaneseq
    %v193 = vshrl.u32 %v192, 7
    %v194 = vsub.s32 5, %v193
    %v195 = vrot.slane %v168, %v194
    %v196 = vlaneseq
    %v197 = vshrl.u32 %v196, 7
    %v198 = vsub.s32 6, %v197
    %v199 = vrot.slane %v168, %v198
    %v200 = vlaneseq
    %v201 = vshrl.u32 %v200, 7
    %v202 = vsub.s32 7, %v201
    %v203 = vrot.slane %v168, %v202
    %v204 = vlaneseq
    %v205 = vshrl.u32 %v204, 7
    %v206 = vsub.s32 0, %v205
    %v207 = vrot.slane %v169, %v206
    %v237 = vunpack.c.l.b16 %v148
    %v238 = vunpack.c.h.b16 %v148
    %v239 = vunpack.c.l.b16 %v149
    %v240 = vunpack.c.h.b16 %v149
    %v241 = vunpack.c.l.b16 %v150
    %v242 = vunpack.c.h.b16 %v150
    %v243 = vunpack.c.l.b16 %v151
    %v244 = vunpack.c.h.b16 %v151
    %v245 = vunpack.c.l.b16 %v152
    %v246 = vunpack.c.l.b16 %v153
    %v247 = vunpack.c.h.b16 %v153
    %v248 = vunpack.c.l.b16 %v154
    %v249 = vunpack.c.h.b16 %v154
    %v250 = vunpack.c.l.b16 %v155
    %v251 = vunpack.c.h.b16 %v155
    %v252 = vunpack.c.l.b16 %v156
    %v253 = vunpack.c.h.b16 %v156
    %v254 = vunpack.c.l.b16 %v157
    %v255 = vunpack.c.l.b16 %v158
    %v256 = vunpack.c.h.b16 %v158
    %v257 = vunpack.c.l.b16 %v159
    %v258 = vunpack.c.h.b16 %v159
    %v259 = vunpack.c.l.b16 %v160
    %v260 = vunpack.c.h.b16 %v160
    %v261 = vunpack.c.l.b16 %v161
    %v262 = vunpack.c.h.b16 %v161
    %v263 = vunpack.c.l.b16 %v162
    %v264 = vunpack.c.l.b16 %v163
    %v265 = vunpack.c.h.b16 %v163
    %v266 = vunpack.c.l.b16 %v164
    %v267 = vunpack.c.h.b16 %v164
    %v268 = vunpack.c.l.b16 %v165
    %v269 = vunpack.c.h.b16 %v165
    %v270 = vunpack.c.l.b16 %v166
    %v271 = vunpack.c.h.b16 %v166
    %v272 = vunpack.c.l.b16 %v167
    %v273 = vpack.c.b16 %v246, %v237
    %v274 = vpack.c.b16 %v247, %v238
    %v275 = vpack.c.b16 %v248, %v239
    %v276 = vpack.c.b16 %v249, %v240
    %v277 = vpack.c.b16 %v250, %v241
    %v278 = vpack.c.b16 %v251, %v242
    %v279 = vpack.c.b16 %v252, %v243
    %v280 = vpack.c.b16 %v253, %v244
    %v281 = vpack.c.b16 %v254, %v245
    %v282 = vpack.c.b16 %v264, %v255
    %v283 = vpack.c.b16 %v265, %v256
    %v284 = vpack.c.b16 %v266, %v257
    %v285 = vpack.c.b16 %v267, %v258
    %v286 = vpack.c.b16 %v268, %v259
    %v287 = vpack.c.b16 %v269, %v260
    %v288 = vpack.c.b16 %v270, %v261
    %v289 = vpack.c.b16 %v271, %v262
    %v290 = vpack.c.b16 %v272, %v263
    %vm309 = vcmask 261120
    %v311 = vsel %vm309, %v147, 0
    %313 = vmatprep.subr.bf16.mxu0 %v274
    %314 = vmatpush1.bf16.msra.mxu0 %v273
    %315 = vmatprep.subr.bf16.mxu0 %v283
    %316 = vmatpush1.bf16.msra.mxu0 %v282
    %317 = vmatprep.subr.bf16.mxu0 0
    %318 = vmatpush1.bf16.msra.mxu0 0
    %319 = vmatprep.subr.bf16.mxu0 0
    %320 = vmatpush1.bf16.msra.mxu0 0
    %321 = vmatprep.subr.bf16.mxu0 0
    %322 = vmatpush1.bf16.msra.mxu0 0
    %323 = vmatprep.subr.bf16.mxu0 0
    %324 = vmatpush1.bf16.msra.mxu0 0
    %325 = vmatprep.subr.bf16.mxu0 0
    %326 = vmatpush1.bf16.msra.mxu0 0
    %327 = vmatprep.subr.bf16.mxu0 0
    %328 = vmatpush1.bf16.msra.mxu0 0
    %329 = vmatprep.subr.bf16.mxu0 0
    %330 = vmatpush1.bf16.msra.mxu0 0
    %331 = vmatprep.subr.bf16.mxu0 0
    %332 = vmatpush1.bf16.msra.mxu0 0
    %333 = vmatprep.subr.bf16.mxu0 0
    %334 = vmatpush1.bf16.msra.mxu0 0
    %335 = vmatprep.subr.bf16.mxu0 0
    %336 = vmatpush1.bf16.msra.mxu0 0
    %337 = vmatprep.subr.bf16.mxu0 0
    %338 = vmatpush1.bf16.msra.mxu0 0
    %339 = vmatprep.subr.bf16.mxu0 0
    %340 = vmatpush1.bf16.msra.mxu0 0
    %341 = vmatprep.subr.bf16.mxu0 0
    %342 = vmatpush1.bf16.msra.mxu0 0
    %343 = vmatprep.subr.bf16.mxu0 0
    %344 = vmatpush1.bf16.msra.mxu0 0
    %345 = vmatprep.mubr.bf16.mxu0 0
    %346 = vmatmul.mubr.bf16.gmra.mrb[0].mxu0 %v311
    %v347 = vpop.f32.mrb[0].mxu0
    %v348 = vadd.f32 %v175, %v347
    %v349 = vpop.f32.mrb[0].mxu0
    %v350 = vadd.f32 %v179, %v349
    %v351 = vpop.f32.mrb[0].mxu0
    %v352 = vpop.f32.mrb[0].mxu0
    %353 = vdwg.mxu0
    %354 = vmatprep.subr.bf16.mxu0 %v276
    %355 = vmatpush1.bf16.msra.mxu0 %v275
    %356 = vmatprep.subr.bf16.mxu0 %v285
    %357 = vmatpush1.bf16.msra.mxu0 %v284
    %358 = vmatprep.subr.bf16.mxu0 0
    %359 = vmatpush1.bf16.msra.mxu0 0
    %360 = vmatprep.subr.bf16.mxu0 0
    %361 = vmatpush1.bf16.msra.mxu0 0
    %362 = vmatprep.subr.bf16.mxu0 0
    %363 = vmatpush1.bf16.msra.mxu0 0
    %364 = vmatprep.subr.bf16.mxu0 0
    %365 = vmatpush1.bf16.msra.mxu0 0
    %366 = vmatprep.subr.bf16.mxu0 0
    %367 = vmatpush1.bf16.msra.mxu0 0
    %368 = vmatprep.subr.bf16.mxu0 0
    %369 = vmatpush1.bf16.msra.mxu0 0
    %370 = vmatprep.subr.bf16.mxu0 0
    %371 = vmatpush1.bf16.msra.mxu0 0
    %372 = vmatprep.subr.bf16.mxu0 0
    %373 = vmatpush1.bf16.msra.mxu0 0
    %374 = vmatprep.subr.bf16.mxu0 0
    %375 = vmatpush1.bf16.msra.mxu0 0
    %376 = vmatprep.subr.bf16.mxu0 0
    %377 = vmatpush1.bf16.msra.mxu0 0
    %378 = vmatprep.subr.bf16.mxu0 0
    %379 = vmatpush1.bf16.msra.mxu0 0
    %380 = vmatprep.subr.bf16.mxu0 0
    %381 = vmatpush1.bf16.msra.mxu0 0
    %382 = vmatprep.subr.bf16.mxu0 0
    %383 = vmatpush1.bf16.msra.mxu0 0
    %384 = vmatprep.subr.bf16.mxu0 0
    %385 = vmatpush1.bf16.msra.mxu0 0
    %386 = vmatprep.mubr.bf16.mxu0 0
    %387 = vmatmul.mubr.bf16.gmra.mrb[0].mxu0 %v311
    %v388 = vpop.f32.mrb[0].mxu0
    %v389 = vadd.f32 %v183, %v388
    %v390 = vpop.f32.mrb[0].mxu0
    %v391 = vadd.f32 %v187, %v390
    %v392 = vpop.f32.mrb[0].mxu0
    %v393 = vpop.f32.mrb[0].mxu0
    %394 = vdwg.mxu0
    %395 = vmatprep.subr.bf16.mxu0 %v278
    %396 = vmatpush1.bf16.msra.mxu0 %v277
    %397 = vmatprep.subr.bf16.mxu0 %v287
    %398 = vmatpush1.bf16.msra.mxu0 %v286
    %399 = vmatprep.subr.bf16.mxu0 0
    %400 = vmatpush1.bf16.msra.mxu0 0
    %401 = vmatprep.subr.bf16.mxu0 0
    %402 = vmatpush1.bf16.msra.mxu0 0
    %403 = vmatprep.subr.bf16.mxu0 0
    %404 = vmatpush1.bf16.msra.mxu0 0
    %405 = vmatprep.subr.bf16.mxu0 0
    %406 = vmatpush1.bf16.msra.mxu0 0
    %407 = vmatprep.subr.bf16.mxu0 0
    %408 = vmatpush1.bf16.msra.mxu0 0
    %409 = vmatprep.subr.bf16.mxu0 0
    %410 = vmatpush1.bf16.msra.mxu0 0
    %411 = vmatprep.subr.bf16.mxu0 0
    %412 = vmatpush1.bf16.msra.mxu0 0
    %413 = vmatprep.subr.bf16.mxu0 0
    %414 = vmatpush1.bf16.msra.mxu0 0
    %415 = vmatprep.subr.bf16.mxu0 0
    %416 = vmatpush1.bf16.msra.mxu0 0
    %417 = vmatprep.subr.bf16.mxu0 0
    %418 = vmatpush1.bf16.msra.mxu0 0
    %419 = vmatprep.subr.bf16.mxu0 0
    %420 = vmatpush1.bf16.msra.mxu0 0
    %421 = vmatprep.subr.bf16.mxu0 0
    %422 = vmatpush1.bf16.msra.mxu0 0
    %423 = vmatprep.subr.bf16.mxu0 0
    %424 = vmatpush1.bf16.msra.mxu0 0
    %425 = vmatprep.subr.bf16.mxu0 0
    %426 = vmatpush1.bf16.msra.mxu0 0
    %427 = vmatprep.mubr.bf16.mxu0 0
    %428 = vmatmul.mubr.bf16.gmra.mrb[0].mxu0 %v311
    %v429 = vpop.f32.mrb[0].mxu0
    %v430 = vadd.f32 %v191, %v429
    %v431 = vpop.f32.mrb[0].mxu0
    %v432 = vadd.f32 %v195, %v431
    %v433 = vpop.f32.mrb[0].mxu0
    %v434 = vpop.f32.mrb[0].mxu0
    %435 = vdwg.mxu0
    %436 = vmatprep.subr.bf16.mxu0 %v280
    %437 = vmatpush1.bf16.msra.mxu0 %v279
    %438 = vmatprep.subr.bf16.mxu0 %v289
    %439 = vmatpush1.bf16.msra.mxu0 %v288
    %440 = vmatprep.subr.bf16.mxu0 0
    %441 = vmatpush1.bf16.msra.mxu0 0
    %442 = vmatprep.subr.bf16.mxu0 0
    %443 = vmatpush1.bf16.msra.mxu0 0
    %444 = vmatprep.subr.bf16.mxu0 0
    %445 = vmatpush1.bf16.msra.mxu0 0
    %446 = vmatprep.subr.bf16.mxu0 0
    %447 = vmatpush1.bf16.msra.mxu0 0
    %448 = vmatprep.subr.bf16.mxu0 0
    %449 = vmatpush1.bf16.msra.mxu0 0
    %450 = vmatprep.subr.bf16.mxu0 0
    %451 = vmatpush1.bf16.msra.mxu0 0
    %452 = vmatprep.subr.bf16.mxu0 0
    %453 = vmatpush1.bf16.msra.mxu0 0
    %454 = vmatprep.subr.bf16.mxu0 0
    %455 = vmatpush1.bf16.msra.mxu0 0
    %456 = vmatprep.subr.bf16.mxu0 0
    %457 = vmatpush1.bf16.msra.mxu0 0
    %458 = vmatprep.subr.bf16.mxu0 0
    %459 = vmatpush1.bf16.msra.mxu0 0
    %460 = vmatprep.subr.bf16.mxu0 0
    %461 = vmatpush1.bf16.msra.mxu0 0
    %462 = vmatprep.subr.bf16.mxu0 0
    %463 = vmatpush1.bf16.msra.mxu0 0
    %464 = vmatprep.subr.bf16.mxu0 0
    %465 = vmatpush1.bf16.msra.mxu0 0
    %466 = vmatprep.subr.bf16.mxu0 0
    %467 = vmatpush1.bf16.msra.mxu0 0
    %468 = vmatprep.mubr.bf16.mxu0 0
    %469 = vmatmul.mubr.bf16.gmra.mrb[0].mxu0 %v311
    %v470 = vpop.f32.mrb[0].mxu0
    %v471 = vadd.f32 %v199, %v470
    %v472 = vpop.f32.mrb[0].mxu0
    %v473 = vadd.f32 %v203, %v472
    %v474 = vpop.f32.mrb[0].mxu0
    %v475 = vpop.f32.mrb[0].mxu0
    %476 = vdwg.mxu0
    %477 = vmatprep.subr.bf16.mxu0 0
    %478 = vmatpush1.bf16.msra.mxu0 %v281
    %479 = vmatprep.subr.bf16.mxu0 0
    %480 = vmatpush1.bf16.msra.mxu0 %v290
    %481 = vmatprep.subr.bf16.mxu0 0
    %482 = vmatpush1.bf16.msra.mxu0 0
    %483 = vmatprep.subr.bf16.mxu0 0
    %484 = vmatpush1.bf16.msra.mxu0 0
    %485 = vmatprep.subr.bf16.mxu0 0
    %486 = vmatpush1.bf16.msra.mxu0 0
    %487 = vmatprep.subr.bf16.mxu0 0
    %488 = vmatpush1.bf16.msra.mxu0 0
    %489 = vmatprep.subr.bf16.mxu0 0
    %490 = vmatpush1.bf16.msra.mxu0 0
    %491 = vmatprep.subr.bf16.mxu0 0
    %492 = vmatpush1.bf16.msra.mxu0 0
    %493 = vmatprep.subr.bf16.mxu0 0
    %494 = vmatpush1.bf16.msra.mxu0 0
    %495 = vmatprep.subr.bf16.mxu0 0
    %496 = vmatpush1.bf16.msra.mxu0 0
    %497 = vmatprep.subr.bf16.mxu0 0
    %498 = vmatpush1.bf16.msra.mxu0 0
    %499 = vmatprep.subr.bf16.mxu0 0
    %500 = vmatpush1.bf16.msra.mxu0 0
    %501 = vmatprep.subr.bf16.mxu0 0
    %502 = vmatpush1.bf16.msra.mxu0 0
    %503 = vmatprep.subr.bf16.mxu0 0
    %504 = vmatpush1.bf16.msra.mxu0 0
    %505 = vmatprep.subr.bf16.mxu0 0
    %506 = vmatpush1.bf16.msra.mxu0 0
    %507 = vmatprep.subr.bf16.mxu0 0
    %508 = vmatpush1.bf16.msra.mxu0 0
    %509 = vmatprep.mubr.bf16.mxu0 0
    %510 = vmatmul.mubr.bf16.gmra.mrb[0].mxu0 %v311
    %v511 = vpop.f32.mrb[0].mxu0
    %v512 = vadd.f32 %v207, %v511
    %v513 = vpop.f32.mrb[0].mxu0
    %v514 = vpop.f32.mrb[0].mxu0
    %v515 = vpop.f32.mrb[0].mxu0
    %516 = vdwg.mxu0
    %v517 = vmax.f32 %v348, 0.0
    %v518 = vmax.f32 %v350, 0.0
    %v519 = vmax.f32 %v389, 0.0
    %v520 = vmax.f32 %v391, 0.0
    %v521 = vmax.f32 %v430, 0.0
    %v522 = vmax.f32 %v432, 0.0
    %v523 = vmax.f32 %v471, 0.0
    %v524 = vmax.f32 %v473, 0.0
    %v525 = vmax.f32 %v512, 0.0
    %v526 = vpack.c.bf16 %v517, %v517
    %v527 = vpack.c.bf16 %v518, %v518
    %v528 = vpack.c.bf16 %v519, %v519
    %v529 = vpack.c.bf16 %v520, %v520
    %v530 = vpack.c.bf16 %v521, %v521
    %v531 = vpack.c.bf16 %v522, %v522
    %v532 = vpack.c.bf16 %v523, %v523
    %v533 = vpack.c.bf16 %v524, %v524
    %v534 = vpack.c.bf16 %v525, %v525
    %v535 = vld [vmem:[#allocation8] sm:$0xff]
    %v536 = vld [vmem:[#allocation8 + $0x8] sm:$0xff]
    %v537 = vld [vmem:[#allocation8 + $0x10] sm:$0xf]
    %v538 = vld [vmem:[#allocation8 + $0x14] sm:$0xff]
    %v539 = vld [vmem:[#allocation8 + $0x1c] sm:$0xff]
    %v540 = vld [vmem:[#allocation8 + $0x24] sm:$0xf]
    %v541 = vld [vmem:[#allocation8 + $0x28] sm:$0xff]
    %v542 = vld [vmem:[#allocation8 + $0x30] sm:$0xff]
    %v543 = vld [vmem:[#allocation8 + $0x38] sm:$0xf]
    %v544 = vld [vmem:[#allocation8 + $0x3c] sm:$0xff]
    %v545 = vld [vmem:[#allocation8 + $0x44] sm:$0xff]
    %v546 = vld [vmem:[#allocation8 + $0x4c] sm:$0xf]
    %v547 = vld [vmem:[#allocation8 + $0x50] sm:$0xff]
    %v548 = vld [vmem:[#allocation8 + $0x58] sm:$0xff]
    %v549 = vld [vmem:[#allocation8 + $0x60] sm:$0xf]
    %v550 = vld [vmem:[#allocation8 + $0x64] sm:$0xff]
    %v551 = vld [vmem:[#allocation8 + $0x6c] sm:$0xff]
    %v552 = vld [vmem:[#allocation8 + $0x74] sm:$0xf]
    %v553 = vld [vmem:[#allocation8 + $0x78] sm:$0xff]
    %v554 = vld [vmem:[#allocation8 + $0x80] sm:$0xff]
    %v555 = vld [vmem:[#allocation8 + $0x88] sm:$0xf]
    %v556 = vld [vmem:[#allocation8 + $0x8c] sm:$0xff]
    %v557 = vld [vmem:[#allocation8 + $0x94] sm:$0xff]
    %v558 = vld [vmem:[#allocation8 + $0x9c] sm:$0xf]
    %v559 = vld [vmem:[#allocation8 + $0xa0] sm:$0xff]
    %v560 = vld [vmem:[#allocation8 + $0xa8] sm:$0xff]
    %v561 = vld [vmem:[#allocation8 + $0xb0] sm:$0xf]
    %v562 = vld [vmem:[#allocation8 + $0xb4] sm:$0xff]
    %v563 = vld [vmem:[#allocation8 + $0xbc] sm:$0xff]
    %v564 = vld [vmem:[#allocation8 + $0xc4] sm:$0xf]
    %v565 = vld [vmem:[#allocation8 + $0xc8] sm:$0xff]
    %v566 = vld [vmem:[#allocation8 + $0xd0] sm:$0xff]
    %v567 = vld [vmem:[#allocation8 + $0xd8] sm:$0xf]
    %v568 = vld [vmem:[#allocation8 + $0xdc] sm:$0xff]
    %v569 = vld [vmem:[#allocation8 + $0xe4] sm:$0xff]
    %v570 = vld [vmem:[#allocation8 + $0xec] sm:$0xf]
    %v571 = vld [vmem:[#allocation8 + $0xf0] sm:$0xff]
    %v572 = vld [vmem:[#allocation8 + $0xf8] sm:$0xff]
    %v573 = vld [vmem:[#allocation8 + $0x100] sm:$0xf]
    %v574 = vld [vmem:[#allocation8 + $0x104] sm:$0xff]
    %v575 = vld [vmem:[#allocation8 + $0x10c] sm:$0xff]
    %v576 = vld [vmem:[#allocation8 + $0x114] sm:$0xf]
    %v577 = vld [vmem:[#allocation8 + $0x118] sm:$0xff]
    %v578 = vld [vmem:[#allocation8 + $0x120] sm:$0xff]
    %v579 = vld [vmem:[#allocation8 + $0x128] sm:$0xf]
    %v580 = vld [vmem:[#allocation8 + $0x12c] sm:$0xff]
    %v581 = vld [vmem:[#allocation8 + $0x134] sm:$0xff]
    %v582 = vld [vmem:[#allocation8 + $0x13c] sm:$0xf]
    %v583 = vld [vmem:[#allocation8 + $0x140] sm:$0xff]
    %v584 = vld [vmem:[#allocation8 + $0x148] sm:$0xff]
    %v585 = vld [vmem:[#allocation8 + $0x150] sm:$0xf]
    %v586 = vld [vmem:[#allocation8 + $0x154] sm:$0xff]
    %v587 = vld [vmem:[#allocation8 + $0x15c] sm:$0xff]
    %v588 = vld [vmem:[#allocation8 + $0x164] sm:$0xf]
    %v589 = vld [vmem:[#allocation8 + $0x168] sm:$0xff]
    %v590 = vld [vmem:[#allocation8 + $0x170] sm:$0xff]
    %v591 = vld [vmem:[#allocation8 + $0x178] sm:$0xf]
    %v592 = vld [vmem:[#allocation8 + $0x17c] sm:$0xff]
    %v593 = vld [vmem:[#allocation8 + $0x184] sm:$0xff]
    %v594 = vld [vmem:[#allocation8 + $0x18c] sm:$0xf]
    %v595 = vld [vmem:[#allocation8 + $0x190] sm:$0xff]
    %v596 = vld [vmem:[#allocation8 + $0x198] sm:$0xff]
    %v597 = vld [vmem:[#allocation8 + $0x1a0] sm:$0xf]
    %v598 = vld [vmem:[#allocation8 + $0x1a4] sm:$0xff]
    %v599 = vld [vmem:[#allocation8 + $0x1ac] sm:$0xff]
    %v600 = vld [vmem:[#allocation8 + $0x1b4] sm:$0xf]
    %v601 = vld [vmem:[#allocation8 + $0x1b8] sm:$0xff]
    %v602 = vld [vmem:[#allocation8 + $0x1c0] sm:$0xff]
    %v603 = vld [vmem:[#allocation8 + $0x1c8] sm:$0xf]
    %v604 = vld [vmem:[#allocation8 + $0x1cc] sm:$0xff]
    %v605 = vld [vmem:[#allocation8 + $0x1d4] sm:$0xff]
    %v606 = vld [vmem:[#allocation8 + $0x1dc] sm:$0xf]
    %v607 = vld [vmem:[#allocation8 + $0x1e0] sm:$0xff]
    %v608 = vld [vmem:[#allocation8 + $0x1e8] sm:$0xff]
    %v609 = vld [vmem:[#allocation8 + $0x1f0] sm:$0xf]
    %v610 = vld [vmem:[#allocation8 + $0x1f4] sm:$0xff]
    %v611 = vld [vmem:[#allocation8 + $0x1fc] sm:$0xff]
    %v612 = vld [vmem:[#allocation8 + $0x204] sm:$0xf]
    %v613 = vld [vmem:[#allocation8 + $0x208] sm:$0xff]
    %v614 = vld [vmem:[#allocation8 + $0x210] sm:$0xff]
    %v615 = vld [vmem:[#allocation8 + $0x218] sm:$0xf]
    %v616 = vld [vmem:[#allocation8 + $0x21c] sm:$0xff]
    %v617 = vld [vmem:[#allocation8 + $0x224] sm:$0xff]
    %v618 = vld [vmem:[#allocation8 + $0x22c] sm:$0xf]
    %v619 = vld [vmem:[#allocation8 + $0x230] sm:$0xff]
    %v620 = vld [vmem:[#allocation8 + $0x238] sm:$0xff]
    %v621 = vld [vmem:[#allocation8 + $0x240] sm:$0xf]
    %v622 = vld [vmem:[#allocation8 + $0x244] sm:$0xff]
    %v623 = vld [vmem:[#allocation8 + $0x24c] sm:$0xff]
    %v624 = vld [vmem:[#allocation8 + $0x254] sm:$0xf]
    %v625 = vld [vmem:[#allocation8 + $0x258] sm:$0xff]
    %v626 = vld [vmem:[#allocation8 + $0x260] sm:$0xff]
    %v627 = vld [vmem:[#allocation8 + $0x268] sm:$0xf]
    %v628 = vld [vmem:[#allocation8 + $0x26c] sm:$0xff]
    %v629 = vld [vmem:[#allocation8 + $0x274] sm:$0xff]
    %v630 = vld [vmem:[#allocation8 + $0x27c] sm:$0xf]
    %v631 = vld [vmem:[#allocation8 + $0x280] sm:$0xff]
    %v632 = vld [vmem:[#allocation8 + $0x288] sm:$0xff]
    %v633 = vld [vmem:[#allocation8 + $0x290] sm:$0xf]
    %v634 = vld [vmem:[#allocation8 + $0x294] sm:$0xff]
    %v635 = vld [vmem:[#allocation8 + $0x29c] sm:$0xff]
    %v636 = vld [vmem:[#allocation8 + $0x2a4] sm:$0xf]
    %v637 = vld [vmem:[#allocation8 + $0x2a8] sm:$0xff]
    %v638 = vld [vmem:[#allocation8 + $0x2b0] sm:$0xff]
    %v639 = vld [vmem:[#allocation8 + $0x2b8] sm:$0xf]
    %v640 = vld [vmem:[#allocation8 + $0x2bc] sm:$0xff]
    %v641 = vld [vmem:[#allocation8 + $0x2c4] sm:$0xff]
    %v642 = vld [vmem:[#allocation8 + $0x2cc] sm:$0xf]
    %v643 = vld [vmem:[#allocation8 + $0x2d0] sm:$0xff]
    %v644 = vld [vmem:[#allocation8 + $0x2d8] sm:$0xff]
    %v645 = vld [vmem:[#allocation8 + $0x2e0] sm:$0xf]
    %v646 = vld [vmem:[#allocation8 + $0x2e4] sm:$0xff]
    %v647 = vld [vmem:[#allocation8 + $0x2ec] sm:$0xff]
    %v648 = vld [vmem:[#allocation8 + $0x2f4] sm:$0xf]
    %v649 = vld [vmem:[#allocation8 + $0x2f8] sm:$0xff]
    %v650 = vld [vmem:[#allocation8 + $0x300] sm:$0xff]
    %v651 = vld [vmem:[#allocation8 + $0x308] sm:$0xf]
    %v652 = vld [vmem:[#allocation8 + $0x30c] sm:$0xff]
    %v653 = vld [vmem:[#allocation8 + $0x314] sm:$0xff]
    %v654 = vld [vmem:[#allocation8 + $0x31c] sm:$0xf]
    %v655 = vld [vmem:[#allocation8 + $0x320] sm:$0xff]
    %v656 = vld [vmem:[#allocation8 + $0x328] sm:$0xff]
    %v657 = vld [vmem:[#allocation8 + $0x330] sm:$0xf]
    %v658 = vld [vmem:[#allocation8 + $0x334] sm:$0xff]
    %v659 = vld [vmem:[#allocation8 + $0x33c] sm:$0xff]
    %v660 = vld [vmem:[#allocation8 + $0x344] sm:$0xf]
    %v661 = vld [vmem:[#allocation8 + $0x348] sm:$0xff]
    %v662 = vld [vmem:[#allocation8 + $0x350] sm:$0xff]
    %v663 = vld [vmem:[#allocation8 + $0x358] sm:$0xf]
    %v664 = vld [vmem:[#allocation8 + $0x35c] sm:$0xff]
    %v665 = vld [vmem:[#allocation8 + $0x364] sm:$0xff]
    %v666 = vld [vmem:[#allocation8 + $0x36c] sm:$0xf]
    %v667 = vld [vmem:[#allocation8 + $0x370] sm:$0xff]
    %v668 = vld [vmem:[#allocation8 + $0x378] sm:$0xff]
    %v669 = vld [vmem:[#allocation8 + $0x380] sm:$0xf]
    %v670 = vld [vmem:[#allocation8 + $0x384] sm:$0xff]
    %v671 = vld [vmem:[#allocation8 + $0x38c] sm:$0xff]
    %v672 = vld [vmem:[#allocation8 + $0x394] sm:$0xf]
    %v673 = vld [vmem:[#allocation8 + $0x398] sm:$0xff]
    %v674 = vld [vmem:[#allocation8 + $0x3a0] sm:$0xff]
    %v675 = vld [vmem:[#allocation8 + $0x3a8] sm:$0xf]
    %v676 = vld [vmem:[#allocation8 + $0x3ac] sm:$0xff]
    %v677 = vld [vmem:[#allocation8 + $0x3b4] sm:$0xff]
    %v678 = vld [vmem:[#allocation8 + $0x3bc] sm:$0xf]
    %v679 = vld [vmem:[#allocation8 + $0x3c0] sm:$0xff]
    %v680 = vld [vmem:[#allocation8 + $0x3c8] sm:$0xff]
    %v681 = vld [vmem:[#allocation8 + $0x3d0] sm:$0xf]
    %v682 = vld [vmem:[#allocation8 + $0x3d4] sm:$0xff]
    %v683 = vld [vmem:[#allocation8 + $0x3dc] sm:$0xff]
    %v684 = vld [vmem:[#allocation8 + $0x3e4] sm:$0xf]
    %v685 = vld [vmem:[#allocation8 + $0x3e8] sm:$0xff]
    %v686 = vld [vmem:[#allocation8 + $0x3f0] sm:$0xff]
    %v687 = vld [vmem:[#allocation8 + $0x3f8] sm:$0xf]
    %v688 = vld [vmem:[#allocation8 + $0x3fc] sm:$0xff]
    %v689 = vld [vmem:[#allocation8 + $0x404] sm:$0xff]
    %v690 = vld [vmem:[#allocation8 + $0x40c] sm:$0xf]
    %v691 = vld [vmem:[#allocation8 + $0x410] sm:$0xff]
    %v692 = vld [vmem:[#allocation8 + $0x418] sm:$0xff]
    %v693 = vld [vmem:[#allocation8 + $0x420] sm:$0xf]
    %v694 = vld [vmem:[#allocation8 + $0x424] sm:$0xff]
    %v695 = vld [vmem:[#allocation8 + $0x42c] sm:$0xff]
    %v696 = vld [vmem:[#allocation8 + $0x434] sm:$0xf]
    %v697 = vld [vmem:[#allocation8 + $0x438] sm:$0xff]
    %v698 = vld [vmem:[#allocation8 + $0x440] sm:$0xff]
    %v699 = vld [vmem:[#allocation8 + $0x448] sm:$0xf]
    %v700 = vld [vmem:[#allocation8 + $0x44c] sm:$0xff]
    %v701 = vld [vmem:[#allocation8 + $0x454] sm:$0xff]
    %v702 = vld [vmem:[#allocation8 + $0x45c] sm:$0xf]
    %v703 = vld [vmem:[#allocation8 + $0x460] sm:$0xff]
    %v704 = vld [vmem:[#allocation8 + $0x468] sm:$0xff]
    %v705 = vld [vmem:[#allocation8 + $0x470] sm:$0xf]
    %v706 = vld [vmem:[#allocation8 + $0x474] sm:$0xff]
    %v707 = vld [vmem:[#allocation8 + $0x47c] sm:$0xff]
    %v708 = vld [vmem:[#allocation8 + $0x484] sm:$0xf]
    %v709 = vld [vmem:[#allocation8 + $0x488] sm:$0xff]
    %v710 = vld [vmem:[#allocation8 + $0x490] sm:$0xff]
    %v711 = vld [vmem:[#allocation8 + $0x498] sm:$0xf]
    %v712 = vld [vmem:[#allocation8 + $0x49c] sm:$0xff]
    %v713 = vld [vmem:[#allocation8 + $0x4a4] sm:$0xff]
    %v714 = vld [vmem:[#allocation8 + $0x4ac] sm:$0xf]
    %v715 = vld [vmem:[#allocation8 + $0x4b0] sm:$0xff]
    %v716 = vld [vmem:[#allocation8 + $0x4b8] sm:$0xff]
    %v717 = vld [vmem:[#allocation8 + $0x4c0] sm:$0xf]
    %v718 = vld [vmem:[#allocation8 + $0x4c4] sm:$0xff]
    %v719 = vld [vmem:[#allocation8 + $0x4cc] sm:$0xff]
    %v720 = vld [vmem:[#allocation8 + $0x4d4] sm:$0xf]
    %v721 = vld [vmem:[#allocation8 + $0x4d8] sm:$0xff]
    %v722 = vld [vmem:[#allocation8 + $0x4e0] sm:$0xff]
    %v723 = vld [vmem:[#allocation8 + $0x4e8] sm:$0xf]
    %v724 = vld [vmem:[#allocation8 + $0x4ec] sm:$0xff]
    %v725 = vld [vmem:[#allocation8 + $0x4f4] sm:$0xff]
    %v726 = vld [vmem:[#allocation8 + $0x4fc] sm:$0xf]
    %v727 = vld [vmem:[#allocation8 + $0x500] sm:$0xff]
    %v728 = vld [vmem:[#allocation8 + $0x508] sm:$0xff]
    %v729 = vld [vmem:[#allocation8 + $0x510] sm:$0xf]
    %v730 = vld [vmem:[#allocation8 + $0x514] sm:$0xff]
    %v731 = vld [vmem:[#allocation8 + $0x51c] sm:$0xff]
    %v732 = vld [vmem:[#allocation8 + $0x524] sm:$0xf]
    %v733 = vld [vmem:[#allocation8 + $0x528] sm:$0xff]
    %v734 = vld [vmem:[#allocation8 + $0x530] sm:$0xff]
    %v735 = vld [vmem:[#allocation8 + $0x538] sm:$0xf]
    %v736 = vld [vmem:[#allocation8 + $0x53c] sm:$0xff]
    %v737 = vld [vmem:[#allocation8 + $0x544] sm:$0xff]
    %v738 = vld [vmem:[#allocation8 + $0x54c] sm:$0xf]
    %v739 = vld [vmem:[#allocation8 + $0x550] sm:$0xff]
    %v740 = vld [vmem:[#allocation8 + $0x558] sm:$0xff]
    %v741 = vld [vmem:[#allocation8 + $0x560] sm:$0xf]
    %v742 = vld [vmem:[#allocation8 + $0x564] sm:$0xff]
    %v743 = vld [vmem:[#allocation8 + $0x56c] sm:$0xff]
    %v744 = vld [vmem:[#allocation8 + $0x574] sm:$0xf]
    %v745 = vld [vmem:[#allocation8 + $0x578] sm:$0xff]
    %v746 = vld [vmem:[#allocation8 + $0x580] sm:$0xff]
    %v747 = vld [vmem:[#allocation8 + $0x588] sm:$0xf]
    %v748 = vld [vmem:[#allocation8 + $0x58c] sm:$0xff]
    %v749 = vld [vmem:[#allocation8 + $0x594] sm:$0xff]
    %v750 = vld [vmem:[#allocation8 + $0x59c] sm:$0xf]
    %v751 = vld [vmem:[#allocation8 + $0x5a0] sm:$0xff]
    %v752 = vld [vmem:[#allocation8 + $0x5a8] sm:$0xff]
    %v753 = vld [vmem:[#allocation8 + $0x5b0] sm:$0xf]
    %v754 = vld [vmem:[#allocation8 + $0x5b4] sm:$0xff]
    %v755 = vld [vmem:[#allocation8 + $0x5bc] sm:$0xff]
    %v756 = vld [vmem:[#allocation8 + $0x5c4] sm:$0xf]
    %v757 = vld [vmem:[#allocation8 + $0x5c8] sm:$0xff]
    %v758 = vld [vmem:[#allocation8 + $0x5d0] sm:$0xff]
    %v759 = vld [vmem:[#allocation8 + $0x5d8] sm:$0xf]
    %v760 = vld [vmem:[#allocation8 + $0x5dc] sm:$0xff]
    %v761 = vld [vmem:[#allocation8 + $0x5e4] sm:$0xff]
    %v762 = vld [vmem:[#allocation8 + $0x5ec] sm:$0xf]
    %v763 = vld [vmem:[#allocation8 + $0x5f0] sm:$0xff]
    %v764 = vld [vmem:[#allocation8 + $0x5f8] sm:$0xff]
    %v765 = vld [vmem:[#allocation8 + $0x600] sm:$0xf]
    %v766 = vld [vmem:[#allocation8 + $0x604] sm:$0xff]
    %v767 = vld [vmem:[#allocation8 + $0x60c] sm:$0xff]
    %v768 = vld [vmem:[#allocation8 + $0x614] sm:$0xf]
    %v769 = vld [vmem:[#allocation8 + $0x618] sm:$0xff]
    %v770 = vld [vmem:[#allocation8 + $0x620] sm:$0xff]
    %v771 = vld [vmem:[#allocation8 + $0x628] sm:$0xf]
    %v772 = vld [vmem:[#allocation8 + $0x62c] sm:$0xff]
    %v773 = vld [vmem:[#allocation8 + $0x634] sm:$0xff]
    %v774 = vld [vmem:[#allocation8 + $0x63c] sm:$0xf]
    %v775 = vld [vmem:[#allocation8 + $0x640] sm:$0xff]
    %v776 = vld [vmem:[#allocation8 + $0x648] sm:$0xff]
    %v777 = vld [vmem:[#allocation8 + $0x650] sm:$0xf]
    %v778 = vld [vmem:[#allocation8 + $0x654] sm:$0xff]
    %v779 = vld [vmem:[#allocation8 + $0x65c] sm:$0xff]
    %v780 = vld [vmem:[#allocation8 + $0x664] sm:$0xf]
    %v781 = vld [vmem:[#allocation8 + $0x668] sm:$0xff]
    %v782 = vld [vmem:[#allocation8 + $0x670] sm:$0xff]
    %v783 = vld [vmem:[#allocation8 + $0x678] sm:$0xf]
    %v784 = vld [vmem:[#allocation8 + $0x67c] sm:$0xff]
    %v785 = vld [vmem:[#allocation8 + $0x684] sm:$0xff]
    %v786 = vld [vmem:[#allocation8 + $0x68c] sm:$0xf]
    %v787 = vld [vmem:[#allocation8 + $0x690] sm:$0xff]
    %v788 = vld [vmem:[#allocation8 + $0x698] sm:$0xff]
    %v789 = vld [vmem:[#allocation8 + $0x6a0] sm:$0xf]
    %v790 = vld [vmem:[#allocation8 + $0x6a4] sm:$0xff]
    %v791 = vld [vmem:[#allocation8 + $0x6ac] sm:$0xff]
    %v792 = vld [vmem:[#allocation8 + $0x6b4] sm:$0xf]
    %v793 = vld [vmem:[#allocation8 + $0x6b8] sm:$0xff]
    %v794 = vld [vmem:[#allocation8 + $0x6c0] sm:$0xff]
    %v795 = vld [vmem:[#allocation8 + $0x6c8] sm:$0xf]
    %v796 = vld [vmem:[#allocation8 + $0x6cc] sm:$0xff]
    %v797 = vld [vmem:[#allocation8 + $0x6d4] sm:$0xff]
    %v798 = vld [vmem:[#allocation8 + $0x6dc] sm:$0xf]
    %v799 = vld [vmem:[#allocation8 + $0x6e0] sm:$0xff]
    %v800 = vld [vmem:[#allocation8 + $0x6e8] sm:$0xff]
    %v801 = vld [vmem:[#allocation8 + $0x6f0] sm:$0xf]
    %v802 = vld [vmem:[#allocation8 + $0x6f4] sm:$0xff]
    %v803 = vld [vmem:[#allocation8 + $0x6fc] sm:$0xff]
    %v804 = vld [vmem:[#allocation8 + $0x704] sm:$0xf]
    %v805 = vld [vmem:[#allocation8 + $0x708] sm:$0xff]
    %v806 = vld [vmem:[#allocation8 + $0x710] sm:$0xff]
    %v807 = vld [vmem:[#allocation8 + $0x718] sm:$0xf]
    %v808 = vld [vmem:[#allocation8 + $0x71c] sm:$0xff]
    %v809 = vld [vmem:[#allocation8 + $0x724] sm:$0xff]
    %v810 = vld [vmem:[#allocation8 + $0x72c] sm:$0xf]
    %v811 = vld [vmem:[#allocation8 + $0x730] sm:$0xff]
    %v812 = vld [vmem:[#allocation8 + $0x738] sm:$0xff]
    %v813 = vld [vmem:[#allocation8 + $0x740] sm:$0xf]
    %v814 = vld [vmem:[#allocation8 + $0x744] sm:$0xff]
    %v815 = vld [vmem:[#allocation8 + $0x74c] sm:$0xff]
    %v816 = vld [vmem:[#allocation8 + $0x754] sm:$0xf]
    %v817 = vld [vmem:[#allocation8 + $0x758] sm:$0xff]
    %v818 = vld [vmem:[#allocation8 + $0x760] sm:$0xff]
    %v819 = vld [vmem:[#allocation8 + $0x768] sm:$0xf]
    %v820 = vld [vmem:[#allocation8 + $0x76c] sm:$0xff]
    %v821 = vld [vmem:[#allocation8 + $0x774] sm:$0xff]
    %v822 = vld [vmem:[#allocation8 + $0x77c] sm:$0xf]
    %v823 = vld [vmem:[#allocation8 + $0x780] sm:$0xff]
    %v824 = vld [vmem:[#allocation8 + $0x788] sm:$0xff]
    %v825 = vld [vmem:[#allocation8 + $0x790] sm:$0xf]
    %v826 = vld [vmem:[#allocation8 + $0x794] sm:$0xff]
    %v827 = vld [vmem:[#allocation8 + $0x79c] sm:$0xff]
    %v828 = vld [vmem:[#allocation8 + $0x7a4] sm:$0xf]
    %v829 = vld [vmem:[#allocation8 + $0x7a8] sm:$0xff]
    %v830 = vld [vmem:[#allocation8 + $0x7b0] sm:$0xff]
    %v831 = vld [vmem:[#allocation8 + $0x7b8] sm:$0xf]
    %v832 = vld [vmem:[#allocation8 + $0x7bc] sm:$0xff]
    %v833 = vld [vmem:[#allocation8 + $0x7c4] sm:$0xff]
    %v834 = vld [vmem:[#allocation8 + $0x7cc] sm:$0xf]
    %v835 = vld [vmem:[#allocation8 + $0x7d0] sm:$0xff]
    %v836 = vld [vmem:[#allocation8 + $0x7d8] sm:$0xff]
    %v837 = vld [vmem:[#allocation8 + $0x7e0] sm:$0xf]
    %v838 = vld [vmem:[#allocation8 + $0x7e4] sm:$0xff]
    %v839 = vld [vmem:[#allocation8 + $0x7ec] sm:$0xff]
    %v840 = vld [vmem:[#allocation8 + $0x7f4] sm:$0xf]
    %v841 = vld [vmem:[#allocation8 + $0x7f8] sm:$0xff]
    %v842 = vld [vmem:[#allocation8 + $0x800] sm:$0xff]
    %v843 = vld [vmem:[#allocation8 + $0x808] sm:$0xf]
    %v844 = vld [vmem:[#allocation8 + $0x80c] sm:$0xff]
    %v845 = vld [vmem:[#allocation8 + $0x814] sm:$0xff]
    %v846 = vld [vmem:[#allocation8 + $0x81c] sm:$0xf]
    %v847 = vld [vmem:[#allocation8 + $0x820] sm:$0xff]
    %v848 = vld [vmem:[#allocation8 + $0x828] sm:$0xff]
    %v849 = vld [vmem:[#allocation8 + $0x830] sm:$0xf]
    %v850 = vld [vmem:[#allocation8 + $0x834] sm:$0xff]
    %v851 = vld [vmem:[#allocation8 + $0x83c] sm:$0xff]
    %v852 = vld [vmem:[#allocation8 + $0x844] sm:$0xf]
    %v853 = vld [vmem:[#allocation8 + $0x848] sm:$0xff]
    %v854 = vld [vmem:[#allocation8 + $0x850] sm:$0xff]
    %v855 = vld [vmem:[#allocation8 + $0x858] sm:$0xf]
    %v856 = vld [vmem:[#allocation8 + $0x85c] sm:$0xff]
    %v857 = vld [vmem:[#allocation8 + $0x864] sm:$0xff]
    %v858 = vld [vmem:[#allocation8 + $0x86c] sm:$0xf]
    %v859 = vld [vmem:[#allocation8 + $0x870] sm:$0xff]
    %v860 = vld [vmem:[#allocation8 + $0x878] sm:$0xff]
    %v861 = vld [vmem:[#allocation8 + $0x880] sm:$0xf]
    %v862 = vld [vmem:[#allocation8 + $0x884] sm:$0xff]
    %v863 = vld [vmem:[#allocation8 + $0x88c] sm:$0xff]
    %v864 = vld [vmem:[#allocation8 + $0x894] sm:$0xf]
    %v865 = vld [vmem:[#allocation8 + $0x898] sm:$0xff]
    %v866 = vld [vmem:[#allocation8 + $0x8a0] sm:$0xff]
    %v867 = vld [vmem:[#allocation8 + $0x8a8] sm:$0xf]
    %v868 = vld [vmem:[#allocation8 + $0x8ac] sm:$0xff]
    %v869 = vld [vmem:[#allocation8 + $0x8b4] sm:$0xff]
    %v870 = vld [vmem:[#allocation8 + $0x8bc] sm:$0xf]
    %v871 = vld [vmem:[#allocation8 + $0x8c0] sm:$0xff]
    %v872 = vld [vmem:[#allocation8 + $0x8c8] sm:$0xff]
    %v873 = vld [vmem:[#allocation8 + $0x8d0] sm:$0xf]
    %v874 = vld [vmem:[#allocation8 + $0x8d4] sm:$0xff]
    %v875 = vld [vmem:[#allocation8 + $0x8dc] sm:$0xff]
    %v876 = vld [vmem:[#allocation8 + $0x8e4] sm:$0xf]
    %v877 = vld [vmem:[#allocation8 + $0x8e8] sm:$0xff]
    %v878 = vld [vmem:[#allocation8 + $0x8f0] sm:$0xff]
    %v879 = vld [vmem:[#allocation8 + $0x8f8] sm:$0xf]
    %v880 = vld [vmem:[#allocation8 + $0x8fc] sm:$0xff]
    %v881 = vld [vmem:[#allocation8 + $0x904] sm:$0xff]
    %v882 = vld [vmem:[#allocation8 + $0x90c] sm:$0xf]
    %v883 = vld [vmem:[#allocation8 + $0x910] sm:$0xff]
    %v884 = vld [vmem:[#allocation8 + $0x918] sm:$0xff]
    %v885 = vld [vmem:[#allocation8 + $0x920] sm:$0xf]
    %v886 = vld [vmem:[#allocation8 + $0x924] sm:$0xff]
    %v887 = vld [vmem:[#allocation8 + $0x92c] sm:$0xff]
    %v888 = vld [vmem:[#allocation8 + $0x934] sm:$0xf]
    %v889 = vld [vmem:[#allocation8 + $0x938] sm:$0xff]
    %v890 = vld [vmem:[#allocation8 + $0x940] sm:$0xff]
    %v891 = vld [vmem:[#allocation8 + $0x948] sm:$0xf]
    %v892 = vld [vmem:[#allocation8 + $0x94c] sm:$0xff]
    %v893 = vld [vmem:[#allocation8 + $0x954] sm:$0xff]
    %v894 = vld [vmem:[#allocation8 + $0x95c] sm:$0xf]
    %v895 = vld [vmem:[#allocation8 + $0x960] sm:$0xff]
    %v896 = vld [vmem:[#allocation8 + $0x968] sm:$0xff]
    %v897 = vld [vmem:[#allocation8 + $0x970] sm:$0xf]
    %v898 = vld [vmem:[#allocation8 + $0x974] sm:$0xff]
    %v899 = vld [vmem:[#allocation8 + $0x97c] sm:$0xff]
    %v900 = vld [vmem:[#allocation8 + $0x984] sm:$0xf]
    %v901 = vld [vmem:[#allocation8 + $0x988] sm:$0xff]
    %v902 = vld [vmem:[#allocation8 + $0x990] sm:$0xff]
    %v903 = vld [vmem:[#allocation8 + $0x998] sm:$0xf]
    %v904 = vld [vmem:[#allocation8 + $0x99c] sm:$0xff]
    %v905 = vld [vmem:[#allocation8 + $0x9a4] sm:$0xff]
    %v906 = vld [vmem:[#allocation8 + $0x9ac] sm:$0xf]
    %v907 = vld [vmem:[#allocation8 + $0x9b0] sm:$0xff]
    %v908 = vld [vmem:[#allocation8 + $0x9b8] sm:$0xff]
    %v909 = vld [vmem:[#allocation8 + $0x9c0] sm:$0xf]
    %v910 = vld [vmem:[#allocation8 + $0x9c4] sm:$0xff]
    %v911 = vld [vmem:[#allocation8 + $0x9cc] sm:$0xff]
    %v912 = vld [vmem:[#allocation8 + $0x9d4] sm:$0xf]
    %v913 = vld [vmem:[#allocation8 + $0x9d8] sm:$0xff]
    %v914 = vld [vmem:[#allocation8 + $0x9e0] sm:$0xff]
    %v915 = vld [vmem:[#allocation8 + $0x9e8] sm:$0xf]
    %v916 = vld [vmem:[#allocation8 + $0x9ec] sm:$0xff]
    %v917 = vld [vmem:[#allocation8 + $0x9f4] sm:$0xff]
    %v918 = vld [vmem:[#allocation8 + $0x9fc] sm:$0xf]
    %v919 = vld [vmem:[#allocation8 + $0xa00] sm:$0xff]
    %v920 = vld [vmem:[#allocation8 + $0xa08] sm:$0xff]
    %v921 = vld [vmem:[#allocation8 + $0xa10] sm:$0xf]
    %v922 = vld [vmem:[#allocation8 + $0xa14] sm:$0xff]
    %v923 = vld [vmem:[#allocation8 + $0xa1c] sm:$0xff]
    %v924 = vld [vmem:[#allocation8 + $0xa24] sm:$0xf]
    %v925 = vld [vmem:[#allocation8 + $0xa28] sm:$0xff]
    %v926 = vld [vmem:[#allocation8 + $0xa30] sm:$0xff]
    %v927 = vld [vmem:[#allocation8 + $0xa38] sm:$0xf]
    %v928 = vld [vmem:[#allocation8 + $0xa3c] sm:$0xff]
    %v929 = vld [vmem:[#allocation8 + $0xa44] sm:$0xff]
    %v930 = vld [vmem:[#allocation8 + $0xa4c] sm:$0xf]
    %v931 = vld [vmem:[#allocation8 + $0xa50] sm:$0xff]
    %v932 = vld [vmem:[#allocation8 + $0xa58] sm:$0xff]
    %v933 = vld [vmem:[#allocation8 + $0xa60] sm:$0xf]
    %v934 = vld [vmem:[#allocation8 + $0xa64] sm:$0xff]
    %v935 = vld [vmem:[#allocation8 + $0xa6c] sm:$0xff]
    %v936 = vld [vmem:[#allocation8 + $0xa74] sm:$0xf]
    %v937 = vld [vmem:[#allocation8 + $0xa78] sm:$0xff]
    %v938 = vld [vmem:[#allocation8 + $0xa80] sm:$0xff]
    %v939 = vld [vmem:[#allocation8 + $0xa88] sm:$0xf]
    %v940 = vld [vmem:[#allocation8 + $0xa8c] sm:$0xff]
    %v941 = vld [vmem:[#allocation8 + $0xa94] sm:$0xff]
    %v942 = vld [vmem:[#allocation8 + $0xa9c] sm:$0xf]
    %v943 = vld [vmem:[#allocation8 + $0xaa0] sm:$0xff]
    %v944 = vld [vmem:[#allocation8 + $0xaa8] sm:$0xff]
    %v945 = vld [vmem:[#allocation8 + $0xab0] sm:$0xf]
    %v946 = vld [vmem:[#allocation8 + $0xab4] sm:$0xff]
    %v947 = vld [vmem:[#allocation8 + $0xabc] sm:$0xff]
    %v948 = vld [vmem:[#allocation8 + $0xac4] sm:$0xf]
    %v949 = vld [vmem:[#allocation8 + $0xac8] sm:$0xff]
    %v950 = vld [vmem:[#allocation8 + $0xad0] sm:$0xff]
    %v951 = vld [vmem:[#allocation8 + $0xad8] sm:$0xf]
    %v952 = vld [vmem:[#allocation8 + $0xadc] sm:$0xff]
    %v953 = vld [vmem:[#allocation8 + $0xae4] sm:$0xff]
    %v954 = vld [vmem:[#allocation8 + $0xaec] sm:$0xf]
    %v955 = vld [vmem:[#allocation8 + $0xaf0] sm:$0xff]
    %v956 = vld [vmem:[#allocation8 + $0xaf8] sm:$0xff]
    %v957 = vld [vmem:[#allocation8 + $0xb00] sm:$0xf]
    %v958 = vld [vmem:[#allocation8 + $0xb04] sm:$0xff]
    %v959 = vld [vmem:[#allocation8 + $0xb0c] sm:$0xff]
    %v960 = vld [vmem:[#allocation8 + $0xb14] sm:$0xf]
    %v961 = vld [vmem:[#allocation8 + $0xb18] sm:$0xff]
    %v962 = vld [vmem:[#allocation8 + $0xb20] sm:$0xff]
    %v963 = vld [vmem:[#allocation8 + $0xb28] sm:$0xf]
    %v964 = vld [vmem:[#allocation8 + $0xb2c] sm:$0xff]
    %v965 = vld [vmem:[#allocation8 + $0xb34] sm:$0xff]
    %v966 = vld [vmem:[#allocation8 + $0xb3c] sm:$0xf]
    %v967 = vld [vmem:[#allocation10] sm:$0x1f]
    %v969 = vlaneseq
    %v970 = vshrl.u32 %v969, 7
    %v971 = vsub.s32 0, %v970
    %v972 = vrot.slane %v967, %v971
    %v973 = vlaneseq
    %v974 = vshrl.u32 %v973, 7
    %v975 = vsub.s32 1, %v974
    %v976 = vrot.slane %v967, %v975
    %v977 = vlaneseq
    %v978 = vshrl.u32 %v977, 7
    %v979 = vsub.s32 2, %v978
    %v980 = vrot.slane %v967, %v979
    %v981 = vlaneseq
    %v982 = vshrl.u32 %v981, 7
    %v983 = vsub.s32 3, %v982
    %v984 = vrot.slane %v967, %v983
    %v985 = vlaneseq
    %v986 = vshrl.u32 %v985, 7
    %v987 = vsub.s32 4, %v986
    %v988 = vrot.slane %v967, %v987
    %v1426 = vunpack.c.l.b16 %v535
    %v1427 = vunpack.c.h.b16 %v535
    %v1428 = vunpack.c.l.b16 %v536
    %v1429 = vunpack.c.h.b16 %v536
    %v1430 = vunpack.c.l.b16 %v537
    %v1431 = vunpack.c.l.b16 %v538
    %v1432 = vunpack.c.h.b16 %v538
    %v1433 = vunpack.c.l.b16 %v539
    %v1434 = vunpack.c.h.b16 %v539
    %v1435 = vunpack.c.l.b16 %v540
    %v1436 = vunpack.c.l.b16 %v541
    %v1437 = vunpack.c.h.b16 %v541
    %v1438 = vunpack.c.l.b16 %v542
    %v1439 = vunpack.c.h.b16 %v542
    %v1440 = vunpack.c.l.b16 %v543
    %v1441 = vunpack.c.l.b16 %v544
    %v1442 = vunpack.c.h.b16 %v544
    %v1443 = vunpack.c.l.b16 %v545
    %v1444 = vunpack.c.h.b16 %v545
    %v1445 = vunpack.c.l.b16 %v546
    %v1446 = vunpack.c.l.b16 %v547
    %v1447 = vunpack.c.h.b16 %v547
    %v1448 = vunpack.c.l.b16 %v548
    %v1449 = vunpack.c.h.b16 %v548
    %v1450 = vunpack.c.l.b16 %v549
    %v1451 = vunpack.c.l.b16 %v550
    %v1452 = vunpack.c.h.b16 %v550
    %v1453 = vunpack.c.l.b16 %v551
    %v1454 = vunpack.c.h.b16 %v551
    %v1455 = vunpack.c.l.b16 %v552
    %v1456 = vunpack.c.l.b16 %v553
    %v1457 = vunpack.c.h.b16 %v553
    %v1458 = vunpack.c.l.b16 %v554
    %v1459 = vunpack.c.h.b16 %v554
    %v1460 = vunpack.c.l.b16 %v555
    %v1461 = vunpack.c.l.b16 %v556
    %v1462 = vunpack.c.h.b16 %v556
    %v1463 = vunpack.c.l.b16 %v557
    %v1464 = vunpack.c.h.b16 %v557
    %v1465 = vunpack.c.l.b16 %v558
    %v1466 = vunpack.c.l.b16 %v559
    %v1467 = vunpack.c.h.b16 %v559
    %v1468 = vunpack.c.l.b16 %v560
    %v1469 = vunpack.c.h.b16 %v560
    %v1470 = vunpack.c.l.b16 %v561
    %v1471 = vunpack.c.l.b16 %v562
    %v1472 = vunpack.c.h.b16 %v562
    %v1473 = vunpack.c.l.b16 %v563
    %v1474 = vunpack.c.h.b16 %v563
    %v1475 = vunpack.c.l.b16 %v564
    %v1476 = vunpack.c.l.b16 %v565
    %v1477 = vunpack.c.h.b16 %v565
    %v1478 = vunpack.c.l.b16 %v566
    %v1479 = vunpack.c.h.b16 %v566
    %v1480 = vunpack.c.l.b16 %v567
    %v1481 = vunpack.c.l.b16 %v568
    %v1482 = vunpack.c.h.b16 %v568
    %v1483 = vunpack.c.l.b16 %v569
    %v1484 = vunpack.c.h.b16 %v569
    %v1485 = vunpack.c.l.b16 %v570
    %v1486 = vunpack.c.l.b16 %v571
    %v1487 = vunpack.c.h.b16 %v571
    %v1488 = vunpack.c.l.b16 %v572
    %v1489 = vunpack.c.h.b16 %v572
    %v1490 = vunpack.c.l.b16 %v573
    %v1491 = vunpack.c.l.b16 %v574
    %v1492 = vunpack.c.h.b16 %v574
    %v1493 = vunpack.c.l.b16 %v575
    %v1494 = vunpack.c.h.b16 %v575
    %v1495 = vunpack.c.l.b16 %v576
    %v1496 = vunpack.c.l.b16 %v577
    %v1497 = vunpack.c.h.b16 %v577
    %v1498 = vunpack.c.l.b16 %v578
    %v1499 = vunpack.c.h.b16 %v578
    %v1500 = vunpack.c.l.b16 %v579
    %v1501 = vunpack.c.l.b16 %v580
    %v1502 = vunpack.c.h.b16 %v580
    %v1503 = vunpack.c.l.b16 %v581
    %v1504 = vunpack.c.h.b16 %v581
    %v1505 = vunpack.c.l.b16 %v582
    %v1506 = vunpack.c.l.b16 %v583
    %v1507 = vunpack.c.h.b16 %v583
    %v1508 = vunpack.c.l.b16 %v584
    %v1509 = vunpack.c.h.b16 %v584
    %v1510 = vunpack.c.l.b16 %v585
    %v1511 = vunpack.c.l.b16 %v586
    %v1512 = vunpack.c.h.b16 %v586
    %v1513 = vunpack.c.l.b16 %v587
    %v1514 = vunpack.c.h.b16 %v587
    %v1515 = vunpack.c.l.b16 %v588
    %v1516 = vunpack.c.l.b16 %v589
    %v1517 = vunpack.c.h.b16 %v589
    %v1518 = vunpack.c.l.b16 %v590
    %v1519 = vunpack.c.h.b16 %v590
    %v1520 = vunpack.c.l.b16 %v591
    %v1521 = vunpack.c.l.b16 %v592
    %v1522 = vunpack.c.h.b16 %v592
    %v1523 = vunpack.c.l.b16 %v593
    %v1524 = vunpack.c.h.b16 %v593
    %v1525 = vunpack.c.l.b16 %v594
    %v1526 = vunpack.c.l.b16 %v595
    %v1527 = vunpack.c.h.b16 %v595
    %v1528 = vunpack.c.l.b16 %v596
    %v1529 = vunpack.c.h.b16 %v596
    %v1530 = vunpack.c.l.b16 %v597
    %v1531 = vunpack.c.l.b16 %v598
    %v1532 = vunpack.c.h.b16 %v598
    %v1533 = vunpack.c.l.b16 %v599
    %v1534 = vunpack.c.h.b16 %v599
    %v1535 = vunpack.c.l.b16 %v600
    %v1536 = vunpack.c.l.b16 %v601
    %v1537 = vunpack.c.h.b16 %v601
    %v1538 = vunpack.c.l.b16 %v602
    %v1539 = vunpack.c.h.b16 %v602
    %v1540 = vunpack.c.l.b16 %v603
    %v1541 = vunpack.c.l.b16 %v604
    %v1542 = vunpack.c.h.b16 %v604
    %v1543 = vunpack.c.l.b16 %v605
    %v1544 = vunpack.c.h.b16 %v605
    %v1545 = vunpack.c.l.b16 %v606
    %v1546 = vunpack.c.l.b16 %v607
    %v1547 = vunpack.c.h.b16 %v607
    %v1548 = vunpack.c.l.b16 %v608
    %v1549 = vunpack.c.h.b16 %v608
    %v1550 = vunpack.c.l.b16 %v609
    %v1551 = vunpack.c.l.b16 %v610
    %v1552 = vunpack.c.h.b16 %v610
    %v1553 = vunpack.c.l.b16 %v611
    %v1554 = vunpack.c.h.b16 %v611
    %v1555 = vunpack.c.l.b16 %v612
    %v1556 = vunpack.c.l.b16 %v613
    %v1557 = vunpack.c.h.b16 %v613
    %v1558 = vunpack.c.l.b16 %v614
    %v1559 = vunpack.c.h.b16 %v614
    %v1560 = vunpack.c.l.b16 %v615
    %v1561 = vunpack.c.l.b16 %v616
    %v1562 = vunpack.c.h.b16 %v616
    %v1563 = vunpack.c.l.b16 %v617
    %v1564 = vunpack.c.h.b16 %v617
    %v1565 = vunpack.c.l.b16 %v618
    %v1566 = vunpack.c.l.b16 %v619
    %v1567 = vunpack.c.h.b16 %v619
    %v1568 = vunpack.c.l.b16 %v620
    %v1569 = vunpack.c.h.b16 %v620
    %v1570 = vunpack.c.l.b16 %v621
    %v1571 = vunpack.c.l.b16 %v622
    %v1572 = vunpack.c.h.b16 %v622
    %v1573 = vunpack.c.l.b16 %v623
    %v1574 = vunpack.c.h.b16 %v623
    %v1575 = vunpack.c.l.b16 %v624
    %v1576 = vunpack.c.l.b16 %v625
    %v1577 = vunpack.c.h.b16 %v625
    %v1578 = vunpack.c.l.b16 %v626
    %v1579 = vunpack.c.h.b16 %v626
    %v1580 = vunpack.c.l.b16 %v627
    %v1581 = vunpack.c.l.b16 %v628
    %v1582 = vunpack.c.h.b16 %v628
    %v1583 = vunpack.c.l.b16 %v629
    %v1584 = vunpack.c.h.b16 %v629
    %v1585 = vunpack.c.l.b16 %v630
    %v1586 = vunpack.c.l.b16 %v631
    %v1587 = vunpack.c.h.b16 %v631
    %v1588 = vunpack.c.l.b16 %v632
    %v1589 = vunpack.c.h.b16 %v632
    %v1590 = vunpack.c.l.b16 %v633
    %v1591 = vunpack.c.l.b16 %v634
    %v1592 = vunpack.c.h.b16 %v634
    %v1593 = vunpack.c.l.b16 %v635
    %v1594 = vunpack.c.h.b16 %v635
    %v1595 = vunpack.c.l.b16 %v636
    %v1596 = vunpack.c.l.b16 %v637
    %v1597 = vunpack.c.h.b16 %v637
    %v1598 = vunpack.c.l.b16 %v638
    %v1599 = vunpack.c.h.b16 %v638
    %v1600 = vunpack.c.l.b16 %v639
    %v1601 = vunpack.c.l.b16 %v640
    %v1602 = vunpack.c.h.b16 %v640
    %v1603 = vunpack.c.l.b16 %v641
    %v1604 = vunpack.c.h.b16 %v641
    %v1605 = vunpack.c.l.b16 %v642
    %v1606 = vunpack.c.l.b16 %v643
    %v1607 = vunpack.c.h.b16 %v643
    %v1608 = vunpack.c.l.b16 %v644
    %v1609 = vunpack.c.h.b16 %v644
    %v1610 = vunpack.c.l.b16 %v645
    %v1611 = vunpack.c.l.b16 %v646
    %v1612 = vunpack.c.h.b16 %v646
    %v1613 = vunpack.c.l.b16 %v647
    %v1614 = vunpack.c.h.b16 %v647
    %v1615 = vunpack.c.l.b16 %v648
    %v1616 = vunpack.c.l.b16 %v649
    %v1617 = vunpack.c.h.b16 %v649
    %v1618 = vunpack.c.l.b16 %v650
    %v1619 = vunpack.c.h.b16 %v650
    %v1620 = vunpack.c.l.b16 %v651
    %v1621 = vunpack.c.l.b16 %v652
    %v1622 = vunpack.c.h.b16 %v652
    %v1623 = vunpack.c.l.b16 %v653
    %v1624 = vunpack.c.h.b16 %v653
    %v1625 = vunpack.c.l.b16 %v654
    %v1626 = vunpack.c.l.b16 %v655
    %v1627 = vunpack.c.h.b16 %v655
    %v1628 = vunpack.c.l.b16 %v656
    %v1629 = vunpack.c.h.b16 %v656
    %v1630 = vunpack.c.l.b16 %v657
    %v1631 = vunpack.c.l.b16 %v658
    %v1632 = vunpack.c.h.b16 %v658
    %v1633 = vunpack.c.l.b16 %v659
    %v1634 = vunpack.c.h.b16 %v659
    %v1635 = vunpack.c.l.b16 %v660
    %v1636 = vunpack.c.l.b16 %v661
    %v1637 = vunpack.c.h.b16 %v661
    %v1638 = vunpack.c.l.b16 %v662
    %v1639 = vunpack.c.h.b16 %v662
    %v1640 = vunpack.c.l.b16 %v663
    %v1641 = vunpack.c.l.b16 %v664
    %v1642 = vunpack.c.h.b16 %v664
    %v1643 = vunpack.c.l.b16 %v665
    %v1644 = vunpack.c.h.b16 %v665
    %v1645 = vunpack.c.l.b16 %v666
    %v1646 = vunpack.c.l.b16 %v667
    %v1647 = vunpack.c.h.b16 %v667
    %v1648 = vunpack.c.l.b16 %v668
    %v1649 = vunpack.c.h.b16 %v668
    %v1650 = vunpack.c.l.b16 %v669
    %v1651 = vunpack.c.l.b16 %v670
    %v1652 = vunpack.c.h.b16 %v670
    %v1653 = vunpack.c.l.b16 %v671
    %v1654 = vunpack.c.h.b16 %v671
    %v1655 = vunpack.c.l.b16 %v672
    %v1656 = vunpack.c.l.b16 %v673
    %v1657 = vunpack.c.h.b16 %v673
    %v1658 = vunpack.c.l.b16 %v674
    %v1659 = vunpack.c.h.b16 %v674
    %v1660 = vunpack.c.l.b16 %v675
    %v1661 = vunpack.c.l.b16 %v676
    %v1662 = vunpack.c.h.b16 %v676
    %v1663 = vunpack.c.l.b16 %v677
    %v1664 = vunpack.c.h.b16 %v677
    %v1665 = vunpack.c.l.b16 %v678
    %v1666 = vunpack.c.l.b16 %v679
    %v1667 = vunpack.c.h.b16 %v679
    %v1668 = vunpack.c.l.b16 %v680
    %v1669 = vunpack.c.h.b16 %v680
    %v1670 = vunpack.c.l.b16 %v681
    %v1671 = vunpack.c.l.b16 %v682
    %v1672 = vunpack.c.h.b16 %v682
    %v1673 = vunpack.c.l.b16 %v683
    %v1674 = vunpack.c.h.b16 %v683
    %v1675 = vunpack.c.l.b16 %v684
    %v1676 = vunpack.c.l.b16 %v685
    %v1677 = vunpack.c.h.b16 %v685
    %v1678 = vunpack.c.l.b16 %v686
    %v1679 = vunpack.c.h.b16 %v686
    %v1680 = vunpack.c.l.b16 %v687
    %v1681 = vunpack.c.l.b16 %v688
    %v1682 = vunpack.c.h.b16 %v688
    %v1683 = vunpack.c.l.b16 %v689
    %v1684 = vunpack.c.h.b16 %v689
    %v1685 = vunpack.c.l.b16 %v690
    %v1686 = vunpack.c.l.b16 %v691
    %v1687 = vunpack.c.h.b16 %v691
    %v1688 = vunpack.c.l.b16 %v692
    %v1689 = vunpack.c.h.b16 %v692
    %v1690 = vunpack.c.l.b16 %v693
    %v1691 = vunpack.c.l.b16 %v694
    %v1692 = vunpack.c.h.b16 %v694
    %v1693 = vunpack.c.l.b16 %v695
    %v1694 = vunpack.c.h.b16 %v695
    %v1695 = vunpack.c.l.b16 %v696
    %v1696 = vunpack.c.l.b16 %v697
    %v1697 = vunpack.c.h.b16 %v697
    %v1698 = vunpack.c.l.b16 %v698
    %v1699 = vunpack.c.h.b16 %v698
    %v1700 = vunpack.c.l.b16 %v699
    %v1701 = vunpack.c.l.b16 %v700
    %v1702 = vunpack.c.h.b16 %v700
    %v1703 = vunpack.c.l.b16 %v701
    %v1704 = vunpack.c.h.b16 %v701
    %v1705 = vunpack.c.l.b16 %v702
    %v1706 = vunpack.c.l.b16 %v703
    %v1707 = vunpack.c.h.b16 %v703
    %v1708 = vunpack.c.l.b16 %v704
    %v1709 = vunpack.c.h.b16 %v704
    %v1710 = vunpack.c.l.b16 %v705
    %v1711 = vunpack.c.l.b16 %v706
    %v1712 = vunpack.c.h.b16 %v706
    %v1713 = vunpack.c.l.b16 %v707
    %v1714 = vunpack.c.h.b16 %v707
    %v1715 = vunpack.c.l.b16 %v708
    %v1716 = vunpack.c.l.b16 %v709
    %v1717 = vunpack.c.h.b16 %v709
    %v1718 = vunpack.c.l.b16 %v710
    %v1719 = vunpack.c.h.b16 %v710
    %v1720 = vunpack.c.l.b16 %v711
    %v1721 = vunpack.c.l.b16 %v712
    %v1722 = vunpack.c.h.b16 %v712
    %v1723 = vunpack.c.l.b16 %v713
    %v1724 = vunpack.c.h.b16 %v713
    %v1725 = vunpack.c.l.b16 %v714
    %v1726 = vunpack.c.l.b16 %v715
    %v1727 = vunpack.c.h.b16 %v715
    %v1728 = vunpack.c.l.b16 %v716
    %v1729 = vunpack.c.h.b16 %v716
    %v1730 = vunpack.c.l.b16 %v717
    %v1731 = vunpack.c.l.b16 %v718
    %v1732 = vunpack.c.h.b16 %v718
    %v1733 = vunpack.c.l.b16 %v719
    %v1734 = vunpack.c.h.b16 %v719
    %v1735 = vunpack.c.l.b16 %v720
    %v1736 = vunpack.c.l.b16 %v721
    %v1737 = vunpack.c.h.b16 %v721
    %v1738 = vunpack.c.l.b16 %v722
    %v1739 = vunpack.c.h.b16 %v722
    %v1740 = vunpack.c.l.b16 %v723
    %v1741 = vunpack.c.l.b16 %v724
    %v1742 = vunpack.c.h.b16 %v724
    %v1743 = vunpack.c.l.b16 %v725
    %v1744 = vunpack.c.h.b16 %v725
    %v1745 = vunpack.c.l.b16 %v726
    %v1746 = vunpack.c.l.b16 %v727
    %v1747 = vunpack.c.h.b16 %v727
    %v1748 = vunpack.c.l.b16 %v728
    %v1749 = vunpack.c.h.b16 %v728
    %v1750 = vunpack.c.l.b16 %v729
    %v1751 = vunpack.c.l.b16 %v730
    %v1752 = vunpack.c.h.b16 %v730
    %v1753 = vunpack.c.l.b16 %v731
    %v1754 = vunpack.c.h.b16 %v731
    %v1755 = vunpack.c.l.b16 %v732
    %v1756 = vunpack.c.l.b16 %v733
    %v1757 = vunpack.c.h.b16 %v733
    %v1758 = vunpack.c.l.b16 %v734
    %v1759 = vunpack.c.h.b16 %v734
    %v1760 = vunpack.c.l.b16 %v735
    %v1761 = vunpack.c.l.b16 %v736
    %v1762 = vunpack.c.h.b16 %v736
    %v1763 = vunpack.c.l.b16 %v737
    %v1764 = vunpack.c.h.b16 %v737
    %v1765 = vunpack.c.l.b16 %v738
    %v1766 = vunpack.c.l.b16 %v739
    %v1767 = vunpack.c.h.b16 %v739
    %v1768 = vunpack.c.l.b16 %v740
    %v1769 = vunpack.c.h.b16 %v740
    %v1770 = vunpack.c.l.b16 %v741
    %v1771 = vunpack.c.l.b16 %v742
    %v1772 = vunpack.c.h.b16 %v742
    %v1773 = vunpack.c.l.b16 %v743
    %v1774 = vunpack.c.h.b16 %v743
    %v1775 = vunpack.c.l.b16 %v744
    %v1776 = vunpack.c.l.b16 %v745
    %v1777 = vunpack.c.h.b16 %v745
    %v1778 = vunpack.c.l.b16 %v746
    %v1779 = vunpack.c.h.b16 %v746
    %v1780 = vunpack.c.l.b16 %v747
    %v1781 = vunpack.c.l.b16 %v748
    %v1782 = vunpack.c.h.b16 %v748
    %v1783 = vunpack.c.l.b16 %v749
    %v1784 = vunpack.c.h.b16 %v749
    %v1785 = vunpack.c.l.b16 %v750
    %v1786 = vunpack.c.l.b16 %v751
    %v1787 = vunpack.c.h.b16 %v751
    %v1788 = vunpack.c.l.b16 %v752
    %v1789 = vunpack.c.h.b16 %v752
    %v1790 = vunpack.c.l.b16 %v753
    %v1791 = vunpack.c.l.b16 %v754
    %v1792 = vunpack.c.h.b16 %v754
    %v1793 = vunpack.c.l.b16 %v755
    %v1794 = vunpack.c.h.b16 %v755
    %v1795 = vunpack.c.l.b16 %v756
    %v1796 = vunpack.c.l.b16 %v757
    %v1797 = vunpack.c.h.b16 %v757
    %v1798 = vunpack.c.l.b16 %v758
    %v1799 = vunpack.c.h.b16 %v758
    %v1800 = vunpack.c.l.b16 %v759
    %v1801 = vunpack.c.l.b16 %v760
    %v1802 = vunpack.c.h.b16 %v760
    %v1803 = vunpack.c.l.b16 %v761
    %v1804 = vunpack.c.h.b16 %v761
    %v1805 = vunpack.c.l.b16 %v762
    %v1806 = vunpack.c.l.b16 %v763
    %v1807 = vunpack.c.h.b16 %v763
    %v1808 = vunpack.c.l.b16 %v764
    %v1809 = vunpack.c.h.b16 %v764
    %v1810 = vunpack.c.l.b16 %v765
    %v1811 = vunpack.c.l.b16 %v766
    %v1812 = vunpack.c.h.b16 %v766
    %v1813 = vunpack.c.l.b16 %v767
    %v1814 = vunpack.c.h.b16 %v767
    %v1815 = vunpack.c.l.b16 %v768
    %v1816 = vunpack.c.l.b16 %v769
    %v1817 = vunpack.c.h.b16 %v769
    %v1818 = vunpack.c.l.b16 %v770
    %v1819 = vunpack.c.h.b16 %v770
    %v1820 = vunpack.c.l.b16 %v771
    %v1821 = vunpack.c.l.b16 %v772
    %v1822 = vunpack.c.h.b16 %v772
    %v1823 = vunpack.c.l.b16 %v773
    %v1824 = vunpack.c.h.b16 %v773
    %v1825 = vunpack.c.l.b16 %v774
    %v1826 = vunpack.c.l.b16 %v775
    %v1827 = vunpack.c.h.b16 %v775
    %v1828 = vunpack.c.l.b16 %v776
    %v1829 = vunpack.c.h.b16 %v776
    %v1830 = vunpack.c.l.b16 %v777
    %v1831 = vunpack.c.l.b16 %v778
    %v1832 = vunpack.c.h.b16 %v778
    %v1833 = vunpack.c.l.b16 %v779
    %v1834 = vunpack.c.h.b16 %v779
    %v1835 = vunpack.c.l.b16 %v780
    %v1836 = vunpack.c.l.b16 %v781
    %v1837 = vunpack.c.h.b16 %v781
    %v1838 = vunpack.c.l.b16 %v782
    %v1839 = vunpack.c.h.b16 %v782
    %v1840 = vunpack.c.l.b16 %v783
    %v1841 = vunpack.c.l.b16 %v784
    %v1842 = vunpack.c.h.b16 %v784
    %v1843 = vunpack.c.l.b16 %v785
    %v1844 = vunpack.c.h.b16 %v785
    %v1845 = vunpack.c.l.b16 %v786
    %v1846 = vunpack.c.l.b16 %v787
    %v1847 = vunpack.c.h.b16 %v787
    %v1848 = vunpack.c.l.b16 %v788
    %v1849 = vunpack.c.h.b16 %v788
    %v1850 = vunpack.c.l.b16 %v789
    %v1851 = vunpack.c.l.b16 %v790
    %v1852 = vunpack.c.h.b16 %v790
    %v1853 = vunpack.c.l.b16 %v791
    %v1854 = vunpack.c.h.b16 %v791
    %v1855 = vunpack.c.l.b16 %v792
    %v1856 = vunpack.c.l.b16 %v793
    %v1857 = vunpack.c.h.b16 %v793
    %v1858 = vunpack.c.l.b16 %v794
    %v1859 = vunpack.c.h.b16 %v794
    %v1860 = vunpack.c.l.b16 %v795
    %v1861 = vunpack.c.l.b16 %v796
    %v1862 = vunpack.c.h.b16 %v796
    %v1863 = vunpack.c.l.b16 %v797
    %v1864 = vunpack.c.h.b16 %v797
    %v1865 = vunpack.c.l.b16 %v798
    %v1866 = vunpack.c.l.b16 %v799
    %v1867 = vunpack.c.h.b16 %v799
    %v1868 = vunpack.c.l.b16 %v800
    %v1869 = vunpack.c.h.b16 %v800
    %v1870 = vunpack.c.l.b16 %v801
    %v1871 = vunpack.c.l.b16 %v802
    %v1872 = vunpack.c.h.b16 %v802
    %v1873 = vunpack.c.l.b16 %v803
    %v1874 = vunpack.c.h.b16 %v803
    %v1875 = vunpack.c.l.b16 %v804
    %v1876 = vunpack.c.l.b16 %v805
    %v1877 = vunpack.c.h.b16 %v805
    %v1878 = vunpack.c.l.b16 %v806
    %v1879 = vunpack.c.h.b16 %v806
    %v1880 = vunpack.c.l.b16 %v807
    %v1881 = vunpack.c.l.b16 %v808
    %v1882 = vunpack.c.h.b16 %v808
    %v1883 = vunpack.c.l.b16 %v809
    %v1884 = vunpack.c.h.b16 %v809
    %v1885 = vunpack.c.l.b16 %v810
    %v1886 = vunpack.c.l.b16 %v811
    %v1887 = vunpack.c.h.b16 %v811
    %v1888 = vunpack.c.l.b16 %v812
    %v1889 = vunpack.c.h.b16 %v812
    %v1890 = vunpack.c.l.b16 %v813
    %v1891 = vunpack.c.l.b16 %v814
    %v1892 = vunpack.c.h.b16 %v814
    %v1893 = vunpack.c.l.b16 %v815
    %v1894 = vunpack.c.h.b16 %v815
    %v1895 = vunpack.c.l.b16 %v816
    %v1896 = vunpack.c.l.b16 %v817
    %v1897 = vunpack.c.h.b16 %v817
    %v1898 = vunpack.c.l.b16 %v818
    %v1899 = vunpack.c.h.b16 %v818
    %v1900 = vunpack.c.l.b16 %v819
    %v1901 = vunpack.c.l.b16 %v820
    %v1902 = vunpack.c.h.b16 %v820
    %v1903 = vunpack.c.l.b16 %v821
    %v1904 = vunpack.c.h.b16 %v821
    %v1905 = vunpack.c.l.b16 %v822
    %v1906 = vunpack.c.l.b16 %v823
    %v1907 = vunpack.c.h.b16 %v823
    %v1908 = vunpack.c.l.b16 %v824
    %v1909 = vunpack.c.h.b16 %v824
    %v1910 = vunpack.c.l.b16 %v825
    %v1911 = vunpack.c.l.b16 %v826
    %v1912 = vunpack.c.h.b16 %v826
    %v1913 = vunpack.c.l.b16 %v827
    %v1914 = vunpack.c.h.b16 %v827
    %v1915 = vunpack.c.l.b16 %v828
    %v1916 = vunpack.c.l.b16 %v829
    %v1917 = vunpack.c.h.b16 %v829
    %v1918 = vunpack.c.l.b16 %v830
    %v1919 = vunpack.c.h.b16 %v830
    %v1920 = vunpack.c.l.b16 %v831
    %v1921 = vunpack.c.l.b16 %v832
    %v1922 = vunpack.c.h.b16 %v832
    %v1923 = vunpack.c.l.b16 %v833
    %v1924 = vunpack.c.h.b16 %v833
    %v1925 = vunpack.c.l.b16 %v834
    %v1926 = vunpack.c.l.b16 %v835
    %v1927 = vunpack.c.h.b16 %v835
    %v1928 = vunpack.c.l.b16 %v836
    %v1929 = vunpack.c.h.b16 %v836
    %v1930 = vunpack.c.l.b16 %v837
    %v1931 = vunpack.c.l.b16 %v838
    %v1932 = vunpack.c.h.b16 %v838
    %v1933 = vunpack.c.l.b16 %v839
    %v1934 = vunpack.c.h.b16 %v839
    %v1935 = vunpack.c.l.b16 %v840
    %v1936 = vunpack.c.l.b16 %v841
    %v1937 = vunpack.c.h.b16 %v841
    %v1938 = vunpack.c.l.b16 %v842
    %v1939 = vunpack.c.h.b16 %v842
    %v1940 = vunpack.c.l.b16 %v843
    %v1941 = vunpack.c.l.b16 %v844
    %v1942 = vunpack.c.h.b16 %v844
    %v1943 = vunpack.c.l.b16 %v845
    %v1944 = vunpack.c.h.b16 %v845
    %v1945 = vunpack.c.l.b16 %v846
    %v1946 = vunpack.c.l.b16 %v847
    %v1947 = vunpack.c.h.b16 %v847
    %v1948 = vunpack.c.l.b16 %v848
    %v1949 = vunpack.c.h.b16 %v848
    %v1950 = vunpack.c.l.b16 %v849
    %v1951 = vunpack.c.l.b16 %v850
    %v1952 = vunpack.c.h.b16 %v850
    %v1953 = vunpack.c.l.b16 %v851
    %v1954 = vunpack.c.h.b16 %v851
    %v1955 = vunpack.c.l.b16 %v852
    %v1956 = vunpack.c.l.b16 %v853
    %v1957 = vunpack.c.h.b16 %v853
    %v1958 = vunpack.c.l.b16 %v854
    %v1959 = vunpack.c.h.b16 %v854
    %v1960 = vunpack.c.l.b16 %v855
    %v1961 = vunpack.c.l.b16 %v856
    %v1962 = vunpack.c.h.b16 %v856
    %v1963 = vunpack.c.l.b16 %v857
    %v1964 = vunpack.c.h.b16 %v857
    %v1965 = vunpack.c.l.b16 %v858
    %v1966 = vunpack.c.l.b16 %v859
    %v1967 = vunpack.c.h.b16 %v859
    %v1968 = vunpack.c.l.b16 %v860
    %v1969 = vunpack.c.h.b16 %v860
    %v1970 = vunpack.c.l.b16 %v861
    %v1971 = vunpack.c.l.b16 %v862
    %v1972 = vunpack.c.h.b16 %v862
    %v1973 = vunpack.c.l.b16 %v863
    %v1974 = vunpack.c.h.b16 %v863
    %v1975 = vunpack.c.l.b16 %v864
    %v1976 = vunpack.c.l.b16 %v865
    %v1977 = vunpack.c.h.b16 %v865
    %v1978 = vunpack.c.l.b16 %v866
    %v1979 = vunpack.c.h.b16 %v866
    %v1980 = vunpack.c.l.b16 %v867
    %v1981 = vunpack.c.l.b16 %v868
    %v1982 = vunpack.c.h.b16 %v868
    %v1983 = vunpack.c.l.b16 %v869
    %v1984 = vunpack.c.h.b16 %v869
    %v1985 = vunpack.c.l.b16 %v870
    %v1986 = vunpack.c.l.b16 %v871
    %v1987 = vunpack.c.h.b16 %v871
    %v1988 = vunpack.c.l.b16 %v872
    %v1989 = vunpack.c.h.b16 %v872
    %v1990 = vunpack.c.l.b16 %v873
    %v1991 = vunpack.c.l.b16 %v874
    %v1992 = vunpack.c.h.b16 %v874
    %v1993 = vunpack.c.l.b16 %v875
    %v1994 = vunpack.c.h.b16 %v875
    %v1995 = vunpack.c.l.b16 %v876
    %v1996 = vunpack.c.l.b16 %v877
    %v1997 = vunpack.c.h.b16 %v877
    %v1998 = vunpack.c.l.b16 %v878
    %v1999 = vunpack.c.h.b16 %v878
    %v2000 = vunpack.c.l.b16 %v879
    %v2001 = vunpack.c.l.b16 %v880
    %v2002 = vunpack.c.h.b16 %v880
    %v2003 = vunpack.c.l.b16 %v881
    %v2004 = vunpack.c.h.b16 %v881
    %v2005 = vunpack.c.l.b16 %v882
    %v2006 = vunpack.c.l.b16 %v883
    %v2007 = vunpack.c.h.b16 %v883
    %v2008 = vunpack.c.l.b16 %v884
    %v2009 = vunpack.c.h.b16 %v884
    %v2010 = vunpack.c.l.b16 %v885
    %v2011 = vunpack.c.l.b16 %v886
    %v2012 = vunpack.c.h.b16 %v886
    %v2013 = vunpack.c.l.b16 %v887
    %v2014 = vunpack.c.h.b16 %v887
    %v2015 = vunpack.c.l.b16 %v888
    %v2016 = vunpack.c.l.b16 %v889
    %v2017 = vunpack.c.h.b16 %v889
    %v2018 = vunpack.c.l.b16 %v890
    %v2019 = vunpack.c.h.b16 %v890
    %v2020 = vunpack.c.l.b16 %v891
    %v2021 = vunpack.c.l.b16 %v892
    %v2022 = vunpack.c.h.b16 %v892
    %v2023 = vunpack.c.l.b16 %v893
    %v2024 = vunpack.c.h.b16 %v893
    %v2025 = vunpack.c.l.b16 %v894
    %v2026 = vunpack.c.l.b16 %v895
    %v2027 = vunpack.c.h.b16 %v895
    %v2028 = vunpack.c.l.b16 %v896
    %v2029 = vunpack.c.h.b16 %v896
    %v2030 = vunpack.c.l.b16 %v897
    %v2031 = vunpack.c.l.b16 %v898
    %v2032 = vunpack.c.h.b16 %v898
    %v2033 = vunpack.c.l.b16 %v899
    %v2034 = vunpack.c.h.b16 %v899
    %v2035 = vunpack.c.l.b16 %v900
    %v2036 = vunpack.c.l.b16 %v901
    %v2037 = vunpack.c.h.b16 %v901
    %v2038 = vunpack.c.l.b16 %v902
    %v2039 = vunpack.c.h.b16 %v902
    %v2040 = vunpack.c.l.b16 %v903
    %v2041 = vunpack.c.l.b16 %v904
    %v2042 = vunpack.c.h.b16 %v904
    %v2043 = vunpack.c.l.b16 %v905
    %v2044 = vunpack.c.h.b16 %v905
    %v2045 = vunpack.c.l.b16 %v906
    %v2046 = vunpack.c.l.b16 %v907
    %v2047 = vunpack.c.h.b16 %v907
    %v2048 = vunpack.c.l.b16 %v908
    %v2049 = vunpack.c.h.b16 %v908
    %v2050 = vunpack.c.l.b16 %v909
    %v2051 = vunpack.c.l.b16 %v910
    %v2052 = vunpack.c.h.b16 %v910
    %v2053 = vunpack.c.l.b16 %v911
    %v2054 = vunpack.c.h.b16 %v911
    %v2055 = vunpack.c.l.b16 %v912
    %v2056 = vunpack.c.l.b16 %v913
    %v2057 = vunpack.c.h.b16 %v913
    %v2058 = vunpack.c.l.b16 %v914
    %v2059 = vunpack.c.h.b16 %v914
    %v2060 = vunpack.c.l.b16 %v915
    %v2061 = vunpack.c.l.b16 %v916
    %v2062 = vunpack.c.h.b16 %v916
    %v2063 = vunpack.c.l.b16 %v917
    %v2064 = vunpack.c.h.b16 %v917
    %v2065 = vunpack.c.l.b16 %v918
    %v2066 = vunpack.c.l.b16 %v919
    %v2067 = vunpack.c.h.b16 %v919
    %v2068 = vunpack.c.l.b16 %v920
    %v2069 = vunpack.c.h.b16 %v920
    %v2070 = vunpack.c.l.b16 %v921
    %v2071 = vunpack.c.l.b16 %v922
    %v2072 = vunpack.c.h.b16 %v922
    %v2073 = vunpack.c.l.b16 %v923
    %v2074 = vunpack.c.h.b16 %v923
    %v2075 = vunpack.c.l.b16 %v924
    %v2076 = vunpack.c.l.b16 %v925
    %v2077 = vunpack.c.h.b16 %v925
    %v2078 = vunpack.c.l.b16 %v926
    %v2079 = vunpack.c.h.b16 %v926
    %v2080 = vunpack.c.l.b16 %v927
    %v2081 = vunpack.c.l.b16 %v928
    %v2082 = vunpack.c.h.b16 %v928
    %v2083 = vunpack.c.l.b16 %v929
    %v2084 = vunpack.c.h.b16 %v929
    %v2085 = vunpack.c.l.b16 %v930
    %v2086 = vunpack.c.l.b16 %v931
    %v2087 = vunpack.c.h.b16 %v931
    %v2088 = vunpack.c.l.b16 %v932
    %v2089 = vunpack.c.h.b16 %v932
    %v2090 = vunpack.c.l.b16 %v933
    %v2091 = vunpack.c.l.b16 %v934
    %v2092 = vunpack.c.h.b16 %v934
    %v2093 = vunpack.c.l.b16 %v935
    %v2094 = vunpack.c.h.b16 %v935
    %v2095 = vunpack.c.l.b16 %v936
    %v2096 = vunpack.c.l.b16 %v937
    %v2097 = vunpack.c.h.b16 %v937
    %v2098 = vunpack.c.l.b16 %v938
    %v2099 = vunpack.c.h.b16 %v938
    %v2100 = vunpack.c.l.b16 %v939
    %v2101 = vunpack.c.l.b16 %v940
    %v2102 = vunpack.c.h.b16 %v940
    %v2103 = vunpack.c.l.b16 %v941
    %v2104 = vunpack.c.h.b16 %v941
    %v2105 = vunpack.c.l.b16 %v942
    %v2106 = vunpack.c.l.b16 %v943
    %v2107 = vunpack.c.h.b16 %v943
    %v2108 = vunpack.c.l.b16 %v944
    %v2109 = vunpack.c.h.b16 %v944
    %v2110 = vunpack.c.l.b16 %v945
    %v2111 = vunpack.c.l.b16 %v946
    %v2112 = vunpack.c.h.b16 %v946
    %v2113 = vunpack.c.l.b16 %v947
    %v2114 = vunpack.c.h.b16 %v947
    %v2115 = vunpack.c.l.b16 %v948
    %v2116 = vunpack.c.l.b16 %v949
    %v2117 = vunpack.c.h.b16 %v949
    %v2118 = vunpack.c.l.b16 %v950
    %v2119 = vunpack.c.h.b16 %v950
    %v2120 = vunpack.c.l.b16 %v951
    %v2121 = vunpack.c.l.b16 %v952
    %v2122 = vunpack.c.h.b16 %v952
    %v2123 = vunpack.c.l.b16 %v953
    %v2124 = vunpack.c.h.b16 %v953
    %v2125 = vunpack.c.l.b16 %v954
    %v2126 = vunpack.c.l.b16 %v955
    %v2127 = vunpack.c.h.b16 %v955
    %v2128 = vunpack.c.l.b16 %v956
    %v2129 = vunpack.c.h.b16 %v956
    %v2130 = vunpack.c.l.b16 %v957
    %v2131 = vunpack.c.l.b16 %v958
    %v2132 = vunpack.c.h.b16 %v958
    %v2133 = vunpack.c.l.b16 %v959
    %v2134 = vunpack.c.h.b16 %v959
    %v2135 = vunpack.c.l.b16 %v960
    %v2136 = vunpack.c.l.b16 %v961
    %v2137 = vunpack.c.h.b16 %v961
    %v2138 = vunpack.c.l.b16 %v962
    %v2139 = vunpack.c.h.b16 %v962
    %v2140 = vunpack.c.l.b16 %v963
    %v2141 = vunpack.c.l.b16 %v964
    %v2142 = vunpack.c.h.b16 %v964
    %v2143 = vunpack.c.l.b16 %v965
    %v2144 = vunpack.c.h.b16 %v965
    %v2145 = vunpack.c.l.b16 %v966
    %v2146 = vpack.c.b16 %v1431, %v1426
    %v2147 = vpack.c.b16 %v1432, %v1427
    %v2148 = vpack.c.b16 %v1433, %v1428
    %v2149 = vpack.c.b16 %v1434, %v1429
    %v2150 = vpack.c.b16 %v1435, %v1430
    %v2151 = vpack.c.b16 %v1441, %v1436
    %v2152 = vpack.c.b16 %v1442, %v1437
    %v2153 = vpack.c.b16 %v1443, %v1438
    %v2154 = vpack.c.b16 %v1444, %v1439
    %v2155 = vpack.c.b16 %v1445, %v1440
    %v2156 = vpack.c.b16 %v1451, %v1446
    %v2157 = vpack.c.b16 %v1452, %v1447
    %v2158 = vpack.c.b16 %v1453, %v1448
    %v2159 = vpack.c.b16 %v1454, %v1449
    %v2160 = vpack.c.b16 %v1455, %v1450
    %v2161 = vpack.c.b16 %v1461, %v1456
    %v2162 = vpack.c.b16 %v1462, %v1457
    %v2163 = vpack.c.b16 %v1463, %v1458
    %v2164 = vpack.c.b16 %v1464, %v1459
    %v2165 = vpack.c.b16 %v1465, %v1460
    %v2166 = vpack.c.b16 %v1471, %v1466
    %v2167 = vpack.c.b16 %v1472, %v1467
    %v2168 = vpack.c.b16 %v1473, %v1468
    %v2169 = vpack.c.b16 %v1474, %v1469
    %v2170 = vpack.c.b16 %v1475, %v1470
    %v2171 = vpack.c.b16 %v1481, %v1476
    %v2172 = vpack.c.b16 %v1482, %v1477
    %v2173 = vpack.c.b16 %v1483, %v1478
    %v2174 = vpack.c.b16 %v1484, %v1479
    %v2175 = vpack.c.b16 %v1485, %v1480
    %v2176 = vpack.c.b16 %v1491, %v1486
    %v2177 = vpack.c.b16 %v1492, %v1487
    %v2178 = vpack.c.b16 %v1493, %v1488
    %v2179 = vpack.c.b16 %v1494, %v1489
    %v2180 = vpack.c.b16 %v1495, %v1490
    %v2181 = vpack.c.b16 %v1501, %v1496
    %v2182 = vpack.c.b16 %v1502, %v1497
    %v2183 = vpack.c.b16 %v1503, %v1498
    %v2184 = vpack.c.b16 %v1504, %v1499
    %v2185 = vpack.c.b16 %v1505, %v1500
    %v2186 = vpack.c.b16 %v1511, %v1506
    %v2187 = vpack.c.b16 %v1512, %v1507
    %v2188 = vpack.c.b16 %v1513, %v1508
    %v2189 = vpack.c.b16 %v1514, %v1509
    %v2190 = vpack.c.b16 %v1515, %v1510
    %v2191 = vpack.c.b16 %v1521, %v1516
    %v2192 = vpack.c.b16 %v1522, %v1517
    %v2193 = vpack.c.b16 %v1523, %v1518
    %v2194 = vpack.c.b16 %v1524, %v1519
    %v2195 = vpack.c.b16 %v1525, %v1520
    %v2196 = vpack.c.b16 %v1531, %v1526
    %v2197 = vpack.c.b16 %v1532, %v1527
    %v2198 = vpack.c.b16 %v1533, %v1528
    %v2199 = vpack.c.b16 %v1534, %v1529
    %v2200 = vpack.c.b16 %v1535, %v1530
    %v2201 = vpack.c.b16 %v1541, %v1536
    %v2202 = vpack.c.b16 %v1542, %v1537
    %v2203 = vpack.c.b16 %v1543, %v1538
    %v2204 = vpack.c.b16 %v1544, %v1539
    %v2205 = vpack.c.b16 %v1545, %v1540
    %v2206 = vpack.c.b16 %v1551, %v1546
    %v2207 = vpack.c.b16 %v1552, %v1547
    %v2208 = vpack.c.b16 %v1553, %v1548
    %v2209 = vpack.c.b16 %v1554, %v1549
    %v2210 = vpack.c.b16 %v1555, %v1550
    %v2211 = vpack.c.b16 %v1561, %v1556
    %v2212 = vpack.c.b16 %v1562, %v1557
    %v2213 = vpack.c.b16 %v1563, %v1558
    %v2214 = vpack.c.b16 %v1564, %v1559
    %v2215 = vpack.c.b16 %v1565, %v1560
    %v2216 = vpack.c.b16 %v1571, %v1566
    %v2217 = vpack.c.b16 %v1572, %v1567
    %v2218 = vpack.c.b16 %v1573, %v1568
    %v2219 = vpack.c.b16 %v1574, %v1569
    %v2220 = vpack.c.b16 %v1575, %v1570
    %v2221 = vpack.c.b16 %v1581, %v1576
    %v2222 = vpack.c.b16 %v1582, %v1577
    %v2223 = vpack.c.b16 %v1583, %v1578
    %v2224 = vpack.c.b16 %v1584, %v1579
    %v2225 = vpack.c.b16 %v1585, %v1580
    %v2226 = vpack.c.b16 %v1591, %v1586
    %v2227 = vpack.c.b16 %v1592, %v1587
    %v2228 = vpack.c.b16 %v1593, %v1588
    %v2229 = vpack.c.b16 %v1594, %v1589
    %v2230 = vpack.c.b16 %v1595, %v1590
    %v2231 = vpack.c.b16 %v1601, %v1596
    %v2232 = vpack.c.b16 %v1602, %v1597
    %v2233 = vpack.c.b16 %v1603, %v1598
    %v2234 = vpack.c.b16 %v1604, %v1599
    %v2235 = vpack.c.b16 %v1605, %v1600
    %v2236 = vpack.c.b16 %v1611, %v1606
    %v2237 = vpack.c.b16 %v1612, %v1607
    %v2238 = vpack.c.b16 %v1613, %v1608
    %v2239 = vpack.c.b16 %v1614, %v1609
    %v2240 = vpack.c.b16 %v1615, %v1610
    %v2241 = vpack.c.b16 %v1621, %v1616
    %v2242 = vpack.c.b16 %v1622, %v1617
    %v2243 = vpack.c.b16 %v1623, %v1618
    %v2244 = vpack.c.b16 %v1624, %v1619
    %v2245 = vpack.c.b16 %v1625, %v1620
    %v2246 = vpack.c.b16 %v1631, %v1626
    %v2247 = vpack.c.b16 %v1632, %v1627
    %v2248 = vpack.c.b16 %v1633, %v1628
    %v2249 = vpack.c.b16 %v1634, %v1629
    %v2250 = vpack.c.b16 %v1635, %v1630
    %v2251 = vpack.c.b16 %v1641, %v1636
    %v2252 = vpack.c.b16 %v1642, %v1637
    %v2253 = vpack.c.b16 %v1643, %v1638
    %v2254 = vpack.c.b16 %v1644, %v1639
    %v2255 = vpack.c.b16 %v1645, %v1640
    %v2256 = vpack.c.b16 %v1651, %v1646
    %v2257 = vpack.c.b16 %v1652, %v1647
    %v2258 = vpack.c.b16 %v1653, %v1648
    %v2259 = vpack.c.b16 %v1654, %v1649
    %v2260 = vpack.c.b16 %v1655, %v1650
    %v2261 = vpack.c.b16 %v1661, %v1656
    %v2262 = vpack.c.b16 %v1662, %v1657
    %v2263 = vpack.c.b16 %v1663, %v1658
    %v2264 = vpack.c.b16 %v1664, %v1659
    %v2265 = vpack.c.b16 %v1665, %v1660
    %v2266 = vpack.c.b16 %v1671, %v1666
    %v2267 = vpack.c.b16 %v1672, %v1667
    %v2268 = vpack.c.b16 %v1673, %v1668
    %v2269 = vpack.c.b16 %v1674, %v1669
    %v2270 = vpack.c.b16 %v1675, %v1670
    %v2271 = vpack.c.b16 %v1681, %v1676
    %v2272 = vpack.c.b16 %v1682, %v1677
    %v2273 = vpack.c.b16 %v1683, %v1678
    %v2274 = vpack.c.b16 %v1684, %v1679
    %v2275 = vpack.c.b16 %v1685, %v1680
    %v2276 = vpack.c.b16 %v1691, %v1686
    %v2277 = vpack.c.b16 %v1692, %v1687
    %v2278 = vpack.c.b16 %v1693, %v1688
    %v2279 = vpack.c.b16 %v1694, %v1689
    %v2280 = vpack.c.b16 %v1695, %v1690
    %v2281 = vpack.c.b16 %v1701, %v1696
    %v2282 = vpack.c.b16 %v1702, %v1697
    %v2283 = vpack.c.b16 %v1703, %v1698
    %v2284 = vpack.c.b16 %v1704, %v1699
    %v2285 = vpack.c.b16 %v1705, %v1700
    %v2286 = vpack.c.b16 %v1711, %v1706
    %v2287 = vpack.c.b16 %v1712, %v1707
    %v2288 = vpack.c.b16 %v1713, %v1708
    %v2289 = vpack.c.b16 %v1714, %v1709
    %v2290 = vpack.c.b16 %v1715, %v1710
    %v2291 = vpack.c.b16 %v1721, %v1716
    %v2292 = vpack.c.b16 %v1722, %v1717
    %v2293 = vpack.c.b16 %v1723, %v1718
    %v2294 = vpack.c.b16 %v1724, %v1719
    %v2295 = vpack.c.b16 %v1725, %v1720
    %v2296 = vpack.c.b16 %v1731, %v1726
    %v2297 = vpack.c.b16 %v1732, %v1727
    %v2298 = vpack.c.b16 %v1733, %v1728
    %v2299 = vpack.c.b16 %v1734, %v1729
    %v2300 = vpack.c.b16 %v1735, %v1730
    %v2301 = vpack.c.b16 %v1741, %v1736
    %v2302 = vpack.c.b16 %v1742, %v1737
    %v2303 = vpack.c.b16 %v1743, %v1738
    %v2304 = vpack.c.b16 %v1744, %v1739
    %v2305 = vpack.c.b16 %v1745, %v1740
    %v2306 = vpack.c.b16 %v1751, %v1746
    %v2307 = vpack.c.b16 %v1752, %v1747
    %v2308 = vpack.c.b16 %v1753, %v1748
    %v2309 = vpack.c.b16 %v1754, %v1749
    %v2310 = vpack.c.b16 %v1755, %v1750
    %v2311 = vpack.c.b16 %v1761, %v1756
    %v2312 = vpack.c.b16 %v1762, %v1757
    %v2313 = vpack.c.b16 %v1763, %v1758
    %v2314 = vpack.c.b16 %v1764, %v1759
    %v2315 = vpack.c.b16 %v1765, %v1760
    %v2316 = vpack.c.b16 %v1771, %v1766
    %v2317 = vpack.c.b16 %v1772, %v1767
    %v2318 = vpack.c.b16 %v1773, %v1768
    %v2319 = vpack.c.b16 %v1774, %v1769
    %v2320 = vpack.c.b16 %v1775, %v1770
    %v2321 = vpack.c.b16 %v1781, %v1776
    %v2322 = vpack.c.b16 %v1782, %v1777
    %v2323 = vpack.c.b16 %v1783, %v1778
    %v2324 = vpack.c.b16 %v1784, %v1779
    %v2325 = vpack.c.b16 %v1785, %v1780
    %v2326 = vpack.c.b16 %v1791, %v1786
    %v2327 = vpack.c.b16 %v1792, %v1787
    %v2328 = vpack.c.b16 %v1793, %v1788
    %v2329 = vpack.c.b16 %v1794, %v1789
    %v2330 = vpack.c.b16 %v1795, %v1790
    %v2331 = vpack.c.b16 %v1801, %v1796
    %v2332 = vpack.c.b16 %v1802, %v1797
    %v2333 = vpack.c.b16 %v1803, %v1798
    %v2334 = vpack.c.b16 %v1804, %v1799
    %v2335 = vpack.c.b16 %v1805, %v1800
    %v2336 = vpack.c.b16 %v1811, %v1806
    %v2337 = vpack.c.b16 %v1812, %v1807
    %v2338 = vpack.c.b16 %v1813, %v1808
    %v2339 = vpack.c.b16 %v1814, %v1809
    %v2340 = vpack.c.b16 %v1815, %v1810
    %v2341 = vpack.c.b16 %v1821, %v1816
    %v2342 = vpack.c.b16 %v1822, %v1817
    %v2343 = vpack.c.b16 %v1823, %v1818
    %v2344 = vpack.c.b16 %v1824, %v1819
    %v2345 = vpack.c.b16 %v1825, %v1820
    %v2346 = vpack.c.b16 %v1831, %v1826
    %v2347 = vpack.c.b16 %v1832, %v1827
    %v2348 = vpack.c.b16 %v1833, %v1828
    %v2349 = vpack.c.b16 %v1834, %v1829
    %v2350 = vpack.c.b16 %v1835, %v1830
    %v2351 = vpack.c.b16 %v1841, %v1836
    %v2352 = vpack.c.b16 %v1842, %v1837
    %v2353 = vpack.c.b16 %v1843, %v1838
    %v2354 = vpack.c.b16 %v1844, %v1839
    %v2355 = vpack.c.b16 %v1845, %v1840
    %v2356 = vpack.c.b16 %v1851, %v1846
    %v2357 = vpack.c.b16 %v1852, %v1847
    %v2358 = vpack.c.b16 %v1853, %v1848
    %v2359 = vpack.c.b16 %v1854, %v1849
    %v2360 = vpack.c.b16 %v1855, %v1850
    %v2361 = vpack.c.b16 %v1861, %v1856
    %v2362 = vpack.c.b16 %v1862, %v1857
    %v2363 = vpack.c.b16 %v1863, %v1858
    %v2364 = vpack.c.b16 %v1864, %v1859
    %v2365 = vpack.c.b16 %v1865, %v1860
    %v2366 = vpack.c.b16 %v1871, %v1866
    %v2367 = vpack.c.b16 %v1872, %v1867
    %v2368 = vpack.c.b16 %v1873, %v1868
    %v2369 = vpack.c.b16 %v1874, %v1869
    %v2370 = vpack.c.b16 %v1875, %v1870
    %v2371 = vpack.c.b16 %v1881, %v1876
    %v2372 = vpack.c.b16 %v1882, %v1877
    %v2373 = vpack.c.b16 %v1883, %v1878
    %v2374 = vpack.c.b16 %v1884, %v1879
    %v2375 = vpack.c.b16 %v1885, %v1880
    %v2376 = vpack.c.b16 %v1891, %v1886
    %v2377 = vpack.c.b16 %v1892, %v1887
    %v2378 = vpack.c.b16 %v1893, %v1888
    %v2379 = vpack.c.b16 %v1894, %v1889
    %v2380 = vpack.c.b16 %v1895, %v1890
    %v2381 = vpack.c.b16 %v1901, %v1896
    %v2382 = vpack.c.b16 %v1902, %v1897
    %v2383 = vpack.c.b16 %v1903, %v1898
    %v2384 = vpack.c.b16 %v1904, %v1899
    %v2385 = vpack.c.b16 %v1905, %v1900
    %v2386 = vpack.c.b16 %v1911, %v1906
    %v2387 = vpack.c.b16 %v1912, %v1907
    %v2388 = vpack.c.b16 %v1913, %v1908
    %v2389 = vpack.c.b16 %v1914, %v1909
    %v2390 = vpack.c.b16 %v1915, %v1910
    %v2391 = vpack.c.b16 %v1921, %v1916
    %v2392 = vpack.c.b16 %v1922, %v1917
    %v2393 = vpack.c.b16 %v1923, %v1918
    %v2394 = vpack.c.b16 %v1924, %v1919
    %v2395 = vpack.c.b16 %v1925, %v1920
    %v2396 = vpack.c.b16 %v1931, %v1926
    %v2397 = vpack.c.b16 %v1932, %v1927
    %v2398 = vpack.c.b16 %v1933, %v1928
    %v2399 = vpack.c.b16 %v1934, %v1929
    %v2400 = vpack.c.b16 %v1935, %v1930
    %v2401 = vpack.c.b16 %v1941, %v1936
    %v2402 = vpack.c.b16 %v1942, %v1937
    %v2403 = vpack.c.b16 %v1943, %v1938
    %v2404 = vpack.c.b16 %v1944, %v1939
    %v2405 = vpack.c.b16 %v1945, %v1940
    %v2406 = vpack.c.b16 %v1951, %v1946
    %v2407 = vpack.c.b16 %v1952, %v1947
    %v2408 = vpack.c.b16 %v1953, %v1948
    %v2409 = vpack.c.b16 %v1954, %v1949
    %v2410 = vpack.c.b16 %v1955, %v1950
    %v2411 = vpack.c.b16 %v1961, %v1956
    %v2412 = vpack.c.b16 %v1962, %v1957
    %v2413 = vpack.c.b16 %v1963, %v1958
    %v2414 = vpack.c.b16 %v1964, %v1959
    %v2415 = vpack.c.b16 %v1965, %v1960
    %v2416 = vpack.c.b16 %v1971, %v1966
    %v2417 = vpack.c.b16 %v1972, %v1967
    %v2418 = vpack.c.b16 %v1973, %v1968
    %v2419 = vpack.c.b16 %v1974, %v1969
    %v2420 = vpack.c.b16 %v1975, %v1970
    %v2421 = vpack.c.b16 %v1981, %v1976
    %v2422 = vpack.c.b16 %v1982, %v1977
    %v2423 = vpack.c.b16 %v1983, %v1978
    %v2424 = vpack.c.b16 %v1984, %v1979
    %v2425 = vpack.c.b16 %v1985, %v1980
    %v2426 = vpack.c.b16 %v1991, %v1986
    %v2427 = vpack.c.b16 %v1992, %v1987
    %v2428 = vpack.c.b16 %v1993, %v1988
    %v2429 = vpack.c.b16 %v1994, %v1989
    %v2430 = vpack.c.b16 %v1995, %v1990
    %v2431 = vpack.c.b16 %v2001, %v1996
    %v2432 = vpack.c.b16 %v2002, %v1997
    %v2433 = vpack.c.b16 %v2003, %v1998
    %v2434 = vpack.c.b16 %v2004, %v1999
    %v2435 = vpack.c.b16 %v2005, %v2000
    %v2436 = vpack.c.b16 %v2011, %v2006
    %v2437 = vpack.c.b16 %v2012, %v2007
    %v2438 = vpack.c.b16 %v2013, %v2008
    %v2439 = vpack.c.b16 %v2014, %v2009
    %v2440 = vpack.c.b16 %v2015, %v2010
    %v2441 = vpack.c.b16 %v2021, %v2016
    %v2442 = vpack.c.b16 %v2022, %v2017
    %v2443 = vpack.c.b16 %v2023, %v2018
    %v2444 = vpack.c.b16 %v2024, %v2019
    %v2445 = vpack.c.b16 %v2025, %v2020
    %v2446 = vpack.c.b16 %v2031, %v2026
    %v2447 = vpack.c.b16 %v2032, %v2027
    %v2448 = vpack.c.b16 %v2033, %v2028
    %v2449 = vpack.c.b16 %v2034, %v2029
    %v2450 = vpack.c.b16 %v2035, %v2030
    %v2451 = vpack.c.b16 %v2041, %v2036
    %v2452 = vpack.c.b16 %v2042, %v2037
    %v2453 = vpack.c.b16 %v2043, %v2038
    %v2454 = vpack.c.b16 %v2044, %v2039
    %v2455 = vpack.c.b16 %v2045, %v2040
    %v2456 = vpack.c.b16 %v2051, %v2046
    %v2457 = vpack.c.b16 %v2052, %v2047
    %v2458 = vpack.c.b16 %v2053, %v2048
    %v2459 = vpack.c.b16 %v2054, %v2049
    %v2460 = vpack.c.b16 %v2055, %v2050
    %v2461 = vpack.c.b16 %v2061, %v2056
    %v2462 = vpack.c.b16 %v2062, %v2057
    %v2463 = vpack.c.b16 %v2063, %v2058
    %v2464 = vpack.c.b16 %v2064, %v2059
    %v2465 = vpack.c.b16 %v2065, %v2060
    %v2466 = vpack.c.b16 %v2071, %v2066
    %v2467 = vpack.c.b16 %v2072, %v2067
    %v2468 = vpack.c.b16 %v2073, %v2068
    %v2469 = vpack.c.b16 %v2074, %v2069
    %v2470 = vpack.c.b16 %v2075, %v2070
    %v2471 = vpack.c.b16 %v2081, %v2076
    %v2472 = vpack.c.b16 %v2082, %v2077
    %v2473 = vpack.c.b16 %v2083, %v2078
    %v2474 = vpack.c.b16 %v2084, %v2079
    %v2475 = vpack.c.b16 %v2085, %v2080
    %v2476 = vpack.c.b16 %v2091, %v2086
    %v2477 = vpack.c.b16 %v2092, %v2087
    %v2478 = vpack.c.b16 %v2093, %v2088
    %v2479 = vpack.c.b16 %v2094, %v2089
    %v2480 = vpack.c.b16 %v2095, %v2090
    %v2481 = vpack.c.b16 %v2101, %v2096
    %v2482 = vpack.c.b16 %v2102, %v2097
    %v2483 = vpack.c.b16 %v2103, %v2098
    %v2484 = vpack.c.b16 %v2104, %v2099
    %v2485 = vpack.c.b16 %v2105, %v2100
    %v2486 = vpack.c.b16 %v2111, %v2106
    %v2487 = vpack.c.b16 %v2112, %v2107
    %v2488 = vpack.c.b16 %v2113, %v2108
    %v2489 = vpack.c.b16 %v2114, %v2109
    %v2490 = vpack.c.b16 %v2115, %v2110
    %v2491 = vpack.c.b16 %v2121, %v2116
    %v2492 = vpack.c.b16 %v2122, %v2117
    %v2493 = vpack.c.b16 %v2123, %v2118
    %v2494 = vpack.c.b16 %v2124, %v2119
    %v2495 = vpack.c.b16 %v2125, %v2120
    %v2496 = vpack.c.b16 %v2131, %v2126
    %v2497 = vpack.c.b16 %v2132, %v2127
    %v2498 = vpack.c.b16 %v2133, %v2128
    %v2499 = vpack.c.b16 %v2134, %v2129
    %v2500 = vpack.c.b16 %v2135, %v2130
    %v2501 = vpack.c.b16 %v2141, %v2136
    %v2502 = vpack.c.b16 %v2142, %v2137
    %v2503 = vpack.c.b16 %v2143, %v2138
    %v2504 = vpack.c.b16 %v2144, %v2139
    %v2505 = vpack.c.b16 %v2145, %v2140
    %2866 = vmatprep.subr.bf16.mxu0 %v2147
    %2867 = vmatpush1.bf16.msra.mxu0 %v2146
    %2868 = vmatprep.subr.bf16.mxu0 %v2152
    %2869 = vmatpush1.bf16.msra.mxu0 %v2151
    %2870 = vmatprep.subr.bf16.mxu0 %v2157
    %2871 = vmatpush1.bf16.msra.mxu0 %v2156
    %2872 = vmatprep.subr.bf16.mxu0 %v2162
    %2873 = vmatpush1.bf16.msra.mxu0 %v2161
    %2874 = vmatprep.subr.bf16.mxu0 %v2167
    %2875 = vmatpush1.bf16.msra.mxu0 %v2166
    %2876 = vmatprep.subr.bf16.mxu0 %v2172
    %2877 = vmatpush1.bf16.msra.mxu0 %v2171
    %2878 = vmatprep.subr.bf16.mxu0 %v2177
    %2879 = vmatpush1.bf16.msra.mxu0 %v2176
    %2880 = vmatprep.subr.bf16.mxu0 %v2182
    %2881 = vmatpush1.bf16.msra.mxu0 %v2181
    %2882 = vmatprep.subr.bf16.mxu0 %v2187
    %2883 = vmatpush1.bf16.msra.mxu0 %v2186
    %2884 = vmatprep.subr.bf16.mxu0 %v2192
    %2885 = vmatpush1.bf16.msra.mxu0 %v2191
    %2886 = vmatprep.subr.bf16.mxu0 %v2197
    %2887 = vmatpush1.bf16.msra.mxu0 %v2196
    %2888 = vmatprep.subr.bf16.mxu0 %v2202
    %2889 = vmatpush1.bf16.msra.mxu0 %v2201
    %2890 = vmatprep.subr.bf16.mxu0 %v2207
    %2891 = vmatpush1.bf16.msra.mxu0 %v2206
    %2892 = vmatprep.subr.bf16.mxu0 %v2212
    %2893 = vmatpush1.bf16.msra.mxu0 %v2211
    %2894 = vmatprep.subr.bf16.mxu0 %v2217
    %2895 = vmatpush1.bf16.msra.mxu0 %v2216
    %2896 = vmatprep.subr.bf16.mxu0 %v2222
    %2897 = vmatpush1.bf16.msra.mxu0 %v2221
    %2898 = vmatprep.mubr.bf16.mxu0 %v527
    %2899 = vmatmul.mubr.bf16.gmra.mrb[0].mxu0 %v526
    %v2900 = vpop.f32.mrb[0].mxu0
    %v2901 = vadd.f32 %v972, %v2900
    %v2902 = vpop.f32.mrb[0].mxu0
    %v2903 = vadd.f32 %v976, %v2902
    %v2904 = vpop.f32.mrb[0].mxu0
    %v2905 = vpop.f32.mrb[0].mxu0
    %2906 = vdwg.mxu0
    %2907 = vmatprep.subr.bf16.mxu0 %v2227
    %2908 = vmatpush1.bf16.msra.mxu0 %v2226
    %2909 = vmatprep.subr.bf16.mxu0 %v2232
    %2910 = vmatpush1.bf16.msra.mxu0 %v2231
    %2911 = vmatprep.subr.bf16.mxu0 %v2237
    %2912 = vmatpush1.bf16.msra.mxu0 %v2236
    %2913 = vmatprep.subr.bf16.mxu0 %v2242
    %2914 = vmatpush1.bf16.msra.mxu0 %v2241
    %2915 = vmatprep.subr.bf16.mxu0 %v2247
    %2916 = vmatpush1.bf16.msra.mxu0 %v2246
    %2917 = vmatprep.subr.bf16.mxu0 %v2252
    %2918 = vmatpush1.bf16.msra.mxu0 %v2251
    %2919 = vmatprep.subr.bf16.mxu0 %v2257
    %2920 = vmatpush1.bf16.msra.mxu0 %v2256
    %2921 = vmatprep.subr.bf16.mxu0 %v2262
    %2922 = vmatpush1.bf16.msra.mxu0 %v2261
    %2923 = vmatprep.subr.bf16.mxu0 %v2267
    %2924 = vmatpush1.bf16.msra.mxu0 %v2266
    %2925 = vmatprep.subr.bf16.mxu0 %v2272
    %2926 = vmatpush1.bf16.msra.mxu0 %v2271
    %2927 = vmatprep.subr.bf16.mxu0 %v2277
    %2928 = vmatpush1.bf16.msra.mxu0 %v2276
    %2929 = vmatprep.subr.bf16.mxu0 %v2282
    %2930 = vmatpush1.bf16.msra.mxu0 %v2281
    %2931 = vmatprep.subr.bf16.mxu0 %v2287
    %2932 = vmatpush1.bf16.msra.mxu0 %v2286
    %2933 = vmatprep.subr.bf16.mxu0 %v2292
    %2934 = vmatpush1.bf16.msra.mxu0 %v2291
    %2935 = vmatprep.subr.bf16.mxu0 %v2297
    %2936 = vmatpush1.bf16.msra.mxu0 %v2296
    %2937 = vmatprep.subr.bf16.mxu0 %v2302
    %2938 = vmatpush1.bf16.msra.mxu0 %v2301
    %2939 = vmatprep.mubr.bf16.mxu0 %v529
    %2940 = vmatmul.mubr.bf16.gmra.mrb[0].mxu0 %v528
    %v2941 = vpop.f32.mrb[0].mxu0
    %v2942 = vadd.f32 %v2901, %v2941
    %v2943 = vpop.f32.mrb[0].mxu0
    %v2944 = vadd.f32 %v2903, %v2943
    %v2945 = vpop.f32.mrb[0].mxu0
    %v2946 = vpop.f32.mrb[0].mxu0
    %2947 = vdwg.mxu0
    %2948 = vmatprep.subr.bf16.mxu0 %v2307
    %2949 = vmatpush1.bf16.msra.mxu0 %v2306
    %2950 = vmatprep.subr.bf16.mxu0 %v2312
    %2951 = vmatpush1.bf16.msra.mxu0 %v2311
    %2952 = vmatprep.subr.bf16.mxu0 %v2317
    %2953 = vmatpush1.bf16.msra.mxu0 %v2316
    %2954 = vmatprep.subr.bf16.mxu0 %v2322
    %2955 = vmatpush1.bf16.msra.mxu0 %v2321
    %2956 = vmatprep.subr.bf16.mxu0 %v2327
    %2957 = vmatpush1.bf16.msra.mxu0 %v2326
    %2958 = vmatprep.subr.bf16.mxu0 %v2332
    %2959 = vmatpush1.bf16.msra.mxu0 %v2331
    %2960 = vmatprep.subr.bf16.mxu0 %v2337
    %2961 = vmatpush1.bf16.msra.mxu0 %v2336
    %2962 = vmatprep.subr.bf16.mxu0 %v2342
    %2963 = vmatpush1.bf16.msra.mxu0 %v2341
    %2964 = vmatprep.subr.bf16.mxu0 %v2347
    %2965 = vmatpush1.bf16.msra.mxu0 %v2346
    %2966 = vmatprep.subr.bf16.mxu0 %v2352
    %2967 = vmatpush1.bf16.msra.mxu0 %v2351
    %2968 = vmatprep.subr.bf16.mxu0 %v2357
    %2969 = vmatpush1.bf16.msra.mxu0 %v2356
    %2970 = vmatprep.subr.bf16.mxu0 %v2362
    %2971 = vmatpush1.bf16.msra.mxu0 %v2361
    %2972 = vmatprep.subr.bf16.mxu0 %v2367
    %2973 = vmatpush1.bf16.msra.mxu0 %v2366
    %2974 = vmatprep.subr.bf16.mxu0 %v2372
    %2975 = vmatpush1.bf16.msra.mxu0 %v2371
    %2976 = vmatprep.subr.bf16.mxu0 %v2377
    %2977 = vmatpush1.bf16.msra.mxu0 %v2376
    %2978 = vmatprep.subr.bf16.mxu0 %v2382
    %2979 = vmatpush1.bf16.msra.mxu0 %v2381
    %2980 = vmatprep.mubr.bf16.mxu0 %v531
    %2981 = vmatmul.mubr.bf16.gmra.mrb[0].mxu0 %v530
    %v2982 = vpop.f32.mrb[0].mxu0
    %v2983 = vadd.f32 %v2942, %v2982
    %v2984 = vpop.f32.mrb[0].mxu0
    %v2985 = vadd.f32 %v2944, %v2984
    %v2986 = vpop.f32.mrb[0].mxu0
    %v2987 = vpop.f32.mrb[0].mxu0
    %2988 = vdwg.mxu0
    %2989 = vmatprep.subr.bf16.mxu0 %v2387
    %2990 = vmatpush1.bf16.msra.mxu0 %v2386
    %2991 = vmatprep.subr.bf16.mxu0 %v2392
    %2992 = vmatpush1.bf16.msra.mxu0 %v2391
    %2993 = vmatprep.subr.bf16.mxu0 %v2397
    %2994 = vmatpush1.bf16.msra.mxu0 %v2396
    %2995 = vmatprep.subr.bf16.mxu0 %v2402
    %2996 = vmatpush1.bf16.msra.mxu0 %v2401
    %2997 = vmatprep.subr.bf16.mxu0 %v2407
    %2998 = vmatpush1.bf16.msra.mxu0 %v2406
    %2999 = vmatprep.subr.bf16.mxu0 %v2412
    %3000 = vmatpush1.bf16.msra.mxu0 %v2411
    %3001 = vmatprep.subr.bf16.mxu0 %v2417
    %3002 = vmatpush1.bf16.msra.mxu0 %v2416
    %3003 = vmatprep.subr.bf16.mxu0 %v2422
    %3004 = vmatpush1.bf16.msra.mxu0 %v2421
    %3005 = vmatprep.subr.bf16.mxu0 %v2427
    %3006 = vmatpush1.bf16.msra.mxu0 %v2426
    %3007 = vmatprep.subr.bf16.mxu0 %v2432
    %3008 = vmatpush1.bf16.msra.mxu0 %v2431
    %3009 = vmatprep.subr.bf16.mxu0 %v2437
    %3010 = vmatpush1.bf16.msra.mxu0 %v2436
    %3011 = vmatprep.subr.bf16.mxu0 %v2442
    %3012 = vmatpush1.bf16.msra.mxu0 %v2441
    %3013 = vmatprep.subr.bf16.mxu0 %v2447
    %3014 = vmatpush1.bf16.msra.mxu0 %v2446
    %3015 = vmatprep.subr.bf16.mxu0 %v2452
    %3016 = vmatpush1.bf16.msra.mxu0 %v2451
    %3017 = vmatprep.subr.bf16.mxu0 %v2457
    %3018 = vmatpush1.bf16.msra.mxu0 %v2456
    %3019 = vmatprep.subr.bf16.mxu0 %v2462
    %3020 = vmatpush1.bf16.msra.mxu0 %v2461
    %3021 = vmatprep.mubr.bf16.mxu0 %v533
    %3022 = vmatmul.mubr.bf16.gmra.mrb[0].mxu0 %v532
    %v3023 = vpop.f32.mrb[0].mxu0
    %v3024 = vadd.f32 %v2983, %v3023
    %v3025 = vpop.f32.mrb[0].mxu0
    %v3026 = vadd.f32 %v2985, %v3025
    %v3027 = vpop.f32.mrb[0].mxu0
    %v3028 = vpop.f32.mrb[0].mxu0
    %3029 = vdwg.mxu0
    %3030 = vmatprep.subr.bf16.mxu0 %v2467
    %3031 = vmatpush1.bf16.msra.mxu0 %v2466
    %3032 = vmatprep.subr.bf16.mxu0 %v2472
    %3033 = vmatpush1.bf16.msra.mxu0 %v2471
    %3034 = vmatprep.subr.bf16.mxu0 %v2477
    %3035 = vmatpush1.bf16.msra.mxu0 %v2476
    %3036 = vmatprep.subr.bf16.mxu0 %v2482
    %3037 = vmatpush1.bf16.msra.mxu0 %v2481
    %3038 = vmatprep.subr.bf16.mxu0 %v2487
    %3039 = vmatpush1.bf16.msra.mxu0 %v2486
    %3040 = vmatprep.subr.bf16.mxu0 %v2492
    %3041 = vmatpush1.bf16.msra.mxu0 %v2491
    %3042 = vmatprep.subr.bf16.mxu0 %v2497
    %3043 = vmatpush1.bf16.msra.mxu0 %v2496
    %3044 = vmatprep.subr.bf16.mxu0 %v2502
    %3045 = vmatpush1.bf16.msra.mxu0 %v2501
    %3046 = vmatprep.subr.bf16.mxu0 0
    %3047 = vmatpush1.bf16.msra.mxu0 0
    %3048 = vmatprep.subr.bf16.mxu0 0
    %3049 = vmatpush1.bf16.msra.mxu0 0
    %3050 = vmatprep.subr.bf16.mxu0 0
    %3051 = vmatpush1.bf16.msra.mxu0 0
    %3052 = vmatprep.subr.bf16.mxu0 0
    %3053 = vmatpush1.bf16.msra.mxu0 0
    %3054 = vmatprep.subr.bf16.mxu0 0
    %3055 = vmatpush1.bf16.msra.mxu0 0
    %3056 = vmatprep.subr.bf16.mxu0 0
    %3057 = vmatpush1.bf16.msra.mxu0 0
    %3058 = vmatprep.subr.bf16.mxu0 0
    %3059 = vmatpush1.bf16.msra.mxu0 0
    %3060 = vmatprep.subr.bf16.mxu0 0
    %3061 = vmatpush1.bf16.msra.mxu0 0
    %3062 = vmatprep.mubr.bf16.mxu0 0
    %3063 = vmatmul.mubr.bf16.gmra.mrb[0].mxu0 %v534
    %v3064 = vpop.f32.mrb[0].mxu0
    %v3065 = vadd.f32 %v3024, %v3064
    %v3066 = vpop.f32.mrb[0].mxu0
    %v3067 = vadd.f32 %v3026, %v3066
    %v3068 = vpop.f32.mrb[0].mxu0
    %v3069 = vpop.f32.mrb[0].mxu0
    %3070 = vdwg.mxu0
    %3071 = vmatprep.subr.bf16.mxu0 %v2149
    %3072 = vmatpush1.bf16.msra.mxu0 %v2148
    %3073 = vmatprep.subr.bf16.mxu0 %v2154
    %3074 = vmatpush1.bf16.msra.mxu0 %v2153
    %3075 = vmatprep.subr.bf16.mxu0 %v2159
    %3076 = vmatpush1.bf16.msra.mxu0 %v2158
    %3077 = vmatprep.subr.bf16.mxu0 %v2164
    %3078 = vmatpush1.bf16.msra.mxu0 %v2163
    %3079 = vmatprep.subr.bf16.mxu0 %v2169
    %3080 = vmatpush1.bf16.msra.mxu0 %v2168
    %3081 = vmatprep.subr.bf16.mxu0 %v2174
    %3082 = vmatpush1.bf16.msra.mxu0 %v2173
    %3083 = vmatprep.subr.bf16.mxu0 %v2179
    %3084 = vmatpush1.bf16.msra.mxu0 %v2178
    %3085 = vmatprep.subr.bf16.mxu0 %v2184
    %3086 = vmatpush1.bf16.msra.mxu0 %v2183
    %3087 = vmatprep.subr.bf16.mxu0 %v2189
    %3088 = vmatpush1.bf16.msra.mxu0 %v2188
    %3089 = vmatprep.subr.bf16.mxu0 %v2194
    %3090 = vmatpush1.bf16.msra.mxu0 %v2193
    %3091 = vmatprep.subr.bf16.mxu0 %v2199
    %3092 = vmatpush1.bf16.msra.mxu0 %v2198
    %3093 = vmatprep.subr.bf16.mxu0 %v2204
    %3094 = vmatpush1.bf16.msra.mxu0 %v2203
    %3095 = vmatprep.subr.bf16.mxu0 %v2209
    %3096 = vmatpush1.bf16.msra.mxu0 %v2208
    %3097 = vmatprep.subr.bf16.mxu0 %v2214
    %3098 = vmatpush1.bf16.msra.mxu0 %v2213
    %3099 = vmatprep.subr.bf16.mxu0 %v2219
    %3100 = vmatpush1.bf16.msra.mxu0 %v2218
    %3101 = vmatprep.subr.bf16.mxu0 %v2224
    %3102 = vmatpush1.bf16.msra.mxu0 %v2223
    %3103 = vmatprep.mubr.bf16.mxu0 %v527
    %3104 = vmatmul.mubr.bf16.gmra.mrb[0].mxu0 %v526
    %v3105 = vpop.f32.mrb[0].mxu0
    %v3106 = vadd.f32 %v980, %v3105
    %v3107 = vpop.f32.mrb[0].mxu0
    %v3108 = vadd.f32 %v984, %v3107
    %v3109 = vpop.f32.mrb[0].mxu0
    %v3110 = vpop.f32.mrb[0].mxu0
    %3111 = vdwg.mxu0
    %3112 = vmatprep.subr.bf16.mxu0 %v2229
    %3113 = vmatpush1.bf16.msra.mxu0 %v2228
    %3114 = vmatprep.subr.bf16.mxu0 %v2234
    %3115 = vmatpush1.bf16.msra.mxu0 %v2233
    %3116 = vmatprep.subr.bf16.mxu0 %v2239
    %3117 = vmatpush1.bf16.msra.mxu0 %v2238
    %3118 = vmatprep.subr.bf16.mxu0 %v2244
    %3119 = vmatpush1.bf16.msra.mxu0 %v2243
    %3120 = vmatprep.subr.bf16.mxu0 %v2249
    %3121 = vmatpush1.bf16.msra.mxu0 %v2248
    %3122 = vmatprep.subr.bf16.mxu0 %v2254
    %3123 = vmatpush1.bf16.msra.mxu0 %v2253
    %3124 = vmatprep.subr.bf16.mxu0 %v2259
    %3125 = vmatpush1.bf16.msra.mxu0 %v2258
    %3126 = vmatprep.subr.bf16.mxu0 %v2264
    %3127 = vmatpush1.bf16.msra.mxu0 %v2263
    %3128 = vmatprep.subr.bf16.mxu0 %v2269
    %3129 = vmatpush1.bf16.msra.mxu0 %v2268
    %3130 = vmatprep.subr.bf16.mxu0 %v2274
    %3131 = vmatpush1.bf16.msra.mxu0 %v2273
    %3132 = vmatprep.subr.bf16.mxu0 %v2279
    %3133 = vmatpush1.bf16.msra.mxu0 %v2278
    %3134 = vmatprep.subr.bf16.mxu0 %v2284
    %3135 = vmatpush1.bf16.msra.mxu0 %v2283
    %3136 = vmatprep.subr.bf16.mxu0 %v2289
    %3137 = vmatpush1.bf16.msra.mxu0 %v2288
    %3138 = vmatprep.subr.bf16.mxu0 %v2294
    %3139 = vmatpush1.bf16.msra.mxu0 %v2293
    %3140 = vmatprep.subr.bf16.mxu0 %v2299
    %3141 = vmatpush1.bf16.msra.mxu0 %v2298
    %3142 = vmatprep.subr.bf16.mxu0 %v2304
    %3143 = vmatpush1.bf16.msra.mxu0 %v2303
    %3144 = vmatprep.mubr.bf16.mxu0 %v529
    %3145 = vmatmul.mubr.bf16.gmra.mrb[0].mxu0 %v528
    %v3146 = vpop.f32.mrb[0].mxu0
    %v3147 = vadd.f32 %v3106, %v3146
    %v3148 = vpop.f32.mrb[0].mxu0
    %v3149 = vadd.f32 %v3108, %v3148
    %v3150 = vpop.f32.mrb[0].mxu0
    %v3151 = vpop.f32.mrb[0].mxu0
    %3152 = vdwg.mxu0
    %3153 = vmatprep.subr.bf16.mxu0 %v2309
    %3154 = vmatpush1.bf16.msra.mxu0 %v2308
    %3155 = vmatprep.subr.bf16.mxu0 %v2314
    %3156 = vmatpush1.bf16.msra.mxu0 %v2313
    %3157 = vmatprep.subr.bf16.mxu0 %v2319
    %3158 = vmatpush1.bf16.msra.mxu0 %v2318
    %3159 = vmatprep.subr.bf16.mxu0 %v2324
    %3160 = vmatpush1.bf16.msra.mxu0 %v2323
    %3161 = vmatprep.subr.bf16.mxu0 %v2329
    %3162 = vmatpush1.bf16.msra.mxu0 %v2328
    %3163 = vmatprep.subr.bf16.mxu0 %v2334
    %3164 = vmatpush1.bf16.msra.mxu0 %v2333
    %3165 = vmatprep.subr.bf16.mxu0 %v2339
    %3166 = vmatpush1.bf16.msra.mxu0 %v2338
    %3167 = vmatprep.subr.bf16.mxu0 %v2344
    %3168 = vmatpush1.bf16.msra.mxu0 %v2343
    %3169 = vmatprep.subr.bf16.mxu0 %v2349
    %3170 = vmatpush1.bf16.msra.mxu0 %v2348
    %3171 = vmatprep.subr.bf16.mxu0 %v2354
    %3172 = vmatpush1.bf16.msra.mxu0 %v2353
    %3173 = vmatprep.subr.bf16.mxu0 %v2359
    %3174 = vmatpush1.bf16.msra.mxu0 %v2358
    %3175 = vmatprep.subr.bf16.mxu0 %v2364
    %3176 = vmatpush1.bf16.msra.mxu0 %v2363
    %3177 = vmatprep.subr.bf16.mxu0 %v2369
    %3178 = vmatpush1.bf16.msra.mxu0 %v2368
    %3179 = vmatprep.subr.bf16.mxu0 %v2374
    %3180 = vmatpush1.bf16.msra.mxu0 %v2373
    %3181 = vmatprep.subr.bf16.mxu0 %v2379
    %3182 = vmatpush1.bf16.msra.mxu0 %v2378
    %3183 = vmatprep.subr.bf16.mxu0 %v2384
    %3184 = vmatpush1.bf16.msra.mxu0 %v2383
    %3185 = vmatprep.mubr.bf16.mxu0 %v531
    %3186 = vmatmul.mubr.bf16.gmra.mrb[0].mxu0 %v530
    %v3187 = vpop.f32.mrb[0].mxu0
    %v3188 = vadd.f32 %v3147, %v3187
    %v3189 = vpop.f32.mrb[0].mxu0
    %v3190 = vadd.f32 %v3149, %v3189
    %v3191 = vpop.f32.mrb[0].mxu0
    %v3192 = vpop.f32.mrb[0].mxu0
    %3193 = vdwg.mxu0
    %3194 = vmatprep.subr.bf16.mxu0 %v2389
    %3195 = vmatpush1.bf16.msra.mxu0 %v2388
    %3196 = vmatprep.subr.bf16.mxu0 %v2394
    %3197 = vmatpush1.bf16.msra.mxu0 %v2393
    %3198 = vmatprep.subr.bf16.mxu0 %v2399
    %3199 = vmatpush1.bf16.msra.mxu0 %v2398
    %3200 = vmatprep.subr.bf16.mxu0 %v2404
    %3201 = vmatpush1.bf16.msra.mxu0 %v2403
    %3202 = vmatprep.subr.bf16.mxu0 %v2409
    %3203 = vmatpush1.bf16.msra.mxu0 %v2408
    %3204 = vmatprep.subr.bf16.mxu0 %v2414
    %3205 = vmatpush1.bf16.msra.mxu0 %v2413
    %3206 = vmatprep.subr.bf16.mxu0 %v2419
    %3207 = vmatpush1.bf16.msra.mxu0 %v2418
    %3208 = vmatprep.subr.bf16.mxu0 %v2424
    %3209 = vmatpush1.bf16.msra.mxu0 %v2423
    %3210 = vmatprep.subr.bf16.mxu0 %v2429
    %3211 = vmatpush1.bf16.msra.mxu0 %v2428
    %3212 = vmatprep.subr.bf16.mxu0 %v2434
    %3213 = vmatpush1.bf16.msra.mxu0 %v2433
    %3214 = vmatprep.subr.bf16.mxu0 %v2439
    %3215 = vmatpush1.bf16.msra.mxu0 %v2438
    %3216 = vmatprep.subr.bf16.mxu0 %v2444
    %3217 = vmatpush1.bf16.msra.mxu0 %v2443
    %3218 = vmatprep.subr.bf16.mxu0 %v2449
    %3219 = vmatpush1.bf16.msra.mxu0 %v2448
    %3220 = vmatprep.subr.bf16.mxu0 %v2454
    %3221 = vmatpush1.bf16.msra.mxu0 %v2453
    %3222 = vmatprep.subr.bf16.mxu0 %v2459
    %3223 = vmatpush1.bf16.msra.mxu0 %v2458
    %3224 = vmatprep.subr.bf16.mxu0 %v2464
    %3225 = vmatpush1.bf16.msra.mxu0 %v2463
    %3226 = vmatprep.mubr.bf16.mxu0 %v533
    %3227 = vmatmul.mubr.bf16.gmra.mrb[0].mxu0 %v532
    %v3228 = vpop.f32.mrb[0].mxu0
    %v3229 = vadd.f32 %v3188, %v3228
    %v3230 = vpop.f32.mrb[0].mxu0
    %v3231 = vadd.f32 %v3190, %v3230
    %v3232 = vpop.f32.mrb[0].mxu0
    %v3233 = vpop.f32.mrb[0].mxu0
    %3234 = vdwg.mxu0
    %3235 = vmatprep.subr.bf16.mxu0 %v2469
    %3236 = vmatpush1.bf16.msra.mxu0 %v2468
    %3237 = vmatprep.subr.bf16.mxu0 %v2474
    %3238 = vmatpush1.bf16.msra.mxu0 %v2473
    %3239 = vmatprep.subr.bf16.mxu0 %v2479
    %3240 = vmatpush1.bf16.msra.mxu0 %v2478
    %3241 = vmatprep.subr.bf16.mxu0 %v2484
    %3242 = vmatpush1.bf16.msra.mxu0 %v2483
    %3243 = vmatprep.subr.bf16.mxu0 %v2489
    %3244 = vmatpush1.bf16.msra.mxu0 %v2488
    %3245 = vmatprep.subr.bf16.mxu0 %v2494
    %3246 = vmatpush1.bf16.msra.mxu0 %v2493
    %3247 = vmatprep.subr.bf16.mxu0 %v2499
    %3248 = vmatpush1.bf16.msra.mxu0 %v2498
    %3249 = vmatprep.subr.bf16.mxu0 %v2504
    %3250 = vmatpush1.bf16.msra.mxu0 %v2503
    %3251 = vmatprep.subr.bf16.mxu0 0
    %3252 = vmatpush1.bf16.msra.mxu0 0
    %3253 = vmatprep.subr.bf16.mxu0 0
    %3254 = vmatpush1.bf16.msra.mxu0 0
    %3255 = vmatprep.subr.bf16.mxu0 0
    %3256 = vmatpush1.bf16.msra.mxu0 0
    %3257 = vmatprep.subr.bf16.mxu0 0
    %3258 = vmatpush1.bf16.msra.mxu0 0
    %3259 = vmatprep.subr.bf16.mxu0 0
    %3260 = vmatpush1.bf16.msra.mxu0 0
    %3261 = vmatprep.subr.bf16.mxu0 0
    %3262 = vmatpush1.bf16.msra.mxu0 0
    %3263 = vmatprep.subr.bf16.mxu0 0
    %3264 = vmatpush1.bf16.msra.mxu0 0
    %3265 = vmatprep.subr.bf16.mxu0 0
    %3266 = vmatpush1.bf16.msra.mxu0 0
    %3267 = vmatprep.mubr.bf16.mxu0 0
    %3268 = vmatmul.mubr.bf16.gmra.mrb[0].mxu0 %v534
    %v3269 = vpop.f32.mrb[0].mxu0
    %v3270 = vadd.f32 %v3229, %v3269
    %v3271 = vpop.f32.mrb[0].mxu0
    %v3272 = vadd.f32 %v3231, %v3271
    %v3273 = vpop.f32.mrb[0].mxu0
    %v3274 = vpop.f32.mrb[0].mxu0
    %3275 = vdwg.mxu0
    %3276 = vmatprep.subr.bf16.mxu0 0
    %3277 = vmatpush1.bf16.msra.mxu0 %v2150
    %3278 = vmatprep.subr.bf16.mxu0 0
    %3279 = vmatpush1.bf16.msra.mxu0 %v2155
    %3280 = vmatprep.subr.bf16.mxu0 0
    %3281 = vmatpush1.bf16.msra.mxu0 %v2160
    %3282 = vmatprep.subr.bf16.mxu0 0
    %3283 = vmatpush1.bf16.msra.mxu0 %v2165
    %3284 = vmatprep.subr.bf16.mxu0 0
    %3285 = vmatpush1.bf16.msra.mxu0 %v2170
    %3286 = vmatprep.subr.bf16.mxu0 0
    %3287 = vmatpush1.bf16.msra.mxu0 %v2175
    %3288 = vmatprep.subr.bf16.mxu0 0
    %3289 = vmatpush1.bf16.msra.mxu0 %v2180
    %3290 = vmatprep.subr.bf16.mxu0 0
    %3291 = vmatpush1.bf16.msra.mxu0 %v2185
    %3292 = vmatprep.subr.bf16.mxu0 0
    %3293 = vmatpush1.bf16.msra.mxu0 %v2190
    %3294 = vmatprep.subr.bf16.mxu0 0
    %3295 = vmatpush1.bf16.msra.mxu0 %v2195
    %3296 = vmatprep.subr.bf16.mxu0 0
    %3297 = vmatpush1.bf16.msra.mxu0 %v2200
    %3298 = vmatprep.subr.bf16.mxu0 0
    %3299 = vmatpush1.bf16.msra.mxu0 %v2205
    %3300 = vmatprep.subr.bf16.mxu0 0
    %3301 = vmatpush1.bf16.msra.mxu0 %v2210
    %3302 = vmatprep.subr.bf16.mxu0 0
    %3303 = vmatpush1.bf16.msra.mxu0 %v2215
    %3304 = vmatprep.subr.bf16.mxu0 0
    %3305 = vmatpush1.bf16.msra.mxu0 %v2220
    %3306 = vmatprep.subr.bf16.mxu0 0
    %3307 = vmatpush1.bf16.msra.mxu0 %v2225
    %3308 = vmatprep.mubr.bf16.mxu0 %v527
    %3309 = vmatmul.mubr.bf16.gmra.mrb[0].mxu0 %v526
    %v3310 = vpop.f32.mrb[0].mxu0
    %v3311 = vadd.f32 %v988, %v3310
    %v3312 = vpop.f32.mrb[0].mxu0
    %v3313 = vpop.f32.mrb[0].mxu0
    %v3314 = vpop.f32.mrb[0].mxu0
    %3315 = vdwg.mxu0
    %3316 = vmatprep.subr.bf16.mxu0 0
    %3317 = vmatpush1.bf16.msra.mxu0 %v2230
    %3318 = vmatprep.subr.bf16.mxu0 0
    %3319 = vmatpush1.bf16.msra.mxu0 %v2235
    %3320 = vmatprep.subr.bf16.mxu0 0
    %3321 = vmatpush1.bf16.msra.mxu0 %v2240
    %3322 = vmatprep.subr.bf16.mxu0 0
    %3323 = vmatpush1.bf16.msra.mxu0 %v2245
    %3324 = vmatprep.subr.bf16.mxu0 0
    %3325 = vmatpush1.bf16.msra.mxu0 %v2250
    %3326 = vmatprep.subr.bf16.mxu0 0
    %3327 = vmatpush1.bf16.msra.mxu0 %v2255
    %3328 = vmatprep.subr.bf16.mxu0 0
    %3329 = vmatpush1.bf16.msra.mxu0 %v2260
    %3330 = vmatprep.subr.bf16.mxu0 0
    %3331 = vmatpush1.bf16.msra.mxu0 %v2265
    %3332 = vmatprep.subr.bf16.mxu0 0
    %3333 = vmatpush1.bf16.msra.mxu0 %v2270
    %3334 = vmatprep.subr.bf16.mxu0 0
    %3335 = vmatpush1.bf16.msra.mxu0 %v2275
    %3336 = vmatprep.subr.bf16.mxu0 0
    %3337 = vmatpush1.bf16.msra.mxu0 %v2280
    %3338 = vmatprep.subr.bf16.mxu0 0
    %3339 = vmatpush1.bf16.msra.mxu0 %v2285
    %3340 = vmatprep.subr.bf16.mxu0 0
    %3341 = vmatpush1.bf16.msra.mxu0 %v2290
    %3342 = vmatprep.subr.bf16.mxu0 0
    %3343 = vmatpush1.bf16.msra.mxu0 %v2295
    %3344 = vmatprep.subr.bf16.mxu0 0
    %3345 = vmatpush1.bf16.msra.mxu0 %v2300
    %3346 = vmatprep.subr.bf16.mxu0 0
    %3347 = vmatpush1.bf16.msra.mxu0 %v2305
    %3348 = vmatprep.mubr.bf16.mxu0 %v529
    %3349 = vmatmul.mubr.bf16.gmra.mrb[0].mxu0 %v528
    %v3350 = vpop.f32.mrb[0].mxu0
    %v3351 = vadd.f32 %v3311, %v3350
    %v3352 = vpop.f32.mrb[0].mxu0
    %v3353 = vpop.f32.mrb[0].mxu0
    %v3354 = vpop.f32.mrb[0].mxu0
    %3355 = vdwg.mxu0
    %3356 = vmatprep.subr.bf16.mxu0 0
    %3357 = vmatpush1.bf16.msra.mxu0 %v2310
    %3358 = vmatprep.subr.bf16.mxu0 0
    %3359 = vmatpush1.bf16.msra.mxu0 %v2315
    %3360 = vmatprep.subr.bf16.mxu0 0
    %3361 = vmatpush1.bf16.msra.mxu0 %v2320
    %3362 = vmatprep.subr.bf16.mxu0 0
    %3363 = vmatpush1.bf16.msra.mxu0 %v2325
    %3364 = vmatprep.subr.bf16.mxu0 0
    %3365 = vmatpush1.bf16.msra.mxu0 %v2330
    %3366 = vmatprep.subr.bf16.mxu0 0
    %3367 = vmatpush1.bf16.msra.mxu0 %v2335
    %3368 = vmatprep.subr.bf16.mxu0 0
    %3369 = vmatpush1.bf16.msra.mxu0 %v2340
    %3370 = vmatprep.subr.bf16.mxu0 0
    %3371 = vmatpush1.bf16.msra.mxu0 %v2345
    %3372 = vmatprep.subr.bf16.mxu0 0
    %3373 = vmatpush1.bf16.msra.mxu0 %v2350
    %3374 = vmatprep.subr.bf16.mxu0 0
    %3375 = vmatpush1.bf16.msra.mxu0 %v2355
    %3376 = vmatprep.subr.bf16.mxu0 0
    %3377 = vmatpush1.bf16.msra.mxu0 %v2360
    %3378 = vmatprep.subr.bf16.mxu0 0
    %3379 = vmatpush1.bf16.msra.mxu0 %v2365
    %3380 = vmatprep.subr.bf16.mxu0 0
    %3381 = vmatpush1.bf16.msra.mxu0 %v2370
    %3382 = vmatprep.subr.bf16.mxu0 0
    %3383 = vmatpush1.bf16.msra.mxu0 %v2375
    %3384 = vmatprep.subr.bf16.mxu0 0
    %3385 = vmatpush1.bf16.msra.mxu0 %v2380
    %3386 = vmatprep.subr.bf16.mxu0 0
    %3387 = vmatpush1.bf16.msra.mxu0 %v2385
    %3388 = vmatprep.mubr.bf16.mxu0 %v531
    %3389 = vmatmul.mubr.bf16.gmra.mrb[0].mxu0 %v530
    %v3390 = vpop.f32.mrb[0].mxu0
    %v3391 = vadd.f32 %v3351, %v3390
    %v3392 = vpop.f32.mrb[0].mxu0
    %v3393 = vpop.f32.mrb[0].mxu0
    %v3394 = vpop.f32.mrb[0].mxu0
    %3395 = vdwg.mxu0
    %3396 = vmatprep.subr.bf16.mxu0 0
    %3397 = vmatpush1.bf16.msra.mxu0 %v2390
    %3398 = vmatprep.subr.bf16.mxu0 0
    %3399 = vmatpush1.bf16.msra.mxu0 %v2395
    %3400 = vmatprep.subr.bf16.mxu0 0
    %3401 = vmatpush1.bf16.msra.mxu0 %v2400
    %3402 = vmatprep.subr.bf16.mxu0 0
    %3403 = vmatpush1.bf16.msra.mxu0 %v2405
    %3404 = vmatprep.subr.bf16.mxu0 0
    %3405 = vmatpush1.bf16.msra.mxu0 %v2410
    %3406 = vmatprep.subr.bf16.mxu0 0
    %3407 = vmatpush1.bf16.msra.mxu0 %v2415
    %3408 = vmatprep.subr.bf16.mxu0 0
    %3409 = vmatpush1.bf16.msra.mxu0 %v2420
    %3410 = vmatprep.subr.bf16.mxu0 0
    %3411 = vmatpush1.bf16.msra.mxu0 %v2425
    %3412 = vmatprep.subr.bf16.mxu0 0
    %3413 = vmatpush1.bf16.msra.mxu0 %v2430
    %3414 = vmatprep.subr.bf16.mxu0 0
    %3415 = vmatpush1.bf16.msra.mxu0 %v2435
    %3416 = vmatprep.subr.bf16.mxu0 0
    %3417 = vmatpush1.bf16.msra.mxu0 %v2440
    %3418 = vmatprep.subr.bf16.mxu0 0
    %3419 = vmatpush1.bf16.msra.mxu0 %v2445
    %3420 = vmatprep.subr.bf16.mxu0 0
    %3421 = vmatpush1.bf16.msra.mxu0 %v2450
    %3422 = vmatprep.subr.bf16.mxu0 0
    %3423 = vmatpush1.bf16.msra.mxu0 %v2455
    %3424 = vmatprep.subr.bf16.mxu0 0
    %3425 = vmatpush1.bf16.msra.mxu0 %v2460
    %3426 = vmatprep.subr.bf16.mxu0 0
    %3427 = vmatpush1.bf16.msra.mxu0 %v2465
    %3428 = vmatprep.mubr.bf16.mxu0 %v533
    %3429 = vmatmul.mubr.bf16.gmra.mrb[0].mxu0 %v532
    %v3430 = vpop.f32.mrb[0].mxu0
    %v3431 = vadd.f32 %v3391, %v3430
    %v3432 = vpop.f32.mrb[0].mxu0
    %v3433 = vpop.f32.mrb[0].mxu0
    %v3434 = vpop.f32.mrb[0].mxu0
    %3435 = vdwg.mxu0
    %3436 = vmatprep.subr.bf16.mxu0 0
    %3437 = vmatpush1.bf16.msra.mxu0 %v2470
    %3438 = vmatprep.subr.bf16.mxu0 0
    %3439 = vmatpush1.bf16.msra.mxu0 %v2475
    %3440 = vmatprep.subr.bf16.mxu0 0
    %3441 = vmatpush1.bf16.msra.mxu0 %v2480
    %3442 = vmatprep.subr.bf16.mxu0 0
    %3443 = vmatpush1.bf16.msra.mxu0 %v2485
    %3444 = vmatprep.subr.bf16.mxu0 0
    %3445 = vmatpush1.bf16.msra.mxu0 %v2490
    %3446 = vmatprep.subr.bf16.mxu0 0
    %3447 = vmatpush1.bf16.msra.mxu0 %v2495
    %3448 = vmatprep.subr.bf16.mxu0 0
    %3449 = vmatpush1.bf16.msra.mxu0 %v2500
    %3450 = vmatprep.subr.bf16.mxu0 0
    %3451 = vmatpush1.bf16.msra.mxu0 %v2505
    %3452 = vmatprep.subr.bf16.mxu0 0
    %3453 = vmatpush1.bf16.msra.mxu0 0
    %3454 = vmatprep.subr.bf16.mxu0 0
    %3455 = vmatpush1.bf16.msra.mxu0 0
    %3456 = vmatprep.subr.bf16.mxu0 0
    %3457 = vmatpush1.bf16.msra.mxu0 0
    %3458 = vmatprep.subr.bf16.mxu0 0
    %3459 = vmatpush1.bf16.msra.mxu0 0
    %3460 = vmatprep.subr.bf16.mxu0 0
    %3461 = vmatpush1.bf16.msra.mxu0 0
    %3462 = vmatprep.subr.bf16.mxu0 0
    %3463 = vmatpush1.bf16.msra.mxu0 0
    %3464 = vmatprep.subr.bf16.mxu0 0
    %3465 = vmatpush1.bf16.msra.mxu0 0
    %3466 = vmatprep.subr.bf16.mxu0 0
    %3467 = vmatpush1.bf16.msra.mxu0 0
    %3468 = vmatprep.mubr.bf16.mxu0 0
    %3469 = vmatmul.mubr.bf16.gmra.mrb[0].mxu0 %v534
    %v3470 = vpop.f32.mrb[0].mxu0
    %v3471 = vadd.f32 %v3431, %v3470
    %v3472 = vpop.f32.mrb[0].mxu0
    %v3473 = vpop.f32.mrb[0].mxu0
    %v3474 = vpop.f32.mrb[0].mxu0
    %3475 = vdwg.mxu0
    %v3476 = vmax.f32 %v3065, 0.0
    %v3477 = vmax.f32 %v3067, 0.0
    %v3478 = vmax.f32 %v3270, 0.0
    %v3479 = vmax.f32 %v3272, 0.0
    %v3480 = vmax.f32 %v3471, 0.0
    %v3481 = vpack.c.bf16 %v3476, %v3476
    %v3482 = vpack.c.bf16 %v3477, %v3477
    %v3483 = vpack.c.bf16 %v3478, %v3478
    %v3484 = vpack.c.bf16 %v3479, %v3479
    %v3485 = vpack.c.bf16 %v3480, %v3480
    %v3486 = vld [vmem:[#allocation11] sm:$0xf]
    %v3487 = vld [vmem:[#allocation11 + $0x4] sm:$0xf]
    %v3488 = vld [vmem:[#allocation11 + $0x8] sm:$0xf]
    %v3489 = vld [vmem:[#allocation11 + $0xc] sm:$0xf]
    %v3490 = vld [vmem:[#allocation11 + $0x10] sm:$0xf]
    %v3491 = vld [vmem:[#allocation11 + $0x14] sm:$0xf]
    %v3492 = vld [vmem:[#allocation11 + $0x18] sm:$0xf]
    %v3493 = vld [vmem:[#allocation11 + $0x1c] sm:$0xf]
    %v3494 = vld [vmem:[#allocation11 + $0x20] sm:$0xf]
    %v3495 = vld [vmem:[#allocation11 + $0x24] sm:$0xf]
    %v3496 = vld [vmem:[#allocation11 + $0x28] sm:$0xf]
    %v3497 = vld [vmem:[#allocation11 + $0x2c] sm:$0xf]
    %v3498 = vld [vmem:[#allocation11 + $0x30] sm:$0xf]
    %v3499 = vld [vmem:[#allocation11 + $0x34] sm:$0xf]
    %v3500 = vld [vmem:[#allocation11 + $0x38] sm:$0xf]
    %v3501 = vld [vmem:[#allocation11 + $0x3c] sm:$0xf]
    %v3502 = vld [vmem:[#allocation11 + $0x40] sm:$0xf]
    %v3503 = vld [vmem:[#allocation11 + $0x44] sm:$0xf]
    %v3504 = vld [vmem:[#allocation11 + $0x48] sm:$0xf]
    %v3505 = vld [vmem:[#allocation11 + $0x4c] sm:$0xf]
    %v3506 = vld [vmem:[#allocation11 + $0x50] sm:$0xf]
    %v3507 = vld [vmem:[#allocation11 + $0x54] sm:$0xf]
    %v3508 = vld [vmem:[#allocation11 + $0x58] sm:$0xf]
    %v3509 = vld [vmem:[#allocation11 + $0x5c] sm:$0xf]
    %v3510 = vld [vmem:[#allocation11 + $0x60] sm:$0xf]
    %v3511 = vld [vmem:[#allocation11 + $0x64] sm:$0xf]
    %v3512 = vld [vmem:[#allocation11 + $0x68] sm:$0xf]
    %v3513 = vld [vmem:[#allocation11 + $0x6c] sm:$0xf]
    %v3514 = vld [vmem:[#allocation11 + $0x70] sm:$0xf]
    %v3515 = vld [vmem:[#allocation11 + $0x74] sm:$0xf]
    %v3516 = vld [vmem:[#allocation11 + $0x78] sm:$0xf]
    %v3517 = vld [vmem:[#allocation11 + $0x7c] sm:$0xf]
    %v3518 = vld [vmem:[#allocation11 + $0x80] sm:$0xf]
    %v3519 = vld [vmem:[#allocation11 + $0x84] sm:$0xf]
    %v3520 = vld [vmem:[#allocation11 + $0x88] sm:$0xf]
    %v3521 = vld [vmem:[#allocation11 + $0x8c] sm:$0xf]
    %v3522 = vld [vmem:[#allocation11 + $0x90] sm:$0xf]
    %v3523 = vld [vmem:[#allocation11 + $0x94] sm:$0xf]
    %v3524 = vld [vmem:[#allocation11 + $0x98] sm:$0xf]
    %v3525 = vld [vmem:[#allocation11 + $0x9c] sm:$0xf]
    %v3526 = vld [vmem:[#allocation11 + $0xa0] sm:$0xf]
    %v3527 = vld [vmem:[#allocation11 + $0xa4] sm:$0xf]
    %v3528 = vld [vmem:[#allocation11 + $0xa8] sm:$0xf]
    %v3529 = vld [vmem:[#allocation11 + $0xac] sm:$0xf]
    %v3530 = vld [vmem:[#allocation11 + $0xb0] sm:$0xf]
    %v3531 = vld [vmem:[#allocation11 + $0xb4] sm:$0xf]
    %v3532 = vld [vmem:[#allocation11 + $0xb8] sm:$0xf]
    %v3533 = vld [vmem:[#allocation11 + $0xbc] sm:$0xf]
    %v3534 = vld [vmem:[#allocation11 + $0xc0] sm:$0xf]
    %v3535 = vld [vmem:[#allocation11 + $0xc4] sm:$0xf]
    %v3536 = vld [vmem:[#allocation11 + $0xc8] sm:$0xf]
    %v3537 = vld [vmem:[#allocation11 + $0xcc] sm:$0xf]
    %v3538 = vld [vmem:[#allocation11 + $0xd0] sm:$0xf]
    %v3539 = vld [vmem:[#allocation11 + $0xd4] sm:$0xf]
    %v3540 = vld [vmem:[#allocation11 + $0xd8] sm:$0xf]
    %v3541 = vld [vmem:[#allocation11 + $0xdc] sm:$0xf]
    %v3542 = vld [vmem:[#allocation11 + $0xe0] sm:$0xf]
    %v3543 = vld [vmem:[#allocation11 + $0xe4] sm:$0xf]
    %v3544 = vld [vmem:[#allocation11 + $0xe8] sm:$0xf]
    %v3545 = vld [vmem:[#allocation11 + $0xec] sm:$0xf]
    %v3546 = vld [vmem:[#allocation11 + $0xf0] sm:$0xf]
    %v3547 = vld [vmem:[#allocation11 + $0xf4] sm:$0xf]
    %v3548 = vld [vmem:[#allocation11 + $0xf8] sm:$0xf]
    %v3549 = vld [vmem:[#allocation11 + $0xfc] sm:$0xf]
    %v3550 = vld [vmem:[#allocation11 + $0x100] sm:$0xf]
    %v3551 = vld [vmem:[#allocation11 + $0x104] sm:$0xf]
    %v3552 = vld [vmem:[#allocation11 + $0x108] sm:$0xf]
    %v3553 = vld [vmem:[#allocation11 + $0x10c] sm:$0xf]
    %v3554 = vld [vmem:[#allocation11 + $0x110] sm:$0xf]
    %v3555 = vld [vmem:[#allocation11 + $0x114] sm:$0xf]
    %v3556 = vld [vmem:[#allocation11 + $0x118] sm:$0xf]
    %v3557 = vld [vmem:[#allocation11 + $0x11c] sm:$0xf]
    %v3558 = vld [vmem:[#allocation11 + $0x120] sm:$0xf]
    %v3559 = vld [vmem:[#allocation11 + $0x124] sm:$0xf]
    %v3560 = vld [vmem:[#allocation11 + $0x128] sm:$0xf]
    %v3561 = vld [vmem:[#allocation11 + $0x12c] sm:$0xf]
    %v3562 = vld [vmem:[#allocation11 + $0x130] sm:$0xf]
    %v3563 = vld [vmem:[#allocation11 + $0x134] sm:$0xf]
    %v3564 = vld [vmem:[#allocation11 + $0x138] sm:$0xf]
    %v3565 = vld [vmem:[#allocation11 + $0x13c] sm:$0xf]
    %v3566 = vld [vmem:[#allocation13] sm:$0x1]
    %v3568 = vlaneseq
    %v3569 = vshrl.u32 %v3568, 7
    %v3570 = vsub.s32 0, %v3569
    %v3571 = vrot.slane %v3566, %v3570
    %v3653 = vunpack.c.l.b16 %v3486
    %v3654 = vunpack.c.l.b16 %v3487
    %v3655 = vunpack.c.l.b16 %v3488
    %v3656 = vunpack.c.l.b16 %v3489
    %v3657 = vunpack.c.l.b16 %v3490
    %v3658 = vunpack.c.l.b16 %v3491
    %v3659 = vunpack.c.l.b16 %v3492
    %v3660 = vunpack.c.l.b16 %v3493
    %v3661 = vunpack.c.l.b16 %v3494
    %v3662 = vunpack.c.l.b16 %v3495
    %v3663 = vunpack.c.l.b16 %v3496
    %v3664 = vunpack.c.l.b16 %v3497
    %v3665 = vunpack.c.l.b16 %v3498
    %v3666 = vunpack.c.l.b16 %v3499
    %v3667 = vunpack.c.l.b16 %v3500
    %v3668 = vunpack.c.l.b16 %v3501
    %v3669 = vunpack.c.l.b16 %v3502
    %v3670 = vunpack.c.l.b16 %v3503
    %v3671 = vunpack.c.l.b16 %v3504
    %v3672 = vunpack.c.l.b16 %v3505
    %v3673 = vunpack.c.l.b16 %v3506
    %v3674 = vunpack.c.l.b16 %v3507
    %v3675 = vunpack.c.l.b16 %v3508
    %v3676 = vunpack.c.l.b16 %v3509
    %v3677 = vunpack.c.l.b16 %v3510
    %v3678 = vunpack.c.l.b16 %v3511
    %v3679 = vunpack.c.l.b16 %v3512
    %v3680 = vunpack.c.l.b16 %v3513
    %v3681 = vunpack.c.l.b16 %v3514
    %v3682 = vunpack.c.l.b16 %v3515
    %v3683 = vunpack.c.l.b16 %v3516
    %v3684 = vunpack.c.l.b16 %v3517
    %v3685 = vunpack.c.l.b16 %v3518
    %v3686 = vunpack.c.l.b16 %v3519
    %v3687 = vunpack.c.l.b16 %v3520
    %v3688 = vunpack.c.l.b16 %v3521
    %v3689 = vunpack.c.l.b16 %v3522
    %v3690 = vunpack.c.l.b16 %v3523
    %v3691 = vunpack.c.l.b16 %v3524
    %v3692 = vunpack.c.l.b16 %v3525
    %v3693 = vunpack.c.l.b16 %v3526
    %v3694 = vunpack.c.l.b16 %v3527
    %v3695 = vunpack.c.l.b16 %v3528
    %v3696 = vunpack.c.l.b16 %v3529
    %v3697 = vunpack.c.l.b16 %v3530
    %v3698 = vunpack.c.l.b16 %v3531
    %v3699 = vunpack.c.l.b16 %v3532
    %v3700 = vunpack.c.l.b16 %v3533
    %v3701 = vunpack.c.l.b16 %v3534
    %v3702 = vunpack.c.l.b16 %v3535
    %v3703 = vunpack.c.l.b16 %v3536
    %v3704 = vunpack.c.l.b16 %v3537
    %v3705 = vunpack.c.l.b16 %v3538
    %v3706 = vunpack.c.l.b16 %v3539
    %v3707 = vunpack.c.l.b16 %v3540
    %v3708 = vunpack.c.l.b16 %v3541
    %v3709 = vunpack.c.l.b16 %v3542
    %v3710 = vunpack.c.l.b16 %v3543
    %v3711 = vunpack.c.l.b16 %v3544
    %v3712 = vunpack.c.l.b16 %v3545
    %v3713 = vunpack.c.l.b16 %v3546
    %v3714 = vunpack.c.l.b16 %v3547
    %v3715 = vunpack.c.l.b16 %v3548
    %v3716 = vunpack.c.l.b16 %v3549
    %v3717 = vunpack.c.l.b16 %v3550
    %v3718 = vunpack.c.l.b16 %v3551
    %v3719 = vunpack.c.l.b16 %v3552
    %v3720 = vunpack.c.l.b16 %v3553
    %v3721 = vunpack.c.l.b16 %v3554
    %v3722 = vunpack.c.l.b16 %v3555
    %v3723 = vunpack.c.l.b16 %v3556
    %v3724 = vunpack.c.l.b16 %v3557
    %v3725 = vunpack.c.l.b16 %v3558
    %v3726 = vunpack.c.l.b16 %v3559
    %v3727 = vunpack.c.l.b16 %v3560
    %v3728 = vunpack.c.l.b16 %v3561
    %v3729 = vunpack.c.l.b16 %v3562
    %v3730 = vunpack.c.l.b16 %v3563
    %v3731 = vunpack.c.l.b16 %v3564
    %v3732 = vunpack.c.l.b16 %v3565
    %v3733 = vpack.c.b16 %v3654, %v3653
    %v3734 = vpack.c.b16 %v3656, %v3655
    %v3735 = vpack.c.b16 %v3658, %v3657
    %v3736 = vpack.c.b16 %v3660, %v3659
    %v3737 = vpack.c.b16 %v3662, %v3661
    %v3738 = vpack.c.b16 %v3664, %v3663
    %v3739 = vpack.c.b16 %v3666, %v3665
    %v3740 = vpack.c.b16 %v3668, %v3667
    %v3741 = vpack.c.b16 %v3670, %v3669
    %v3742 = vpack.c.b16 %v3672, %v3671
    %v3743 = vpack.c.b16 %v3674, %v3673
    %v3744 = vpack.c.b16 %v3676, %v3675
    %v3745 = vpack.c.b16 %v3678, %v3677
    %v3746 = vpack.c.b16 %v3680, %v3679
    %v3747 = vpack.c.b16 %v3682, %v3681
    %v3748 = vpack.c.b16 %v3684, %v3683
    %v3749 = vpack.c.b16 %v3686, %v3685
    %v3750 = vpack.c.b16 %v3688, %v3687
    %v3751 = vpack.c.b16 %v3690, %v3689
    %v3752 = vpack.c.b16 %v3692, %v3691
    %v3753 = vpack.c.b16 %v3694, %v3693
    %v3754 = vpack.c.b16 %v3696, %v3695
    %v3755 = vpack.c.b16 %v3698, %v3697
    %v3756 = vpack.c.b16 %v3700, %v3699
    %v3757 = vpack.c.b16 %v3702, %v3701
    %v3758 = vpack.c.b16 %v3704, %v3703
    %v3759 = vpack.c.b16 %v3706, %v3705
    %v3760 = vpack.c.b16 %v3708, %v3707
    %v3761 = vpack.c.b16 %v3710, %v3709
    %v3762 = vpack.c.b16 %v3712, %v3711
    %v3763 = vpack.c.b16 %v3714, %v3713
    %v3764 = vpack.c.b16 %v3716, %v3715
    %v3765 = vpack.c.b16 %v3718, %v3717
    %v3766 = vpack.c.b16 %v3720, %v3719
    %v3767 = vpack.c.b16 %v3722, %v3721
    %v3768 = vpack.c.b16 %v3724, %v3723
    %v3769 = vpack.c.b16 %v3726, %v3725
    %v3770 = vpack.c.b16 %v3728, %v3727
    %v3771 = vpack.c.b16 %v3730, %v3729
    %v3772 = vpack.c.b16 %v3732, %v3731
    %3813 = vmatprep.subr.bf16.mxu0 0
    %3814 = vmatpush1.bf16.msra.mxu0 %v3733
    %3815 = vmatprep.subr.bf16.mxu0 0
    %3816 = vmatpush1.bf16.msra.mxu0 %v3734
    %3817 = vmatprep.subr.bf16.mxu0 0
    %3818 = vmatpush1.bf16.msra.mxu0 %v3735
    %3819 = vmatprep.subr.bf16.mxu0 0
    %3820 = vmatpush1.bf16.msra.mxu0 %v3736
    %3821 = vmatprep.subr.bf16.mxu0 0
    %3822 = vmatpush1.bf16.msra.mxu0 %v3737
    %3823 = vmatprep.subr.bf16.mxu0 0
    %3824 = vmatpush1.bf16.msra.mxu0 %v3738
    %3825 = vmatprep.subr.bf16.mxu0 0
    %3826 = vmatpush1.bf16.msra.mxu0 %v3739
    %3827 = vmatprep.subr.bf16.mxu0 0
    %3828 = vmatpush1.bf16.msra.mxu0 %v3740
    %3829 = vmatprep.subr.bf16.mxu0 0
    %3830 = vmatpush1.bf16.msra.mxu0 %v3741
    %3831 = vmatprep.subr.bf16.mxu0 0
    %3832 = vmatpush1.bf16.msra.mxu0 %v3742
    %3833 = vmatprep.subr.bf16.mxu0 0
    %3834 = vmatpush1.bf16.msra.mxu0 %v3743
    %3835 = vmatprep.subr.bf16.mxu0 0
    %3836 = vmatpush1.bf16.msra.mxu0 %v3744
    %3837 = vmatprep.subr.bf16.mxu0 0
    %3838 = vmatpush1.bf16.msra.mxu0 %v3745
    %3839 = vmatprep.subr.bf16.mxu0 0
    %3840 = vmatpush1.bf16.msra.mxu0 %v3746
    %3841 = vmatprep.subr.bf16.mxu0 0
    %3842 = vmatpush1.bf16.msra.mxu0 %v3747
    %3843 = vmatprep.subr.bf16.mxu0 0
    %3844 = vmatpush1.bf16.msra.mxu0 %v3748
    %3845 = vmatprep.mubr.bf16.mxu0 %v3482
    %3846 = vmatmul.mubr.bf16.gmra.mrb[0].mxu0 %v3481
    %v3847 = vpop.f32.mrb[0].mxu0
    %v3848 = vadd.f32 %v3571, %v3847
    %v3849 = vpop.f32.mrb[0].mxu0
    %v3850 = vpop.f32.mrb[0].mxu0
    %v3851 = vpop.f32.mrb[0].mxu0
    %3852 = vdwg.mxu0
    %3853 = vmatprep.subr.bf16.mxu0 0
    %3854 = vmatpush1.bf16.msra.mxu0 %v3749
    %3855 = vmatprep.subr.bf16.mxu0 0
    %3856 = vmatpush1.bf16.msra.mxu0 %v3750
    %3857 = vmatprep.subr.bf16.mxu0 0
    %3858 = vmatpush1.bf16.msra.mxu0 %v3751
    %3859 = vmatprep.subr.bf16.mxu0 0
    %3860 = vmatpush1.bf16.msra.mxu0 %v3752
    %3861 = vmatprep.subr.bf16.mxu0 0
    %3862 = vmatpush1.bf16.msra.mxu0 %v3753
    %3863 = vmatprep.subr.bf16.mxu0 0
    %3864 = vmatpush1.bf16.msra.mxu0 %v3754
    %3865 = vmatprep.subr.bf16.mxu0 0
    %3866 = vmatpush1.bf16.msra.mxu0 %v3755
    %3867 = vmatprep.subr.bf16.mxu0 0
    %3868 = vmatpush1.bf16.msra.mxu0 %v3756
    %3869 = vmatprep.subr.bf16.mxu0 0
    %3870 = vmatpush1.bf16.msra.mxu0 %v3757
    %3871 = vmatprep.subr.bf16.mxu0 0
    %3872 = vmatpush1.bf16.msra.mxu0 %v3758
    %3873 = vmatprep.subr.bf16.mxu0 0
    %3874 = vmatpush1.bf16.msra.mxu0 %v3759
    %3875 = vmatprep.subr.bf16.mxu0 0
    %3876 = vmatpush1.bf16.msra.mxu0 %v3760
    %3877 = vmatprep.subr.bf16.mxu0 0
    %3878 = vmatpush1.bf16.msra.mxu0 %v3761
    %3879 = vmatprep.subr.bf16.mxu0 0
    %3880 = vmatpush1.bf16.msra.mxu0 %v3762
    %3881 = vmatprep.subr.bf16.mxu0 0
    %3882 = vmatpush1.bf16.msra.mxu0 %v3763
    %3883 = vmatprep.subr.bf16.mxu0 0
    %3884 = vmatpush1.bf16.msra.mxu0 %v3764
    %3885 = vmatprep.mubr.bf16.mxu0 %v3484
    %3886 = vmatmul.mubr.bf16.gmra.mrb[0].mxu0 %v3483
    %v3887 = vpop.f32.mrb[0].mxu0
    %v3888 = vadd.f32 %v3848, %v3887
    %v3889 = vpop.f32.mrb[0].mxu0
    %v3890 = vpop.f32.mrb[0].mxu0
    %v3891 = vpop.f32.mrb[0].mxu0
    %3892 = vdwg.mxu0
    %3893 = vmatprep.subr.bf16.mxu0 0
    %3894 = vmatpush1.bf16.msra.mxu0 %v3765
    %3895 = vmatprep.subr.bf16.mxu0 0
    %3896 = vmatpush1.bf16.msra.mxu0 %v3766
    %3897 = vmatprep.subr.bf16.mxu0 0
    %3898 = vmatpush1.bf16.msra.mxu0 %v3767
    %3899 = vmatprep.subr.bf16.mxu0 0
    %3900 = vmatpush1.bf16.msra.mxu0 %v3768
    %3901 = vmatprep.subr.bf16.mxu0 0
    %3902 = vmatpush1.bf16.msra.mxu0 %v3769
    %3903 = vmatprep.subr.bf16.mxu0 0
    %3904 = vmatpush1.bf16.msra.mxu0 %v3770
    %3905 = vmatprep.subr.bf16.mxu0 0
    %3906 = vmatpush1.bf16.msra.mxu0 %v3771
    %3907 = vmatprep.subr.bf16.mxu0 0
    %3908 = vmatpush1.bf16.msra.mxu0 %v3772
    %3909 = vmatprep.subr.bf16.mxu0 0
    %3910 = vmatpush1.bf16.msra.mxu0 0
    %3911 = vmatprep.subr.bf16.mxu0 0
    %3912 = vmatpush1.bf16.msra.mxu0 0
    %3913 = vmatprep.subr.bf16.mxu0 0
    %3914 = vmatpush1.bf16.msra.mxu0 0
    %3915 = vmatprep.subr.bf16.mxu0 0
    %3916 = vmatpush1.bf16.msra.mxu0 0
    %3917 = vmatprep.subr.bf16.mxu0 0
    %3918 = vmatpush1.bf16.msra.mxu0 0
    %3919 = vmatprep.subr.bf16.mxu0 0
    %3920 = vmatpush1.bf16.msra.mxu0 0
    %3921 = vmatprep.subr.bf16.mxu0 0
    %3922 = vmatpush1.bf16.msra.mxu0 0
    %3923 = vmatprep.subr.bf16.mxu0 0
    %3924 = vmatpush1.bf16.msra.mxu0 0
    %3925 = vmatprep.mubr.bf16.mxu0 0
    %3926 = vmatmul.mubr.bf16.gmra.mrb[0].mxu0 %v3485
    %v3927 = vpop.f32.mrb[0].mxu0
    %v3928 = vadd.f32 %v3888, %v3927
    %v3929 = vpop.f32.mrb[0].mxu0
    %v3930 = vpop.f32.mrb[0].mxu0
    %v3931 = vpop.f32.mrb[0].mxu0
    %3932 = vdwg.mxu0
    %v3933 = vmax.f32 %v3928, 0.0
    %v3934 = vpack.c.bf16 %v3933, %v3933
    %v3935 = vld [vmem:[#allocation14] sm:$0xf]
    %v3936 = vld [vmem:[#allocation14 + $0x4] sm:$0xf]
    %v3937 = vld [vmem:[#allocation14 + $0x8] sm:$0xf]
    %v3938 = vld [vmem:[#allocation14 + $0xc] sm:$0xf]
    %v3939 = vld [vmem:[#allocation14 + $0x10] sm:$0xf]
    %v3940 = vld [vmem:[#allocation14 + $0x14] sm:$0xf]
    %v3941 = vld [vmem:[#allocation14 + $0x18] sm:$0xf]
    %v3942 = vld [vmem:[#allocation14 + $0x1c] sm:$0xf]
    %v3943 = vld [vmem:[#allocation14 + $0x20] sm:$0xf]
    %v3944 = vld [vmem:[#allocation14 + $0x24] sm:$0xf]
    %v3945 = vld [vmem:[#allocation14 + $0x28] sm:$0xf]
    %v3946 = vld [vmem:[#allocation14 + $0x2c] sm:$0xf]
    %v3947 = vld [vmem:[#allocation14 + $0x30] sm:$0xf]
    %v3948 = vld [vmem:[#allocation14 + $0x34] sm:$0xf]
    %v3949 = vld [vmem:[#allocation14 + $0x38] sm:$0xf]
    %v3950 = vld [vmem:[#allocation14 + $0x3c] sm:$0xf]
    %v3951 = vld [vmem:[#allocation16] sm:$0x1]
    %v3953 = vlaneseq
    %v3954 = vshrl.u32 %v3953, 7
    %v3955 = vsub.s32 0, %v3954
    %v3956 = vrot.slane %v3951, %v3955
    %v3974 = vunpack.c.l.b16 %v3935
    %v3975 = vunpack.c.l.b16 %v3936
    %v3976 = vunpack.c.l.b16 %v3937
    %v3977 = vunpack.c.l.b16 %v3938
    %v3978 = vunpack.c.l.b16 %v3939
    %v3979 = vunpack.c.l.b16 %v3940
    %v3980 = vunpack.c.l.b16 %v3941
    %v3981 = vunpack.c.l.b16 %v3942
    %v3982 = vunpack.c.l.b16 %v3943
    %v3983 = vunpack.c.l.b16 %v3944
    %v3984 = vunpack.c.l.b16 %v3945
    %v3985 = vunpack.c.l.b16 %v3946
    %v3986 = vunpack.c.l.b16 %v3947
    %v3987 = vunpack.c.l.b16 %v3948
    %v3988 = vunpack.c.l.b16 %v3949
    %v3989 = vunpack.c.l.b16 %v3950
    %v3990 = vpack.c.b16 %v3975, %v3974
    %v3991 = vpack.c.b16 %v3977, %v3976
    %v3992 = vpack.c.b16 %v3979, %v3978
    %v3993 = vpack.c.b16 %v3981, %v3980
    %v3994 = vpack.c.b16 %v3983, %v3982
    %v3995 = vpack.c.b16 %v3985, %v3984
    %v3996 = vpack.c.b16 %v3987, %v3986
    %v3997 = vpack.c.b16 %v3989, %v3988
    %4006 = vmatprep.subr.bf16.mxu0 0
    %4007 = vmatpush1.bf16.msra.mxu0 %v3990
    %4008 = vmatprep.subr.bf16.mxu0 0
    %4009 = vmatpush1.bf16.msra.mxu0 %v3991
    %4010 = vmatprep.subr.bf16.mxu0 0
    %4011 = vmatpush1.bf16.msra.mxu0 %v3992
    %4012 = vmatprep.subr.bf16.mxu0 0
    %4013 = vmatpush1.bf16.msra.mxu0 %v3993
    %4014 = vmatprep.subr.bf16.mxu0 0
    %4015 = vmatpush1.bf16.msra.mxu0 %v3994
    %4016 = vmatprep.subr.bf16.mxu0 0
    %4017 = vmatpush1.bf16.msra.mxu0 %v3995
    %4018 = vmatprep.subr.bf16.mxu0 0
    %4019 = vmatpush1.bf16.msra.mxu0 %v3996
    %4020 = vmatprep.subr.bf16.mxu0 0
    %4021 = vmatpush1.bf16.msra.mxu0 %v3997
    %4022 = vmatprep.subr.bf16.mxu0 0
    %4023 = vmatpush1.bf16.msra.mxu0 0
    %4024 = vmatprep.subr.bf16.mxu0 0
    %4025 = vmatpush1.bf16.msra.mxu0 0
    %4026 = vmatprep.subr.bf16.mxu0 0
    %4027 = vmatpush1.bf16.msra.mxu0 0
    %4028 = vmatprep.subr.bf16.mxu0 0
    %4029 = vmatpush1.bf16.msra.mxu0 0
    %4030 = vmatprep.subr.bf16.mxu0 0
    %4031 = vmatpush1.bf16.msra.mxu0 0
    %4032 = vmatprep.subr.bf16.mxu0 0
    %4033 = vmatpush1.bf16.msra.mxu0 0
    %4034 = vmatprep.subr.bf16.mxu0 0
    %4035 = vmatpush1.bf16.msra.mxu0 0
    %4036 = vmatprep.subr.bf16.mxu0 0
    %4037 = vmatpush1.bf16.msra.mxu0 0
    %4038 = vmatprep.mubr.bf16.mxu0 0
    %4039 = vmatmul.mubr.bf16.gmra.mrb[0].mxu0 %v3934
    %v4040 = vpop.f32.mrb[0].mxu0
    %v4041 = vadd.f32 %v3956, %v4040
    %v4042 = vpop.f32.mrb[0].mxu0
    %v4043 = vpop.f32.mrb[0].mxu0
    %v4044 = vpop.f32.mrb[0].mxu0
    %4045 = vdwg.mxu0
    %4046 = vst [vmem:[#allocation17] sm:$0xff] %v4041
    // Predicated region
    $region74: #{tpu_custom_call.1} parent=1 // pred_check
      _
    $region75: #{tpu_custom_call.1} parent=1 // pred_check_branch
      %4048 = sbr.rel (0) target = $region77
    $region76: #{tpu_custom_call.1} parent=1 // pred_region
      %s4050 = ssub.s32 128, 128
      %4051 = vsyncadd [#allocation4], %s4050
      %s4053 = sshll.u32 [#allocation17], 4
      %s4054 = int_to_ptr.vmem [resolvable:$true] %s4053
      %4056 = dma.vmem_to_hbm [thread:$0]  %s4054, 128, %s9, [#allocation4]
    $region77: #{tpu_custom_call.1} parent=1 // pred_fallthru
      _
    // Predicated region
    $region78: #{tpu_custom_call.1} parent=1 // pred_check
      _
    $region79: #{tpu_custom_call.1} parent=1 // pred_check_branch
      %4058 = sbr.rel (0) target = $region81
    $region80: #{tpu_custom_call.1} parent=1 // pred_region
      %4059 = dma.done [#allocation4], 128
    $region81: #{tpu_custom_call.1} parent=1 // pred_fallthru
      _
    %4060 = vsyncpa [#allocation3], 1
    %4061 = vsyncpa [#allocation6], 1
    %4062 = vsyncpa [#allocation9], 1
    %4063 = vsyncpa [#allocation12], 1
    %4064 = vsyncpa [#allocation15], 1
    %4065 = vsyncpa [#allocation4], 1

</llo_original>
